<compile_context>
chip_gen: v5e
topology: v5e:2x2
jax: 0.10.0
libtpu: 0.0.40
codegen_flags: <defaults>
</compile_context>

<pallas_src>
import functools

import jax
import jax.numpy as jnp
from jax.experimental import pallas as pl
from jax.experimental.pallas import tpu as pltpu

ACT_NONE, ACT_RELU, ACT_LEAKY = 0, 1, 2
LEAKY_SLOPE = 0.01            # PyTorch nn.LeakyReLU default
BN_EPS = 1e-5                 # PyTorch nn.BatchNorm1d default
VMEM_LIMIT = 32 * 1024 * 1024  # honest per-kernel budget (fits v7x's 64 MiB)


def _leaky(y):
    # max(y, a*y) == LeakyReLU(y) for 0 < a < 1: one VPU max, no cmp+select.
    return jnp.maximum(y, LEAKY_SLOPE * y)


def _apply_act(y, act):
    if act == ACT_RELU:
        return jnp.maximum(y, 0.0)
    if act == ACT_LEAKY:
        return _leaky(y)
    return y


def _round_up(x, m):
    return ((x + m - 1) // m) * m


def _row_tile(m):
    """(padded_rows, tile_rows) for flattened (B*N, C) operands."""
    if m % 256 == 0 and m >= 512:
        return m, 256
    if m % 128 == 0 and m >= 128:
        return m, 128
    if m >= 128:
        mp = _round_up(m, 128)
        return mp, 128
    mp = _round_up(m, 8)
    return mp, mp


def _col_tile(n):
    """Point-axis tile: 256 fills the v6e/v7x 256-high MXU, else 128, else whole."""
    if n % 256 == 0 and n >= 256:
        return 256
    if n % 128 == 0 and n >= 128:
        return 128
    return n


# ----------------------------------------------------------------------------
# Generic fused MLP chain (Conv1d k=1, no bias + folded BN + activation)^L
# ----------------------------------------------------------------------------
def _mlp_chain_kernel(*refs, acts):
    n = len(acts)
    x_ref = refs[0]
    o_ref = refs[1 + 3 * n]
    h = x_ref[...]
    for l in range(n):
        w = refs[1 + 3 * l][...]
        s = refs[2 + 3 * l][...]
        b = refs[3 + 3 * l][...]
        y = jnp.dot(h.astype(jnp.bfloat16), w,
                    preferred_element_type=jnp.float32)
        h = _apply_act(y * s + b, acts[l])
    o_ref[...] = h.astype(o_ref.dtype)


def mlp_chain(x, layers, acts):
    """x: (M, Cin) f32; layers: [(w bf16 (Ci,Co), scale f32 (1,Co), bias f32 (1,Co))]."""
    m, cin = x.shape
    mp, tm = _row_tile(m)
    if mp != m:
        x = jnp.pad(x, ((0, mp - m), (0, 0)))
    cout = layers[-1][0].shape[1]

    in_specs = [pl.BlockSpec((tm, cin), lambda i: (i, 0))]
    flat = [x]
    flops = 0
    bytes_acc = mp * cin * 4 + mp * cout * 4
    for (w, s, b) in layers:
        ci, co = w.shape
        in_specs.append(pl.BlockSpec((ci, co), lambda i: (0, 0)))
        in_specs.append(pl.BlockSpec((1, co), lambda i: (0, 0)))
        in_specs.append(pl.BlockSpec((1, co), lambda i: (0, 0)))
        flat += [w, s, b]
        flops += 2 * mp * ci * co
        bytes_acc += int(w.size) * w.dtype.itemsize + (int(s.size) + int(b.size)) * 4

    out = pl.pallas_call(
        functools.partial(_mlp_chain_kernel, acts=tuple(acts)),
        out_shape=jax.ShapeDtypeStruct((mp, cout), jnp.float32),
        grid_spec=pltpu.PrefetchScalarGridSpec(
            num_scalar_prefetch=0,
            grid=(mp // tm,),
            in_specs=in_specs,
            out_specs=pl.BlockSpec((tm, cout), lambda i: (i, 0)),
        ),
        compiler_params=pltpu.CompilerParams(
            dimension_semantics=("parallel",),
            vmem_limit_bytes=VMEM_LIMIT),
        cost_estimate=pl.CostEstimate(flops=int(flops), transcendentals=0,
                                      bytes_accessed=int(bytes_acc)),
    )(*flat)
    return out[:m] if mp != m else out


# ----------------------------------------------------------------------------
# Row-tiled NEGATED pairwise squared distances (for KNN via top_k, no extra
# negation pass); column sum-of-squares computed once outside and passed in.
# ----------------------------------------------------------------------------
def _neg_sqdist_kernel(xi_ref, x_ref, ssq_ref, o_ref):
    xi = xi_ref[0]                                              # (ti, C)
    x = x_ref[0]                                                # (N, C)
    rowsq = jnp.sum(xi * xi, axis=-1, keepdims=True)            # (ti, 1) tiny
    gram = jax.lax.dot_general(
        xi, x, (((1,), (1,)), ((), ())), preferred_element_type=jnp.float32)
    # -(rowsq + colsq - 2*gram)
    o_ref[0] = 2.0 * gram - rowsq - ssq_ref[0]


def neg_pairwise_sqdist(x):
    """x: (B, N, C) f32 -> (B, N, N) negated squared euclidean distances."""
    b, n, c = x.shape
    ssq = jnp.sum(x * x, axis=-1)[:, None, :]                   # (B, 1, N), once
    ti = _col_tile(n)
    return pl.pallas_call(
        _neg_sqdist_kernel,
        out_shape=jax.ShapeDtypeStruct((b, n, n), jnp.float32),
        grid_spec=pltpu.PrefetchScalarGridSpec(
            num_scalar_prefetch=0,
            grid=(b, n // ti),
            in_specs=[pl.BlockSpec((1, ti, c), lambda bi, i: (bi, i, 0)),
                      pl.BlockSpec((1, n, c), lambda bi, i: (bi, 0, 0)),
                      pl.BlockSpec((1, 1, n), lambda bi, i: (bi, 0, 0))],
            out_specs=pl.BlockSpec((1, ti, n), lambda bi, i: (bi, i, 0)),
        ),
        compiler_params=pltpu.CompilerParams(
            dimension_semantics=("parallel", "parallel"),
            vmem_limit_bytes=VMEM_LIMIT),
        cost_estimate=pl.CostEstimate(
            flops=2 * b * n * n * c, transcendentals=0,
            bytes_accessed=int(2 * b * n * c * 4 + b * n * n * 4)),
    )(x, x, ssq)


# ----------------------------------------------------------------------------
# Fused encoder trunk: conv1 + (emb-injected) conv2 + conv3
# (emb path hoisted into a per-batch conv2 bias computed once in the wrapper)
# ----------------------------------------------------------------------------
def _enc_trunk_kernel(feat_ref, b2e_ref,
                      w1_ref, s1_ref, b1_ref,
                      w2h_ref, s2_ref,
                      w3_ref, s3_ref, b3_ref, o_ref):
    x = feat_ref[0]                                             # (tn, 12)
    h = jnp.dot(x.astype(jnp.bfloat16), w1_ref[...],
                preferred_element_type=jnp.float32)
    h = jnp.maximum(h * s1_ref[...] + b1_ref[...], 0.0)
    # conv2 on concat([h, emb]) == h @ W2[:64] + emb-part; the emb half (M=1
    # matmul) is pre-folded into b2e = (emb@Wemb+bemb)@W2e*s2 + b2.
    y = jnp.dot(h.astype(jnp.bfloat16), w2h_ref[...],
                preferred_element_type=jnp.float32)
    h = jnp.maximum(y * s2_ref[...] + b2e_ref[0], 0.0)
    y = jnp.dot(h.astype(jnp.bfloat16), w3_ref[...],
                preferred_element_type=jnp.float32)
    o_ref[0] = jnp.maximum(y * s3_ref[...] + b3_ref[...], 0.0)


def encoder_trunk(feat, b2_eff, p):
    b, n, cin = feat.shape
    tn = _col_tile(n)
    c = 64
    return pl.pallas_call(
        _enc_trunk_kernel,
        out_shape=jax.ShapeDtypeStruct((b, n, c), jnp.float32),
        grid_spec=pltpu.PrefetchScalarGridSpec(
            num_scalar_prefetch=0,
            grid=(b, n // tn),
            in_specs=[
                pl.BlockSpec((1, tn, cin), lambda bi, i: (bi, i, 0)),
                pl.BlockSpec((1, 1, c), lambda bi, i: (bi, 0, 0)),
                pl.BlockSpec((cin, c), lambda bi, i: (0, 0)),
                pl.BlockSpec((1, c), lambda bi, i: (0, 0)),
                pl.BlockSpec((1, c), lambda bi, i: (0, 0)),
                pl.BlockSpec((c, c), lambda bi, i: (0, 0)),
                pl.BlockSpec((1, c), lambda bi, i: (0, 0)),
                pl.BlockSpec((c, c), lambda bi, i: (0, 0)),
                pl.BlockSpec((1, c), lambda bi, i: (0, 0)),
                pl.BlockSpec((1, c), lambda bi, i: (0, 0)),
            ],
            out_specs=pl.BlockSpec((1, tn, c), lambda bi, i: (bi, i, 0)),
        ),
        compiler_params=pltpu.CompilerParams(
            dimension_semantics=("parallel", "parallel"),
            vmem_limit_bytes=VMEM_LIMIT),
        cost_estimate=pl.CostEstimate(
            flops=2 * b * n * (cin * c + 2 * c * c),
            transcendentals=0,
            bytes_accessed=int(b * n * cin * 4 + b * n * c * 4 + 3 * c * c * 2)),
    )(feat, b2_eff.reshape(b, 1, c),
      p['conv1_w'], *p['bn1'],
      p['conv2_w_h'], p['bn2'][0],
      p['conv3_w'], *p['bn3'])


# ----------------------------------------------------------------------------
# Fused gl2 conv (128->1024) + global max over points + conv4 (1024->512)
# Running (8,1024) partial max; cross-sublane reduce deferred to finalize.
# ----------------------------------------------------------------------------
def _gl2_head_kernel(agg_ref, wg_ref, sg_ref, bg_ref,
                     w4_ref, s4_ref, b4_ref, o_ref, mx_ref):
    i = pl.program_id(1)

    @pl.when(i == 0)
    def _():
        mx_ref[...] = jnp.full(mx_ref.shape, -jnp.inf, dtype=mx_ref.dtype)

    a = agg_ref[0]                                              # (tn, 128)
    y = jnp.dot(a.astype(jnp.bfloat16), wg_ref[...],
                preferred_element_type=jnp.float32)
    y = _leaky(y * sg_ref[...] + bg_ref[...])                   # (tn, 1024)

    rows = mx_ref.shape[0]
    part = mx_ref[...]
    if rows > 1:
        # Per-8-row (vreg-block) maxes: pure VPU work, no per-tile XLU reduce.
        for r0 in range(0, y.shape[0], rows):
            part = jnp.maximum(part, y[r0:r0 + rows, :])
    else:
        part = jnp.maximum(part, jnp.max(y, axis=0, keepdims=True))
    mx_ref[...] = part

    @pl.when(i == pl.num_programs(1) - 1)
    def _():
        g = jnp.max(mx_ref[...], axis=0, keepdims=True)         # once per batch
        cw = jnp.dot(g.astype(jnp.bfloat16), w4_ref[...],
                     preferred_element_type=jnp.float32)
        o_ref[0] = jnp.maximum(cw * s4_ref[...] + b4_ref[...], 0.0)


def gl2_and_head(agg, p):
    b, n, c = agg.shape                                         # c == 128
    tn = _col_tile(n)
    rows = 8 if tn % 8 == 0 else 1
    return pl.pallas_call(
        _gl2_head_kernel,
        out_shape=jax.ShapeDtypeStruct((b, 1, 512), jnp.float32),
        grid_spec=pltpu.PrefetchScalarGridSpec(
            num_scalar_prefetch=0,
            grid=(b, n // tn),
            in_specs=[
                pl.BlockSpec((1, tn, c), lambda bi, i: (bi, i, 0)),
                pl.BlockSpec((c, 1024), lambda bi, i: (0, 0)),
                pl.BlockSpec((1, 1024), lambda bi, i: (0, 0)),
                pl.BlockSpec((1, 1024), lambda bi, i: (0, 0)),
                pl.BlockSpec((1024, 512), lambda bi, i: (0, 0)),
                pl.BlockSpec((1, 512), lambda bi, i: (0, 0)),
                pl.BlockSpec((1, 512), lambda bi, i: (0, 0)),
            ],
            out_specs=pl.BlockSpec((1, 1, 512), lambda bi, i: (bi, 0, 0)),
            scratch_shapes=[pltpu.VMEM((rows, 1024), jnp.float32)],
        ),
        compiler_params=pltpu.CompilerParams(
            dimension_semantics=("parallel", "arbitrary"),
            vmem_limit_bytes=VMEM_LIMIT),
        cost_estimate=pl.CostEstimate(
            flops=2 * b * n * c * 1024 + 2 * b * 1024 * 512,
            transcendentals=0,
            bytes_accessed=int(b * n * c * 4 + c * 1024 * 2 + 1024 * 512 * 2
                               + b * 512 * 4)),
    )(agg, p['gl2_w'], *p['gl2_bn'], p['conv4_w'], *p['bn4'])


# ----------------------------------------------------------------------------
# Fully fused FBDecoder: fold1 + concat + fold2 in one kernel
# (first-layer matmuls hoisted; lane-dense padded output)
# ----------------------------------------------------------------------------
def _decoder_kernel(gtab_ref, c1_ref, c4_ref, w4hs_ref,
                    f1w2_ref, f1s2_ref, f1b2_ref,
                    f1w3_ref, f1s3_ref, f1b3_ref,
                    f2w2_ref, f2s2_ref, f2b2_ref,
                    f2w3_ref, f2s3_ref, f2b3_ref,
                    o_ref):
    # fold1 layer 1: (grid@W1g)*s1 is a precomputed table, (cw@W1c)*s1+b1 a
    # per-batch bias -> zero matmuls per tile for this layer.
    h = _leaky(gtab_ref[...] + c1_ref[0])                       # (tg, 512)
    h = _leaky(jnp.dot(h.astype(jnp.bfloat16), f1w2_ref[...],
                       preferred_element_type=jnp.float32)
               * f1s2_ref[...] + f1b2_ref[...])
    h3 = _leaky(jnp.dot(h.astype(jnp.bfloat16), f1w3_ref[...],
                        preferred_element_type=jnp.float32)
                * f1s3_ref[...] + f1b3_ref[...])                # (tg, 3)
    # fold2 layer 1: K=3 contraction as 3 broadcast FMAs on the VPU (keeps the
    # MXU free for the 512-wide layers); cw@W4c*s4+b4 hoisted into c4.
    w4hs = w4hs_ref[...]                                        # (3, 512) = W4h*s4
    y = c4_ref[0] + h3[:, 0:1] * w4hs[0:1, :]
    y = y + h3[:, 1:2] * w4hs[1:2, :]
    y = y + h3[:, 2:3] * w4hs[2:3, :]
    h = _leaky(y)
    h = _leaky(jnp.dot(h.astype(jnp.bfloat16), f2w2_ref[...],
                       preferred_element_type=jnp.float32)
               * f2s2_ref[...] + f2b2_ref[...])
    # last layer zero-padded 3 -> 128 output cols: lane-dense store, no vst.msk
    h = _leaky(jnp.dot(h.astype(jnp.bfloat16), f2w3_ref[...],
                       preferred_element_type=jnp.float32)
               * f2s3_ref[...] + f2b3_ref[...])
    o_ref[0] = h                                                # (tg, 128)


def fb_decoder(p, codeword):
    b = codeword.shape[0]
    cw = codeword.reshape(b, 512)
    grid_pts = p['grid']                                        # (G, 2)
    g = grid_pts.shape[0]
    tg = _col_tile(g)
    f1, f2 = p['fold1'], p['fold2']

    # Hoisted constant / per-batch (M<=B) first-layer matmuls: tiny XLA ops.
    gtab = jnp.dot(grid_pts, f1['w1b'].astype(jnp.float32)) * f1['s1']        # (G, 512)
    c1 = (jnp.dot(cw.astype(jnp.bfloat16), f1['w1a'],
                  preferred_element_type=jnp.float32) * f1['s1'] + f1['b1'])  # (B, 512)
    c4 = (jnp.dot(cw.astype(jnp.bfloat16), f2['w1b'],
                  preferred_element_type=jnp.float32) * f2['s1'] + f2['b1'])  # (B, 512)
    w4hs = f2['w1a'].astype(jnp.float32) * f2['s1']                           # (3, 512)

    # Lane-dense output: pad 512->3 layer to 512->128 (zeros), slice afterwards.
    pad = 128 - 3
    w6 = jnp.pad(f2['w3'], ((0, 0), (0, pad)))
    s6 = jnp.pad(f2['s3'], ((0, 0), (0, pad)))
    b6 = jnp.pad(f2['b3'], ((0, 0), (0, pad)))

    def const_spec(shp):
        return pl.BlockSpec(shp, lambda bi, i: (0, 0))

    in_specs = [
        pl.BlockSpec((tg, 512), lambda bi, i: (i, 0)),           # grid table
        pl.BlockSpec((1, 1, 512), lambda bi, i: (bi, 0, 0)),     # c1 per-batch bias
        pl.BlockSpec((1, 1, 512), lambda bi, i: (bi, 0, 0)),     # c4 per-batch bias
        const_spec((3, 512)),                                    # W4h * s4
        const_spec((512, 512)), const_spec((1, 512)), const_spec((1, 512)),
        const_spec((512, 3)), const_spec((1, 3)), const_spec((1, 3)),
        const_spec((512, 512)), const_spec((1, 512)), const_spec((1, 512)),
        const_spec((512, 128)), const_spec((1, 128)), const_spec((1, 128)),
    ]

    flops = 2 * b * g * (512 * 512 + 512 * 3 + 3 * 512 + 512 * 512 + 512 * 128)
    bytes_acc = (g * 512 * 4 + 2 * b * 512 * 4 + b * g * 128 * 4
                 + 2 * 512 * 512 * 2 + 512 * 128 * 2 + 512 * 3 * 2
                 + (3 + 1 + 1 + 1) * 512 * 4)

    out = pl.pallas_call(
        _decoder_kernel,
        out_shape=jax.ShapeDtypeStruct((b, g, 128), jnp.float32),
        grid_spec=pltpu.PrefetchScalarGridSpec(
            num_scalar_prefetch=0,
            grid=(b, g // tg),
            in_specs=in_specs,
            out_specs=pl.BlockSpec((1, tg, 128), lambda bi, i: (bi, i, 0)),
        ),
        compiler_params=pltpu.CompilerParams(
            dimension_semantics=("parallel", "parallel"),
            vmem_limit_bytes=VMEM_LIMIT),
        cost_estimate=pl.CostEstimate(flops=int(flops), transcendentals=0,
                                      bytes_accessed=int(bytes_acc)),
    )(gtab, c1.reshape(b, 1, 512), c4.reshape(b, 1, 512), w4hs,
      f1['w2'], f1['s2'], f1['b2'],
      f1['w3'], f1['s3'], f1['b3'],
      f2['w2'], f2['s2'], f2['b2'],
      w6, s6, b6)
    return out[..., :3]


# ----------------------------------------------------------------------------
# JAX glue (KNN top-k / gather, covariance, graph-layer aggregation)
# ----------------------------------------------------------------------------
def knn_neighbors(x, k):
    # TODO(synk): exact top-k + neighbor gather stays in plain JAX; the Pallas
    # kernel already emits negated distances so no extra (B,N,N) negation pass.
    negd = neg_pairwise_sqdist(x)                               # (B, N, N)
    _, idx = jax.lax.top_k(negd, k)                             # (B, N, k)
    nbrs = jax.vmap(lambda xb, ib: xb[ib])(x, idx)              # (B, N, k, C)
    return idx, nbrs


def compute_local_covariance(nbrs):
    k = nbrs.shape[2]
    mean = jnp.mean(nbrs, axis=2, keepdims=True)
    c = nbrs - mean
    cov = jnp.einsum('bnki,bnkj->bnij', c, c) / k
    return cov.reshape(nbrs.shape[0], nbrs.shape[1], 9)


def gb_encoder(p, x, teeth, k=32):
    b, n, _ = x.shape
    emb_raw = p['embedding'][teeth]                             # (B, 64)
    _, nbrs = knn_neighbors(x, k)
    feat = jnp.concatenate([x, compute_local_covariance(nbrs)], axis=-1)  # (B,N,12)

    # Hoisted emb path: conv_emb (bias conv) + its conv2 contribution, folded
    # into a per-batch conv2 bias (removes per-tile M=1 matmuls in the kernel).
    e = jnp.dot(emb_raw.astype(jnp.bfloat16), p['conv_emb_w'],
                preferred_element_type=jnp.float32) + p['conv_emb_b']      # (B, 64)
    s2, b2 = p['bn2']
    b2_eff = jnp.dot(e.astype(jnp.bfloat16), p['conv2_w_e'],
                     preferred_element_type=jnp.float32) * s2 + b2          # (B, 64)

    h = encoder_trunk(feat, b2_eff, p)                          # (B, N, 64)
    # graph layer 1 (k=8)
    _, nbrs = knn_neighbors(h, 8)
    agg = jnp.max(nbrs, axis=2)                                 # (B, N, 64)
    h = mlp_chain(agg.reshape(b * n, 64),
                  [(p['gl1_w'],) + p['gl1_bn']], (ACT_LEAKY,)).reshape(b, n, 128)
    # graph layer 2 (k=8) fused with global max-pool and conv4
    _, nbrs = knn_neighbors(h, 8)
    agg = jnp.max(nbrs, axis=2)                                 # (B, N, 128)
    return gl2_and_head(agg, p)                                 # (B, 1, 512)


def foldingnet_forward(p, pos, teeth):
    # data.batch is unused by the reference forward pass.
    b = teeth.shape[0]
    x = pos.reshape(b, -1, 3)
    codeword = gb_encoder(p, x, teeth)
    return fb_decoder(p, codeword)


# ----------------------------------------------------------------------------
# Deterministic parameter init (shapes follow the module __init__)
# ----------------------------------------------------------------------------
def _bn_fold(c):
    gamma = jnp.ones((c,), jnp.float32)
    beta = jnp.zeros((c,), jnp.float32)
    rm = jnp.zeros((c,), jnp.float32)
    rv = jnp.ones((c,), jnp.float32)
    scale = gamma / jnp.sqrt(rv + BN_EPS)
    bias = beta - rm * scale
    return scale.reshape(1, c), bias.reshape(1, c)


def init_params(key, encoder_in=12, encoder_out=64, num_points=8):
    keys = iter(jax.random.split(key, 64))

    def conv_w(cin, cout):
        w = jax.random.normal(next(keys), (cin, cout), jnp.float32) / (cin ** 0.5)
        return w.astype(jnp.bfloat16)            # bf16 matmul operands (f32 acc)

    p = {}
    p['embedding'] = jax.random.normal(next(keys), (33, 64), jnp.float32)
    p['conv_emb_w'] = conv_w(64, 64)
    p['conv_emb_b'] = jax.random.normal(next(keys), (1, 64), jnp.float32) * 0.01
    p['conv1_w'] = conv_w(encoder_in, encoder_out); p['bn1'] = _bn_fold(encoder_out)
    # conv2 acts on concat([h(64), emb(64)]); the two row-blocks are kept split
    # so the concat never materializes (emb half is folded into a bias).
    p['conv2_w_h'] = conv_w(encoder_out, encoder_out)
    p['conv2_w_e'] = conv_w(64, encoder_out)
    p['bn2'] = _bn_fold(encoder_out)
    p['conv3_w'] = conv_w(encoder_out, encoder_out); p['bn3'] = _bn_fold(encoder_out)
    p['gl1_w'] = conv_w(64, 128); p['gl1_bn'] = _bn_fold(128)
    p['gl2_w'] = conv_w(128, 1024); p['gl2_bn'] = _bn_fold(1024)
    p['conv4_w'] = conv_w(1024, 512); p['bn4'] = _bn_fold(512)

    def fold_params(split_a, split_b, chans):
        d = {}
        d['w1a'] = conv_w(split_a, chans[0])     # first concat block
        d['w1b'] = conv_w(split_b, chans[0])     # second concat block
        d['s1'], d['b1'] = _bn_fold(chans[0])
        d['w2'] = conv_w(chans[0], chans[1]); d['s2'], d['b2'] = _bn_fold(chans[1])
        d['w3'] = conv_w(chans[1], chans[2]); d['s3'], d['b3'] = _bn_fold(chans[2])
        return d

    p['fold1'] = fold_params(512, 2, (512, 512, 3))    # input = [codeword, grid]
    p['fold2'] = fold_params(3, 512, (512, 512, 3))    # input = [fold1_out, codeword]

    lin = jnp.linspace(-0.5, 0.5, num_points, dtype=jnp.float32)
    p['grid'] = jnp.stack(jnp.meshgrid(lin, lin)).reshape(-1, 2)  # (num_points^2, 2)
    return p


if __name__ == "__main__":
    key = jax.random.PRNGKey(0)
    pk, xk, tk = jax.random.split(key, 3)

    NUM_POINTS = 8          # decoder grid -> 64 folded points
    B, N = 2, 64            # 2 teeth, 64 points each

    params = init_params(pk, encoder_in=12, encoder_out=64, num_points=NUM_POINTS)
    pos = jax.random.normal(xk, (B * N, 3), jnp.float32)        # data.pos
    teeth = jax.random.randint(tk, (B,), 0, 33)                 # data.tooth_n

    fwd = jax.jit(foldingnet_forward)
    out = jax.block_until_ready(fwd(params, pos, teeth))
    assert out.shape == (B, NUM_POINTS * NUM_POINTS, 3), out.shape
    assert bool(jnp.all(jnp.isfinite(out)))
    print("KERNEL_OK")
</pallas_src>

<mosaic_0001>
module attributes {stable_mosaic.version = 11 : i64} {
  func.func @_neg_sqdist_kernel(%arg0: i32, %arg1: i32, %arg2: memref<1x64x3xf32, #tpu.memory_space<vmem>>, %arg3: memref<1x64x3xf32, #tpu.memory_space<vmem>>, %arg4: memref<1x1x64xf32, #tpu.memory_space<vmem>>, %arg5: memref<1x64x64xf32, #tpu.memory_space<vmem>>) attributes {dimension_semantics = [#tpu.dimension_semantics<parallel>, #tpu.dimension_semantics<parallel>], iteration_bounds = array<i64: 2, 1>, scalar_prefetch = 0 : i64, scratch_operands = 0 : i64, tpu.core_type = #tpu.core_type<tc>, window_params = [{transform_indices = @transform_0, window_bounds = array<i64: 1, 64, 3>}, {transform_indices = @transform_1, window_bounds = array<i64: 1, 64, 3>}, {transform_indices = @transform_2, window_bounds = array<i64: 1, 1, 64>}, {transform_indices = @transform_3, window_bounds = array<i64: 1, 64, 64>}]} {
    %c0 = arith.constant 0 : index
    %c0_0 = arith.constant 0 : index
    %c0_1 = arith.constant 0 : index
    %0 = vector.load %arg2[%c0, %c0_0, %c0_1] : memref<1x64x3xf32, #tpu.memory_space<vmem>>, vector<1x64x3xf32>
    %1 = vector.shape_cast %0 : vector<1x64x3xf32> to vector<64x3xf32>
    %c0_2 = arith.constant 0 : index
    %c0_3 = arith.constant 0 : index
    %c0_4 = arith.constant 0 : index
    %2 = vector.load %arg3[%c0_2, %c0_3, %c0_4] : memref<1x64x3xf32, #tpu.memory_space<vmem>>, vector<1x64x3xf32>
    %3 = vector.shape_cast %2 : vector<1x64x3xf32> to vector<64x3xf32>
    %4 = arith.mulf %1, %1 : vector<64x3xf32>
    %cst = arith.constant dense<0.000000e+00> : vector<64xf32>
    %5 = vector.multi_reduction <add>, %4, %cst [1] : vector<64x3xf32> to vector<64xf32>
    %6 = vector.shape_cast %5 : vector<64xf32> to vector<64x1xf32>
    %cst_5 = arith.constant dense<0.000000e+00> : vector<64x64xf32>
    %7 = tpu.matmul %1, %3, %cst_5 {dimension_numbers = #tpu.dot_dimension_numbers<[1], [1], [0], [0], [0, 0, 1, 0], [], []>} : vector<64x3xf32>, vector<64x3xf32>, vector<64x64xf32> -> vector<64x64xf32>
    %cst_6 = arith.constant 2.000000e+00 : f32
    %8 = vector.broadcast %cst_6 : f32 to vector<64x64xf32>
    %9 = arith.mulf %8, %7 : vector<64x64xf32>
    %10 = vector.broadcast %6 : vector<64x1xf32> to vector<64x64xf32>
    %11 = arith.subf %9, %10 : vector<64x64xf32>
    %c0_7 = arith.constant 0 : index
    %c0_8 = arith.constant 0 : index
    %c0_9 = arith.constant 0 : index
    %12 = vector.load %arg4[%c0_7, %c0_8, %c0_9] : memref<1x1x64xf32, #tpu.memory_space<vmem>>, vector<1x1x64xf32>
    %13 = vector.shape_cast %12 : vector<1x1x64xf32> to vector<1x64xf32>
    %14 = vector.broadcast %13 : vector<1x64xf32> to vector<64x64xf32>
    %15 = arith.subf %11, %14 : vector<64x64xf32>
    %c0_10 = arith.constant 0 : index
    %c0_11 = arith.constant 0 : index
    %c0_12 = arith.constant 0 : index
    %16 = vector.load %arg5[%c0_10, %c0_11, %c0_12] : memref<1x64x64xf32, #tpu.memory_space<vmem>>, vector<1x64x64xf32>
    %17 = vector.shape_cast %16 : vector<1x64x64xf32> to vector<64x64xf32>
    %18 = vector.shape_cast %15 : vector<64x64xf32> to vector<1x64x64xf32>
    tpu.vector_store %arg5[%c0_10, %c0_11, %c0_12], %18 {strides = array<i32>} : memref<1x64x64xf32, #tpu.memory_space<vmem>>, vector<1x64x64xf32>,
    return
  }
  func.func @transform_0(%arg0: i32, %arg1: i32) -> (i32, i32, i32) {
    %c0_i32 = arith.constant 0 : i32
    %c0_i32_0 = arith.constant 0 : i32
    return %arg0, %arg1, %c0_i32 : i32, i32, i32
  }
  func.func @transform_1(%arg0: i32, %arg1: i32) -> (i32, i32, i32) {
    %c0_i32 = arith.constant 0 : i32
    %c0_i32_0 = arith.constant 0 : i32
    %c0_i32_1 = arith.constant 0 : i32
    return %arg0, %c0_i32, %c0_i32_0 : i32, i32, i32
  }
  func.func @transform_2(%arg0: i32, %arg1: i32) -> (i32, i32, i32) {
    %c0_i32 = arith.constant 0 : i32
    %c0_i32_0 = arith.constant 0 : i32
    %c0_i32_1 = arith.constant 0 : i32
    return %arg0, %c0_i32, %c0_i32_0 : i32, i32, i32
  }
  func.func @transform_3(%arg0: i32, %arg1: i32) -> (i32, i32, i32) {
    %c0_i32 = arith.constant 0 : i32
    %c0_i32_0 = arith.constant 0 : i32
    return %arg0, %arg1, %c0_i32 : i32, i32, i32
  }
}

module attributes {stable_mosaic.version = 11 : i64} {
  func.func @_enc_trunk_kernel(%arg0: i32, %arg1: i32, %arg2: memref<1x64x12xf32, #tpu.memory_space<vmem>>, %arg3: memref<1x1x64xf32, #tpu.memory_space<vmem>>, %arg4: memref<12x64xbf16, #tpu.memory_space<vmem>>, %arg5: memref<1x64xf32, #tpu.memory_space<vmem>>, %arg6: memref<1x64xf32, #tpu.memory_space<vmem>>, %arg7: memref<64x64xbf16, #tpu.memory_space<vmem>>, %arg8: memref<1x64xf32, #tpu.memory_space<vmem>>, %arg9: memref<64x64xbf16, #tpu.memory_space<vmem>>, %arg10: memref<1x64xf32, #tpu.memory_space<vmem>>, %arg11: memref<1x64xf32, #tpu.memory_space<vmem>>, %arg12: memref<1x64x64xf32, #tpu.memory_space<vmem>>) attributes {dimension_semantics = [#tpu.dimension_semantics<parallel>, #tpu.dimension_semantics<parallel>], iteration_bounds = array<i64: 2, 1>, scalar_prefetch = 0 : i64, scratch_operands = 0 : i64, tpu.core_type = #tpu.core_type<tc>, window_params = [{transform_indices = @transform_0, window_bounds = array<i64: 1, 64, 12>}, {transform_indices = @transform_1, window_bounds = array<i64: 1, 1, 64>}, {pipeline_mode = #tpu.pipeline_mode<synchronous>, transform_indices = @transform_2, window_bounds = array<i64: 12, 64>}, {pipeline_mode = #tpu.pipeline_mode<synchronous>, transform_indices = @transform_3, window_bounds = array<i64: 1, 64>}, {pipeline_mode = #tpu.pipeline_mode<synchronous>, transform_indices = @transform_4, window_bounds = array<i64: 1, 64>}, {pipeline_mode = #tpu.pipeline_mode<synchronous>, transform_indices = @transform_5, window_bounds = array<i64: 64, 64>}, {pipeline_mode = #tpu.pipeline_mode<synchronous>, transform_indices = @transform_6, window_bounds = array<i64: 1, 64>}, {pipeline_mode = #tpu.pipeline_mode<synchronous>, transform_indices = @transform_7, window_bounds = array<i64: 64, 64>}, {pipeline_mode = #tpu.pipeline_mode<synchronous>, transform_indices = @transform_8, window_bounds = array<i64: 1, 64>}, {pipeline_mode = #tpu.pipeline_mode<synchronous>, transform_indices = @transform_9, window_bounds = array<i64: 1, 64>}, {transform_indices = @transform_10, window_bounds = array<i64: 1, 64, 64>}]} {
    %c0 = arith.constant 0 : index
    %c0_0 = arith.constant 0 : index
    %c0_1 = arith.constant 0 : index
    %0 = vector.load %arg2[%c0, %c0_0, %c0_1] : memref<1x64x12xf32, #tpu.memory_space<vmem>>, vector<1x64x12xf32>
    %1 = vector.shape_cast %0 : vector<1x64x12xf32> to vector<64x12xf32>
    %2 = arith.truncf %1 : vector<64x12xf32> to vector<64x12xbf16>
    %c0_2 = arith.constant 0 : index
    %c0_3 = arith.constant 0 : index
    %3 = vector.load %arg4[%c0_2, %c0_3] : memref<12x64xbf16, #tpu.memory_space<vmem>>, vector<12x64xbf16>
    %cst = arith.constant dense<0.000000e+00> : vector<64x64xf32>
    %4 = tpu.matmul %2, %3, %cst {dimension_numbers = #tpu.dot_dimension_numbers<[1], [0], [0], [1], [0, 0, 1, 1], [], []>} : vector<64x12xbf16>, vector<12x64xbf16>, vector<64x64xf32> -> vector<64x64xf32>
    %c0_4 = arith.constant 0 : index
    %c0_5 = arith.constant 0 : index
    %5 = vector.load %arg5[%c0_4, %c0_5] : memref<1x64xf32, #tpu.memory_space<vmem>>, vector<1x64xf32>
    %6 = vector.broadcast %5 : vector<1x64xf32> to vector<64x64xf32>
    %7 = arith.mulf %4, %6 : vector<64x64xf32>
    %c0_6 = arith.constant 0 : index
    %c0_7 = arith.constant 0 : index
    %8 = vector.load %arg6[%c0_6, %c0_7] : memref<1x64xf32, #tpu.memory_space<vmem>>, vector<1x64xf32>
    %9 = vector.broadcast %8 : vector<1x64xf32> to vector<64x64xf32>
    %10 = arith.addf %7, %9 : vector<64x64xf32>
    %cst_8 = arith.constant 0.000000e+00 : f32
    %11 = vector.broadcast %cst_8 : f32 to vector<64x64xf32>
    %12 = arith.maximumf %10, %11 : vector<64x64xf32>
    %13 = arith.truncf %12 : vector<64x64xf32> to vector<64x64xbf16>
    %c0_9 = arith.constant 0 : index
    %c0_10 = arith.constant 0 : index
    %14 = vector.load %arg7[%c0_9, %c0_10] : memref<64x64xbf16, #tpu.memory_space<vmem>>, vector<64x64xbf16>
    %cst_11 = arith.constant dense<0.000000e+00> : vector<64x64xf32>
    %15 = tpu.matmul %13, %14, %cst_11 {dimension_numbers = #tpu.dot_dimension_numbers<[1], [0], [0], [1], [0, 0, 1, 1], [], []>} : vector<64x64xbf16>, vector<64x64xbf16>, vector<64x64xf32> -> vector<64x64xf32>
    %c0_12 = arith.constant 0 : index
    %c0_13 = arith.constant 0 : index
    %16 = vector.load %arg8[%c0_12, %c0_13] : memref<1x64xf32, #tpu.memory_space<vmem>>, vector<1x64xf32>
    %17 = vector.broadcast %16 : vector<1x64xf32> to vector<64x64xf32>
    %18 = arith.mulf %15, %17 : vector<64x64xf32>
    %c0_14 = arith.constant 0 : index
    %c0_15 = arith.constant 0 : index
    %c0_16 = arith.constant 0 : index
    %19 = vector.load %arg3[%c0_14, %c0_15, %c0_16] : memref<1x1x64xf32, #tpu.memory_space<vmem>>, vector<1x1x64xf32>
    %20 = vector.shape_cast %19 : vector<1x1x64xf32> to vector<1x64xf32>
    %21 = vector.broadcast %20 : vector<1x64xf32> to vector<64x64xf32>
    %22 = arith.addf %18, %21 : vector<64x64xf32>
    %cst_17 = arith.constant 0.000000e+00 : f32
    %23 = vector.broadcast %cst_17 : f32 to vector<64x64xf32>
    %24 = arith.maximumf %22, %23 : vector<64x64xf32>
    %25 = arith.truncf %24 : vector<64x64xf32> to vector<64x64xbf16>
    %c0_18 = arith.constant 0 : index
    %c0_19 = arith.constant 0 : index
    %26 = vector.load %arg9[%c0_18, %c0_19] : memref<64x64xbf16, #tpu.memory_space<vmem>>, vector<64x64xbf16>
    %cst_20 = arith.constant dense<0.000000e+00> : vector<64x64xf32>
    %27 = tpu.matmul %25, %26, %cst_20 {dimension_numbers = #tpu.dot_dimension_numbers<[1], [0], [0], [1], [0, 0, 1, 1], [], []>} : vector<64x64xbf16>, vector<64x64xbf16>, vector<64x64xf32> -> vector<64x64xf32>
    %c0_21 = arith.constant 0 : index
    %c0_22 = arith.constant 0 : index
    %28 = vector.load %arg10[%c0_21, %c0_22] : memref<1x64xf32, #tpu.memory_space<vmem>>, vector<1x64xf32>
    %29 = vector.broadcast %28 : vector<1x64xf32> to vector<64x64xf32>
    %30 = arith.mulf %27, %29 : vector<64x64xf32>
    %c0_23 = arith.constant 0 : index
    %c0_24 = arith.constant 0 : index
    %31 = vector.load %arg11[%c0_23, %c0_24] : memref<1x64xf32, #tpu.memory_space<vmem>>, vector<1x64xf32>
    %32 = vector.broadcast %31 : vector<1x64xf32> to vector<64x64xf32>
    %33 = arith.addf %30, %32 : vector<64x64xf32>
    %cst_25 = arith.constant 0.000000e+00 : f32
    %34 = vector.broadcast %cst_25 : f32 to vector<64x64xf32>
    %35 = arith.maximumf %33, %34 : vector<64x64xf32>
    %c0_26 = arith.constant 0 : index
    %c0_27 = arith.constant 0 : index
    %c0_28 = arith.constant 0 : index
    %36 = vector.load %arg12[%c0_26, %c0_27, %c0_28] : memref<1x64x64xf32, #tpu.memory_space<vmem>>, vector<1x64x64xf32>
    %37 = vector.shape_cast %36 : vector<1x64x64xf32> to vector<64x64xf32>
    %38 = vector.shape_cast %35 : vector<64x64xf32> to vector<1x64x64xf32>
    tpu.vector_store %arg12[%c0_26, %c0_27, %c0_28], %38 {strides = array<i32>} : memref<1x64x64xf32, #tpu.memory_space<vmem>>, vector<1x64x64xf32>,
    return
  }
  func.func @transform_0(%arg0: i32, %arg1: i32) -> (i32, i32, i32) {
    %c0_i32 = arith.constant 0 : i32
    %c0_i32_0 = arith.constant 0 : i32
    return %arg0, %arg1, %c0_i32 : i32, i32, i32
  }
  func.func @transform_1(%arg0: i32, %arg1: i32) -> (i32, i32, i32) {
    %c0_i32 = arith.constant 0 : i32
    %c0_i32_0 = arith.constant 0 : i32
    %c0_i32_1 = arith.constant 0 : i32
    return %arg0, %c0_i32, %c0_i32_0 : i32, i32, i32
  }
  func.func @transform_2(%arg0: i32, %arg1: i32) -> (i32, i32) {
    %c0_i32 = arith.constant 0 : i32
    %c0_i32_0 = arith.constant 0 : i32
    %c0_i32_1 = arith.constant 0 : i32
    return %c0_i32, %c0_i32_0 : i32, i32
  }
  func.func @transform_3(%arg0: i32, %arg1: i32) -> (i32, i32) {
    %c0_i32 = arith.constant 0 : i32
    %c0_i32_0 = arith.constant 0 : i32
    %c0_i32_1 = arith.constant 0 : i32
    return %c0_i32, %c0_i32_0 : i32, i32
  }
  func.func @transform_4(%arg0: i32, %arg1: i32) -> (i32, i32) {
    %c0_i32 = arith.constant 0 : i32
    %c0_i32_0 = arith.constant 0 : i32
    %c0_i32_1 = arith.constant 0 : i32
    return %c0_i32, %c0_i32_0 : i32, i32
  }
  func.func @transform_5(%arg0: i32, %arg1: i32) -> (i32, i32) {
    %c0_i32 = arith.constant 0 : i32
    %c0_i32_0 = arith.constant 0 : i32
    %c0_i32_1 = arith.constant 0 : i32
    return %c0_i32, %c0_i32_0 : i32, i32
  }
  func.func @transform_6(%arg0: i32, %arg1: i32) -> (i32, i32) {
    %c0_i32 = arith.constant 0 : i32
    %c0_i32_0 = arith.constant 0 : i32
    %c0_i32_1 = arith.constant 0 : i32
    return %c0_i32, %c0_i32_0 : i32, i32
  }
  func.func @transform_7(%arg0: i32, %arg1: i32) -> (i32, i32) {
    %c0_i32 = arith.constant 0 : i32
    %c0_i32_0 = arith.constant 0 : i32
    %c0_i32_1 = arith.constant 0 : i32
    return %c0_i32, %c0_i32_0 : i32, i32
  }
  func.func @transform_8(%arg0: i32, %arg1: i32) -> (i32, i32) {
    %c0_i32 = arith.constant 0 : i32
    %c0_i32_0 = arith.constant 0 : i32
    %c0_i32_1 = arith.constant 0 : i32
    return %c0_i32, %c0_i32_0 : i32, i32
  }
  func.func @transform_9(%arg0: i32, %arg1: i32) -> (i32, i32) {
    %c0_i32 = arith.constant 0 : i32
    %c0_i32_0 = arith.constant 0 : i32
    %c0_i32_1 = arith.constant 0 : i32
    return %c0_i32, %c0_i32_0 : i32, i32
  }
  func.func @transform_10(%arg0: i32, %arg1: i32) -> (i32, i32, i32) {
    %c0_i32 = arith.constant 0 : i32
    %c0_i32_0 = arith.constant 0 : i32
    return %arg0, %arg1, %c0_i32 : i32, i32, i32
  }
}

module attributes {stable_mosaic.version = 11 : i64} {
  func.func @_neg_sqdist_kernel(%arg0: i32, %arg1: i32, %arg2: memref<1x64x64xf32, #tpu.memory_space<vmem>>, %arg3: memref<1x64x64xf32, #tpu.memory_space<vmem>>, %arg4: memref<1x1x64xf32, #tpu.memory_space<vmem>>, %arg5: memref<1x64x64xf32, #tpu.memory_space<vmem>>) attributes {dimension_semantics = [#tpu.dimension_semantics<parallel>, #tpu.dimension_semantics<parallel>], iteration_bounds = array<i64: 2, 1>, scalar_prefetch = 0 : i64, scratch_operands = 0 : i64, tpu.core_type = #tpu.core_type<tc>, window_params = [{transform_indices = @transform_0, window_bounds = array<i64: 1, 64, 64>}, {transform_indices = @transform_1, window_bounds = array<i64: 1, 64, 64>}, {transform_indices = @transform_2, window_bounds = array<i64: 1, 1, 64>}, {transform_indices = @transform_3, window_bounds = array<i64: 1, 64, 64>}]} {
    %c0 = arith.constant 0 : index
    %c0_0 = arith.constant 0 : index
    %c0_1 = arith.constant 0 : index
    %0 = vector.load %arg2[%c0, %c0_0, %c0_1] : memref<1x64x64xf32, #tpu.memory_space<vmem>>, vector<1x64x64xf32>
    %1 = vector.shape_cast %0 : vector<1x64x64xf32> to vector<64x64xf32>
    %c0_2 = arith.constant 0 : index
    %c0_3 = arith.constant 0 : index
    %c0_4 = arith.constant 0 : index
    %2 = vector.load %arg3[%c0_2, %c0_3, %c0_4] : memref<1x64x64xf32, #tpu.memory_space<vmem>>, vector<1x64x64xf32>
    %3 = vector.shape_cast %2 : vector<1x64x64xf32> to vector<64x64xf32>
    %4 = arith.mulf %1, %1 : vector<64x64xf32>
    %cst = arith.constant dense<0.000000e+00> : vector<64xf32>
    %5 = vector.multi_reduction <add>, %4, %cst [1] : vector<64x64xf32> to vector<64xf32>
    %6 = vector.shape_cast %5 : vector<64xf32> to vector<64x1xf32>
    %cst_5 = arith.constant dense<0.000000e+00> : vector<64x64xf32>
    %7 = tpu.matmul %1, %3, %cst_5 {dimension_numbers = #tpu.dot_dimension_numbers<[1], [1], [0], [0], [0, 0, 1, 0], [], []>} : vector<64x64xf32>, vector<64x64xf32>, vector<64x64xf32> -> vector<64x64xf32>
    %cst_6 = arith.constant 2.000000e+00 : f32
    %8 = vector.broadcast %cst_6 : f32 to vector<64x64xf32>
    %9 = arith.mulf %8, %7 : vector<64x64xf32>
    %10 = vector.broadcast %6 : vector<64x1xf32> to vector<64x64xf32>
    %11 = arith.subf %9, %10 : vector<64x64xf32>
    %c0_7 = arith.constant 0 : index
    %c0_8 = arith.constant 0 : index
    %c0_9 = arith.constant 0 : index
    %12 = vector.load %arg4[%c0_7, %c0_8, %c0_9] : memref<1x1x64xf32, #tpu.memory_space<vmem>>, vector<1x1x64xf32>
    %13 = vector.shape_cast %12 : vector<1x1x64xf32> to vector<1x64xf32>
    %14 = vector.broadcast %13 : vector<1x64xf32> to vector<64x64xf32>
    %15 = arith.subf %11, %14 : vector<64x64xf32>
    %c0_10 = arith.constant 0 : index
    %c0_11 = arith.constant 0 : index
    %c0_12 = arith.constant 0 : index
    %16 = vector.load %arg5[%c0_10, %c0_11, %c0_12] : memref<1x64x64xf32, #tpu.memory_space<vmem>>, vector<1x64x64xf32>
    %17 = vector.shape_cast %16 : vector<1x64x64xf32> to vector<64x64xf32>
    %18 = vector.shape_cast %15 : vector<64x64xf32> to vector<1x64x64xf32>
    tpu.vector_store %arg5[%c0_10, %c0_11, %c0_12], %18 {strides = array<i32>} : memref<1x64x64xf32, #tpu.memory_space<vmem>>, vector<1x64x64xf32>,
    return
  }
  func.func @transform_0(%arg0: i32, %arg1: i32) -> (i32, i32, i32) {
    %c0_i32 = arith.constant 0 : i32
    %c0_i32_0 = arith.constant 0 : i32
    return %arg0, %arg1, %c0_i32 : i32, i32, i32
  }
  func.func @transform_1(%arg0: i32, %arg1: i32) -> (i32, i32, i32) {
    %c0_i32 = arith.constant 0 : i32
    %c0_i32_0 = arith.constant 0 : i32
    %c0_i32_1 = arith.constant 0 : i32
    return %arg0, %c0_i32, %c0_i32_0 : i32, i32, i32
  }
  func.func @transform_2(%arg0: i32, %arg1: i32) -> (i32, i32, i32) {
    %c0_i32 = arith.constant 0 : i32
    %c0_i32_0 = arith.constant 0 : i32
    %c0_i32_1 = arith.constant 0 : i32
    return %arg0, %c0_i32, %c0_i32_0 : i32, i32, i32
  }
  func.func @transform_3(%arg0: i32, %arg1: i32) -> (i32, i32, i32) {
    %c0_i32 = arith.constant 0 : i32
    %c0_i32_0 = arith.constant 0 : i32
    return %arg0, %arg1, %c0_i32 : i32, i32, i32
  }
}

module attributes {stable_mosaic.version = 11 : i64} {
  func.func @_mlp_chain_kernel(%arg0: i32, %arg1: memref<128x64xf32, #tpu.memory_space<vmem>>, %arg2: memref<64x128xbf16, #tpu.memory_space<vmem>>, %arg3: memref<1x128xf32, #tpu.memory_space<vmem>>, %arg4: memref<1x128xf32, #tpu.memory_space<vmem>>, %arg5: memref<128x128xf32, #tpu.memory_space<vmem>>) attributes {dimension_semantics = [#tpu.dimension_semantics<parallel>], iteration_bounds = array<i64: 1>, scalar_prefetch = 0 : i64, scratch_operands = 0 : i64, tpu.core_type = #tpu.core_type<tc>, window_params = [{transform_indices = @transform_0, window_bounds = array<i64: 128, 64>}, {pipeline_mode = #tpu.pipeline_mode<synchronous>, transform_indices = @transform_1, window_bounds = array<i64: 64, 128>}, {pipeline_mode = #tpu.pipeline_mode<synchronous>, transform_indices = @transform_2, window_bounds = array<i64: 1, 128>}, {pipeline_mode = #tpu.pipeline_mode<synchronous>, transform_indices = @transform_3, window_bounds = array<i64: 1, 128>}, {transform_indices = @transform_4, window_bounds = array<i64: 128, 128>}]} {
    %c0 = arith.constant 0 : index
    %c0_0 = arith.constant 0 : index
    %0 = vector.load %arg1[%c0, %c0_0] : memref<128x64xf32, #tpu.memory_space<vmem>>, vector<128x64xf32>
    %c0_1 = arith.constant 0 : index
    %c0_2 = arith.constant 0 : index
    %1 = vector.load %arg2[%c0_1, %c0_2] : memref<64x128xbf16, #tpu.memory_space<vmem>>, vector<64x128xbf16>
    %c0_3 = arith.constant 0 : index
    %c0_4 = arith.constant 0 : index
    %2 = vector.load %arg3[%c0_3, %c0_4] : memref<1x128xf32, #tpu.memory_space<vmem>>, vector<1x128xf32>
    %c0_5 = arith.constant 0 : index
    %c0_6 = arith.constant 0 : index
    %3 = vector.load %arg4[%c0_5, %c0_6] : memref<1x128xf32, #tpu.memory_space<vmem>>, vector<1x128xf32>
    %4 = arith.truncf %0 : vector<128x64xf32> to vector<128x64xbf16>
    %cst = arith.constant dense<0.000000e+00> : vector<128x128xf32>
    %5 = tpu.matmul %4, %1, %cst {dimension_numbers = #tpu.dot_dimension_numbers<[1], [0], [0], [1], [0, 0, 1, 1], [], []>} : vector<128x64xbf16>, vector<64x128xbf16>, vector<128x128xf32> -> vector<128x128xf32>
    %6 = vector.broadcast %2 : vector<1x128xf32> to vector<128x128xf32>
    %7 = arith.mulf %5, %6 : vector<128x128xf32>
    %8 = vector.broadcast %3 : vector<1x128xf32> to vector<128x128xf32>
    %9 = arith.addf %7, %8 : vector<128x128xf32>
    %cst_7 = arith.constant 0.00999999977 : f32
    %10 = vector.broadcast %cst_7 : f32 to vector<128x128xf32>
    %11 = arith.mulf %10, %9 : vector<128x128xf32>
    %12 = arith.maximumf %9, %11 : vector<128x128xf32>
    %c0_8 = arith.constant 0 : index
    %c0_9 = arith.constant 0 : index
    %13 = vector.load %arg5[%c0_8, %c0_9] : memref<128x128xf32, #tpu.memory_space<vmem>>, vector<128x128xf32>
    tpu.vector_store %arg5[%c0_8, %c0_9], %12 {strides = array<i32>} : memref<128x128xf32, #tpu.memory_space<vmem>>, vector<128x128xf32>,
    return
  }
  func.func @transform_0(%arg0: i32) -> (i32, i32) {
    %c0_i32 = arith.constant 0 : i32
    %c0_i32_0 = arith.constant 0 : i32
    return %arg0, %c0_i32 : i32, i32
  }
  func.func @transform_1(%arg0: i32) -> (i32, i32) {
    %c0_i32 = arith.constant 0 : i32
    %c0_i32_0 = arith.constant 0 : i32
    %c0_i32_1 = arith.constant 0 : i32
    return %c0_i32, %c0_i32_0 : i32, i32
  }
  func.func @transform_2(%arg0: i32) -> (i32, i32) {
    %c0_i32 = arith.constant 0 : i32
    %c0_i32_0 = arith.constant 0 : i32
    %c0_i32_1 = arith.constant 0 : i32
    return %c0_i32, %c0_i32_0 : i32, i32
  }
  func.func @transform_3(%arg0: i32) -> (i32, i32) {
    %c0_i32 = arith.constant 0 : i32
    %c0_i32_0 = arith.constant 0 : i32
    %c0_i32_1 = arith.constant 0 : i32
    return %c0_i32, %c0_i32_0 : i32, i32
  }
  func.func @transform_4(%arg0: i32) -> (i32, i32) {
    %c0_i32 = arith.constant 0 : i32
    %c0_i32_0 = arith.constant 0 : i32
    return %arg0, %c0_i32 : i32, i32
  }
}

module attributes {stable_mosaic.version = 11 : i64} {
  func.func @_neg_sqdist_kernel(%arg0: i32, %arg1: i32, %arg2: memref<1x64x128xf32, #tpu.memory_space<vmem>>, %arg3: memref<1x64x128xf32, #tpu.memory_space<vmem>>, %arg4: memref<1x1x64xf32, #tpu.memory_space<vmem>>, %arg5: memref<1x64x64xf32, #tpu.memory_space<vmem>>) attributes {dimension_semantics = [#tpu.dimension_semantics<parallel>, #tpu.dimension_semantics<parallel>], iteration_bounds = array<i64: 2, 1>, scalar_prefetch = 0 : i64, scratch_operands = 0 : i64, tpu.core_type = #tpu.core_type<tc>, window_params = [{transform_indices = @transform_0, window_bounds = array<i64: 1, 64, 128>}, {transform_indices = @transform_1, window_bounds = array<i64: 1, 64, 128>}, {transform_indices = @transform_2, window_bounds = array<i64: 1, 1, 64>}, {transform_indices = @transform_3, window_bounds = array<i64: 1, 64, 64>}]} {
    %c0 = arith.constant 0 : index
    %c0_0 = arith.constant 0 : index
    %c0_1 = arith.constant 0 : index
    %0 = vector.load %arg2[%c0, %c0_0, %c0_1] : memref<1x64x128xf32, #tpu.memory_space<vmem>>, vector<1x64x128xf32>
    %1 = vector.shape_cast %0 : vector<1x64x128xf32> to vector<64x128xf32>
    %c0_2 = arith.constant 0 : index
    %c0_3 = arith.constant 0 : index
    %c0_4 = arith.constant 0 : index
    %2 = vector.load %arg3[%c0_2, %c0_3, %c0_4] : memref<1x64x128xf32, #tpu.memory_space<vmem>>, vector<1x64x128xf32>
    %3 = vector.shape_cast %2 : vector<1x64x128xf32> to vector<64x128xf32>
    %4 = arith.mulf %1, %1 : vector<64x128xf32>
    %cst = arith.constant dense<0.000000e+00> : vector<64xf32>
    %5 = vector.multi_reduction <add>, %4, %cst [1] : vector<64x128xf32> to vector<64xf32>
    %6 = vector.shape_cast %5 : vector<64xf32> to vector<64x1xf32>
    %cst_5 = arith.constant dense<0.000000e+00> : vector<64x64xf32>
    %7 = tpu.matmul %1, %3, %cst_5 {dimension_numbers = #tpu.dot_dimension_numbers<[1], [1], [0], [0], [0, 0, 1, 0], [], []>} : vector<64x128xf32>, vector<64x128xf32>, vector<64x64xf32> -> vector<64x64xf32>
    %cst_6 = arith.constant 2.000000e+00 : f32
    %8 = vector.broadcast %cst_6 : f32 to vector<64x64xf32>
    %9 = arith.mulf %8, %7 : vector<64x64xf32>
    %10 = vector.broadcast %6 : vector<64x1xf32> to vector<64x64xf32>
    %11 = arith.subf %9, %10 : vector<64x64xf32>
    %c0_7 = arith.constant 0 : index
    %c0_8 = arith.constant 0 : index
    %c0_9 = arith.constant 0 : index
    %12 = vector.load %arg4[%c0_7, %c0_8, %c0_9] : memref<1x1x64xf32, #tpu.memory_space<vmem>>, vector<1x1x64xf32>
    %13 = vector.shape_cast %12 : vector<1x1x64xf32> to vector<1x64xf32>
    %14 = vector.broadcast %13 : vector<1x64xf32> to vector<64x64xf32>
    %15 = arith.subf %11, %14 : vector<64x64xf32>
    %c0_10 = arith.constant 0 : index
    %c0_11 = arith.constant 0 : index
    %c0_12 = arith.constant 0 : index
    %16 = vector.load %arg5[%c0_10, %c0_11, %c0_12] : memref<1x64x64xf32, #tpu.memory_space<vmem>>, vector<1x64x64xf32>
    %17 = vector.shape_cast %16 : vector<1x64x64xf32> to vector<64x64xf32>
    %18 = vector.shape_cast %15 : vector<64x64xf32> to vector<1x64x64xf32>
    tpu.vector_store %arg5[%c0_10, %c0_11, %c0_12], %18 {strides = array<i32>} : memref<1x64x64xf32, #tpu.memory_space<vmem>>, vector<1x64x64xf32>,
    return
  }
  func.func @transform_0(%arg0: i32, %arg1: i32) -> (i32, i32, i32) {
    %c0_i32 = arith.constant 0 : i32
    %c0_i32_0 = arith.constant 0 : i32
    return %arg0, %arg1, %c0_i32 : i32, i32, i32
  }
  func.func @transform_1(%arg0: i32, %arg1: i32) -> (i32, i32, i32) {
    %c0_i32 = arith.constant 0 : i32
    %c0_i32_0 = arith.constant 0 : i32
    %c0_i32_1 = arith.constant 0 : i32
    return %arg0, %c0_i32, %c0_i32_0 : i32, i32, i32
  }
  func.func @transform_2(%arg0: i32, %arg1: i32) -> (i32, i32, i32) {
    %c0_i32 = arith.constant 0 : i32
    %c0_i32_0 = arith.constant 0 : i32
    %c0_i32_1 = arith.constant 0 : i32
    return %arg0, %c0_i32, %c0_i32_0 : i32, i32, i32
  }
  func.func @transform_3(%arg0: i32, %arg1: i32) -> (i32, i32, i32) {
    %c0_i32 = arith.constant 0 : i32
    %c0_i32_0 = arith.constant 0 : i32
    return %arg0, %arg1, %c0_i32 : i32, i32, i32
  }
}

module attributes {stable_mosaic.version = 11 : i64} {
  func.func @_gl2_head_kernel(%arg0: i32, %arg1: i32, %arg2: memref<1x64x128xf32, #tpu.memory_space<vmem>>, %arg3: memref<128x1024xbf16, #tpu.memory_space<vmem>>, %arg4: memref<1x1024xf32, #tpu.memory_space<vmem>>, %arg5: memref<1x1024xf32, #tpu.memory_space<vmem>>, %arg6: memref<1024x512xbf16, #tpu.memory_space<vmem>>, %arg7: memref<1x512xf32, #tpu.memory_space<vmem>>, %arg8: memref<1x512xf32, #tpu.memory_space<vmem>>, %arg9: memref<1x1x512xf32, #tpu.memory_space<vmem>>, %arg10: memref<8x1024xf32, #tpu.memory_space<vmem>>) attributes {dimension_semantics = [#tpu.dimension_semantics<parallel>, #tpu.dimension_semantics<arbitrary>], iteration_bounds = array<i64: 2, 1>, scalar_prefetch = 0 : i64, scratch_operands = 1 : i64, tpu.core_type = #tpu.core_type<tc>, window_params = [{transform_indices = @transform_0, window_bounds = array<i64: 1, 64, 128>}, {pipeline_mode = #tpu.pipeline_mode<synchronous>, transform_indices = @transform_1, window_bounds = array<i64: 128, 1024>}, {pipeline_mode = #tpu.pipeline_mode<synchronous>, transform_indices = @transform_2, window_bounds = array<i64: 1, 1024>}, {pipeline_mode = #tpu.pipeline_mode<synchronous>, transform_indices = @transform_3, window_bounds = array<i64: 1, 1024>}, {pipeline_mode = #tpu.pipeline_mode<synchronous>, transform_indices = @transform_4, window_bounds = array<i64: 1024, 512>}, {pipeline_mode = #tpu.pipeline_mode<synchronous>, transform_indices = @transform_5, window_bounds = array<i64: 1, 512>}, {pipeline_mode = #tpu.pipeline_mode<synchronous>, transform_indices = @transform_6, window_bounds = array<i64: 1, 512>}, {transform_indices = @transform_7, window_bounds = array<i64: 1, 1, 512>}]} {
    %c0_i32 = arith.constant 0 : i32
    %0 = arith.cmpi eq, %arg1, %c0_i32 : i32
    %1 = arith.extui %0 : i1 to i32
    %c0_i32_0 = arith.constant 0 : i32
    %2 = arith.cmpi ne, %1, %c0_i32_0 : i32
    scf.if %2 {
      %cst_16 = arith.constant 0xFF800000 : f32
      %38 = vector.broadcast %cst_16 : f32 to vector<8x1024xf32>
      %c0_17 = arith.constant 0 : index
      %c0_18 = arith.constant 0 : index
      %39 = vector.load %arg10[%c0_17, %c0_18] : memref<8x1024xf32, #tpu.memory_space<vmem>>, vector<8x1024xf32>
      tpu.vector_store %arg10[%c0_17, %c0_18], %38 {strides = array<i32>} : memref<8x1024xf32, #tpu.memory_space<vmem>>, vector<8x1024xf32>,
    } else {
    }
    %c0 = arith.constant 0 : index
    %c0_1 = arith.constant 0 : index
    %c0_2 = arith.constant 0 : index
    %3 = vector.load %arg2[%c0, %c0_1, %c0_2] : memref<1x64x128xf32, #tpu.memory_space<vmem>>, vector<1x64x128xf32>
    %4 = vector.shape_cast %3 : vector<1x64x128xf32> to vector<64x128xf32>
    %5 = arith.truncf %4 : vector<64x128xf32> to vector<64x128xbf16>
    %c0_3 = arith.constant 0 : index
    %c0_4 = arith.constant 0 : index
    %6 = vector.load %arg3[%c0_3, %c0_4] : memref<128x1024xbf16, #tpu.memory_space<vmem>>, vector<128x1024xbf16>
    %cst = arith.constant dense<0.000000e+00> : vector<64x1024xf32>
    %7 = tpu.matmul %5, %6, %cst {dimension_numbers = #tpu.dot_dimension_numbers<[1], [0], [0], [1], [0, 0, 1, 1], [], []>} : vector<64x128xbf16>, vector<128x1024xbf16>, vector<64x1024xf32> -> vector<64x1024xf32>
    %c0_5 = arith.constant 0 : index
    %c0_6 = arith.constant 0 : index
    %8 = vector.load %arg4[%c0_5, %c0_6] : memref<1x1024xf32, #tpu.memory_space<vmem>>, vector<1x1024xf32>
    %9 = vector.broadcast %8 : vector<1x1024xf32> to vector<64x1024xf32>
    %10 = arith.mulf %7, %9 : vector<64x1024xf32>
    %c0_7 = arith.constant 0 : index
    %c0_8 = arith.constant 0 : index
    %11 = vector.load %arg5[%c0_7, %c0_8] : memref<1x1024xf32, #tpu.memory_space<vmem>>, vector<1x1024xf32>
    %12 = vector.broadcast %11 : vector<1x1024xf32> to vector<64x1024xf32>
    %13 = arith.addf %10, %12 : vector<64x1024xf32>
    %cst_9 = arith.constant 0.00999999977 : f32
    %14 = vector.broadcast %cst_9 : f32 to vector<64x1024xf32>
    %15 = arith.mulf %14, %13 : vector<64x1024xf32>
    %16 = arith.maximumf %13, %15 : vector<64x1024xf32>
    %c0_10 = arith.constant 0 : index
    %c0_11 = arith.constant 0 : index
    %17 = vector.load %arg10[%c0_10, %c0_11] : memref<8x1024xf32, #tpu.memory_space<vmem>>, vector<8x1024xf32>
    %18 = vector.extract_strided_slice %16 {offsets = [0, 0], sizes = [8, 1024], strides = [1, 1]} : vector<64x1024xf32> to vector<8x1024xf32>
    %19 = arith.maximumf %17, %18 : vector<8x1024xf32>
    %20 = vector.extract_strided_slice %16 {offsets = [8, 0], sizes = [8, 1024], strides = [1, 1]} : vector<64x1024xf32> to vector<8x1024xf32>
    %21 = arith.maximumf %19, %20 : vector<8x1024xf32>
    %22 = vector.extract_strided_slice %16 {offsets = [16, 0], sizes = [8, 1024], strides = [1, 1]} : vector<64x1024xf32> to vector<8x1024xf32>
    %23 = arith.maximumf %21, %22 : vector<8x1024xf32>
    %24 = vector.extract_strided_slice %16 {offsets = [24, 0], sizes = [8, 1024], strides = [1, 1]} : vector<64x1024xf32> to vector<8x1024xf32>
    %25 = arith.maximumf %23, %24 : vector<8x1024xf32>
    %26 = vector.extract_strided_slice %16 {offsets = [32, 0], sizes = [8, 1024], strides = [1, 1]} : vector<64x1024xf32> to vector<8x1024xf32>
    %27 = arith.maximumf %25, %26 : vector<8x1024xf32>
    %28 = vector.extract_strided_slice %16 {offsets = [40, 0], sizes = [8, 1024], strides = [1, 1]} : vector<64x1024xf32> to vector<8x1024xf32>
    %29 = arith.maximumf %27, %28 : vector<8x1024xf32>
    %30 = vector.extract_strided_slice %16 {offsets = [48, 0], sizes = [8, 1024], strides = [1, 1]} : vector<64x1024xf32> to vector<8x1024xf32>
    %31 = arith.maximumf %29, %30 : vector<8x1024xf32>
    %32 = vector.extract_strided_slice %16 {offsets = [56, 0], sizes = [8, 1024], strides = [1, 1]} : vector<64x1024xf32> to vector<8x1024xf32>
    %33 = arith.maximumf %31, %32 : vector<8x1024xf32>
    %c0_12 = arith.constant 0 : index
    %c0_13 = arith.constant 0 : index
    %34 = vector.load %arg10[%c0_12, %c0_13] : memref<8x1024xf32, #tpu.memory_space<vmem>>, vector<8x1024xf32>
    tpu.vector_store %arg10[%c0_12, %c0_13], %33 {strides = array<i32>} : memref<8x1024xf32, #tpu.memory_space<vmem>>, vector<8x1024xf32>,
    %c0_i32_14 = arith.constant 0 : i32
    %35 = arith.cmpi eq, %arg1, %c0_i32_14 : i32
    %36 = arith.extui %35 : i1 to i32
    %c0_i32_15 = arith.constant 0 : i32
    %37 = arith.cmpi ne, %36, %c0_i32_15 : i32
    scf.if %37 {
      %c0_16 = arith.constant 0 : index
      %c0_17 = arith.constant 0 : index
      %38 = vector.load %arg10[%c0_16, %c0_17] : memref<8x1024xf32, #tpu.memory_space<vmem>>, vector<8x1024xf32>
      %cst_18 = arith.constant dense<0xFF800000> : vector<1024xf32>
      %39 = vector.multi_reduction <maximumf>, %38, %cst_18 [0] : vector<8x1024xf32> to vector<1024xf32>
      %40 = vector.shape_cast %39 : vector<1024xf32> to vector<1x1024xf32>
      %41 = arith.truncf %40 : vector<1x1024xf32> to vector<1x1024xbf16>
      %c0_19 = arith.constant 0 : index
      %c0_20 = arith.constant 0 : index
      %42 = vector.load %arg6[%c0_19, %c0_20] : memref<1024x512xbf16, #tpu.memory_space<vmem>>, vector<1024x512xbf16>
      %cst_21 = arith.constant dense<0.000000e+00> : vector<1x512xf32>
      %43 = tpu.matmul %41, %42, %cst_21 {dimension_numbers = #tpu.dot_dimension_numbers<[1], [0], [0], [1], [0, 0, 1, 1], [], []>} : vector<1x1024xbf16>, vector<1024x512xbf16>, vector<1x512xf32> -> vector<1x512xf32>
      %c0_22 = arith.constant 0 : index
      %c0_23 = arith.constant 0 : index
      %44 = vector.load %arg7[%c0_22, %c0_23] : memref<1x512xf32, #tpu.memory_space<vmem>>, vector<1x512xf32>
      %45 = arith.mulf %43, %44 : vector<1x512xf32>
      %c0_24 = arith.constant 0 : index
      %c0_25 = arith.constant 0 : index
      %46 = vector.load %arg8[%c0_24, %c0_25] : memref<1x512xf32, #tpu.memory_space<vmem>>, vector<1x512xf32>
      %47 = arith.addf %45, %46 : vector<1x512xf32>
      %cst_26 = arith.constant 0.000000e+00 : f32
      %48 = vector.broadcast %cst_26 : f32 to vector<1x512xf32>
      %49 = arith.maximumf %47, %48 : vector<1x512xf32>
      %c0_27 = arith.constant 0 : index
      %c0_28 = arith.constant 0 : index
      %c0_29 = arith.constant 0 : index
      %50 = vector.load %arg9[%c0_27, %c0_28, %c0_29] : memref<1x1x512xf32, #tpu.memory_space<vmem>>, vector<1x1x512xf32>
      %51 = vector.shape_cast %50 : vector<1x1x512xf32> to vector<1x512xf32>
      %52 = vector.shape_cast %49 : vector<1x512xf32> to vector<1x1x512xf32>
      tpu.vector_store %arg9[%c0_27, %c0_28, %c0_29], %52 {strides = array<i32>} : memref<1x1x512xf32, #tpu.memory_space<vmem>>, vector<1x1x512xf32>,
    } else {
    }
    return
  }
  func.func @transform_0(%arg0: i32, %arg1: i32) -> (i32, i32, i32) {
    %c0_i32 = arith.constant 0 : i32
    %c0_i32_0 = arith.constant 0 : i32
    return %arg0, %arg1, %c0_i32 : i32, i32, i32
  }
  func.func @transform_1(%arg0: i32, %arg1: i32) -> (i32, i32) {
    %c0_i32 = arith.constant 0 : i32
    %c0_i32_0 = arith.constant 0 : i32
    %c0_i32_1 = arith.constant 0 : i32
    return %c0_i32, %c0_i32_0 : i32, i32
  }
  func.func @transform_2(%arg0: i32, %arg1: i32) -> (i32, i32) {
    %c0_i32 = arith.constant 0 : i32
    %c0_i32_0 = arith.constant 0 : i32
    %c0_i32_1 = arith.constant 0 : i32
    return %c0_i32, %c0_i32_0 : i32, i32
  }
  func.func @transform_3(%arg0: i32, %arg1: i32) -> (i32, i32) {
    %c0_i32 = arith.constant 0 : i32
    %c0_i32_0 = arith.constant 0 : i32
    %c0_i32_1 = arith.constant 0 : i32
    return %c0_i32, %c0_i32_0 : i32, i32
  }
  func.func @transform_4(%arg0: i32, %arg1: i32) -> (i32, i32) {
    %c0_i32 = arith.constant 0 : i32
    %c0_i32_0 = arith.constant 0 : i32
    %c0_i32_1 = arith.constant 0 : i32
    return %c0_i32, %c0_i32_0 : i32, i32
  }
  func.func @transform_5(%arg0: i32, %arg1: i32) -> (i32, i32) {
    %c0_i32 = arith.constant 0 : i32
    %c0_i32_0 = arith.constant 0 : i32
    %c0_i32_1 = arith.constant 0 : i32
    return %c0_i32, %c0_i32_0 : i32, i32
  }
  func.func @transform_6(%arg0: i32, %arg1: i32) -> (i32, i32) {
    %c0_i32 = arith.constant 0 : i32
    %c0_i32_0 = arith.constant 0 : i32
    %c0_i32_1 = arith.constant 0 : i32
    return %c0_i32, %c0_i32_0 : i32, i32
  }
  func.func @transform_7(%arg0: i32, %arg1: i32) -> (i32, i32, i32) {
    %c0_i32 = arith.constant 0 : i32
    %c0_i32_0 = arith.constant 0 : i32
    %c0_i32_1 = arith.constant 0 : i32
    return %arg0, %c0_i32, %c0_i32_0 : i32, i32, i32
  }
}

module attributes {stable_mosaic.version = 11 : i64} {
  func.func @_decoder_kernel(%arg0: i32, %arg1: i32, %arg2: memref<64x512xf32, #tpu.memory_space<vmem>>, %arg3: memref<1x1x512xf32, #tpu.memory_space<vmem>>, %arg4: memref<1x1x512xf32, #tpu.memory_space<vmem>>, %arg5: memref<3x512xf32, #tpu.memory_space<vmem>>, %arg6: memref<512x512xbf16, #tpu.memory_space<vmem>>, %arg7: memref<1x512xf32, #tpu.memory_space<vmem>>, %arg8: memref<1x512xf32, #tpu.memory_space<vmem>>, %arg9: memref<512x3xbf16, #tpu.memory_space<vmem>>, %arg10: memref<1x3xf32, #tpu.memory_space<vmem>>, %arg11: memref<1x3xf32, #tpu.memory_space<vmem>>, %arg12: memref<512x512xbf16, #tpu.memory_space<vmem>>, %arg13: memref<1x512xf32, #tpu.memory_space<vmem>>, %arg14: memref<1x512xf32, #tpu.memory_space<vmem>>, %arg15: memref<512x128xbf16, #tpu.memory_space<vmem>>, %arg16: memref<1x128xf32, #tpu.memory_space<vmem>>, %arg17: memref<1x128xf32, #tpu.memory_space<vmem>>, %arg18: memref<1x64x128xf32, #tpu.memory_space<vmem>>) attributes {dimension_semantics = [#tpu.dimension_semantics<parallel>, #tpu.dimension_semantics<parallel>], iteration_bounds = array<i64: 2, 1>, scalar_prefetch = 0 : i64, scratch_operands = 0 : i64, tpu.core_type = #tpu.core_type<tc>, window_params = [{transform_indices = @transform_0, window_bounds = array<i64: 64, 512>}, {transform_indices = @transform_1, window_bounds = array<i64: 1, 1, 512>}, {transform_indices = @transform_2, window_bounds = array<i64: 1, 1, 512>}, {pipeline_mode = #tpu.pipeline_mode<synchronous>, transform_indices = @transform_3, window_bounds = array<i64: 3, 512>}, {pipeline_mode = #tpu.pipeline_mode<synchronous>, transform_indices = @transform_4, window_bounds = array<i64: 512, 512>}, {pipeline_mode = #tpu.pipeline_mode<synchronous>, transform_indices = @transform_5, window_bounds = array<i64: 1, 512>}, {pipeline_mode = #tpu.pipeline_mode<synchronous>, transform_indices = @transform_6, window_bounds = array<i64: 1, 512>}, {pipeline_mode = #tpu.pipeline_mode<synchronous>, transform_indices = @transform_7, window_bounds = array<i64: 512, 3>}, {pipeline_mode = #tpu.pipeline_mode<synchronous>, transform_indices = @transform_8, window_bounds = array<i64: 1, 3>}, {pipeline_mode = #tpu.pipeline_mode<synchronous>, transform_indices = @transform_9, window_bounds = array<i64: 1, 3>}, {pipeline_mode = #tpu.pipeline_mode<synchronous>, transform_indices = @transform_10, window_bounds = array<i64: 512, 512>}, {pipeline_mode = #tpu.pipeline_mode<synchronous>, transform_indices = @transform_11, window_bounds = array<i64: 1, 512>}, {pipeline_mode = #tpu.pipeline_mode<synchronous>, transform_indices = @transform_12, window_bounds = array<i64: 1, 512>}, {pipeline_mode = #tpu.pipeline_mode<synchronous>, transform_indices = @transform_13, window_bounds = array<i64: 512, 128>}, {pipeline_mode = #tpu.pipeline_mode<synchronous>, transform_indices = @transform_14, window_bounds = array<i64: 1, 128>}, {pipeline_mode = #tpu.pipeline_mode<synchronous>, transform_indices = @transform_15, window_bounds = array<i64: 1, 128>}, {transform_indices = @transform_16, window_bounds = array<i64: 1, 64, 128>}]} {
    %c0 = arith.constant 0 : index
    %c0_0 = arith.constant 0 : index
    %0 = vector.load %arg2[%c0, %c0_0] : memref<64x512xf32, #tpu.memory_space<vmem>>, vector<64x512xf32>
    %c0_1 = arith.constant 0 : index
    %c0_2 = arith.constant 0 : index
    %c0_3 = arith.constant 0 : index
    %1 = vector.load %arg3[%c0_1, %c0_2, %c0_3] : memref<1x1x512xf32, #tpu.memory_space<vmem>>, vector<1x1x512xf32>
    %2 = vector.shape_cast %1 : vector<1x1x512xf32> to vector<1x512xf32>
    %3 = vector.broadcast %2 : vector<1x512xf32> to vector<64x512xf32>
    %4 = arith.addf %0, %3 : vector<64x512xf32>
    %cst = arith.constant 0.00999999977 : f32
    %5 = vector.broadcast %cst : f32 to vector<64x512xf32>
    %6 = arith.mulf %5, %4 : vector<64x512xf32>
    %7 = arith.maximumf %4, %6 : vector<64x512xf32>
    %8 = arith.truncf %7 : vector<64x512xf32> to vector<64x512xbf16>
    %c0_4 = arith.constant 0 : index
    %c0_5 = arith.constant 0 : index
    %9 = vector.load %arg6[%c0_4, %c0_5] : memref<512x512xbf16, #tpu.memory_space<vmem>>, vector<512x512xbf16>
    %cst_6 = arith.constant dense<0.000000e+00> : vector<64x512xf32>
    %10 = tpu.matmul %8, %9, %cst_6 {dimension_numbers = #tpu.dot_dimension_numbers<[1], [0], [0], [1], [0, 0, 1, 1], [], []>} : vector<64x512xbf16>, vector<512x512xbf16>, vector<64x512xf32> -> vector<64x512xf32>
    %c0_7 = arith.constant 0 : index
    %c0_8 = arith.constant 0 : index
    %11 = vector.load %arg7[%c0_7, %c0_8] : memref<1x512xf32, #tpu.memory_space<vmem>>, vector<1x512xf32>
    %12 = vector.broadcast %11 : vector<1x512xf32> to vector<64x512xf32>
    %13 = arith.mulf %10, %12 : vector<64x512xf32>
    %c0_9 = arith.constant 0 : index
    %c0_10 = arith.constant 0 : index
    %14 = vector.load %arg8[%c0_9, %c0_10] : memref<1x512xf32, #tpu.memory_space<vmem>>, vector<1x512xf32>
    %15 = vector.broadcast %14 : vector<1x512xf32> to vector<64x512xf32>
    %16 = arith.addf %13, %15 : vector<64x512xf32>
    %cst_11 = arith.constant 0.00999999977 : f32
    %17 = vector.broadcast %cst_11 : f32 to vector<64x512xf32>
    %18 = arith.mulf %17, %16 : vector<64x512xf32>
    %19 = arith.maximumf %16, %18 : vector<64x512xf32>
    %20 = arith.truncf %19 : vector<64x512xf32> to vector<64x512xbf16>
    %c0_12 = arith.constant 0 : index
    %c0_13 = arith.constant 0 : index
    %21 = vector.load %arg9[%c0_12, %c0_13] : memref<512x3xbf16, #tpu.memory_space<vmem>>, vector<512x3xbf16>
    %cst_14 = arith.constant dense<0.000000e+00> : vector<64x3xf32>
    %22 = tpu.matmul %20, %21, %cst_14 {dimension_numbers = #tpu.dot_dimension_numbers<[1], [0], [0], [1], [0, 0, 1, 1], [], []>} : vector<64x512xbf16>, vector<512x3xbf16>, vector<64x3xf32> -> vector<64x3xf32>
    %c0_15 = arith.constant 0 : index
    %c0_16 = arith.constant 0 : index
    %23 = vector.load %arg10[%c0_15, %c0_16] : memref<1x3xf32, #tpu.memory_space<vmem>>, vector<1x3xf32>
    %24 = vector.broadcast %23 : vector<1x3xf32> to vector<64x3xf32>
    %25 = arith.mulf %22, %24 : vector<64x3xf32>
    %c0_17 = arith.constant 0 : index
    %c0_18 = arith.constant 0 : index
    %26 = vector.load %arg11[%c0_17, %c0_18] : memref<1x3xf32, #tpu.memory_space<vmem>>, vector<1x3xf32>
    %27 = vector.broadcast %26 : vector<1x3xf32> to vector<64x3xf32>
    %28 = arith.addf %25, %27 : vector<64x3xf32>
    %cst_19 = arith.constant 0.00999999977 : f32
    %29 = vector.broadcast %cst_19 : f32 to vector<64x3xf32>
    %30 = arith.mulf %29, %28 : vector<64x3xf32>
    %31 = arith.maximumf %28, %30 : vector<64x3xf32>
    %c0_20 = arith.constant 0 : index
    %c0_21 = arith.constant 0 : index
    %32 = vector.load %arg5[%c0_20, %c0_21] : memref<3x512xf32, #tpu.memory_space<vmem>>, vector<3x512xf32>
    %c0_22 = arith.constant 0 : index
    %c0_23 = arith.constant 0 : index
    %c0_24 = arith.constant 0 : index
    %33 = vector.load %arg4[%c0_22, %c0_23, %c0_24] : memref<1x1x512xf32, #tpu.memory_space<vmem>>, vector<1x1x512xf32>
    %34 = vector.shape_cast %33 : vector<1x1x512xf32> to vector<1x512xf32>
    %35 = vector.extract_strided_slice %31 {offsets = [0, 0], sizes = [64, 1], strides = [1, 1]} : vector<64x3xf32> to vector<64x1xf32>
    %36 = vector.extract_strided_slice %32 {offsets = [0, 0], sizes = [1, 512], strides = [1, 1]} : vector<3x512xf32> to vector<1x512xf32>
    %37 = vector.broadcast %35 : vector<64x1xf32> to vector<64x512xf32>
    %38 = vector.broadcast %36 : vector<1x512xf32> to vector<64x512xf32>
    %39 = arith.mulf %37, %38 : vector<64x512xf32>
    %40 = vector.broadcast %34 : vector<1x512xf32> to vector<64x512xf32>
    %41 = arith.addf %40, %39 : vector<64x512xf32>
    %42 = vector.extract_strided_slice %31 {offsets = [0, 1], sizes = [64, 1], strides = [1, 1]} : vector<64x3xf32> to vector<64x1xf32>
    %43 = vector.extract_strided_slice %32 {offsets = [1, 0], sizes = [1, 512], strides = [1, 1]} : vector<3x512xf32> to vector<1x512xf32>
    %44 = vector.broadcast %42 : vector<64x1xf32> to vector<64x512xf32>
    %45 = vector.broadcast %43 : vector<1x512xf32> to vector<64x512xf32>
    %46 = arith.mulf %44, %45 : vector<64x512xf32>
    %47 = arith.addf %41, %46 : vector<64x512xf32>
    %48 = vector.extract_strided_slice %31 {offsets = [0, 2], sizes = [64, 1], strides = [1, 1]} : vector<64x3xf32> to vector<64x1xf32>
    %49 = vector.extract_strided_slice %32 {offsets = [2, 0], sizes = [1, 512], strides = [1, 1]} : vector<3x512xf32> to vector<1x512xf32>
    %50 = vector.broadcast %48 : vector<64x1xf32> to vector<64x512xf32>
    %51 = vector.broadcast %49 : vector<1x512xf32> to vector<64x512xf32>
    %52 = arith.mulf %50, %51 : vector<64x512xf32>
    %53 = arith.addf %47, %52 : vector<64x512xf32>
    %cst_25 = arith.constant 0.00999999977 : f32
    %54 = vector.broadcast %cst_25 : f32 to vector<64x512xf32>
    %55 = arith.mulf %54, %53 : vector<64x512xf32>
    %56 = arith.maximumf %53, %55 : vector<64x512xf32>
    %57 = arith.truncf %56 : vector<64x512xf32> to vector<64x512xbf16>
    %c0_26 = arith.constant 0 : index
    %c0_27 = arith.constant 0 : index
    %58 = vector.load %arg12[%c0_26, %c0_27] : memref<512x512xbf16, #tpu.memory_space<vmem>>, vector<512x512xbf16>
    %cst_28 = arith.constant dense<0.000000e+00> : vector<64x512xf32>
    %59 = tpu.matmul %57, %58, %cst_28 {dimension_numbers = #tpu.dot_dimension_numbers<[1], [0], [0], [1], [0, 0, 1, 1], [], []>} : vector<64x512xbf16>, vector<512x512xbf16>, vector<64x512xf32> -> vector<64x512xf32>
    %c0_29 = arith.constant 0 : index
    %c0_30 = arith.constant 0 : index
    %60 = vector.load %arg13[%c0_29, %c0_30] : memref<1x512xf32, #tpu.memory_space<vmem>>, vector<1x512xf32>
    %61 = vector.broadcast %60 : vector<1x512xf32> to vector<64x512xf32>
    %62 = arith.mulf %59, %61 : vector<64x512xf32>
    %c0_31 = arith.constant 0 : index
    %c0_32 = arith.constant 0 : index
    %63 = vector.load %arg14[%c0_31, %c0_32] : memref<1x512xf32, #tpu.memory_space<vmem>>, vector<1x512xf32>
    %64 = vector.broadcast %63 : vector<1x512xf32> to vector<64x512xf32>
    %65 = arith.addf %62, %64 : vector<64x512xf32>
    %cst_33 = arith.constant 0.00999999977 : f32
    %66 = vector.broadcast %cst_33 : f32 to vector<64x512xf32>
    %67 = arith.mulf %66, %65 : vector<64x512xf32>
    %68 = arith.maximumf %65, %67 : vector<64x512xf32>
    %69 = arith.truncf %68 : vector<64x512xf32> to vector<64x512xbf16>
    %c0_34 = arith.constant 0 : index
    %c0_35 = arith.constant 0 : index
    %70 = vector.load %arg15[%c0_34, %c0_35] : memref<512x128xbf16, #tpu.memory_space<vmem>>, vector<512x128xbf16>
    %cst_36 = arith.constant dense<0.000000e+00> : vector<64x128xf32>
    %71 = tpu.matmul %69, %70, %cst_36 {dimension_numbers = #tpu.dot_dimension_numbers<[1], [0], [0], [1], [0, 0, 1, 1], [], []>} : vector<64x512xbf16>, vector<512x128xbf16>, vector<64x128xf32> -> vector<64x128xf32>
    %c0_37 = arith.constant 0 : index
    %c0_38 = arith.constant 0 : index
    %72 = vector.load %arg16[%c0_37, %c0_38] : memref<1x128xf32, #tpu.memory_space<vmem>>, vector<1x128xf32>
    %73 = vector.broadcast %72 : vector<1x128xf32> to vector<64x128xf32>
    %74 = arith.mulf %71, %73 : vector<64x128xf32>
    %c0_39 = arith.constant 0 : index
    %c0_40 = arith.constant 0 : index
    %75 = vector.load %arg17[%c0_39, %c0_40] : memref<1x128xf32, #tpu.memory_space<vmem>>, vector<1x128xf32>
    %76 = vector.broadcast %75 : vector<1x128xf32> to vector<64x128xf32>
    %77 = arith.addf %74, %76 : vector<64x128xf32>
    %cst_41 = arith.constant 0.00999999977 : f32
    %78 = vector.broadcast %cst_41 : f32 to vector<64x128xf32>
    %79 = arith.mulf %78, %77 : vector<64x128xf32>
    %80 = arith.maximumf %77, %79 : vector<64x128xf32>
    %c0_42 = arith.constant 0 : index
    %c0_43 = arith.constant 0 : index
    %c0_44 = arith.constant 0 : index
    %81 = vector.load %arg18[%c0_42, %c0_43, %c0_44] : memref<1x64x128xf32, #tpu.memory_space<vmem>>, vector<1x64x128xf32>
    %82 = vector.shape_cast %81 : vector<1x64x128xf32> to vector<64x128xf32>
    %83 = vector.shape_cast %80 : vector<64x128xf32> to vector<1x64x128xf32>
    tpu.vector_store %arg18[%c0_42, %c0_43, %c0_44], %83 {strides = array<i32>} : memref<1x64x128xf32, #tpu.memory_space<vmem>>, vector<1x64x128xf32>,
    return
  }
  func.func @transform_0(%arg0: i32, %arg1: i32) -> (i32, i32) {
    %c0_i32 = arith.constant 0 : i32
    %c0_i32_0 = arith.constant 0 : i32
    return %arg1, %c0_i32 : i32, i32
  }
  func.func @transform_1(%arg0: i32, %arg1: i32) -> (i32, i32, i32) {
    %c0_i32 = arith.constant 0 : i32
    %c0_i32_0 = arith.constant 0 : i32
    %c0_i32_1 = arith.constant 0 : i32
    return %arg0, %c0_i32, %c0_i32_0 : i32, i32, i32
  }
  func.func @transform_2(%arg0: i32, %arg1: i32) -> (i32, i32, i32) {
    %c0_i32 = arith.constant 0 : i32
    %c0_i32_0 = arith.constant 0 : i32
    %c0_i32_1 = arith.constant 0 : i32
    return %arg0, %c0_i32, %c0_i32_0 : i32, i32, i32
  }
  func.func @transform_3(%arg0: i32, %arg1: i32) -> (i32, i32) {
    %c0_i32 = arith.constant 0 : i32
    %c0_i32_0 = arith.constant 0 : i32
    %c0_i32_1 = arith.constant 0 : i32
    return %c0_i32, %c0_i32_0 : i32, i32
  }
  func.func @transform_4(%arg0: i32, %arg1: i32) -> (i32, i32) {
    %c0_i32 = arith.constant 0 : i32
    %c0_i32_0 = arith.constant 0 : i32
    %c0_i32_1 = arith.constant 0 : i32
    return %c0_i32, %c0_i32_0 : i32, i32
  }
  func.func @transform_5(%arg0: i32, %arg1: i32) -> (i32, i32) {
    %c0_i32 = arith.constant 0 : i32
    %c0_i32_0 = arith.constant 0 : i32
    %c0_i32_1 = arith.constant 0 : i32
    return %c0_i32, %c0_i32_0 : i32, i32
  }
  func.func @transform_6(%arg0: i32, %arg1: i32) -> (i32, i32) {
    %c0_i32 = arith.constant 0 : i32
    %c0_i32_0 = arith.constant 0 : i32
    %c0_i32_1 = arith.constant 0 : i32
    return %c0_i32, %c0_i32_0 : i32, i32
  }
  func.func @transform_7(%arg0: i32, %arg1: i32) -> (i32, i32) {
    %c0_i32 = arith.constant 0 : i32
    %c0_i32_0 = arith.constant 0 : i32
    %c0_i32_1 = arith.constant 0 : i32
    return %c0_i32, %c0_i32_0 : i32, i32
  }
  func.func @transform_8(%arg0: i32, %arg1: i32) -> (i32, i32) {
    %c0_i32 = arith.constant 0 : i32
    %c0_i32_0 = arith.constant 0 : i32
    %c0_i32_1 = arith.constant 0 : i32
    return %c0_i32, %c0_i32_0 : i32, i32
  }
  func.func @transform_9(%arg0: i32, %arg1: i32) -> (i32, i32) {
    %c0_i32 = arith.constant 0 : i32
    %c0_i32_0 = arith.constant 0 : i32
    %c0_i32_1 = arith.constant 0 : i32
    return %c0_i32, %c0_i32_0 : i32, i32
  }
  func.func @transform_10(%arg0: i32, %arg1: i32) -> (i32, i32) {
    %c0_i32 = arith.constant 0 : i32
    %c0_i32_0 = arith.constant 0 : i32
    %c0_i32_1 = arith.constant 0 : i32
    return %c0_i32, %c0_i32_0 : i32, i32
  }
  func.func @transform_11(%arg0: i32, %arg1: i32) -> (i32, i32) {
    %c0_i32 = arith.constant 0 : i32
    %c0_i32_0 = arith.constant 0 : i32
    %c0_i32_1 = arith.constant 0 : i32
    return %c0_i32, %c0_i32_0 : i32, i32
  }
  func.func @transform_12(%arg0: i32, %arg1: i32) -> (i32, i32) {
    %c0_i32 = arith.constant 0 : i32
    %c0_i32_0 = arith.constant 0 : i32
    %c0_i32_1 = arith.constant 0 : i32
    return %c0_i32, %c0_i32_0 : i32, i32
  }
  func.func @transform_13(%arg0: i32, %arg1: i32) -> (i32, i32) {
    %c0_i32 = arith.constant 0 : i32
    %c0_i32_0 = arith.constant 0 : i32
    %c0_i32_1 = arith.constant 0 : i32
    return %c0_i32, %c0_i32_0 : i32, i32
  }
  func.func @transform_14(%arg0: i32, %arg1: i32) -> (i32, i32) {
    %c0_i32 = arith.constant 0 : i32
    %c0_i32_0 = arith.constant 0 : i32
    %c0_i32_1 = arith.constant 0 : i32
    return %c0_i32, %c0_i32_0 : i32, i32
  }
  func.func @transform_15(%arg0: i32, %arg1: i32) -> (i32, i32) {
    %c0_i32 = arith.constant 0 : i32
    %c0_i32_0 = arith.constant 0 : i32
    %c0_i32_1 = arith.constant 0 : i32
    return %c0_i32, %c0_i32_0 : i32, i32
  }
  func.func @transform_16(%arg0: i32, %arg1: i32) -> (i32, i32, i32) {
    %c0_i32 = arith.constant 0 : i32
    %c0_i32_0 = arith.constant 0 : i32
    return %arg0, %arg1, %c0_i32 : i32, i32, i32
  }
}

</mosaic_0001>

<llo_original>
// kernel: foldingnet_forward.7
$region0: #{foldingnet_forward.7}
  #allocation0 [shape = 'u32[]', space=smem, size = 0x4, offset = 0x4, fixed_abs, tag = 'smem constant byte address 0x4 - core index']
  #allocation1 [shape = 'u32[72,128]{1,0:T(1,128)}', space=vmem, size = 0x9000, scoped, tag = 'internal scratch']
  %s0 = inlined_call_operand.vmem [shape: f32[2,64,3], index: 0, kind: input, shape index: {}, may-alias: {0,1}]
  %s1 = inlined_call_operand.vmem [shape: f32[2,64,3], index: 1, kind: input, shape index: {}, may-alias: {0,1}]
  %s2 = inlined_call_operand.vmem [shape: f32[2,1,64], index: 2, kind: input, shape index: {}]
  %s3 = inlined_call_operand.vmem [shape: f32[2,64,64], index: 3, kind: output, shape index: {}]
  %s4 = sld [smem:[#allocation0]]
  $region45: #{foldingnet_forward.7} parent=0
    _
  %s6 = ssub.s32 1, %s4
  %s7 = scalar_select 0, %s6, %s4
  loop: start=0, step=1, limit=4
  $region2: #{foldingnet_forward.7} parent=0 // loop_pre_header
    _
  $region3: #{foldingnet_forward.7} parent=0 // loop_header
    %s9 = sphi 0, %s13
    %p10 = scmp.ge.s32.totalorder %s9, 4
    %s16 = sphi 0, %s28
    %s17 = sphi 0, %s24
    %s18 = sphi 0, %s16
    %s19 = sphi 0, %s17
    %s20 = sphi 0, %s18
    %s21 = sphi 0, %s19
    %s33 = sphi 0, %s35
    %s36 = sphi 0, %s33
    %s37 = sphi 0, %s36
    %s53 = sphi 0, %s37
    %s59 = sphi 0, %s61
    %s62 = sphi 0, %s59
    %s63 = sphi 0, %s62
    %s79 = sphi 0, %s63
    %s85 = sphi 0, %s87
    %s88 = sphi 0, %s85
    %s89 = sphi 0, %s88
    %s105 = sphi 0, %s89
    %s113 = sphi 0, %s115
    %s116 = sphi 0, %s113
    %s117 = sphi 0, %s116
    %s133 = sphi 0, %s117
  $region4: #{foldingnet_forward.7} parent=0 // loop_header_branch
    %12 = sbr.rel (%p10) target = $region8
  $region5: #{foldingnet_forward.7} parent=0 // loop_body
    %s14 = ssub.s32 %s9, 1
    %s15 = ssub.s32 %s9, 2
    %s22 = sadd.s32 1, %s17
    %p23 = scmp.ge.s32.totalorder %s22, 1
    %s24 = scalar_select %p23, 0, %s22
    %s25 = sadd.s32 1, %s16
    %s26 = scalar_select %p23, %s25, %s16
    %p27 = scmp.ge.s32.totalorder %s26, 2
    %s28 = scalar_select %p27, 0, %s26
    %s29 = ssub.s32 %s16, %s28
    %s30 = ssub.s32 %s17, %s24
    %s31 = sor.u32 %s29, %s30
    %p32 = scmp.eq.s32.totalorder %s31, 0
    %s34 = sadd.s32 %s33, 1
    %s35 = scalar_select %p32, %s33, %s34
    %p38 = pneg %p32
    %p39 = scmp.eq.s32.totalorder %s9, 1
    %p40 = por %p38, %p39
    %p41 = scmp.ne.s32.totalorder %s33, %s36
    %p42 = scmp.eq.s32.totalorder %s9, 0
    %p43 = por %p41, %p42
    %p44 = scmp.ne.s32.totalorder %s33, %s36
    %p45 = scmp.eq.s32.totalorder %s14, 1
    %p46 = por %p44, %p45
    %p47 = scmp.ne.s32.totalorder %s36, %s37
    %p48 = scmp.eq.s32.totalorder %s14, 0
    %p49 = por %p47, %p48
    %p50 = scmp.ne.s32.totalorder %s36, %s37
    %p51 = scmp.eq.s32.totalorder %s15, 1
    %p52 = por %p50, %p51
    %p54 = scmp.ne.s32.totalorder %s37, %s53
    %p55 = scmp.eq.s32.totalorder %s15, 0
    %p56 = por %p54, %p55
    %s57 = ssub.s32 %s16, %s28
    %p58 = scmp.eq.s32.totalorder %s57, 0
    %s60 = sadd.s32 %s59, 1
    %s61 = scalar_select %p58, %s59, %s60
    %p64 = pneg %p58
    %p65 = scmp.eq.s32.totalorder %s9, 1
    %p66 = por %p64, %p65
    %p67 = scmp.ne.s32.totalorder %s59, %s62
    %p68 = scmp.eq.s32.totalorder %s9, 0
    %p69 = por %p67, %p68
    %p70 = scmp.ne.s32.totalorder %s59, %s62
    %p71 = scmp.eq.s32.totalorder %s14, 1
    %p72 = por %p70, %p71
    %p73 = scmp.ne.s32.totalorder %s62, %s63
    %p74 = scmp.eq.s32.totalorder %s14, 0
    %p75 = por %p73, %p74
    %p76 = scmp.ne.s32.totalorder %s62, %s63
    %p77 = scmp.eq.s32.totalorder %s15, 1
    %p78 = por %p76, %p77
    %p80 = scmp.ne.s32.totalorder %s63, %s79
    %p81 = scmp.eq.s32.totalorder %s15, 0
    %p82 = por %p80, %p81
    %s83 = ssub.s32 %s16, %s28
    %p84 = scmp.eq.s32.totalorder %s83, 0
    %s86 = sadd.s32 %s85, 1
    %s87 = scalar_select %p84, %s85, %s86
    %p90 = pneg %p84
    %p91 = scmp.eq.s32.totalorder %s9, 1
    %p92 = por %p90, %p91
    %p93 = scmp.ne.s32.totalorder %s85, %s88
    %p94 = scmp.eq.s32.totalorder %s9, 0
    %p95 = por %p93, %p94
    %p96 = scmp.ne.s32.totalorder %s85, %s88
    %p97 = scmp.eq.s32.totalorder %s14, 1
    %p98 = por %p96, %p97
    %p99 = scmp.ne.s32.totalorder %s88, %s89
    %p100 = scmp.eq.s32.totalorder %s14, 0
    %p101 = por %p99, %p100
    %p102 = scmp.ne.s32.totalorder %s88, %s89
    %p103 = scmp.eq.s32.totalorder %s15, 1
    %p104 = por %p102, %p103
    %p106 = scmp.ne.s32.totalorder %s89, %s105
    %p107 = scmp.eq.s32.totalorder %s15, 0
    %p108 = por %p106, %p107
    %s109 = ssub.s32 %s16, %s28
    %s110 = ssub.s32 %s17, %s24
    %s111 = sor.u32 %s109, %s110
    %p112 = scmp.eq.s32.totalorder %s111, 0
    %s114 = sadd.s32 %s113, 1
    %s115 = scalar_select %p112, %s113, %s114
    %p118 = pneg %p112
    %p119 = scmp.eq.s32.totalorder %s9, 1
    %p120 = por %p118, %p119
    %p121 = scmp.ne.s32.totalorder %s113, %s116
    %p122 = scmp.eq.s32.totalorder %s9, 0
    %p123 = por %p121, %p122
    %p124 = scmp.ne.s32.totalorder %s113, %s116
    %p125 = scmp.eq.s32.totalorder %s14, 1
    %p126 = por %p124, %p125
    %p127 = scmp.ne.s32.totalorder %s116, %s117
    %p128 = scmp.eq.s32.totalorder %s14, 0
    %p129 = por %p127, %p128
    %p130 = scmp.ne.s32.totalorder %s116, %s117
    %p131 = scmp.eq.s32.totalorder %s15, 1
    %p132 = por %p130, %p131
    %p134 = scmp.ne.s32.totalorder %s117, %s133
    %p135 = scmp.eq.s32.totalorder %s15, 0
    %p136 = por %p134, %p135
    %p137 = scmp.le.s32.totalorder 1, %s9
    %p138 = scmp.lt.s32.totalorder %s9, 3
    %p139 = pnand %p137, %p138
    %p140 = pneg %p139
    // Predicated region
    $region9: #{foldingnet_forward.7} parent=5 // pred_check
      _
    $region10: #{foldingnet_forward.7} parent=5 // pred_check_branch
      %142 = sbr.rel (%p139) target = $region12
    $region11: #{foldingnet_forward.7} parent=5 // pred_region
      %s143 = ssub.s32 %s9, 1
    $region12: #{foldingnet_forward.7} parent=5 // pred_fallthru
      _
    %p144 = scmp.lt.s32.totalorder %s9, 2
    // Predicated region
    $region13: #{foldingnet_forward.7} parent=5 // pred_check
      %p145 = pneg %p144
    $region14: #{foldingnet_forward.7} parent=5 // pred_check_branch
      %147 = sbr.rel (%p145) target = $region16
    $region15: #{foldingnet_forward.7} parent=5 // pred_region
      // Predicated region
      $region17: #{foldingnet_forward.7} parent=15 // pred_check
        %p148 = pneg %p43
      $region18: #{foldingnet_forward.7} parent=15 // pred_check_branch
        %150 = sbr.rel (%p148) target = $region20
      $region19: #{foldingnet_forward.7} parent=15 // pred_region
        %s151 = smul.u32 8, %s17
        %p152 = scmp.lt.s32.totalorder %s16, 1
        %s153 = scalar_select %p152, %s16, 1
        %p154 = scmp.lt.s32.totalorder %s151, 7
        %s155 = scalar_select %p154, %s151, 7
        %s156 = smul.addr %s153, 8
        %s157 = sadd.s32 %s155, %s156
        %s158 = smul.addr %s157, 8
        %s159 = scalar_lea.vmem %s0, %s158
        %s160 = smul.u32 8, %s17
      $region20: #{foldingnet_forward.7} parent=15 // pred_fallthru
        _
      // Predicated region
      $region21: #{foldingnet_forward.7} parent=15 // pred_check
        %p161 = pneg %p69
      $region22: #{foldingnet_forward.7} parent=15 // pred_check_branch
        %163 = sbr.rel (%p161) target = $region24
      $region23: #{foldingnet_forward.7} parent=15 // pred_region
        %p164 = scmp.lt.s32.totalorder %s16, 1
        %s165 = scalar_select %p164, %s16, 1
        %s166 = smul.addr %s165, 8
        %s167 = smul.addr %s166, 8
        %s168 = scalar_lea.vmem %s1, %s167
      $region24: #{foldingnet_forward.7} parent=15 // pred_fallthru
        _
      // Predicated region
      $region25: #{foldingnet_forward.7} parent=15 // pred_check
        %p169 = pneg %p95
      $region26: #{foldingnet_forward.7} parent=15 // pred_check_branch
        %171 = sbr.rel (%p169) target = $region28
      $region27: #{foldingnet_forward.7} parent=15 // pred_region
        %p172 = scmp.lt.s32.totalorder %s16, 1
        %s173 = scalar_select %p172, %s16, 1
        %s174 = scalar_lea.vmem %s2, %s173
      $region28: #{foldingnet_forward.7} parent=15 // pred_fallthru
        _
    $region16: #{foldingnet_forward.7} parent=5 // pred_fallthru
      _
    %p175 = scmp.le.s32.totalorder 1, %s9
    %p176 = scmp.lt.s32.totalorder %s9, 3
    %p177 = pnand %p175, %p176
    %p178 = pneg %p177
    // Predicated region
    $region29: #{foldingnet_forward.7} parent=5 // pred_check
      _
    $region30: #{foldingnet_forward.7} parent=5 // pred_check_branch
      %180 = sbr.rel (%p177) target = $region32
    $region31: #{foldingnet_forward.7} parent=5 // pred_region
      %s181 = ssub.s32 %s9, 1
      %s182 = smul.u32 8, %s19
      %p183 = scmp.lt.s32.totalorder %s18, 1
      %s184 = scalar_select %p183, %s18, 1
      %p185 = scmp.lt.s32.totalorder %s182, 7
      %s186 = scalar_select %p185, %s182, 7
      %s187 = smul.addr %s184, 8
      %s188 = sadd.s32 %s186, %s187
      %s189 = smul.addr %s188, 8
      %s190 = scalar_lea.vmem %s0, %s189
      %p191 = pneg %p49
      %p192 = pneg %p46
      %p193 = scmp.lt.s32.totalorder %s18, 1
      %s194 = scalar_select %p193, %s18, 1
      %s195 = smul.addr %s194, 8
      %s196 = smul.addr %s195, 8
      %s197 = scalar_lea.vmem %s1, %s196
      %p198 = pneg %p75
      %p199 = pneg %p72
      %p200 = scmp.lt.s32.totalorder %s18, 1
      %s201 = scalar_select %p200, %s18, 1
      %s202 = scalar_lea.vmem %s2, %s201
      %p203 = pneg %p101
      %p204 = pneg %p98
      %p205 = pneg %p129
      %p206 = pneg %p126
      %s207 = smul.u32 8, %s19
      %p208 = scmp.lt.s32.totalorder %s18, 1
      %s209 = scalar_select %p208, %s18, 1
      %p210 = scmp.lt.s32.totalorder %s207, 7
      %s211 = scalar_select %p210, %s207, 7
      %s212 = smul.addr %s209, 8
      %s213 = sadd.s32 %s211, %s212
      %s214 = smul.addr %s213, 8
      %s215 = scalar_lea.vmem %s3, %s214
      %s216 = smul.u32 8, %s19
      %p217 = scmp.lt.s32.totalorder %s18, 1
      %s218 = scalar_select %p217, %s18, 1
      %p219 = scmp.lt.s32.totalorder %s216, 7
      %s220 = scalar_select %p219, %s216, 7
      %s221 = smul.addr %s218, 8
      %s222 = sadd.s32 %s220, %s221
      %s223 = smul.addr %s222, 8
      %s224 = scalar_lea.vmem %s0, %s223
      %s225 = smul.u32 8, %s19
      %p226 = scmp.lt.s32.totalorder %s18, 1
      %s227 = scalar_select %p226, %s18, 1
      %s228 = smul.addr %s227, 8
      %s229 = smul.addr %s228, 8
      %s230 = scalar_lea.vmem %s1, %s229
      %p231 = scmp.lt.s32.totalorder %s18, 1
      %s232 = scalar_select %p231, %s18, 1
      %s233 = scalar_lea.vmem %s2, %s232
      %s234 = smul.u32 8, %s19
      %p235 = scmp.lt.s32.totalorder %s18, 1
      %s236 = scalar_select %p235, %s18, 1
      %p237 = scmp.lt.s32.totalorder %s234, 7
      %s238 = scalar_select %p237, %s234, 7
      %s239 = smul.addr %s236, 8
      %s240 = sadd.s32 %s238, %s239
      %s241 = smul.addr %s240, 8
      %s242 = scalar_lea.vmem %s3, %s241
      %s243 = smul.u32 8, %s19
      %v244 = vld [vmem:[%s224] sm:$0xff]
      %v245 = vld [vmem:[%s224 + $0x8] sm:$0xff]
      %v246 = vld [vmem:[%s224 + $0x10] sm:$0xff]
      %v247 = vld [vmem:[%s224 + $0x18] sm:$0xff]
      %v248 = vld [vmem:[%s224 + $0x20] sm:$0xff]
      %v249 = vld [vmem:[%s224 + $0x28] sm:$0xff]
      %v250 = vld [vmem:[%s224 + $0x30] sm:$0xff]
      %v251 = vld [vmem:[%s224 + $0x38] sm:$0xff]
      %v252 = vld [vmem:[%s230] sm:$0xff]
      %v253 = vld [vmem:[%s230 + $0x8] sm:$0xff]
      %v254 = vld [vmem:[%s230 + $0x10] sm:$0xff]
      %v255 = vld [vmem:[%s230 + $0x18] sm:$0xff]
      %v256 = vld [vmem:[%s230 + $0x20] sm:$0xff]
      %v257 = vld [vmem:[%s230 + $0x28] sm:$0xff]
      %v258 = vld [vmem:[%s230 + $0x30] sm:$0xff]
      %v259 = vld [vmem:[%s230 + $0x38] sm:$0xff]
      %v260 = vmul.f32 %v244, %v244
      %v261 = vmul.f32 %v245, %v245
      %v262 = vmul.f32 %v246, %v246
      %v263 = vmul.f32 %v247, %v247
      %v264 = vmul.f32 %v248, %v248
      %v265 = vmul.f32 %v249, %v249
      %v266 = vmul.f32 %v250, %v250
      %v267 = vmul.f32 %v251, %v251
      %vm268 = vcmask 23552
      %v269 = vsel %vm268, %v260, 0.0
      %270 = vadd.xlane.f32.xlu0 %v269
      %v271 = vpop.xlane.xlu0 %270
      %v272 = vsel %vm268, %v261, 0.0
      %273 = vadd.xlane.f32.xlu0 %v272
      %v274 = vpop.xlane.xlu0 %273
      %v275 = vsel %vm268, %v262, 0.0
      %276 = vadd.xlane.f32.xlu0 %v275
      %v277 = vpop.xlane.xlu0 %276
      %v278 = vsel %vm268, %v263, 0.0
      %279 = vadd.xlane.f32.xlu0 %v278
      %v280 = vpop.xlane.xlu0 %279
      %v281 = vsel %vm268, %v264, 0.0
      %282 = vadd.xlane.f32.xlu0 %v281
      %v283 = vpop.xlane.xlu0 %282
      %v284 = vsel %vm268, %v265, 0.0
      %285 = vadd.xlane.f32.xlu0 %v284
      %v286 = vpop.xlane.xlu0 %285
      %v287 = vsel %vm268, %v266, 0.0
      %288 = vadd.xlane.f32.xlu0 %v287
      %v289 = vpop.xlane.xlu0 %288
      %v290 = vsel %vm268, %v267, 0.0
      %291 = vadd.xlane.f32.xlu0 %v290
      %v292 = vpop.xlane.xlu0 %291
      %v294 = vsel %vm268, %v244, 0
      %v297 = vsel %vm268, %v245, 0
      %v300 = vsel %vm268, %v246, 0
      %v303 = vsel %vm268, %v247, 0
      %v306 = vsel %vm268, %v248, 0
      %v309 = vsel %vm268, %v249, 0
      %v312 = vsel %vm268, %v250, 0
      %v315 = vsel %vm268, %v251, 0
      %v318 = vsel %vm268, %v252, 0
      %v321 = vsel %vm268, %v253, 0
      %v324 = vsel %vm268, %v254, 0
      %v327 = vsel %vm268, %v255, 0
      %v330 = vsel %vm268, %v256, 0
      %v333 = vsel %vm268, %v257, 0
      %v336 = vsel %vm268, %v258, 0
      %v339 = vsel %vm268, %v259, 0
      %341 = vmatpush.xpose.msra.mxu0 0.0
      %342 = vmatpush.xpose.msra.mxu0 0.0
      %343 = vmatpush.xpose.msra.mxu0 0.0
      %344 = vmatpush.xpose.msra.mxu0 0.0
      %345 = vmatpush.xpose.msra.mxu0 0.0
      %346 = vmatpush.xpose.msra.mxu0 0.0
      %347 = vmatpush.xpose.msra.mxu0 0.0
      %348 = vmatpush.xpose.msra.mxu0 0.0
      %349 = vmatpush.xpose.msra.mxu0 %v339
      %350 = vmatpush.xpose.msra.mxu0 %v336
      %351 = vmatpush.xpose.msra.mxu0 %v333
      %352 = vmatpush.xpose.msra.mxu0 %v330
      %353 = vmatpush.xpose.msra.mxu0 %v327
      %354 = vmatpush.xpose.msra.mxu0 %v324
      %355 = vmatpush.xpose.msra.mxu0 %v321
      %356 = vmatpush.xpose.msra.mxu0 %v318
      %357 = vmatmul.f32.gmra.mxu0 %v294
      %v358 = vpop.f32.mrf.mxu0
      %v359 = vadd.f32 0.0, %v358
      %360 = vmatmul.f32.gmra.mxu0 %v297
      %v361 = vpop.f32.mrf.mxu0
      %v362 = vadd.f32 0.0, %v361
      %363 = vmatmul.f32.gmra.mxu0 %v300
      %v364 = vpop.f32.mrf.mxu0
      %v365 = vadd.f32 0.0, %v364
      %366 = vmatmul.f32.gmra.mxu0 %v303
      %v367 = vpop.f32.mrf.mxu0
      %v368 = vadd.f32 0.0, %v367
      %369 = vmatmul.f32.gmra.mxu0 %v306
      %v370 = vpop.f32.mrf.mxu0
      %v371 = vadd.f32 0.0, %v370
      %372 = vmatmul.f32.gmra.mxu0 %v309
      %v373 = vpop.f32.mrf.mxu0
      %v374 = vadd.f32 0.0, %v373
      %375 = vmatmul.f32.gmra.mxu0 %v312
      %v376 = vpop.f32.mrf.mxu0
      %v377 = vadd.f32 0.0, %v376
      %378 = vmatmul.f32.gmra.mxu0 %v315
      %v379 = vpop.f32.mrf.mxu0
      %v380 = vadd.f32 0.0, %v379
      %381 = vdwg.mxu0
      %v382 = vmul.f32 %v359, 2.0
      %v383 = vmul.f32 %v362, 2.0
      %v384 = vmul.f32 %v365, 2.0
      %v385 = vmul.f32 %v368, 2.0
      %v386 = vmul.f32 %v371, 2.0
      %v387 = vmul.f32 %v374, 2.0
      %v388 = vmul.f32 %v377, 2.0
      %v389 = vmul.f32 %v380, 2.0
      %v390 = vsub.f32 %v382, %v271
      %v391 = vsub.f32 %v383, %v274
      %v392 = vsub.f32 %v384, %v277
      %v393 = vsub.f32 %v385, %v280
      %v394 = vsub.f32 %v386, %v283
      %v395 = vsub.f32 %v387, %v286
      %v396 = vsub.f32 %v388, %v289
      %v397 = vsub.f32 %v389, %v292
      %v398 = vld [vmem:[%s233] sm:$0x1]
      %v400 = vperm.slane %v398, 0
      %v402 = vsub.f32 %v390, %v400
      %v403 = vsub.f32 %v391, %v400
      %v404 = vsub.f32 %v392, %v400
      %v405 = vsub.f32 %v393, %v400
      %v406 = vsub.f32 %v394, %v400
      %v407 = vsub.f32 %v395, %v400
      %v408 = vsub.f32 %v396, %v400
      %v409 = vsub.f32 %v397, %v400
      %vm410 = vcmask 523264
      %411 = vst.msk [vmem:[%s242] sm:$0xff] %vm410, %v402
      %412 = vst.msk [vmem:[%s242 + $0x8] sm:$0xff] %vm410, %v403
      %413 = vst.msk [vmem:[%s242 + $0x10] sm:$0xff] %vm410, %v404
      %414 = vst.msk [vmem:[%s242 + $0x18] sm:$0xff] %vm410, %v405
      %415 = vst.msk [vmem:[%s242 + $0x20] sm:$0xff] %vm410, %v406
      %416 = vst.msk [vmem:[%s242 + $0x28] sm:$0xff] %vm410, %v407
      %417 = vst.msk [vmem:[%s242 + $0x30] sm:$0xff] %vm410, %v408
      %418 = vst.msk [vmem:[%s242 + $0x38] sm:$0xff] %vm410, %v409
      %s419 = smul.u32 8, %s19
      %p420 = scmp.lt.s32.totalorder %s18, 1
      %s421 = scalar_select %p420, %s18, 1
      %p422 = scmp.lt.s32.totalorder %s419, 7
      %s423 = scalar_select %p422, %s419, 7
      %s424 = smul.addr %s421, 8
      %s425 = sadd.s32 %s423, %s424
      %s426 = smul.addr %s425, 8
      %s427 = scalar_lea.vmem %s3, %s426
      // Predicated region
      $region33: #{foldingnet_forward.7} parent=31 // pred_check
        %p428 = pneg %p126
      $region34: #{foldingnet_forward.7} parent=31 // pred_check_branch
        %430 = sbr.rel (%p428) target = $region36
      $region35: #{foldingnet_forward.7} parent=31 // pred_region
        %s431 = smul.u32 8, %s19
      $region36: #{foldingnet_forward.7} parent=31 // pred_fallthru
        _
    $region32: #{foldingnet_forward.7} parent=5 // pred_fallthru
      _
    %p432 = scmp.le.s32.totalorder 2, %s9
    // Predicated region
    $region37: #{foldingnet_forward.7} parent=5 // pred_check
      %p433 = pneg %p432
    $region38: #{foldingnet_forward.7} parent=5 // pred_check_branch
      %435 = sbr.rel (%p433) target = $region40
    $region39: #{foldingnet_forward.7} parent=5 // pred_region
      %s436 = ssub.s32 %s9, 2
      // Predicated region
      $region41: #{foldingnet_forward.7} parent=39 // pred_check
        %p437 = pneg %p132
      $region42: #{foldingnet_forward.7} parent=39 // pred_check_branch
        %439 = sbr.rel (%p437) target = $region44
      $region43: #{foldingnet_forward.7} parent=39 // pred_region
        %s440 = smul.u32 8, %s21
        %p441 = scmp.lt.s32.totalorder %s20, 1
        %s442 = scalar_select %p441, %s20, 1
        %p443 = scmp.lt.s32.totalorder %s440, 7
        %s444 = scalar_select %p443, %s440, 7
        %s445 = smul.addr %s442, 8
        %s446 = sadd.s32 %s444, %s445
        %s447 = smul.addr %s446, 8
        %s448 = scalar_lea.vmem %s3, %s447
      $region44: #{foldingnet_forward.7} parent=39 // pred_fallthru
        _
    $region40: #{foldingnet_forward.7} parent=5 // pred_fallthru
      _
  $region6: #{foldingnet_forward.7} parent=0 // loop_footer
    %s13 = sadd.s32 1, %s9
  $region7: #{foldingnet_forward.7} parent=0 // loop_footer_branch
    %8 = sbr.rel target = $region3
  $region8: #{foldingnet_forward.7} parent=0 // loop_exit
    _

// kernel: foldingnet_forward.9
$region0: #{foldingnet_forward.9}
  #allocation0 [shape = 'u32[]', space=smem, size = 0x4, offset = 0x4, fixed_abs, tag = 'smem constant byte address 0x4 - core index']
  #allocation1 [shape = 'u32[72,128]{1,0:T(1,128)}', space=vmem, size = 0x9000, scoped, tag = 'internal scratch']
  %s0 = inlined_call_operand.vmem [shape: f32[2,64,64], index: 0, kind: input, shape index: {}, may-alias: {0,1}]
  %s1 = inlined_call_operand.vmem [shape: f32[2,64,64], index: 1, kind: input, shape index: {}, may-alias: {0,1}]
  %s2 = inlined_call_operand.vmem [shape: f32[2,1,64], index: 2, kind: input, shape index: {}]
  %s3 = inlined_call_operand.vmem [shape: f32[2,64,64], index: 3, kind: output, shape index: {}]
  %s4 = sld [smem:[#allocation0]]
  $region45: #{foldingnet_forward.9} parent=0
    _
  %s6 = ssub.s32 1, %s4
  %s7 = scalar_select 0, %s6, %s4
  loop: start=0, step=1, limit=4
  $region2: #{foldingnet_forward.9} parent=0 // loop_pre_header
    _
  $region3: #{foldingnet_forward.9} parent=0 // loop_header
    %s9 = sphi 0, %s13
    %p10 = scmp.ge.s32.totalorder %s9, 4
    %s16 = sphi 0, %s28
    %s17 = sphi 0, %s24
    %s18 = sphi 0, %s16
    %s19 = sphi 0, %s17
    %s20 = sphi 0, %s18
    %s21 = sphi 0, %s19
    %s33 = sphi 0, %s35
    %s36 = sphi 0, %s33
    %s37 = sphi 0, %s36
    %s53 = sphi 0, %s37
    %s59 = sphi 0, %s61
    %s62 = sphi 0, %s59
    %s63 = sphi 0, %s62
    %s79 = sphi 0, %s63
    %s85 = sphi 0, %s87
    %s88 = sphi 0, %s85
    %s89 = sphi 0, %s88
    %s105 = sphi 0, %s89
    %s113 = sphi 0, %s115
    %s116 = sphi 0, %s113
    %s117 = sphi 0, %s116
    %s133 = sphi 0, %s117
  $region4: #{foldingnet_forward.9} parent=0 // loop_header_branch
    %12 = sbr.rel (%p10) target = $region8
  $region5: #{foldingnet_forward.9} parent=0 // loop_body
    %s14 = ssub.s32 %s9, 1
    %s15 = ssub.s32 %s9, 2
    %s22 = sadd.s32 1, %s17
    %p23 = scmp.ge.s32.totalorder %s22, 1
    %s24 = scalar_select %p23, 0, %s22
    %s25 = sadd.s32 1, %s16
    %s26 = scalar_select %p23, %s25, %s16
    %p27 = scmp.ge.s32.totalorder %s26, 2
    %s28 = scalar_select %p27, 0, %s26
    %s29 = ssub.s32 %s16, %s28
    %s30 = ssub.s32 %s17, %s24
    %s31 = sor.u32 %s29, %s30
    %p32 = scmp.eq.s32.totalorder %s31, 0
    %s34 = sadd.s32 %s33, 1
    %s35 = scalar_select %p32, %s33, %s34
    %p38 = pneg %p32
    %p39 = scmp.eq.s32.totalorder %s9, 1
    %p40 = por %p38, %p39
    %p41 = scmp.ne.s32.totalorder %s33, %s36
    %p42 = scmp.eq.s32.totalorder %s9, 0
    %p43 = por %p41, %p42
    %p44 = scmp.ne.s32.totalorder %s33, %s36
    %p45 = scmp.eq.s32.totalorder %s14, 1
    %p46 = por %p44, %p45
    %p47 = scmp.ne.s32.totalorder %s36, %s37
    %p48 = scmp.eq.s32.totalorder %s14, 0
    %p49 = por %p47, %p48
    %p50 = scmp.ne.s32.totalorder %s36, %s37
    %p51 = scmp.eq.s32.totalorder %s15, 1
    %p52 = por %p50, %p51
    %p54 = scmp.ne.s32.totalorder %s37, %s53
    %p55 = scmp.eq.s32.totalorder %s15, 0
    %p56 = por %p54, %p55
    %s57 = ssub.s32 %s16, %s28
    %p58 = scmp.eq.s32.totalorder %s57, 0
    %s60 = sadd.s32 %s59, 1
    %s61 = scalar_select %p58, %s59, %s60
    %p64 = pneg %p58
    %p65 = scmp.eq.s32.totalorder %s9, 1
    %p66 = por %p64, %p65
    %p67 = scmp.ne.s32.totalorder %s59, %s62
    %p68 = scmp.eq.s32.totalorder %s9, 0
    %p69 = por %p67, %p68
    %p70 = scmp.ne.s32.totalorder %s59, %s62
    %p71 = scmp.eq.s32.totalorder %s14, 1
    %p72 = por %p70, %p71
    %p73 = scmp.ne.s32.totalorder %s62, %s63
    %p74 = scmp.eq.s32.totalorder %s14, 0
    %p75 = por %p73, %p74
    %p76 = scmp.ne.s32.totalorder %s62, %s63
    %p77 = scmp.eq.s32.totalorder %s15, 1
    %p78 = por %p76, %p77
    %p80 = scmp.ne.s32.totalorder %s63, %s79
    %p81 = scmp.eq.s32.totalorder %s15, 0
    %p82 = por %p80, %p81
    %s83 = ssub.s32 %s16, %s28
    %p84 = scmp.eq.s32.totalorder %s83, 0
    %s86 = sadd.s32 %s85, 1
    %s87 = scalar_select %p84, %s85, %s86
    %p90 = pneg %p84
    %p91 = scmp.eq.s32.totalorder %s9, 1
    %p92 = por %p90, %p91
    %p93 = scmp.ne.s32.totalorder %s85, %s88
    %p94 = scmp.eq.s32.totalorder %s9, 0
    %p95 = por %p93, %p94
    %p96 = scmp.ne.s32.totalorder %s85, %s88
    %p97 = scmp.eq.s32.totalorder %s14, 1
    %p98 = por %p96, %p97
    %p99 = scmp.ne.s32.totalorder %s88, %s89
    %p100 = scmp.eq.s32.totalorder %s14, 0
    %p101 = por %p99, %p100
    %p102 = scmp.ne.s32.totalorder %s88, %s89
    %p103 = scmp.eq.s32.totalorder %s15, 1
    %p104 = por %p102, %p103
    %p106 = scmp.ne.s32.totalorder %s89, %s105
    %p107 = scmp.eq.s32.totalorder %s15, 0
    %p108 = por %p106, %p107
    %s109 = ssub.s32 %s16, %s28
    %s110 = ssub.s32 %s17, %s24
    %s111 = sor.u32 %s109, %s110
    %p112 = scmp.eq.s32.totalorder %s111, 0
    %s114 = sadd.s32 %s113, 1
    %s115 = scalar_select %p112, %s113, %s114
    %p118 = pneg %p112
    %p119 = scmp.eq.s32.totalorder %s9, 1
    %p120 = por %p118, %p119
    %p121 = scmp.ne.s32.totalorder %s113, %s116
    %p122 = scmp.eq.s32.totalorder %s9, 0
    %p123 = por %p121, %p122
    %p124 = scmp.ne.s32.totalorder %s113, %s116
    %p125 = scmp.eq.s32.totalorder %s14, 1
    %p126 = por %p124, %p125
    %p127 = scmp.ne.s32.totalorder %s116, %s117
    %p128 = scmp.eq.s32.totalorder %s14, 0
    %p129 = por %p127, %p128
    %p130 = scmp.ne.s32.totalorder %s116, %s117
    %p131 = scmp.eq.s32.totalorder %s15, 1
    %p132 = por %p130, %p131
    %p134 = scmp.ne.s32.totalorder %s117, %s133
    %p135 = scmp.eq.s32.totalorder %s15, 0
    %p136 = por %p134, %p135
    %p137 = scmp.le.s32.totalorder 1, %s9
    %p138 = scmp.lt.s32.totalorder %s9, 3
    %p139 = pnand %p137, %p138
    %p140 = pneg %p139
    // Predicated region
    $region9: #{foldingnet_forward.9} parent=5 // pred_check
      _
    $region10: #{foldingnet_forward.9} parent=5 // pred_check_branch
      %142 = sbr.rel (%p139) target = $region12
    $region11: #{foldingnet_forward.9} parent=5 // pred_region
      %s143 = ssub.s32 %s9, 1
    $region12: #{foldingnet_forward.9} parent=5 // pred_fallthru
      _
    %p144 = scmp.lt.s32.totalorder %s9, 2
    // Predicated region
    $region13: #{foldingnet_forward.9} parent=5 // pred_check
      %p145 = pneg %p144
    $region14: #{foldingnet_forward.9} parent=5 // pred_check_branch
      %147 = sbr.rel (%p145) target = $region16
    $region15: #{foldingnet_forward.9} parent=5 // pred_region
      // Predicated region
      $region17: #{foldingnet_forward.9} parent=15 // pred_check
        %p148 = pneg %p43
      $region18: #{foldingnet_forward.9} parent=15 // pred_check_branch
        %150 = sbr.rel (%p148) target = $region20
      $region19: #{foldingnet_forward.9} parent=15 // pred_region
        %s151 = smul.u32 8, %s17
        %p152 = scmp.lt.s32.totalorder %s16, 1
        %s153 = scalar_select %p152, %s16, 1
        %p154 = scmp.lt.s32.totalorder %s151, 7
        %s155 = scalar_select %p154, %s151, 7
        %s156 = smul.addr %s153, 8
        %s157 = sadd.s32 %s155, %s156
        %s158 = smul.addr %s157, 8
        %s159 = scalar_lea.vmem %s0, %s158
        %s160 = smul.u32 8, %s17
      $region20: #{foldingnet_forward.9} parent=15 // pred_fallthru
        _
      // Predicated region
      $region21: #{foldingnet_forward.9} parent=15 // pred_check
        %p161 = pneg %p69
      $region22: #{foldingnet_forward.9} parent=15 // pred_check_branch
        %163 = sbr.rel (%p161) target = $region24
      $region23: #{foldingnet_forward.9} parent=15 // pred_region
        %p164 = scmp.lt.s32.totalorder %s16, 1
        %s165 = scalar_select %p164, %s16, 1
        %s166 = smul.addr %s165, 8
        %s167 = smul.addr %s166, 8
        %s168 = scalar_lea.vmem %s1, %s167
      $region24: #{foldingnet_forward.9} parent=15 // pred_fallthru
        _
      // Predicated region
      $region25: #{foldingnet_forward.9} parent=15 // pred_check
        %p169 = pneg %p95
      $region26: #{foldingnet_forward.9} parent=15 // pred_check_branch
        %171 = sbr.rel (%p169) target = $region28
      $region27: #{foldingnet_forward.9} parent=15 // pred_region
        %p172 = scmp.lt.s32.totalorder %s16, 1
        %s173 = scalar_select %p172, %s16, 1
        %s174 = scalar_lea.vmem %s2, %s173
      $region28: #{foldingnet_forward.9} parent=15 // pred_fallthru
        _
    $region16: #{foldingnet_forward.9} parent=5 // pred_fallthru
      _
    %p175 = scmp.le.s32.totalorder 1, %s9
    %p176 = scmp.lt.s32.totalorder %s9, 3
    %p177 = pnand %p175, %p176
    %p178 = pneg %p177
    // Predicated region
    $region29: #{foldingnet_forward.9} parent=5 // pred_check
      _
    $region30: #{foldingnet_forward.9} parent=5 // pred_check_branch
      %180 = sbr.rel (%p177) target = $region32
    $region31: #{foldingnet_forward.9} parent=5 // pred_region
      %s181 = ssub.s32 %s9, 1
      %s182 = smul.u32 8, %s19
      %p183 = scmp.lt.s32.totalorder %s18, 1
      %s184 = scalar_select %p183, %s18, 1
      %p185 = scmp.lt.s32.totalorder %s182, 7
      %s186 = scalar_select %p185, %s182, 7
      %s187 = smul.addr %s184, 8
      %s188 = sadd.s32 %s186, %s187
      %s189 = smul.addr %s188, 8
      %s190 = scalar_lea.vmem %s0, %s189
      %p191 = pneg %p49
      %p192 = pneg %p46
      %p193 = scmp.lt.s32.totalorder %s18, 1
      %s194 = scalar_select %p193, %s18, 1
      %s195 = smul.addr %s194, 8
      %s196 = smul.addr %s195, 8
      %s197 = scalar_lea.vmem %s1, %s196
      %p198 = pneg %p75
      %p199 = pneg %p72
      %p200 = scmp.lt.s32.totalorder %s18, 1
      %s201 = scalar_select %p200, %s18, 1
      %s202 = scalar_lea.vmem %s2, %s201
      %p203 = pneg %p101
      %p204 = pneg %p98
      %p205 = pneg %p129
      %p206 = pneg %p126
      %s207 = smul.u32 8, %s19
      %p208 = scmp.lt.s32.totalorder %s18, 1
      %s209 = scalar_select %p208, %s18, 1
      %p210 = scmp.lt.s32.totalorder %s207, 7
      %s211 = scalar_select %p210, %s207, 7
      %s212 = smul.addr %s209, 8
      %s213 = sadd.s32 %s211, %s212
      %s214 = smul.addr %s213, 8
      %s215 = scalar_lea.vmem %s3, %s214
      %s216 = smul.u32 8, %s19
      %p217 = scmp.lt.s32.totalorder %s18, 1
      %s218 = scalar_select %p217, %s18, 1
      %p219 = scmp.lt.s32.totalorder %s216, 7
      %s220 = scalar_select %p219, %s216, 7
      %s221 = smul.addr %s218, 8
      %s222 = sadd.s32 %s220, %s221
      %s223 = smul.addr %s222, 8
      %s224 = scalar_lea.vmem %s0, %s223
      %s225 = smul.u32 8, %s19
      %p226 = scmp.lt.s32.totalorder %s18, 1
      %s227 = scalar_select %p226, %s18, 1
      %s228 = smul.addr %s227, 8
      %s229 = smul.addr %s228, 8
      %s230 = scalar_lea.vmem %s1, %s229
      %p231 = scmp.lt.s32.totalorder %s18, 1
      %s232 = scalar_select %p231, %s18, 1
      %s233 = scalar_lea.vmem %s2, %s232
      %s234 = smul.u32 8, %s19
      %p235 = scmp.lt.s32.totalorder %s18, 1
      %s236 = scalar_select %p235, %s18, 1
      %p237 = scmp.lt.s32.totalorder %s234, 7
      %s238 = scalar_select %p237, %s234, 7
      %s239 = smul.addr %s236, 8
      %s240 = sadd.s32 %s238, %s239
      %s241 = smul.addr %s240, 8
      %s242 = scalar_lea.vmem %s3, %s241
      %s243 = smul.u32 8, %s19
      %v244 = vld [vmem:[%s224] sm:$0xff]
      %v245 = vld [vmem:[%s224 + $0x8] sm:$0xff]
      %v246 = vld [vmem:[%s224 + $0x10] sm:$0xff]
      %v247 = vld [vmem:[%s224 + $0x18] sm:$0xff]
      %v248 = vld [vmem:[%s224 + $0x20] sm:$0xff]
      %v249 = vld [vmem:[%s224 + $0x28] sm:$0xff]
      %v250 = vld [vmem:[%s224 + $0x30] sm:$0xff]
      %v251 = vld [vmem:[%s224 + $0x38] sm:$0xff]
      %v252 = vld [vmem:[%s230] sm:$0xff]
      %v253 = vld [vmem:[%s230 + $0x8] sm:$0xff]
      %v254 = vld [vmem:[%s230 + $0x10] sm:$0xff]
      %v255 = vld [vmem:[%s230 + $0x18] sm:$0xff]
      %v256 = vld [vmem:[%s230 + $0x20] sm:$0xff]
      %v257 = vld [vmem:[%s230 + $0x28] sm:$0xff]
      %v258 = vld [vmem:[%s230 + $0x30] sm:$0xff]
      %v259 = vld [vmem:[%s230 + $0x38] sm:$0xff]
      %v260 = vmul.f32 %v244, %v244
      %v261 = vmul.f32 %v245, %v245
      %v262 = vmul.f32 %v246, %v246
      %v263 = vmul.f32 %v247, %v247
      %v264 = vmul.f32 %v248, %v248
      %v265 = vmul.f32 %v249, %v249
      %v266 = vmul.f32 %v250, %v250
      %v267 = vmul.f32 %v251, %v251
      %vm268 = vcmask 523264
      %v269 = vsel %vm268, %v260, 0.0
      %270 = vadd.xlane.f32.xlu0 %v269
      %v271 = vpop.xlane.xlu0 %270
      %v272 = vsel %vm268, %v261, 0.0
      %273 = vadd.xlane.f32.xlu0 %v272
      %v274 = vpop.xlane.xlu0 %273
      %v275 = vsel %vm268, %v262, 0.0
      %276 = vadd.xlane.f32.xlu0 %v275
      %v277 = vpop.xlane.xlu0 %276
      %v278 = vsel %vm268, %v263, 0.0
      %279 = vadd.xlane.f32.xlu0 %v278
      %v280 = vpop.xlane.xlu0 %279
      %v281 = vsel %vm268, %v264, 0.0
      %282 = vadd.xlane.f32.xlu0 %v281
      %v283 = vpop.xlane.xlu0 %282
      %v284 = vsel %vm268, %v265, 0.0
      %285 = vadd.xlane.f32.xlu0 %v284
      %v286 = vpop.xlane.xlu0 %285
      %v287 = vsel %vm268, %v266, 0.0
      %288 = vadd.xlane.f32.xlu0 %v287
      %v289 = vpop.xlane.xlu0 %288
      %v290 = vsel %vm268, %v267, 0.0
      %291 = vadd.xlane.f32.xlu0 %v290
      %v292 = vpop.xlane.xlu0 %291
      %v294 = vsel %vm268, %v244, 0
      %v297 = vsel %vm268, %v245, 0
      %v300 = vsel %vm268, %v246, 0
      %v303 = vsel %vm268, %v247, 0
      %v306 = vsel %vm268, %v248, 0
      %v309 = vsel %vm268, %v249, 0
      %v312 = vsel %vm268, %v250, 0
      %v315 = vsel %vm268, %v251, 0
      %v318 = vsel %vm268, %v252, 0
      %v321 = vsel %vm268, %v253, 0
      %v324 = vsel %vm268, %v254, 0
      %v327 = vsel %vm268, %v255, 0
      %v330 = vsel %vm268, %v256, 0
      %v333 = vsel %vm268, %v257, 0
      %v336 = vsel %vm268, %v258, 0
      %v339 = vsel %vm268, %v259, 0
      %341 = vmatpush.xpose.msra.mxu0 0.0
      %342 = vmatpush.xpose.msra.mxu0 0.0
      %343 = vmatpush.xpose.msra.mxu0 0.0
      %344 = vmatpush.xpose.msra.mxu0 0.0
      %345 = vmatpush.xpose.msra.mxu0 0.0
      %346 = vmatpush.xpose.msra.mxu0 0.0
      %347 = vmatpush.xpose.msra.mxu0 0.0
      %348 = vmatpush.xpose.msra.mxu0 0.0
      %349 = vmatpush.xpose.msra.mxu0 %v339
      %350 = vmatpush.xpose.msra.mxu0 %v336
      %351 = vmatpush.xpose.msra.mxu0 %v333
      %352 = vmatpush.xpose.msra.mxu0 %v330
      %353 = vmatpush.xpose.msra.mxu0 %v327
      %354 = vmatpush.xpose.msra.mxu0 %v324
      %355 = vmatpush.xpose.msra.mxu0 %v321
      %356 = vmatpush.xpose.msra.mxu0 %v318
      %357 = vmatmul.f32.gmra.mxu0 %v294
      %v358 = vpop.f32.mrf.mxu0
      %v359 = vadd.f32 0.0, %v358
      %360 = vmatmul.f32.gmra.mxu0 %v297
      %v361 = vpop.f32.mrf.mxu0
      %v362 = vadd.f32 0.0, %v361
      %363 = vmatmul.f32.gmra.mxu0 %v300
      %v364 = vpop.f32.mrf.mxu0
      %v365 = vadd.f32 0.0, %v364
      %366 = vmatmul.f32.gmra.mxu0 %v303
      %v367 = vpop.f32.mrf.mxu0
      %v368 = vadd.f32 0.0, %v367
      %369 = vmatmul.f32.gmra.mxu0 %v306
      %v370 = vpop.f32.mrf.mxu0
      %v371 = vadd.f32 0.0, %v370
      %372 = vmatmul.f32.gmra.mxu0 %v309
      %v373 = vpop.f32.mrf.mxu0
      %v374 = vadd.f32 0.0, %v373
      %375 = vmatmul.f32.gmra.mxu0 %v312
      %v376 = vpop.f32.mrf.mxu0
      %v377 = vadd.f32 0.0, %v376
      %378 = vmatmul.f32.gmra.mxu0 %v315
      %v379 = vpop.f32.mrf.mxu0
      %v380 = vadd.f32 0.0, %v379
      %381 = vdwg.mxu0
      %v382 = vmul.f32 %v359, 2.0
      %v383 = vmul.f32 %v362, 2.0
      %v384 = vmul.f32 %v365, 2.0
      %v385 = vmul.f32 %v368, 2.0
      %v386 = vmul.f32 %v371, 2.0
      %v387 = vmul.f32 %v374, 2.0
      %v388 = vmul.f32 %v377, 2.0
      %v389 = vmul.f32 %v380, 2.0
      %v390 = vsub.f32 %v382, %v271
      %v391 = vsub.f32 %v383, %v274
      %v392 = vsub.f32 %v384, %v277
      %v393 = vsub.f32 %v385, %v280
      %v394 = vsub.f32 %v386, %v283
      %v395 = vsub.f32 %v387, %v286
      %v396 = vsub.f32 %v388, %v289
      %v397 = vsub.f32 %v389, %v292
      %v398 = vld [vmem:[%s233] sm:$0x1]
      %v400 = vperm.slane %v398, 0
      %v402 = vsub.f32 %v390, %v400
      %v403 = vsub.f32 %v391, %v400
      %v404 = vsub.f32 %v392, %v400
      %v405 = vsub.f32 %v393, %v400
      %v406 = vsub.f32 %v394, %v400
      %v407 = vsub.f32 %v395, %v400
      %v408 = vsub.f32 %v396, %v400
      %v409 = vsub.f32 %v397, %v400
      %410 = vst.msk [vmem:[%s242] sm:$0xff] %vm268, %v402
      %411 = vst.msk [vmem:[%s242 + $0x8] sm:$0xff] %vm268, %v403
      %412 = vst.msk [vmem:[%s242 + $0x10] sm:$0xff] %vm268, %v404
      %413 = vst.msk [vmem:[%s242 + $0x18] sm:$0xff] %vm268, %v405
      %414 = vst.msk [vmem:[%s242 + $0x20] sm:$0xff] %vm268, %v406
      %415 = vst.msk [vmem:[%s242 + $0x28] sm:$0xff] %vm268, %v407
      %416 = vst.msk [vmem:[%s242 + $0x30] sm:$0xff] %vm268, %v408
      %417 = vst.msk [vmem:[%s242 + $0x38] sm:$0xff] %vm268, %v409
      %s418 = smul.u32 8, %s19
      %p419 = scmp.lt.s32.totalorder %s18, 1
      %s420 = scalar_select %p419, %s18, 1
      %p421 = scmp.lt.s32.totalorder %s418, 7
      %s422 = scalar_select %p421, %s418, 7
      %s423 = smul.addr %s420, 8
      %s424 = sadd.s32 %s422, %s423
      %s425 = smul.addr %s424, 8
      %s426 = scalar_lea.vmem %s3, %s425
      // Predicated region
      $region33: #{foldingnet_forward.9} parent=31 // pred_check
        %p427 = pneg %p126
      $region34: #{foldingnet_forward.9} parent=31 // pred_check_branch
        %429 = sbr.rel (%p427) target = $region36
      $region35: #{foldingnet_forward.9} parent=31 // pred_region
        %s430 = smul.u32 8, %s19
      $region36: #{foldingnet_forward.9} parent=31 // pred_fallthru
        _
    $region32: #{foldingnet_forward.9} parent=5 // pred_fallthru
      _
    %p431 = scmp.le.s32.totalorder 2, %s9
    // Predicated region
    $region37: #{foldingnet_forward.9} parent=5 // pred_check
      %p432 = pneg %p431
    $region38: #{foldingnet_forward.9} parent=5 // pred_check_branch
      %434 = sbr.rel (%p432) target = $region40
    $region39: #{foldingnet_forward.9} parent=5 // pred_region
      %s435 = ssub.s32 %s9, 2
      // Predicated region
      $region41: #{foldingnet_forward.9} parent=39 // pred_check
        %p436 = pneg %p132
      $region42: #{foldingnet_forward.9} parent=39 // pred_check_branch
        %438 = sbr.rel (%p436) target = $region44
      $region43: #{foldingnet_forward.9} parent=39 // pred_region
        %s439 = smul.u32 8, %s21
        %p440 = scmp.lt.s32.totalorder %s20, 1
        %s441 = scalar_select %p440, %s20, 1
        %p442 = scmp.lt.s32.totalorder %s439, 7
        %s443 = scalar_select %p442, %s439, 7
        %s444 = smul.addr %s441, 8
        %s445 = sadd.s32 %s443, %s444
        %s446 = smul.addr %s445, 8
        %s447 = scalar_lea.vmem %s3, %s446
      $region44: #{foldingnet_forward.9} parent=39 // pred_fallthru
        _
    $region40: #{foldingnet_forward.9} parent=5 // pred_fallthru
      _
  $region6: #{foldingnet_forward.9} parent=0 // loop_footer
    %s13 = sadd.s32 1, %s9
  $region7: #{foldingnet_forward.9} parent=0 // loop_footer_branch
    %8 = sbr.rel target = $region3
  $region8: #{foldingnet_forward.9} parent=0 // loop_exit
    _

// kernel: foldingnet_forward.8
$region0: #{foldingnet_forward.8}
  #allocation0 [shape = 'u32[]', space=smem, size = 0x4, offset = 0x4, fixed_abs, tag = 'smem constant byte address 0x4 - core index']
  #allocation1 [shape = 'u32[72,128]{1,0:T(1,128)}', space=vmem, size = 0x9000, scoped, tag = 'internal scratch']
  %s0 = inlined_call_operand.vmem [shape: f32[2,64,12], index: 0, kind: input, shape index: {}]
  %s1 = inlined_call_operand.vmem [shape: f32[2,1,64], index: 1, kind: input, shape index: {}]
  %s2 = inlined_call_operand.vmem [shape: bf16[12,64], index: 2, kind: input, shape index: {}]
  %s3 = inlined_call_operand.vmem [shape: f32[1,64], index: 3, kind: input, shape index: {}]
  %s4 = inlined_call_operand.vmem [shape: f32[1,64], index: 4, kind: input, shape index: {}]
  %s5 = inlined_call_operand.vmem [shape: bf16[64,64], index: 5, kind: input, shape index: {}]
  %s6 = inlined_call_operand.vmem [shape: f32[1,64], index: 6, kind: input, shape index: {}]
  %s7 = inlined_call_operand.vmem [shape: bf16[64,64], index: 7, kind: input, shape index: {}]
  %s8 = inlined_call_operand.vmem [shape: f32[1,64], index: 8, kind: input, shape index: {}]
  %s9 = inlined_call_operand.vmem [shape: f32[1,64], index: 9, kind: input, shape index: {}]
  %s10 = inlined_call_operand.vmem [shape: f32[2,64,64], index: 10, kind: output, shape index: {}]
  %s11 = sld [smem:[#allocation0]]
  $region73: #{foldingnet_forward.8} parent=0
    _
  %s13 = ssub.s32 1, %s11
  %s14 = scalar_select 0, %s13, %s11
  loop: start=0, step=1, limit=4
  $region2: #{foldingnet_forward.8} parent=0 // loop_pre_header
    _
  $region3: #{foldingnet_forward.8} parent=0 // loop_header
    %s16 = sphi 0, %s20
    %p17 = scmp.ge.s32.totalorder %s16, 4
    %s23 = sphi 0, %s35
    %s24 = sphi 0, %s31
    %s25 = sphi 0, %s23
    %s26 = sphi 0, %s24
    %s27 = sphi 0, %s25
    %s28 = sphi 0, %s26
    %s40 = sphi 0, %s42
    %s43 = sphi 0, %s40
    %s44 = sphi 0, %s43
    %s60 = sphi 0, %s44
    %s66 = sphi 0, %s68
    %s69 = sphi 0, %s66
    %s70 = sphi 0, %s69
    %s86 = sphi 0, %s70
    %s90 = sphi 0, %s90
    %s92 = sphi 0, %s90
    %s93 = sphi 0, %s92
    %s107 = sphi 0, %s93
    %s111 = sphi 0, %s111
    %s113 = sphi 0, %s111
    %s114 = sphi 0, %s113
    %s128 = sphi 0, %s114
    %s132 = sphi 0, %s132
    %s134 = sphi 0, %s132
    %s135 = sphi 0, %s134
    %s149 = sphi 0, %s135
    %s153 = sphi 0, %s153
    %s155 = sphi 0, %s153
    %s156 = sphi 0, %s155
    %s170 = sphi 0, %s156
    %s174 = sphi 0, %s174
    %s176 = sphi 0, %s174
    %s177 = sphi 0, %s176
    %s191 = sphi 0, %s177
    %s195 = sphi 0, %s195
    %s197 = sphi 0, %s195
    %s198 = sphi 0, %s197
    %s212 = sphi 0, %s198
    %s216 = sphi 0, %s216
    %s218 = sphi 0, %s216
    %s219 = sphi 0, %s218
    %s233 = sphi 0, %s219
    %s237 = sphi 0, %s237
    %s239 = sphi 0, %s237
    %s240 = sphi 0, %s239
    %s254 = sphi 0, %s240
    %s262 = sphi 0, %s264
    %s265 = sphi 0, %s262
    %s266 = sphi 0, %s265
    %s282 = sphi 0, %s266
  $region4: #{foldingnet_forward.8} parent=0 // loop_header_branch
    %19 = sbr.rel (%p17) target = $region8
  $region5: #{foldingnet_forward.8} parent=0 // loop_body
    %s21 = ssub.s32 %s16, 1
    %s22 = ssub.s32 %s16, 2
    %s29 = sadd.s32 1, %s24
    %p30 = scmp.ge.s32.totalorder %s29, 1
    %s31 = scalar_select %p30, 0, %s29
    %s32 = sadd.s32 1, %s23
    %s33 = scalar_select %p30, %s32, %s23
    %p34 = scmp.ge.s32.totalorder %s33, 2
    %s35 = scalar_select %p34, 0, %s33
    %s36 = ssub.s32 %s23, %s35
    %s37 = ssub.s32 %s24, %s31
    %s38 = sor.u32 %s36, %s37
    %p39 = scmp.eq.s32.totalorder %s38, 0
    %s41 = sadd.s32 %s40, 1
    %s42 = scalar_select %p39, %s40, %s41
    %p45 = pneg %p39
    %p46 = scmp.eq.s32.totalorder %s16, 1
    %p47 = por %p45, %p46
    %p48 = scmp.ne.s32.totalorder %s40, %s43
    %p49 = scmp.eq.s32.totalorder %s16, 0
    %p50 = por %p48, %p49
    %p51 = scmp.ne.s32.totalorder %s40, %s43
    %p52 = scmp.eq.s32.totalorder %s21, 1
    %p53 = por %p51, %p52
    %p54 = scmp.ne.s32.totalorder %s43, %s44
    %p55 = scmp.eq.s32.totalorder %s21, 0
    %p56 = por %p54, %p55
    %p57 = scmp.ne.s32.totalorder %s43, %s44
    %p58 = scmp.eq.s32.totalorder %s22, 1
    %p59 = por %p57, %p58
    %p61 = scmp.ne.s32.totalorder %s44, %s60
    %p62 = scmp.eq.s32.totalorder %s22, 0
    %p63 = por %p61, %p62
    %s64 = ssub.s32 %s23, %s35
    %p65 = scmp.eq.s32.totalorder %s64, 0
    %s67 = sadd.s32 %s66, 1
    %s68 = scalar_select %p65, %s66, %s67
    %p71 = pneg %p65
    %p72 = scmp.eq.s32.totalorder %s16, 1
    %p73 = por %p71, %p72
    %p74 = scmp.ne.s32.totalorder %s66, %s69
    %p75 = scmp.eq.s32.totalorder %s16, 0
    %p76 = por %p74, %p75
    %p77 = scmp.ne.s32.totalorder %s66, %s69
    %p78 = scmp.eq.s32.totalorder %s21, 1
    %p79 = por %p77, %p78
    %p80 = scmp.ne.s32.totalorder %s69, %s70
    %p81 = scmp.eq.s32.totalorder %s21, 0
    %p82 = por %p80, %p81
    %p83 = scmp.ne.s32.totalorder %s69, %s70
    %p84 = scmp.eq.s32.totalorder %s22, 1
    %p85 = por %p83, %p84
    %p87 = scmp.ne.s32.totalorder %s70, %s86
    %p88 = scmp.eq.s32.totalorder %s22, 0
    %p89 = por %p87, %p88
    %s91 = sadd.s32 %s90, 1
    %p94 = scmp.eq.s32.totalorder %s16, 1
    %p95 = scmp.ne.s32.totalorder %s90, %s92
    %p96 = scmp.eq.s32.totalorder %s16, 0
    %p97 = por %p95, %p96
    %p98 = scmp.ne.s32.totalorder %s90, %s92
    %p99 = scmp.eq.s32.totalorder %s21, 1
    %p100 = por %p98, %p99
    %p101 = scmp.ne.s32.totalorder %s92, %s93
    %p102 = scmp.eq.s32.totalorder %s21, 0
    %p103 = por %p101, %p102
    %p104 = scmp.ne.s32.totalorder %s92, %s93
    %p105 = scmp.eq.s32.totalorder %s22, 1
    %p106 = por %p104, %p105
    %p108 = scmp.ne.s32.totalorder %s93, %s107
    %p109 = scmp.eq.s32.totalorder %s22, 0
    %p110 = por %p108, %p109
    %s112 = sadd.s32 %s111, 1
    %p115 = scmp.eq.s32.totalorder %s16, 1
    %p116 = scmp.ne.s32.totalorder %s111, %s113
    %p117 = scmp.eq.s32.totalorder %s16, 0
    %p118 = por %p116, %p117
    %p119 = scmp.ne.s32.totalorder %s111, %s113
    %p120 = scmp.eq.s32.totalorder %s21, 1
    %p121 = por %p119, %p120
    %p122 = scmp.ne.s32.totalorder %s113, %s114
    %p123 = scmp.eq.s32.totalorder %s21, 0
    %p124 = por %p122, %p123
    %p125 = scmp.ne.s32.totalorder %s113, %s114
    %p126 = scmp.eq.s32.totalorder %s22, 1
    %p127 = por %p125, %p126
    %p129 = scmp.ne.s32.totalorder %s114, %s128
    %p130 = scmp.eq.s32.totalorder %s22, 0
    %p131 = por %p129, %p130
    %s133 = sadd.s32 %s132, 1
    %p136 = scmp.eq.s32.totalorder %s16, 1
    %p137 = scmp.ne.s32.totalorder %s132, %s134
    %p138 = scmp.eq.s32.totalorder %s16, 0
    %p139 = por %p137, %p138
    %p140 = scmp.ne.s32.totalorder %s132, %s134
    %p141 = scmp.eq.s32.totalorder %s21, 1
    %p142 = por %p140, %p141
    %p143 = scmp.ne.s32.totalorder %s134, %s135
    %p144 = scmp.eq.s32.totalorder %s21, 0
    %p145 = por %p143, %p144
    %p146 = scmp.ne.s32.totalorder %s134, %s135
    %p147 = scmp.eq.s32.totalorder %s22, 1
    %p148 = por %p146, %p147
    %p150 = scmp.ne.s32.totalorder %s135, %s149
    %p151 = scmp.eq.s32.totalorder %s22, 0
    %p152 = por %p150, %p151
    %s154 = sadd.s32 %s153, 1
    %p157 = scmp.eq.s32.totalorder %s16, 1
    %p158 = scmp.ne.s32.totalorder %s153, %s155
    %p159 = scmp.eq.s32.totalorder %s16, 0
    %p160 = por %p158, %p159
    %p161 = scmp.ne.s32.totalorder %s153, %s155
    %p162 = scmp.eq.s32.totalorder %s21, 1
    %p163 = por %p161, %p162
    %p164 = scmp.ne.s32.totalorder %s155, %s156
    %p165 = scmp.eq.s32.totalorder %s21, 0
    %p166 = por %p164, %p165
    %p167 = scmp.ne.s32.totalorder %s155, %s156
    %p168 = scmp.eq.s32.totalorder %s22, 1
    %p169 = por %p167, %p168
    %p171 = scmp.ne.s32.totalorder %s156, %s170
    %p172 = scmp.eq.s32.totalorder %s22, 0
    %p173 = por %p171, %p172
    %s175 = sadd.s32 %s174, 1
    %p178 = scmp.eq.s32.totalorder %s16, 1
    %p179 = scmp.ne.s32.totalorder %s174, %s176
    %p180 = scmp.eq.s32.totalorder %s16, 0
    %p181 = por %p179, %p180
    %p182 = scmp.ne.s32.totalorder %s174, %s176
    %p183 = scmp.eq.s32.totalorder %s21, 1
    %p184 = por %p182, %p183
    %p185 = scmp.ne.s32.totalorder %s176, %s177
    %p186 = scmp.eq.s32.totalorder %s21, 0
    %p187 = por %p185, %p186
    %p188 = scmp.ne.s32.totalorder %s176, %s177
    %p189 = scmp.eq.s32.totalorder %s22, 1
    %p190 = por %p188, %p189
    %p192 = scmp.ne.s32.totalorder %s177, %s191
    %p193 = scmp.eq.s32.totalorder %s22, 0
    %p194 = por %p192, %p193
    %s196 = sadd.s32 %s195, 1
    %p199 = scmp.eq.s32.totalorder %s16, 1
    %p200 = scmp.ne.s32.totalorder %s195, %s197
    %p201 = scmp.eq.s32.totalorder %s16, 0
    %p202 = por %p200, %p201
    %p203 = scmp.ne.s32.totalorder %s195, %s197
    %p204 = scmp.eq.s32.totalorder %s21, 1
    %p205 = por %p203, %p204
    %p206 = scmp.ne.s32.totalorder %s197, %s198
    %p207 = scmp.eq.s32.totalorder %s21, 0
    %p208 = por %p206, %p207
    %p209 = scmp.ne.s32.totalorder %s197, %s198
    %p210 = scmp.eq.s32.totalorder %s22, 1
    %p211 = por %p209, %p210
    %p213 = scmp.ne.s32.totalorder %s198, %s212
    %p214 = scmp.eq.s32.totalorder %s22, 0
    %p215 = por %p213, %p214
    %s217 = sadd.s32 %s216, 1
    %p220 = scmp.eq.s32.totalorder %s16, 1
    %p221 = scmp.ne.s32.totalorder %s216, %s218
    %p222 = scmp.eq.s32.totalorder %s16, 0
    %p223 = por %p221, %p222
    %p224 = scmp.ne.s32.totalorder %s216, %s218
    %p225 = scmp.eq.s32.totalorder %s21, 1
    %p226 = por %p224, %p225
    %p227 = scmp.ne.s32.totalorder %s218, %s219
    %p228 = scmp.eq.s32.totalorder %s21, 0
    %p229 = por %p227, %p228
    %p230 = scmp.ne.s32.totalorder %s218, %s219
    %p231 = scmp.eq.s32.totalorder %s22, 1
    %p232 = por %p230, %p231
    %p234 = scmp.ne.s32.totalorder %s219, %s233
    %p235 = scmp.eq.s32.totalorder %s22, 0
    %p236 = por %p234, %p235
    %s238 = sadd.s32 %s237, 1
    %p241 = scmp.eq.s32.totalorder %s16, 1
    %p242 = scmp.ne.s32.totalorder %s237, %s239
    %p243 = scmp.eq.s32.totalorder %s16, 0
    %p244 = por %p242, %p243
    %p245 = scmp.ne.s32.totalorder %s237, %s239
    %p246 = scmp.eq.s32.totalorder %s21, 1
    %p247 = por %p245, %p246
    %p248 = scmp.ne.s32.totalorder %s239, %s240
    %p249 = scmp.eq.s32.totalorder %s21, 0
    %p250 = por %p248, %p249
    %p251 = scmp.ne.s32.totalorder %s239, %s240
    %p252 = scmp.eq.s32.totalorder %s22, 1
    %p253 = por %p251, %p252
    %p255 = scmp.ne.s32.totalorder %s240, %s254
    %p256 = scmp.eq.s32.totalorder %s22, 0
    %p257 = por %p255, %p256
    %s258 = ssub.s32 %s23, %s35
    %s259 = ssub.s32 %s24, %s31
    %s260 = sor.u32 %s258, %s259
    %p261 = scmp.eq.s32.totalorder %s260, 0
    %s263 = sadd.s32 %s262, 1
    %s264 = scalar_select %p261, %s262, %s263
    %p267 = pneg %p261
    %p268 = scmp.eq.s32.totalorder %s16, 1
    %p269 = por %p267, %p268
    %p270 = scmp.ne.s32.totalorder %s262, %s265
    %p271 = scmp.eq.s32.totalorder %s16, 0
    %p272 = por %p270, %p271
    %p273 = scmp.ne.s32.totalorder %s262, %s265
    %p274 = scmp.eq.s32.totalorder %s21, 1
    %p275 = por %p273, %p274
    %p276 = scmp.ne.s32.totalorder %s265, %s266
    %p277 = scmp.eq.s32.totalorder %s21, 0
    %p278 = por %p276, %p277
    %p279 = scmp.ne.s32.totalorder %s265, %s266
    %p280 = scmp.eq.s32.totalorder %s22, 1
    %p281 = por %p279, %p280
    %p283 = scmp.ne.s32.totalorder %s266, %s282
    %p284 = scmp.eq.s32.totalorder %s22, 0
    %p285 = por %p283, %p284
    %p286 = scmp.le.s32.totalorder 1, %s16
    %p287 = scmp.lt.s32.totalorder %s16, 3
    %p288 = pnand %p286, %p287
    %p289 = pneg %p288
    // Predicated region
    $region9: #{foldingnet_forward.8} parent=5 // pred_check
      _
    $region10: #{foldingnet_forward.8} parent=5 // pred_check_branch
      %291 = sbr.rel (%p288) target = $region12
    $region11: #{foldingnet_forward.8} parent=5 // pred_region
      %s292 = ssub.s32 %s16, 1
      // Predicated region
      $region13: #{foldingnet_forward.8} parent=11 // pred_check
        %p293 = pneg %p103
      $region14: #{foldingnet_forward.8} parent=11 // pred_check_branch
        %295 = sbr.rel (%p293) target = $region16
      $region15: #{foldingnet_forward.8} parent=11 // pred_region
        _
      $region16: #{foldingnet_forward.8} parent=11 // pred_fallthru
        _
      // Predicated region
      $region17: #{foldingnet_forward.8} parent=11 // pred_check
        %p296 = pneg %p124
      $region18: #{foldingnet_forward.8} parent=11 // pred_check_branch
        %298 = sbr.rel (%p296) target = $region20
      $region19: #{foldingnet_forward.8} parent=11 // pred_region
        _
      $region20: #{foldingnet_forward.8} parent=11 // pred_fallthru
        _
      // Predicated region
      $region21: #{foldingnet_forward.8} parent=11 // pred_check
        %p299 = pneg %p145
      $region22: #{foldingnet_forward.8} parent=11 // pred_check_branch
        %301 = sbr.rel (%p299) target = $region24
      $region23: #{foldingnet_forward.8} parent=11 // pred_region
        _
      $region24: #{foldingnet_forward.8} parent=11 // pred_fallthru
        _
      // Predicated region
      $region25: #{foldingnet_forward.8} parent=11 // pred_check
        %p302 = pneg %p166
      $region26: #{foldingnet_forward.8} parent=11 // pred_check_branch
        %304 = sbr.rel (%p302) target = $region28
      $region27: #{foldingnet_forward.8} parent=11 // pred_region
        _
      $region28: #{foldingnet_forward.8} parent=11 // pred_fallthru
        _
      // Predicated region
      $region29: #{foldingnet_forward.8} parent=11 // pred_check
        %p305 = pneg %p187
      $region30: #{foldingnet_forward.8} parent=11 // pred_check_branch
        %307 = sbr.rel (%p305) target = $region32
      $region31: #{foldingnet_forward.8} parent=11 // pred_region
        _
      $region32: #{foldingnet_forward.8} parent=11 // pred_fallthru
        _
      // Predicated region
      $region33: #{foldingnet_forward.8} parent=11 // pred_check
        %p308 = pneg %p208
      $region34: #{foldingnet_forward.8} parent=11 // pred_check_branch
        %310 = sbr.rel (%p308) target = $region36
      $region35: #{foldingnet_forward.8} parent=11 // pred_region
        _
      $region36: #{foldingnet_forward.8} parent=11 // pred_fallthru
        _
      // Predicated region
      $region37: #{foldingnet_forward.8} parent=11 // pred_check
        %p311 = pneg %p229
      $region38: #{foldingnet_forward.8} parent=11 // pred_check_branch
        %313 = sbr.rel (%p311) target = $region40
      $region39: #{foldingnet_forward.8} parent=11 // pred_region
        _
      $region40: #{foldingnet_forward.8} parent=11 // pred_fallthru
        _
      // Predicated region
      $region41: #{foldingnet_forward.8} parent=11 // pred_check
        %p314 = pneg %p250
      $region42: #{foldingnet_forward.8} parent=11 // pred_check_branch
        %316 = sbr.rel (%p314) target = $region44
      $region43: #{foldingnet_forward.8} parent=11 // pred_region
        _
      $region44: #{foldingnet_forward.8} parent=11 // pred_fallthru
        _
    $region12: #{foldingnet_forward.8} parent=5 // pred_fallthru
      _
    %p317 = scmp.lt.s32.totalorder %s16, 2
    // Predicated region
    $region45: #{foldingnet_forward.8} parent=5 // pred_check
      %p318 = pneg %p317
    $region46: #{foldingnet_forward.8} parent=5 // pred_check_branch
      %320 = sbr.rel (%p318) target = $region48
    $region47: #{foldingnet_forward.8} parent=5 // pred_region
      // Predicated region
      $region49: #{foldingnet_forward.8} parent=47 // pred_check
        %p321 = pneg %p50
      $region50: #{foldingnet_forward.8} parent=47 // pred_check_branch
        %323 = sbr.rel (%p321) target = $region52
      $region51: #{foldingnet_forward.8} parent=47 // pred_region
        %s324 = smul.u32 8, %s24
        %p325 = scmp.lt.s32.totalorder %s23, 1
        %s326 = scalar_select %p325, %s23, 1
        %p327 = scmp.lt.s32.totalorder %s324, 7
        %s328 = scalar_select %p327, %s324, 7
        %s329 = smul.addr %s326, 8
        %s330 = sadd.s32 %s328, %s329
        %s331 = smul.addr %s330, 8
        %s332 = scalar_lea.vmem %s0, %s331
        %s333 = smul.u32 8, %s24
      $region52: #{foldingnet_forward.8} parent=47 // pred_fallthru
        _
      // Predicated region
      $region53: #{foldingnet_forward.8} parent=47 // pred_check
        %p334 = pneg %p76
      $region54: #{foldingnet_forward.8} parent=47 // pred_check_branch
        %336 = sbr.rel (%p334) target = $region56
      $region55: #{foldingnet_forward.8} parent=47 // pred_region
        %p337 = scmp.lt.s32.totalorder %s23, 1
        %s338 = scalar_select %p337, %s23, 1
        %s339 = scalar_lea.vmem %s1, %s338
      $region56: #{foldingnet_forward.8} parent=47 // pred_fallthru
        _
    $region48: #{foldingnet_forward.8} parent=5 // pred_fallthru
      _
    %p340 = scmp.le.s32.totalorder 1, %s16
    %p341 = scmp.lt.s32.totalorder %s16, 3
    %p342 = pnand %p340, %p341
    %p343 = pneg %p342
    // Predicated region
    $region57: #{foldingnet_forward.8} parent=5 // pred_check
      _
    $region58: #{foldingnet_forward.8} parent=5 // pred_check_branch
      %345 = sbr.rel (%p342) target = $region60
    $region59: #{foldingnet_forward.8} parent=5 // pred_region
      %s346 = ssub.s32 %s16, 1
      %s347 = smul.u32 8, %s26
      %p348 = scmp.lt.s32.totalorder %s25, 1
      %s349 = scalar_select %p348, %s25, 1
      %p350 = scmp.lt.s32.totalorder %s347, 7
      %s351 = scalar_select %p350, %s347, 7
      %s352 = smul.addr %s349, 8
      %s353 = sadd.s32 %s351, %s352
      %s354 = smul.addr %s353, 8
      %s355 = scalar_lea.vmem %s0, %s354
      %p356 = pneg %p56
      %p357 = pneg %p53
      %p358 = scmp.lt.s32.totalorder %s25, 1
      %s359 = scalar_select %p358, %s25, 1
      %s360 = scalar_lea.vmem %s1, %s359
      %p361 = pneg %p82
      %p362 = pneg %p79
      %p363 = pneg %p103
      %p364 = pneg %p100
      %p365 = pneg %p124
      %p366 = pneg %p121
      %p367 = pneg %p145
      %p368 = pneg %p142
      %p369 = pneg %p166
      %p370 = pneg %p163
      %p371 = pneg %p187
      %p372 = pneg %p184
      %p373 = pneg %p208
      %p374 = pneg %p205
      %p375 = pneg %p229
      %p376 = pneg %p226
      %p377 = pneg %p250
      %p378 = pneg %p247
      %p379 = pneg %p278
      %p380 = pneg %p275
      %s381 = smul.u32 8, %s26
      %p382 = scmp.lt.s32.totalorder %s25, 1
      %s383 = scalar_select %p382, %s25, 1
      %p384 = scmp.lt.s32.totalorder %s381, 7
      %s385 = scalar_select %p384, %s381, 7
      %s386 = smul.addr %s383, 8
      %s387 = sadd.s32 %s385, %s386
      %s388 = smul.addr %s387, 8
      %s389 = scalar_lea.vmem %s10, %s388
      %s390 = smul.u32 8, %s26
      %p391 = scmp.lt.s32.totalorder %s25, 1
      %s392 = scalar_select %p391, %s25, 1
      %p393 = scmp.lt.s32.totalorder %s390, 7
      %s394 = scalar_select %p393, %s390, 7
      %s395 = smul.addr %s392, 8
      %s396 = sadd.s32 %s394, %s395
      %s397 = smul.addr %s396, 8
      %s398 = scalar_lea.vmem %s0, %s397
      %s399 = smul.u32 8, %s26
      %p400 = scmp.lt.s32.totalorder %s25, 1
      %s401 = scalar_select %p400, %s25, 1
      %s402 = scalar_lea.vmem %s1, %s401
      %s403 = smul.u32 8, %s26
      %p404 = scmp.lt.s32.totalorder %s25, 1
      %s405 = scalar_select %p404, %s25, 1
      %p406 = scmp.lt.s32.totalorder %s403, 7
      %s407 = scalar_select %p406, %s403, 7
      %s408 = smul.addr %s405, 8
      %s409 = sadd.s32 %s407, %s408
      %s410 = smul.addr %s409, 8
      %s411 = scalar_lea.vmem %s10, %s410
      %s412 = smul.u32 8, %s26
      %v414 = vld [vmem:[%s398] sm:$0xff]
      %v415 = vld [vmem:[%s398 + $0x8] sm:$0xff]
      %v416 = vld [vmem:[%s398 + $0x10] sm:$0xff]
      %v417 = vld [vmem:[%s398 + $0x18] sm:$0xff]
      %v418 = vld [vmem:[%s398 + $0x20] sm:$0xff]
      %v419 = vld [vmem:[%s398 + $0x28] sm:$0xff]
      %v420 = vld [vmem:[%s398 + $0x30] sm:$0xff]
      %v421 = vld [vmem:[%s398 + $0x38] sm:$0xff]
      %v422 = vpack.c.bf16 %v415, %v414
      %v423 = vpack.c.bf16 %v417, %v416
      %v424 = vpack.c.bf16 %v419, %v418
      %v425 = vpack.c.bf16 %v421, %v420
      %v426 = vld [vmem:[%s2] sm:$0xf]
      %v427 = vld [vmem:[%s2 + $0x4] sm:$0x3]
      %v430 = vunpack.c.l.b16 %v426
      %v431 = vunpack.c.l.b16 %v427
      %v432 = vpack.c.b16 %v431, %v430
      %vm433 = vcmask 97280
      %v435 = vsel %vm433, %v422, 0
      %v438 = vsel %vm433, %v423, 0
      %v441 = vsel %vm433, %v424, 0
      %v444 = vsel %vm433, %v425, 0
      %vm446 = vcmask 1045504
      %v448 = vsel %vm446, %v432, 0
      %450 = vmatpush.bf16.msra.mxu0 0
      %451 = vmatpush.bf16.msra.mxu0 0
      %452 = vmatpush.bf16.msra.mxu0 0
      %453 = vmatpush.bf16.msra.mxu0 0
      %454 = vmatpush.bf16.msra.mxu0 0
      %455 = vmatpush.bf16.msra.mxu0 0
      %456 = vmatpush.bf16.msra.mxu0 0
      %457 = vmatpush.bf16.msra.mxu0 %v448
      %458 = vmatmul.bf16.gmra.mxu0 %v435
      %v459 = vpop.f32.mrf.mxu0
      %v460 = vadd.f32 0.0, %v459
      %v461 = vpop.f32.mrf.mxu0
      %v462 = vadd.f32 0.0, %v461
      %463 = vmatmul.bf16.gmra.mxu0 %v438
      %v464 = vpop.f32.mrf.mxu0
      %v465 = vadd.f32 0.0, %v464
      %v466 = vpop.f32.mrf.mxu0
      %v467 = vadd.f32 0.0, %v466
      %468 = vmatmul.bf16.gmra.mxu0 %v441
      %v469 = vpop.f32.mrf.mxu0
      %v470 = vadd.f32 0.0, %v469
      %v471 = vpop.f32.mrf.mxu0
      %v472 = vadd.f32 0.0, %v471
      %473 = vmatmul.bf16.gmra.mxu0 %v444
      %v474 = vpop.f32.mrf.mxu0
      %v475 = vadd.f32 0.0, %v474
      %v476 = vpop.f32.mrf.mxu0
      %v477 = vadd.f32 0.0, %v476
      %478 = vdwg.mxu0
      %v479 = vld [vmem:[%s3] sm:$0x1]
      %v481 = vperm.slane %v479, 0
      %v483 = vmul.f32 %v460, %v481
      %v484 = vmul.f32 %v462, %v481
      %v485 = vmul.f32 %v465, %v481
      %v486 = vmul.f32 %v467, %v481
      %v487 = vmul.f32 %v470, %v481
      %v488 = vmul.f32 %v472, %v481
      %v489 = vmul.f32 %v475, %v481
      %v490 = vmul.f32 %v477, %v481
      %v491 = vld [vmem:[%s4] sm:$0x1]
      %v493 = vperm.slane %v491, 0
      %v495 = vadd.f32 %v483, %v493
      %v496 = vadd.f32 %v484, %v493
      %v497 = vadd.f32 %v485, %v493
      %v498 = vadd.f32 %v486, %v493
      %v499 = vadd.f32 %v487, %v493
      %v500 = vadd.f32 %v488, %v493
      %v501 = vadd.f32 %v489, %v493
      %v502 = vadd.f32 %v490, %v493
      %v503 = vmax.f32 %v495, 0.0
      %v504 = vmax.f32 %v496, 0.0
      %v505 = vmax.f32 %v497, 0.0
      %v506 = vmax.f32 %v498, 0.0
      %v507 = vmax.f32 %v499, 0.0
      %v508 = vmax.f32 %v500, 0.0
      %v509 = vmax.f32 %v501, 0.0
      %v510 = vmax.f32 %v502, 0.0
      %v511 = vpack.c.bf16 %v504, %v503
      %v512 = vpack.c.bf16 %v506, %v505
      %v513 = vpack.c.bf16 %v508, %v507
      %v514 = vpack.c.bf16 %v510, %v509
      %v515 = vld [vmem:[%s5] sm:$0xf]
      %v516 = vld [vmem:[%s5 + $0x4] sm:$0xf]
      %v517 = vld [vmem:[%s5 + $0x8] sm:$0xf]
      %v518 = vld [vmem:[%s5 + $0xc] sm:$0xf]
      %v519 = vld [vmem:[%s5 + $0x10] sm:$0xf]
      %v520 = vld [vmem:[%s5 + $0x14] sm:$0xf]
      %v521 = vld [vmem:[%s5 + $0x18] sm:$0xf]
      %v522 = vld [vmem:[%s5 + $0x1c] sm:$0xf]
      %v531 = vunpack.c.l.b16 %v515
      %v532 = vunpack.c.l.b16 %v516
      %v533 = vunpack.c.l.b16 %v517
      %v534 = vunpack.c.l.b16 %v518
      %v535 = vunpack.c.l.b16 %v519
      %v536 = vunpack.c.l.b16 %v520
      %v537 = vunpack.c.l.b16 %v521
      %v538 = vunpack.c.l.b16 %v522
      %v539 = vpack.c.b16 %v532, %v531
      %v540 = vpack.c.b16 %v534, %v533
      %v541 = vpack.c.b16 %v536, %v535
      %v542 = vpack.c.b16 %v538, %v537
      %vm547 = vcmask 523264
      %v549 = vsel %vm547, %v511, 0
      %v552 = vsel %vm547, %v512, 0
      %v555 = vsel %vm547, %v513, 0
      %v558 = vsel %vm547, %v514, 0
      %560 = vmatpush.bf16.msra.mxu0 0
      %561 = vmatpush.bf16.msra.mxu0 0
      %562 = vmatpush.bf16.msra.mxu0 0
      %563 = vmatpush.bf16.msra.mxu0 0
      %564 = vmatpush.bf16.msra.mxu0 %v542
      %565 = vmatpush.bf16.msra.mxu0 %v541
      %566 = vmatpush.bf16.msra.mxu0 %v540
      %567 = vmatpush.bf16.msra.mxu0 %v539
      %568 = vmatmul.bf16.gmra.mxu0 %v549
      %v569 = vpop.f32.mrf.mxu0
      %v570 = vadd.f32 0.0, %v569
      %v571 = vpop.f32.mrf.mxu0
      %v572 = vadd.f32 0.0, %v571
      %573 = vmatmul.bf16.gmra.mxu0 %v552
      %v574 = vpop.f32.mrf.mxu0
      %v575 = vadd.f32 0.0, %v574
      %v576 = vpop.f32.mrf.mxu0
      %v577 = vadd.f32 0.0, %v576
      %578 = vmatmul.bf16.gmra.mxu0 %v555
      %v579 = vpop.f32.mrf.mxu0
      %v580 = vadd.f32 0.0, %v579
      %v581 = vpop.f32.mrf.mxu0
      %v582 = vadd.f32 0.0, %v581
      %583 = vmatmul.bf16.gmra.mxu0 %v558
      %v584 = vpop.f32.mrf.mxu0
      %v585 = vadd.f32 0.0, %v584
      %v586 = vpop.f32.mrf.mxu0
      %v587 = vadd.f32 0.0, %v586
      %588 = vdwg.mxu0
      %v589 = vld [vmem:[%s6] sm:$0x1]
      %v591 = vperm.slane %v589, 0
      %v593 = vmul.f32 %v570, %v591
      %v594 = vmul.f32 %v572, %v591
      %v595 = vmul.f32 %v575, %v591
      %v596 = vmul.f32 %v577, %v591
      %v597 = vmul.f32 %v580, %v591
      %v598 = vmul.f32 %v582, %v591
      %v599 = vmul.f32 %v585, %v591
      %v600 = vmul.f32 %v587, %v591
      %v601 = vld [vmem:[%s402] sm:$0x1]
      %v603 = vperm.slane %v601, 0
      %v605 = vadd.f32 %v593, %v603
      %v606 = vadd.f32 %v594, %v603
      %v607 = vadd.f32 %v595, %v603
      %v608 = vadd.f32 %v596, %v603
      %v609 = vadd.f32 %v597, %v603
      %v610 = vadd.f32 %v598, %v603
      %v611 = vadd.f32 %v599, %v603
      %v612 = vadd.f32 %v600, %v603
      %v613 = vmax.f32 %v605, 0.0
      %v614 = vmax.f32 %v606, 0.0
      %v615 = vmax.f32 %v607, 0.0
      %v616 = vmax.f32 %v608, 0.0
      %v617 = vmax.f32 %v609, 0.0
      %v618 = vmax.f32 %v610, 0.0
      %v619 = vmax.f32 %v611, 0.0
      %v620 = vmax.f32 %v612, 0.0
      %v621 = vpack.c.bf16 %v614, %v613
      %v622 = vpack.c.bf16 %v616, %v615
      %v623 = vpack.c.bf16 %v618, %v617
      %v624 = vpack.c.bf16 %v620, %v619
      %v625 = vld [vmem:[%s7] sm:$0xf]
      %v626 = vld [vmem:[%s7 + $0x4] sm:$0xf]
      %v627 = vld [vmem:[%s7 + $0x8] sm:$0xf]
      %v628 = vld [vmem:[%s7 + $0xc] sm:$0xf]
      %v629 = vld [vmem:[%s7 + $0x10] sm:$0xf]
      %v630 = vld [vmem:[%s7 + $0x14] sm:$0xf]
      %v631 = vld [vmem:[%s7 + $0x18] sm:$0xf]
      %v632 = vld [vmem:[%s7 + $0x1c] sm:$0xf]
      %v641 = vunpack.c.l.b16 %v625
      %v642 = vunpack.c.l.b16 %v626
      %v643 = vunpack.c.l.b16 %v627
      %v644 = vunpack.c.l.b16 %v628
      %v645 = vunpack.c.l.b16 %v629
      %v646 = vunpack.c.l.b16 %v630
      %v647 = vunpack.c.l.b16 %v631
      %v648 = vunpack.c.l.b16 %v632
      %v649 = vpack.c.b16 %v642, %v641
      %v650 = vpack.c.b16 %v644, %v643
      %v651 = vpack.c.b16 %v646, %v645
      %v652 = vpack.c.b16 %v648, %v647
      %v658 = vsel %vm547, %v621, 0
      %v661 = vsel %vm547, %v622, 0
      %v664 = vsel %vm547, %v623, 0
      %v667 = vsel %vm547, %v624, 0
      %669 = vmatpush.bf16.msra.mxu0 0
      %670 = vmatpush.bf16.msra.mxu0 0
      %671 = vmatpush.bf16.msra.mxu0 0
      %672 = vmatpush.bf16.msra.mxu0 0
      %673 = vmatpush.bf16.msra.mxu0 %v652
      %674 = vmatpush.bf16.msra.mxu0 %v651
      %675 = vmatpush.bf16.msra.mxu0 %v650
      %676 = vmatpush.bf16.msra.mxu0 %v649
      %677 = vmatmul.bf16.gmra.mxu0 %v658
      %v678 = vpop.f32.mrf.mxu0
      %v679 = vadd.f32 0.0, %v678
      %v680 = vpop.f32.mrf.mxu0
      %v681 = vadd.f32 0.0, %v680
      %682 = vmatmul.bf16.gmra.mxu0 %v661
      %v683 = vpop.f32.mrf.mxu0
      %v684 = vadd.f32 0.0, %v683
      %v685 = vpop.f32.mrf.mxu0
      %v686 = vadd.f32 0.0, %v685
      %687 = vmatmul.bf16.gmra.mxu0 %v664
      %v688 = vpop.f32.mrf.mxu0
      %v689 = vadd.f32 0.0, %v688
      %v690 = vpop.f32.mrf.mxu0
      %v691 = vadd.f32 0.0, %v690
      %692 = vmatmul.bf16.gmra.mxu0 %v667
      %v693 = vpop.f32.mrf.mxu0
      %v694 = vadd.f32 0.0, %v693
      %v695 = vpop.f32.mrf.mxu0
      %v696 = vadd.f32 0.0, %v695
      %697 = vdwg.mxu0
      %v698 = vld [vmem:[%s8] sm:$0x1]
      %v700 = vperm.slane %v698, 0
      %v702 = vmul.f32 %v679, %v700
      %v703 = vmul.f32 %v681, %v700
      %v704 = vmul.f32 %v684, %v700
      %v705 = vmul.f32 %v686, %v700
      %v706 = vmul.f32 %v689, %v700
      %v707 = vmul.f32 %v691, %v700
      %v708 = vmul.f32 %v694, %v700
      %v709 = vmul.f32 %v696, %v700
      %v710 = vld [vmem:[%s9] sm:$0x1]
      %v712 = vperm.slane %v710, 0
      %v714 = vadd.f32 %v702, %v712
      %v715 = vadd.f32 %v703, %v712
      %v716 = vadd.f32 %v704, %v712
      %v717 = vadd.f32 %v705, %v712
      %v718 = vadd.f32 %v706, %v712
      %v719 = vadd.f32 %v707, %v712
      %v720 = vadd.f32 %v708, %v712
      %v721 = vadd.f32 %v709, %v712
      %v722 = vmax.f32 %v714, 0.0
      %v723 = vmax.f32 %v715, 0.0
      %v724 = vmax.f32 %v716, 0.0
      %v725 = vmax.f32 %v717, 0.0
      %v726 = vmax.f32 %v718, 0.0
      %v727 = vmax.f32 %v719, 0.0
      %v728 = vmax.f32 %v720, 0.0
      %v729 = vmax.f32 %v721, 0.0
      %730 = vst.msk [vmem:[%s411] sm:$0xff] %vm547, %v722
      %731 = vst.msk [vmem:[%s411 + $0x8] sm:$0xff] %vm547, %v723
      %732 = vst.msk [vmem:[%s411 + $0x10] sm:$0xff] %vm547, %v724
      %733 = vst.msk [vmem:[%s411 + $0x18] sm:$0xff] %vm547, %v725
      %734 = vst.msk [vmem:[%s411 + $0x20] sm:$0xff] %vm547, %v726
      %735 = vst.msk [vmem:[%s411 + $0x28] sm:$0xff] %vm547, %v727
      %736 = vst.msk [vmem:[%s411 + $0x30] sm:$0xff] %vm547, %v728
      %737 = vst.msk [vmem:[%s411 + $0x38] sm:$0xff] %vm547, %v729
      %s738 = smul.u32 8, %s26
      %p739 = scmp.lt.s32.totalorder %s25, 1
      %s740 = scalar_select %p739, %s25, 1
      %p741 = scmp.lt.s32.totalorder %s738, 7
      %s742 = scalar_select %p741, %s738, 7
      %s743 = smul.addr %s740, 8
      %s744 = sadd.s32 %s742, %s743
      %s745 = smul.addr %s744, 8
      %s746 = scalar_lea.vmem %s10, %s745
      // Predicated region
      $region61: #{foldingnet_forward.8} parent=59 // pred_check
        %p747 = pneg %p275
      $region62: #{foldingnet_forward.8} parent=59 // pred_check_branch
        %749 = sbr.rel (%p747) target = $region64
      $region63: #{foldingnet_forward.8} parent=59 // pred_region
        %s750 = smul.u32 8, %s26
      $region64: #{foldingnet_forward.8} parent=59 // pred_fallthru
        _
    $region60: #{foldingnet_forward.8} parent=5 // pred_fallthru
      _
    %p751 = scmp.le.s32.totalorder 2, %s16
    // Predicated region
    $region65: #{foldingnet_forward.8} parent=5 // pred_check
      %p752 = pneg %p751
    $region66: #{foldingnet_forward.8} parent=5 // pred_check_branch
      %754 = sbr.rel (%p752) target = $region68
    $region67: #{foldingnet_forward.8} parent=5 // pred_region
      %s755 = ssub.s32 %s16, 2
      // Predicated region
      $region69: #{foldingnet_forward.8} parent=67 // pred_check
        %p756 = pneg %p281
      $region70: #{foldingnet_forward.8} parent=67 // pred_check_branch
        %758 = sbr.rel (%p756) target = $region72
      $region71: #{foldingnet_forward.8} parent=67 // pred_region
        %s759 = smul.u32 8, %s28
        %p760 = scmp.lt.s32.totalorder %s27, 1
        %s761 = scalar_select %p760, %s27, 1
        %p762 = scmp.lt.s32.totalorder %s759, 7
        %s763 = scalar_select %p762, %s759, 7
        %s764 = smul.addr %s761, 8
        %s765 = sadd.s32 %s763, %s764
        %s766 = smul.addr %s765, 8
        %s767 = scalar_lea.vmem %s10, %s766
      $region72: #{foldingnet_forward.8} parent=67 // pred_fallthru
        _
    $region68: #{foldingnet_forward.8} parent=5 // pred_fallthru
      _
  $region6: #{foldingnet_forward.8} parent=0 // loop_footer
    %s20 = sadd.s32 1, %s16
  $region7: #{foldingnet_forward.8} parent=0 // loop_footer_branch
    %15 = sbr.rel target = $region3
  $region8: #{foldingnet_forward.8} parent=0 // loop_exit
    _

// kernel: foldingnet_forward.10
$region0: #{foldingnet_forward.10}
  #allocation0 [shape = 'u32[]', space=smem, size = 0x4, offset = 0x4, fixed_abs, tag = 'smem constant byte address 0x4 - core index']
  #allocation1 [shape = 'u32[72,128]{1,0:T(1,128)}', space=vmem, size = 0x9000, scoped, tag = 'internal scratch']
  %s0 = inlined_call_operand.vmem [shape: f32[128,64], index: 0, kind: input, shape index: {}]
  %s1 = inlined_call_operand.vmem [shape: bf16[64,128], index: 1, kind: input, shape index: {}]
  %s2 = inlined_call_operand.vmem [shape: f32[1,128], index: 2, kind: input, shape index: {}]
  %s3 = inlined_call_operand.vmem [shape: f32[1,128], index: 3, kind: input, shape index: {}]
  %s4 = inlined_call_operand.vmem [shape: f32[128,128], index: 4, kind: output, shape index: {}]
  %s5 = sld [smem:[#allocation0]]
  $region26: #{foldingnet_forward.10} parent=0
    _
  %s7 = ssub.s32 1, %s5
  %s8 = scalar_select 0, %s7, %s5
  // Predicated region
  $region2: #{foldingnet_forward.10} parent=0 // pred_check
    _
  $region3: #{foldingnet_forward.10} parent=0 // pred_check_branch
    %10 = sbr.rel (0) target = $region5
  $region4: #{foldingnet_forward.10} parent=0 // pred_region
    _
  $region5: #{foldingnet_forward.10} parent=0 // pred_fallthru
    _
  // Predicated region
  $region6: #{foldingnet_forward.10} parent=0 // pred_check
    _
  $region7: #{foldingnet_forward.10} parent=0 // pred_check_branch
    %12 = sbr.rel (0) target = $region9
  $region8: #{foldingnet_forward.10} parent=0 // pred_region
    _
  $region9: #{foldingnet_forward.10} parent=0 // pred_fallthru
    _
  // Predicated region
  $region10: #{foldingnet_forward.10} parent=0 // pred_check
    _
  $region11: #{foldingnet_forward.10} parent=0 // pred_check_branch
    %14 = sbr.rel (0) target = $region13
  $region12: #{foldingnet_forward.10} parent=0 // pred_region
    _
  $region13: #{foldingnet_forward.10} parent=0 // pred_fallthru
    _
  // Predicated region
  $region14: #{foldingnet_forward.10} parent=0 // pred_check
    _
  $region15: #{foldingnet_forward.10} parent=0 // pred_check_branch
    %16 = sbr.rel (0) target = $region17
  $region16: #{foldingnet_forward.10} parent=0 // pred_region
    _
  $region17: #{foldingnet_forward.10} parent=0 // pred_fallthru
    _
  %v18 = vld [vmem:[%s0] sm:$0xff]
  %v19 = vld [vmem:[%s0 + $0x8] sm:$0xff]
  %v20 = vld [vmem:[%s0 + $0x10] sm:$0xff]
  %v21 = vld [vmem:[%s0 + $0x18] sm:$0xff]
  %v22 = vld [vmem:[%s0 + $0x20] sm:$0xff]
  %v23 = vld [vmem:[%s0 + $0x28] sm:$0xff]
  %v24 = vld [vmem:[%s0 + $0x30] sm:$0xff]
  %v25 = vld [vmem:[%s0 + $0x38] sm:$0xff]
  %v26 = vld [vmem:[%s0 + $0x40] sm:$0xff]
  %v27 = vld [vmem:[%s0 + $0x48] sm:$0xff]
  %v28 = vld [vmem:[%s0 + $0x50] sm:$0xff]
  %v29 = vld [vmem:[%s0 + $0x58] sm:$0xff]
  %v30 = vld [vmem:[%s0 + $0x60] sm:$0xff]
  %v31 = vld [vmem:[%s0 + $0x68] sm:$0xff]
  %v32 = vld [vmem:[%s0 + $0x70] sm:$0xff]
  %v33 = vld [vmem:[%s0 + $0x78] sm:$0xff]
  %v34 = vld [vmem:[%s1] sm:$0xf]
  %v35 = vld [vmem:[%s1 + $0x4] sm:$0xf]
  %v36 = vld [vmem:[%s1 + $0x8] sm:$0xf]
  %v37 = vld [vmem:[%s1 + $0xc] sm:$0xf]
  %v38 = vld [vmem:[%s1 + $0x10] sm:$0xf]
  %v39 = vld [vmem:[%s1 + $0x14] sm:$0xf]
  %v40 = vld [vmem:[%s1 + $0x18] sm:$0xf]
  %v41 = vld [vmem:[%s1 + $0x1c] sm:$0xf]
  %v42 = vld [vmem:[%s2] sm:$0x1]
  %v43 = vld [vmem:[%s3] sm:$0x1]
  %v44 = vpack.c.bf16 %v19, %v18
  %v45 = vpack.c.bf16 %v21, %v20
  %v46 = vpack.c.bf16 %v23, %v22
  %v47 = vpack.c.bf16 %v25, %v24
  %v48 = vpack.c.bf16 %v27, %v26
  %v49 = vpack.c.bf16 %v29, %v28
  %v50 = vpack.c.bf16 %v31, %v30
  %v51 = vpack.c.bf16 %v33, %v32
  %v60 = vunpack.c.l.b16 %v34
  %v61 = vunpack.c.l.b16 %v35
  %v62 = vunpack.c.l.b16 %v36
  %v63 = vunpack.c.l.b16 %v37
  %v64 = vunpack.c.l.b16 %v38
  %v65 = vunpack.c.l.b16 %v39
  %v66 = vunpack.c.l.b16 %v40
  %v67 = vunpack.c.l.b16 %v41
  %v68 = vpack.c.b16 %v61, %v60
  %v69 = vpack.c.b16 %v63, %v62
  %v70 = vpack.c.b16 %v65, %v64
  %v71 = vpack.c.b16 %v67, %v66
  %vm76 = vcmask 523264
  %v78 = vsel %vm76, %v44, 0
  %v81 = vsel %vm76, %v45, 0
  %v84 = vsel %vm76, %v46, 0
  %v87 = vsel %vm76, %v47, 0
  %v90 = vsel %vm76, %v48, 0
  %v93 = vsel %vm76, %v49, 0
  %v96 = vsel %vm76, %v50, 0
  %v99 = vsel %vm76, %v51, 0
  %101 = vmatpush.bf16.msra.mxu0 0
  %102 = vmatpush.bf16.msra.mxu0 0
  %103 = vmatpush.bf16.msra.mxu0 0
  %104 = vmatpush.bf16.msra.mxu0 0
  %105 = vmatpush.bf16.msra.mxu0 %v71
  %106 = vmatpush.bf16.msra.mxu0 %v70
  %107 = vmatpush.bf16.msra.mxu0 %v69
  %108 = vmatpush.bf16.msra.mxu0 %v68
  %109 = vmatmul.bf16.gmra.mxu0 %v78
  %v110 = vpop.f32.mrf.mxu0
  %v111 = vadd.f32 0.0, %v110
  %v112 = vpop.f32.mrf.mxu0
  %v113 = vadd.f32 0.0, %v112
  %114 = vmatmul.bf16.gmra.mxu0 %v81
  %v115 = vpop.f32.mrf.mxu0
  %v116 = vadd.f32 0.0, %v115
  %v117 = vpop.f32.mrf.mxu0
  %v118 = vadd.f32 0.0, %v117
  %119 = vmatmul.bf16.gmra.mxu0 %v84
  %v120 = vpop.f32.mrf.mxu0
  %v121 = vadd.f32 0.0, %v120
  %v122 = vpop.f32.mrf.mxu0
  %v123 = vadd.f32 0.0, %v122
  %124 = vmatmul.bf16.gmra.mxu0 %v87
  %v125 = vpop.f32.mrf.mxu0
  %v126 = vadd.f32 0.0, %v125
  %v127 = vpop.f32.mrf.mxu0
  %v128 = vadd.f32 0.0, %v127
  %129 = vmatmul.bf16.gmra.mxu0 %v90
  %v130 = vpop.f32.mrf.mxu0
  %v131 = vadd.f32 0.0, %v130
  %v132 = vpop.f32.mrf.mxu0
  %v133 = vadd.f32 0.0, %v132
  %134 = vmatmul.bf16.gmra.mxu0 %v93
  %v135 = vpop.f32.mrf.mxu0
  %v136 = vadd.f32 0.0, %v135
  %v137 = vpop.f32.mrf.mxu0
  %v138 = vadd.f32 0.0, %v137
  %139 = vmatmul.bf16.gmra.mxu0 %v96
  %v140 = vpop.f32.mrf.mxu0
  %v141 = vadd.f32 0.0, %v140
  %v142 = vpop.f32.mrf.mxu0
  %v143 = vadd.f32 0.0, %v142
  %144 = vmatmul.bf16.gmra.mxu0 %v99
  %v145 = vpop.f32.mrf.mxu0
  %v146 = vadd.f32 0.0, %v145
  %v147 = vpop.f32.mrf.mxu0
  %v148 = vadd.f32 0.0, %v147
  %149 = vdwg.mxu0
  %v151 = vperm.slane %v42, 0
  %v153 = vmul.f32 %v111, %v151
  %v154 = vmul.f32 %v113, %v151
  %v155 = vmul.f32 %v116, %v151
  %v156 = vmul.f32 %v118, %v151
  %v157 = vmul.f32 %v121, %v151
  %v158 = vmul.f32 %v123, %v151
  %v159 = vmul.f32 %v126, %v151
  %v160 = vmul.f32 %v128, %v151
  %v161 = vmul.f32 %v131, %v151
  %v162 = vmul.f32 %v133, %v151
  %v163 = vmul.f32 %v136, %v151
  %v164 = vmul.f32 %v138, %v151
  %v165 = vmul.f32 %v141, %v151
  %v166 = vmul.f32 %v143, %v151
  %v167 = vmul.f32 %v146, %v151
  %v168 = vmul.f32 %v148, %v151
  %v170 = vperm.slane %v43, 0
  %v172 = vadd.f32 %v153, %v170
  %v173 = vadd.f32 %v154, %v170
  %v174 = vadd.f32 %v155, %v170
  %v175 = vadd.f32 %v156, %v170
  %v176 = vadd.f32 %v157, %v170
  %v177 = vadd.f32 %v158, %v170
  %v178 = vadd.f32 %v159, %v170
  %v179 = vadd.f32 %v160, %v170
  %v180 = vadd.f32 %v161, %v170
  %v181 = vadd.f32 %v162, %v170
  %v182 = vadd.f32 %v163, %v170
  %v183 = vadd.f32 %v164, %v170
  %v184 = vadd.f32 %v165, %v170
  %v185 = vadd.f32 %v166, %v170
  %v186 = vadd.f32 %v167, %v170
  %v187 = vadd.f32 %v168, %v170
  %v188 = vmul.f32 %v172, 0.01
  %v189 = vmul.f32 %v173, 0.01
  %v190 = vmul.f32 %v174, 0.01
  %v191 = vmul.f32 %v175, 0.01
  %v192 = vmul.f32 %v176, 0.01
  %v193 = vmul.f32 %v177, 0.01
  %v194 = vmul.f32 %v178, 0.01
  %v195 = vmul.f32 %v179, 0.01
  %v196 = vmul.f32 %v180, 0.01
  %v197 = vmul.f32 %v181, 0.01
  %v198 = vmul.f32 %v182, 0.01
  %v199 = vmul.f32 %v183, 0.01
  %v200 = vmul.f32 %v184, 0.01
  %v201 = vmul.f32 %v185, 0.01
  %v202 = vmul.f32 %v186, 0.01
  %v203 = vmul.f32 %v187, 0.01
  %v204 = vmax.f32 %v172, %v188
  %v205 = vmax.f32 %v173, %v189
  %v206 = vmax.f32 %v174, %v190
  %v207 = vmax.f32 %v175, %v191
  %v208 = vmax.f32 %v176, %v192
  %v209 = vmax.f32 %v177, %v193
  %v210 = vmax.f32 %v178, %v194
  %v211 = vmax.f32 %v179, %v195
  %v212 = vmax.f32 %v180, %v196
  %v213 = vmax.f32 %v181, %v197
  %v214 = vmax.f32 %v182, %v198
  %v215 = vmax.f32 %v183, %v199
  %v216 = vmax.f32 %v184, %v200
  %v217 = vmax.f32 %v185, %v201
  %v218 = vmax.f32 %v186, %v202
  %v219 = vmax.f32 %v187, %v203
  %220 = vst [vmem:[%s4] sm:$0xff] %v204
  %221 = vst [vmem:[%s4 + $0x8] sm:$0xff] %v205
  %222 = vst [vmem:[%s4 + $0x10] sm:$0xff] %v206
  %223 = vst [vmem:[%s4 + $0x18] sm:$0xff] %v207
  %224 = vst [vmem:[%s4 + $0x20] sm:$0xff] %v208
  %225 = vst [vmem:[%s4 + $0x28] sm:$0xff] %v209
  %226 = vst [vmem:[%s4 + $0x30] sm:$0xff] %v210
  %227 = vst [vmem:[%s4 + $0x38] sm:$0xff] %v211
  %228 = vst [vmem:[%s4 + $0x40] sm:$0xff] %v212
  %229 = vst [vmem:[%s4 + $0x48] sm:$0xff] %v213
  %230 = vst [vmem:[%s4 + $0x50] sm:$0xff] %v214
  %231 = vst [vmem:[%s4 + $0x58] sm:$0xff] %v215
  %232 = vst [vmem:[%s4 + $0x60] sm:$0xff] %v216
  %233 = vst [vmem:[%s4 + $0x68] sm:$0xff] %v217
  %234 = vst [vmem:[%s4 + $0x70] sm:$0xff] %v218
  %235 = vst [vmem:[%s4 + $0x78] sm:$0xff] %v219
  // Predicated region
  $region18: #{foldingnet_forward.10} parent=0 // pred_check
    _
  $region19: #{foldingnet_forward.10} parent=0 // pred_check_branch
    %237 = sbr.rel (0) target = $region21
  $region20: #{foldingnet_forward.10} parent=0 // pred_region
    _
  $region21: #{foldingnet_forward.10} parent=0 // pred_fallthru
    _
  // Predicated region
  $region22: #{foldingnet_forward.10} parent=0 // pred_check
    _
  $region23: #{foldingnet_forward.10} parent=0 // pred_check_branch
    %239 = sbr.rel (0) target = $region25
  $region24: #{foldingnet_forward.10} parent=0 // pred_region
    _
  $region25: #{foldingnet_forward.10} parent=0 // pred_fallthru
    _

// kernel: foldingnet_forward.11
$region0: #{foldingnet_forward.11}
  #allocation0 [shape = 'u32[]', space=smem, size = 0x4, offset = 0x4, fixed_abs, tag = 'smem constant byte address 0x4 - core index']
  #allocation1 [shape = 'u32[72,128]{1,0:T(1,128)}', space=vmem, size = 0x9000, scoped, tag = 'internal scratch']
  %s0 = inlined_call_operand.vmem [shape: f32[2,64,128], index: 0, kind: input, shape index: {}, may-alias: {0,1}]
  %s1 = inlined_call_operand.vmem [shape: f32[2,64,128], index: 1, kind: input, shape index: {}, may-alias: {0,1}]
  %s2 = inlined_call_operand.vmem [shape: f32[2,1,64], index: 2, kind: input, shape index: {}]
  %s3 = inlined_call_operand.vmem [shape: f32[2,64,64], index: 3, kind: output, shape index: {}]
  %s4 = sld [smem:[#allocation0]]
  $region45: #{foldingnet_forward.11} parent=0
    _
  %s6 = ssub.s32 1, %s4
  %s7 = scalar_select 0, %s6, %s4
  loop: start=0, step=1, limit=4
  $region2: #{foldingnet_forward.11} parent=0 // loop_pre_header
    _
  $region3: #{foldingnet_forward.11} parent=0 // loop_header
    %s9 = sphi 0, %s13
    %p10 = scmp.ge.s32.totalorder %s9, 4
    %s16 = sphi 0, %s28
    %s17 = sphi 0, %s24
    %s18 = sphi 0, %s16
    %s19 = sphi 0, %s17
    %s20 = sphi 0, %s18
    %s21 = sphi 0, %s19
    %s33 = sphi 0, %s35
    %s36 = sphi 0, %s33
    %s37 = sphi 0, %s36
    %s53 = sphi 0, %s37
    %s59 = sphi 0, %s61
    %s62 = sphi 0, %s59
    %s63 = sphi 0, %s62
    %s79 = sphi 0, %s63
    %s85 = sphi 0, %s87
    %s88 = sphi 0, %s85
    %s89 = sphi 0, %s88
    %s105 = sphi 0, %s89
    %s113 = sphi 0, %s115
    %s116 = sphi 0, %s113
    %s117 = sphi 0, %s116
    %s133 = sphi 0, %s117
  $region4: #{foldingnet_forward.11} parent=0 // loop_header_branch
    %12 = sbr.rel (%p10) target = $region8
  $region5: #{foldingnet_forward.11} parent=0 // loop_body
    %s14 = ssub.s32 %s9, 1
    %s15 = ssub.s32 %s9, 2
    %s22 = sadd.s32 1, %s17
    %p23 = scmp.ge.s32.totalorder %s22, 1
    %s24 = scalar_select %p23, 0, %s22
    %s25 = sadd.s32 1, %s16
    %s26 = scalar_select %p23, %s25, %s16
    %p27 = scmp.ge.s32.totalorder %s26, 2
    %s28 = scalar_select %p27, 0, %s26
    %s29 = ssub.s32 %s16, %s28
    %s30 = ssub.s32 %s17, %s24
    %s31 = sor.u32 %s29, %s30
    %p32 = scmp.eq.s32.totalorder %s31, 0
    %s34 = sadd.s32 %s33, 1
    %s35 = scalar_select %p32, %s33, %s34
    %p38 = pneg %p32
    %p39 = scmp.eq.s32.totalorder %s9, 1
    %p40 = por %p38, %p39
    %p41 = scmp.ne.s32.totalorder %s33, %s36
    %p42 = scmp.eq.s32.totalorder %s9, 0
    %p43 = por %p41, %p42
    %p44 = scmp.ne.s32.totalorder %s33, %s36
    %p45 = scmp.eq.s32.totalorder %s14, 1
    %p46 = por %p44, %p45
    %p47 = scmp.ne.s32.totalorder %s36, %s37
    %p48 = scmp.eq.s32.totalorder %s14, 0
    %p49 = por %p47, %p48
    %p50 = scmp.ne.s32.totalorder %s36, %s37
    %p51 = scmp.eq.s32.totalorder %s15, 1
    %p52 = por %p50, %p51
    %p54 = scmp.ne.s32.totalorder %s37, %s53
    %p55 = scmp.eq.s32.totalorder %s15, 0
    %p56 = por %p54, %p55
    %s57 = ssub.s32 %s16, %s28
    %p58 = scmp.eq.s32.totalorder %s57, 0
    %s60 = sadd.s32 %s59, 1
    %s61 = scalar_select %p58, %s59, %s60
    %p64 = pneg %p58
    %p65 = scmp.eq.s32.totalorder %s9, 1
    %p66 = por %p64, %p65
    %p67 = scmp.ne.s32.totalorder %s59, %s62
    %p68 = scmp.eq.s32.totalorder %s9, 0
    %p69 = por %p67, %p68
    %p70 = scmp.ne.s32.totalorder %s59, %s62
    %p71 = scmp.eq.s32.totalorder %s14, 1
    %p72 = por %p70, %p71
    %p73 = scmp.ne.s32.totalorder %s62, %s63
    %p74 = scmp.eq.s32.totalorder %s14, 0
    %p75 = por %p73, %p74
    %p76 = scmp.ne.s32.totalorder %s62, %s63
    %p77 = scmp.eq.s32.totalorder %s15, 1
    %p78 = por %p76, %p77
    %p80 = scmp.ne.s32.totalorder %s63, %s79
    %p81 = scmp.eq.s32.totalorder %s15, 0
    %p82 = por %p80, %p81
    %s83 = ssub.s32 %s16, %s28
    %p84 = scmp.eq.s32.totalorder %s83, 0
    %s86 = sadd.s32 %s85, 1
    %s87 = scalar_select %p84, %s85, %s86
    %p90 = pneg %p84
    %p91 = scmp.eq.s32.totalorder %s9, 1
    %p92 = por %p90, %p91
    %p93 = scmp.ne.s32.totalorder %s85, %s88
    %p94 = scmp.eq.s32.totalorder %s9, 0
    %p95 = por %p93, %p94
    %p96 = scmp.ne.s32.totalorder %s85, %s88
    %p97 = scmp.eq.s32.totalorder %s14, 1
    %p98 = por %p96, %p97
    %p99 = scmp.ne.s32.totalorder %s88, %s89
    %p100 = scmp.eq.s32.totalorder %s14, 0
    %p101 = por %p99, %p100
    %p102 = scmp.ne.s32.totalorder %s88, %s89
    %p103 = scmp.eq.s32.totalorder %s15, 1
    %p104 = por %p102, %p103
    %p106 = scmp.ne.s32.totalorder %s89, %s105
    %p107 = scmp.eq.s32.totalorder %s15, 0
    %p108 = por %p106, %p107
    %s109 = ssub.s32 %s16, %s28
    %s110 = ssub.s32 %s17, %s24
    %s111 = sor.u32 %s109, %s110
    %p112 = scmp.eq.s32.totalorder %s111, 0
    %s114 = sadd.s32 %s113, 1
    %s115 = scalar_select %p112, %s113, %s114
    %p118 = pneg %p112
    %p119 = scmp.eq.s32.totalorder %s9, 1
    %p120 = por %p118, %p119
    %p121 = scmp.ne.s32.totalorder %s113, %s116
    %p122 = scmp.eq.s32.totalorder %s9, 0
    %p123 = por %p121, %p122
    %p124 = scmp.ne.s32.totalorder %s113, %s116
    %p125 = scmp.eq.s32.totalorder %s14, 1
    %p126 = por %p124, %p125
    %p127 = scmp.ne.s32.totalorder %s116, %s117
    %p128 = scmp.eq.s32.totalorder %s14, 0
    %p129 = por %p127, %p128
    %p130 = scmp.ne.s32.totalorder %s116, %s117
    %p131 = scmp.eq.s32.totalorder %s15, 1
    %p132 = por %p130, %p131
    %p134 = scmp.ne.s32.totalorder %s117, %s133
    %p135 = scmp.eq.s32.totalorder %s15, 0
    %p136 = por %p134, %p135
    %p137 = scmp.le.s32.totalorder 1, %s9
    %p138 = scmp.lt.s32.totalorder %s9, 3
    %p139 = pnand %p137, %p138
    %p140 = pneg %p139
    // Predicated region
    $region9: #{foldingnet_forward.11} parent=5 // pred_check
      _
    $region10: #{foldingnet_forward.11} parent=5 // pred_check_branch
      %142 = sbr.rel (%p139) target = $region12
    $region11: #{foldingnet_forward.11} parent=5 // pred_region
      %s143 = ssub.s32 %s9, 1
    $region12: #{foldingnet_forward.11} parent=5 // pred_fallthru
      _
    %p144 = scmp.lt.s32.totalorder %s9, 2
    // Predicated region
    $region13: #{foldingnet_forward.11} parent=5 // pred_check
      %p145 = pneg %p144
    $region14: #{foldingnet_forward.11} parent=5 // pred_check_branch
      %147 = sbr.rel (%p145) target = $region16
    $region15: #{foldingnet_forward.11} parent=5 // pred_region
      // Predicated region
      $region17: #{foldingnet_forward.11} parent=15 // pred_check
        %p148 = pneg %p43
      $region18: #{foldingnet_forward.11} parent=15 // pred_check_branch
        %150 = sbr.rel (%p148) target = $region20
      $region19: #{foldingnet_forward.11} parent=15 // pred_region
        %s151 = smul.u32 8, %s17
        %p152 = scmp.lt.s32.totalorder %s16, 1
        %s153 = scalar_select %p152, %s16, 1
        %p154 = scmp.lt.s32.totalorder %s151, 7
        %s155 = scalar_select %p154, %s151, 7
        %s156 = smul.addr %s153, 8
        %s157 = sadd.s32 %s155, %s156
        %s158 = smul.addr %s157, 8
        %s159 = scalar_lea.vmem %s0, %s158
        %s160 = smul.u32 8, %s17
      $region20: #{foldingnet_forward.11} parent=15 // pred_fallthru
        _
      // Predicated region
      $region21: #{foldingnet_forward.11} parent=15 // pred_check
        %p161 = pneg %p69
      $region22: #{foldingnet_forward.11} parent=15 // pred_check_branch
        %163 = sbr.rel (%p161) target = $region24
      $region23: #{foldingnet_forward.11} parent=15 // pred_region
        %p164 = scmp.lt.s32.totalorder %s16, 1
        %s165 = scalar_select %p164, %s16, 1
        %s166 = smul.addr %s165, 8
        %s167 = smul.addr %s166, 8
        %s168 = scalar_lea.vmem %s1, %s167
      $region24: #{foldingnet_forward.11} parent=15 // pred_fallthru
        _
      // Predicated region
      $region25: #{foldingnet_forward.11} parent=15 // pred_check
        %p169 = pneg %p95
      $region26: #{foldingnet_forward.11} parent=15 // pred_check_branch
        %171 = sbr.rel (%p169) target = $region28
      $region27: #{foldingnet_forward.11} parent=15 // pred_region
        %p172 = scmp.lt.s32.totalorder %s16, 1
        %s173 = scalar_select %p172, %s16, 1
        %s174 = scalar_lea.vmem %s2, %s173
      $region28: #{foldingnet_forward.11} parent=15 // pred_fallthru
        _
    $region16: #{foldingnet_forward.11} parent=5 // pred_fallthru
      _
    %p175 = scmp.le.s32.totalorder 1, %s9
    %p176 = scmp.lt.s32.totalorder %s9, 3
    %p177 = pnand %p175, %p176
    %p178 = pneg %p177
    // Predicated region
    $region29: #{foldingnet_forward.11} parent=5 // pred_check
      _
    $region30: #{foldingnet_forward.11} parent=5 // pred_check_branch
      %180 = sbr.rel (%p177) target = $region32
    $region31: #{foldingnet_forward.11} parent=5 // pred_region
      %s181 = ssub.s32 %s9, 1
      %s182 = smul.u32 8, %s19
      %p183 = scmp.lt.s32.totalorder %s18, 1
      %s184 = scalar_select %p183, %s18, 1
      %p185 = scmp.lt.s32.totalorder %s182, 7
      %s186 = scalar_select %p185, %s182, 7
      %s187 = smul.addr %s184, 8
      %s188 = sadd.s32 %s186, %s187
      %s189 = smul.addr %s188, 8
      %s190 = scalar_lea.vmem %s0, %s189
      %p191 = pneg %p49
      %p192 = pneg %p46
      %p193 = scmp.lt.s32.totalorder %s18, 1
      %s194 = scalar_select %p193, %s18, 1
      %s195 = smul.addr %s194, 8
      %s196 = smul.addr %s195, 8
      %s197 = scalar_lea.vmem %s1, %s196
      %p198 = pneg %p75
      %p199 = pneg %p72
      %p200 = scmp.lt.s32.totalorder %s18, 1
      %s201 = scalar_select %p200, %s18, 1
      %s202 = scalar_lea.vmem %s2, %s201
      %p203 = pneg %p101
      %p204 = pneg %p98
      %p205 = pneg %p129
      %p206 = pneg %p126
      %s207 = smul.u32 8, %s19
      %p208 = scmp.lt.s32.totalorder %s18, 1
      %s209 = scalar_select %p208, %s18, 1
      %p210 = scmp.lt.s32.totalorder %s207, 7
      %s211 = scalar_select %p210, %s207, 7
      %s212 = smul.addr %s209, 8
      %s213 = sadd.s32 %s211, %s212
      %s214 = smul.addr %s213, 8
      %s215 = scalar_lea.vmem %s3, %s214
      %s216 = smul.u32 8, %s19
      %p217 = scmp.lt.s32.totalorder %s18, 1
      %s218 = scalar_select %p217, %s18, 1
      %p219 = scmp.lt.s32.totalorder %s216, 7
      %s220 = scalar_select %p219, %s216, 7
      %s221 = smul.addr %s218, 8
      %s222 = sadd.s32 %s220, %s221
      %s223 = smul.addr %s222, 8
      %s224 = scalar_lea.vmem %s0, %s223
      %s225 = smul.u32 8, %s19
      %p226 = scmp.lt.s32.totalorder %s18, 1
      %s227 = scalar_select %p226, %s18, 1
      %s228 = smul.addr %s227, 8
      %s229 = smul.addr %s228, 8
      %s230 = scalar_lea.vmem %s1, %s229
      %p231 = scmp.lt.s32.totalorder %s18, 1
      %s232 = scalar_select %p231, %s18, 1
      %s233 = scalar_lea.vmem %s2, %s232
      %s234 = smul.u32 8, %s19
      %p235 = scmp.lt.s32.totalorder %s18, 1
      %s236 = scalar_select %p235, %s18, 1
      %p237 = scmp.lt.s32.totalorder %s234, 7
      %s238 = scalar_select %p237, %s234, 7
      %s239 = smul.addr %s236, 8
      %s240 = sadd.s32 %s238, %s239
      %s241 = smul.addr %s240, 8
      %s242 = scalar_lea.vmem %s3, %s241
      %s243 = smul.u32 8, %s19
      %v244 = vld [vmem:[%s224] sm:$0xff]
      %v245 = vld [vmem:[%s224 + $0x8] sm:$0xff]
      %v246 = vld [vmem:[%s224 + $0x10] sm:$0xff]
      %v247 = vld [vmem:[%s224 + $0x18] sm:$0xff]
      %v248 = vld [vmem:[%s224 + $0x20] sm:$0xff]
      %v249 = vld [vmem:[%s224 + $0x28] sm:$0xff]
      %v250 = vld [vmem:[%s224 + $0x30] sm:$0xff]
      %v251 = vld [vmem:[%s224 + $0x38] sm:$0xff]
      %v252 = vld [vmem:[%s230] sm:$0xff]
      %v253 = vld [vmem:[%s230 + $0x8] sm:$0xff]
      %v254 = vld [vmem:[%s230 + $0x10] sm:$0xff]
      %v255 = vld [vmem:[%s230 + $0x18] sm:$0xff]
      %v256 = vld [vmem:[%s230 + $0x20] sm:$0xff]
      %v257 = vld [vmem:[%s230 + $0x28] sm:$0xff]
      %v258 = vld [vmem:[%s230 + $0x30] sm:$0xff]
      %v259 = vld [vmem:[%s230 + $0x38] sm:$0xff]
      %v260 = vmul.f32 %v244, %v244
      %v261 = vmul.f32 %v245, %v245
      %v262 = vmul.f32 %v246, %v246
      %v263 = vmul.f32 %v247, %v247
      %v264 = vmul.f32 %v248, %v248
      %v265 = vmul.f32 %v249, %v249
      %v266 = vmul.f32 %v250, %v250
      %v267 = vmul.f32 %v251, %v251
      %268 = vadd.xlane.f32.xlu0 %v260
      %v269 = vpop.xlane.xlu0 %268
      %270 = vadd.xlane.f32.xlu0 %v261
      %v271 = vpop.xlane.xlu0 %270
      %272 = vadd.xlane.f32.xlu0 %v262
      %v273 = vpop.xlane.xlu0 %272
      %274 = vadd.xlane.f32.xlu0 %v263
      %v275 = vpop.xlane.xlu0 %274
      %276 = vadd.xlane.f32.xlu0 %v264
      %v277 = vpop.xlane.xlu0 %276
      %278 = vadd.xlane.f32.xlu0 %v265
      %v279 = vpop.xlane.xlu0 %278
      %280 = vadd.xlane.f32.xlu0 %v266
      %v281 = vpop.xlane.xlu0 %280
      %282 = vadd.xlane.f32.xlu0 %v267
      %v283 = vpop.xlane.xlu0 %282
      %284 = vmatpush.xpose.msra.mxu0 0.0
      %285 = vmatpush.xpose.msra.mxu0 0.0
      %286 = vmatpush.xpose.msra.mxu0 0.0
      %287 = vmatpush.xpose.msra.mxu0 0.0
      %288 = vmatpush.xpose.msra.mxu0 0.0
      %289 = vmatpush.xpose.msra.mxu0 0.0
      %290 = vmatpush.xpose.msra.mxu0 0.0
      %291 = vmatpush.xpose.msra.mxu0 0.0
      %292 = vmatpush.xpose.msra.mxu0 %v259
      %293 = vmatpush.xpose.msra.mxu0 %v258
      %294 = vmatpush.xpose.msra.mxu0 %v257
      %295 = vmatpush.xpose.msra.mxu0 %v256
      %296 = vmatpush.xpose.msra.mxu0 %v255
      %297 = vmatpush.xpose.msra.mxu0 %v254
      %298 = vmatpush.xpose.msra.mxu0 %v253
      %299 = vmatpush.xpose.msra.mxu0 %v252
      %300 = vmatmul.f32.gmra.mxu0 %v244
      %v301 = vpop.f32.mrf.mxu0
      %v302 = vadd.f32 0.0, %v301
      %303 = vmatmul.f32.gmra.mxu0 %v245
      %v304 = vpop.f32.mrf.mxu0
      %v305 = vadd.f32 0.0, %v304
      %306 = vmatmul.f32.gmra.mxu0 %v246
      %v307 = vpop.f32.mrf.mxu0
      %v308 = vadd.f32 0.0, %v307
      %309 = vmatmul.f32.gmra.mxu0 %v247
      %v310 = vpop.f32.mrf.mxu0
      %v311 = vadd.f32 0.0, %v310
      %312 = vmatmul.f32.gmra.mxu0 %v248
      %v313 = vpop.f32.mrf.mxu0
      %v314 = vadd.f32 0.0, %v313
      %315 = vmatmul.f32.gmra.mxu0 %v249
      %v316 = vpop.f32.mrf.mxu0
      %v317 = vadd.f32 0.0, %v316
      %318 = vmatmul.f32.gmra.mxu0 %v250
      %v319 = vpop.f32.mrf.mxu0
      %v320 = vadd.f32 0.0, %v319
      %321 = vmatmul.f32.gmra.mxu0 %v251
      %v322 = vpop.f32.mrf.mxu0
      %v323 = vadd.f32 0.0, %v322
      %324 = vdwg.mxu0
      %v325 = vmul.f32 %v302, 2.0
      %v326 = vmul.f32 %v305, 2.0
      %v327 = vmul.f32 %v308, 2.0
      %v328 = vmul.f32 %v311, 2.0
      %v329 = vmul.f32 %v314, 2.0
      %v330 = vmul.f32 %v317, 2.0
      %v331 = vmul.f32 %v320, 2.0
      %v332 = vmul.f32 %v323, 2.0
      %v333 = vsub.f32 %v325, %v269
      %v334 = vsub.f32 %v326, %v271
      %v335 = vsub.f32 %v327, %v273
      %v336 = vsub.f32 %v328, %v275
      %v337 = vsub.f32 %v329, %v277
      %v338 = vsub.f32 %v330, %v279
      %v339 = vsub.f32 %v331, %v281
      %v340 = vsub.f32 %v332, %v283
      %v341 = vld [vmem:[%s233] sm:$0x1]
      %v343 = vperm.slane %v341, 0
      %v345 = vsub.f32 %v333, %v343
      %v346 = vsub.f32 %v334, %v343
      %v347 = vsub.f32 %v335, %v343
      %v348 = vsub.f32 %v336, %v343
      %v349 = vsub.f32 %v337, %v343
      %v350 = vsub.f32 %v338, %v343
      %v351 = vsub.f32 %v339, %v343
      %v352 = vsub.f32 %v340, %v343
      %vm353 = vcmask 523264
      %354 = vst.msk [vmem:[%s242] sm:$0xff] %vm353, %v345
      %355 = vst.msk [vmem:[%s242 + $0x8] sm:$0xff] %vm353, %v346
      %356 = vst.msk [vmem:[%s242 + $0x10] sm:$0xff] %vm353, %v347
      %357 = vst.msk [vmem:[%s242 + $0x18] sm:$0xff] %vm353, %v348
      %358 = vst.msk [vmem:[%s242 + $0x20] sm:$0xff] %vm353, %v349
      %359 = vst.msk [vmem:[%s242 + $0x28] sm:$0xff] %vm353, %v350
      %360 = vst.msk [vmem:[%s242 + $0x30] sm:$0xff] %vm353, %v351
      %361 = vst.msk [vmem:[%s242 + $0x38] sm:$0xff] %vm353, %v352
      %s362 = smul.u32 8, %s19
      %p363 = scmp.lt.s32.totalorder %s18, 1
      %s364 = scalar_select %p363, %s18, 1
      %p365 = scmp.lt.s32.totalorder %s362, 7
      %s366 = scalar_select %p365, %s362, 7
      %s367 = smul.addr %s364, 8
      %s368 = sadd.s32 %s366, %s367
      %s369 = smul.addr %s368, 8
      %s370 = scalar_lea.vmem %s3, %s369
      // Predicated region
      $region33: #{foldingnet_forward.11} parent=31 // pred_check
        %p371 = pneg %p126
      $region34: #{foldingnet_forward.11} parent=31 // pred_check_branch
        %373 = sbr.rel (%p371) target = $region36
      $region35: #{foldingnet_forward.11} parent=31 // pred_region
        %s374 = smul.u32 8, %s19
      $region36: #{foldingnet_forward.11} parent=31 // pred_fallthru
        _
    $region32: #{foldingnet_forward.11} parent=5 // pred_fallthru
      _
    %p375 = scmp.le.s32.totalorder 2, %s9
    // Predicated region
    $region37: #{foldingnet_forward.11} parent=5 // pred_check
      %p376 = pneg %p375
    $region38: #{foldingnet_forward.11} parent=5 // pred_check_branch
      %378 = sbr.rel (%p376) target = $region40
    $region39: #{foldingnet_forward.11} parent=5 // pred_region
      %s379 = ssub.s32 %s9, 2
      // Predicated region
      $region41: #{foldingnet_forward.11} parent=39 // pred_check
        %p380 = pneg %p132
      $region42: #{foldingnet_forward.11} parent=39 // pred_check_branch
        %382 = sbr.rel (%p380) target = $region44
      $region43: #{foldingnet_forward.11} parent=39 // pred_region
        %s383 = smul.u32 8, %s21
        %p384 = scmp.lt.s32.totalorder %s20, 1
        %s385 = scalar_select %p384, %s20, 1
        %p386 = scmp.lt.s32.totalorder %s383, 7
        %s387 = scalar_select %p386, %s383, 7
        %s388 = smul.addr %s385, 8
        %s389 = sadd.s32 %s387, %s388
        %s390 = smul.addr %s389, 8
        %s391 = scalar_lea.vmem %s3, %s390
      $region44: #{foldingnet_forward.11} parent=39 // pred_fallthru
        _
    $region40: #{foldingnet_forward.11} parent=5 // pred_fallthru
      _
  $region6: #{foldingnet_forward.11} parent=0 // loop_footer
    %s13 = sadd.s32 1, %s9
  $region7: #{foldingnet_forward.11} parent=0 // loop_footer_branch
    %8 = sbr.rel target = $region3
  $region8: #{foldingnet_forward.11} parent=0 // loop_exit
    _

// kernel: foldingnet_forward.12
$region0: #{foldingnet_forward.12}
  #allocation0 [shape = 'u32[]', space=smem, size = 0x4, offset = 0x4, fixed_abs, tag = 'smem constant byte address 0x4 - core index']
  #allocation1 [shape = 'u32[72,128]{1,0:T(1,128)}', space=vmem, size = 0x9000, scoped, tag = 'internal scratch']
  #allocation2 [shape = 'f32[8,1024]{1,0:T(8,128)}', space=vmem, size = 0x8000, scoped, tag = 'scratch operand']
  %s0 = inlined_call_operand.vmem [shape: f32[2,64,128], index: 0, kind: input, shape index: {}]
  %s1 = inlined_call_operand.vmem [shape: bf16[128,1024], index: 1, kind: input, shape index: {}]
  %s2 = inlined_call_operand.vmem [shape: f32[1,1024], index: 2, kind: input, shape index: {}]
  %s3 = inlined_call_operand.vmem [shape: f32[1,1024], index: 3, kind: input, shape index: {}]
  %s4 = inlined_call_operand.vmem [shape: bf16[1024,512], index: 4, kind: input, shape index: {}]
  %s5 = inlined_call_operand.vmem [shape: f32[1,512], index: 5, kind: input, shape index: {}]
  %s6 = inlined_call_operand.vmem [shape: f32[1,512], index: 6, kind: input, shape index: {}]
  %s7 = inlined_call_operand.vmem [shape: f32[2,1,512], index: 7, kind: output, shape index: {}]
  %s8 = sld [smem:[#allocation0]]
  $region69: #{foldingnet_forward.12} parent=0
    _
  %s10 = ssub.s32 1, %s8
  %s11 = scalar_select 0, %s10, %s8
  loop: start=0, step=1, limit=4
  $region2: #{foldingnet_forward.12} parent=0 // loop_pre_header
    _
  $region3: #{foldingnet_forward.12} parent=0 // loop_header
    %s13 = sphi 0, %s17
    %p14 = scmp.ge.s32.totalorder %s13, 4
    %s20 = sphi 0, %s32
    %s21 = sphi 0, %s28
    %s22 = sphi 0, %s20
    %s23 = sphi 0, %s21
    %s24 = sphi 0, %s22
    %s25 = sphi 0, %s23
    %s37 = sphi 0, %s39
    %s40 = sphi 0, %s37
    %s41 = sphi 0, %s40
    %s57 = sphi 0, %s41
    %s61 = sphi 0, %s61
    %s63 = sphi 0, %s61
    %s64 = sphi 0, %s63
    %s78 = sphi 0, %s64
    %s82 = sphi 0, %s82
    %s84 = sphi 0, %s82
    %s85 = sphi 0, %s84
    %s99 = sphi 0, %s85
    %s103 = sphi 0, %s103
    %s105 = sphi 0, %s103
    %s106 = sphi 0, %s105
    %s120 = sphi 0, %s106
    %s124 = sphi 0, %s124
    %s126 = sphi 0, %s124
    %s127 = sphi 0, %s126
    %s141 = sphi 0, %s127
    %s145 = sphi 0, %s145
    %s147 = sphi 0, %s145
    %s148 = sphi 0, %s147
    %s162 = sphi 0, %s148
    %s166 = sphi 0, %s166
    %s168 = sphi 0, %s166
    %s169 = sphi 0, %s168
    %s183 = sphi 0, %s169
    %s189 = sphi 0, %s191
    %s192 = sphi 0, %s189
    %s193 = sphi 0, %s192
    %s209 = sphi 0, %s193
  $region4: #{foldingnet_forward.12} parent=0 // loop_header_branch
    %16 = sbr.rel (%p14) target = $region8
  $region5: #{foldingnet_forward.12} parent=0 // loop_body
    %s18 = ssub.s32 %s13, 1
    %s19 = ssub.s32 %s13, 2
    %s26 = sadd.s32 1, %s21
    %p27 = scmp.ge.s32.totalorder %s26, 1
    %s28 = scalar_select %p27, 0, %s26
    %s29 = sadd.s32 1, %s20
    %s30 = scalar_select %p27, %s29, %s20
    %p31 = scmp.ge.s32.totalorder %s30, 2
    %s32 = scalar_select %p31, 0, %s30
    %s33 = ssub.s32 %s20, %s32
    %s34 = ssub.s32 %s21, %s28
    %s35 = sor.u32 %s33, %s34
    %p36 = scmp.eq.s32.totalorder %s35, 0
    %s38 = sadd.s32 %s37, 1
    %s39 = scalar_select %p36, %s37, %s38
    %p42 = pneg %p36
    %p43 = scmp.eq.s32.totalorder %s13, 1
    %p44 = por %p42, %p43
    %p45 = scmp.ne.s32.totalorder %s37, %s40
    %p46 = scmp.eq.s32.totalorder %s13, 0
    %p47 = por %p45, %p46
    %p48 = scmp.ne.s32.totalorder %s37, %s40
    %p49 = scmp.eq.s32.totalorder %s18, 1
    %p50 = por %p48, %p49
    %p51 = scmp.ne.s32.totalorder %s40, %s41
    %p52 = scmp.eq.s32.totalorder %s18, 0
    %p53 = por %p51, %p52
    %p54 = scmp.ne.s32.totalorder %s40, %s41
    %p55 = scmp.eq.s32.totalorder %s19, 1
    %p56 = por %p54, %p55
    %p58 = scmp.ne.s32.totalorder %s41, %s57
    %p59 = scmp.eq.s32.totalorder %s19, 0
    %p60 = por %p58, %p59
    %s62 = sadd.s32 %s61, 1
    %p65 = scmp.eq.s32.totalorder %s13, 1
    %p66 = scmp.ne.s32.totalorder %s61, %s63
    %p67 = scmp.eq.s32.totalorder %s13, 0
    %p68 = por %p66, %p67
    %p69 = scmp.ne.s32.totalorder %s61, %s63
    %p70 = scmp.eq.s32.totalorder %s18, 1
    %p71 = por %p69, %p70
    %p72 = scmp.ne.s32.totalorder %s63, %s64
    %p73 = scmp.eq.s32.totalorder %s18, 0
    %p74 = por %p72, %p73
    %p75 = scmp.ne.s32.totalorder %s63, %s64
    %p76 = scmp.eq.s32.totalorder %s19, 1
    %p77 = por %p75, %p76
    %p79 = scmp.ne.s32.totalorder %s64, %s78
    %p80 = scmp.eq.s32.totalorder %s19, 0
    %p81 = por %p79, %p80
    %s83 = sadd.s32 %s82, 1
    %p86 = scmp.eq.s32.totalorder %s13, 1
    %p87 = scmp.ne.s32.totalorder %s82, %s84
    %p88 = scmp.eq.s32.totalorder %s13, 0
    %p89 = por %p87, %p88
    %p90 = scmp.ne.s32.totalorder %s82, %s84
    %p91 = scmp.eq.s32.totalorder %s18, 1
    %p92 = por %p90, %p91
    %p93 = scmp.ne.s32.totalorder %s84, %s85
    %p94 = scmp.eq.s32.totalorder %s18, 0
    %p95 = por %p93, %p94
    %p96 = scmp.ne.s32.totalorder %s84, %s85
    %p97 = scmp.eq.s32.totalorder %s19, 1
    %p98 = por %p96, %p97
    %p100 = scmp.ne.s32.totalorder %s85, %s99
    %p101 = scmp.eq.s32.totalorder %s19, 0
    %p102 = por %p100, %p101
    %s104 = sadd.s32 %s103, 1
    %p107 = scmp.eq.s32.totalorder %s13, 1
    %p108 = scmp.ne.s32.totalorder %s103, %s105
    %p109 = scmp.eq.s32.totalorder %s13, 0
    %p110 = por %p108, %p109
    %p111 = scmp.ne.s32.totalorder %s103, %s105
    %p112 = scmp.eq.s32.totalorder %s18, 1
    %p113 = por %p111, %p112
    %p114 = scmp.ne.s32.totalorder %s105, %s106
    %p115 = scmp.eq.s32.totalorder %s18, 0
    %p116 = por %p114, %p115
    %p117 = scmp.ne.s32.totalorder %s105, %s106
    %p118 = scmp.eq.s32.totalorder %s19, 1
    %p119 = por %p117, %p118
    %p121 = scmp.ne.s32.totalorder %s106, %s120
    %p122 = scmp.eq.s32.totalorder %s19, 0
    %p123 = por %p121, %p122
    %s125 = sadd.s32 %s124, 1
    %p128 = scmp.eq.s32.totalorder %s13, 1
    %p129 = scmp.ne.s32.totalorder %s124, %s126
    %p130 = scmp.eq.s32.totalorder %s13, 0
    %p131 = por %p129, %p130
    %p132 = scmp.ne.s32.totalorder %s124, %s126
    %p133 = scmp.eq.s32.totalorder %s18, 1
    %p134 = por %p132, %p133
    %p135 = scmp.ne.s32.totalorder %s126, %s127
    %p136 = scmp.eq.s32.totalorder %s18, 0
    %p137 = por %p135, %p136
    %p138 = scmp.ne.s32.totalorder %s126, %s127
    %p139 = scmp.eq.s32.totalorder %s19, 1
    %p140 = por %p138, %p139
    %p142 = scmp.ne.s32.totalorder %s127, %s141
    %p143 = scmp.eq.s32.totalorder %s19, 0
    %p144 = por %p142, %p143
    %s146 = sadd.s32 %s145, 1
    %p149 = scmp.eq.s32.totalorder %s13, 1
    %p150 = scmp.ne.s32.totalorder %s145, %s147
    %p151 = scmp.eq.s32.totalorder %s13, 0
    %p152 = por %p150, %p151
    %p153 = scmp.ne.s32.totalorder %s145, %s147
    %p154 = scmp.eq.s32.totalorder %s18, 1
    %p155 = por %p153, %p154
    %p156 = scmp.ne.s32.totalorder %s147, %s148
    %p157 = scmp.eq.s32.totalorder %s18, 0
    %p158 = por %p156, %p157
    %p159 = scmp.ne.s32.totalorder %s147, %s148
    %p160 = scmp.eq.s32.totalorder %s19, 1
    %p161 = por %p159, %p160
    %p163 = scmp.ne.s32.totalorder %s148, %s162
    %p164 = scmp.eq.s32.totalorder %s19, 0
    %p165 = por %p163, %p164
    %s167 = sadd.s32 %s166, 1
    %p170 = scmp.eq.s32.totalorder %s13, 1
    %p171 = scmp.ne.s32.totalorder %s166, %s168
    %p172 = scmp.eq.s32.totalorder %s13, 0
    %p173 = por %p171, %p172
    %p174 = scmp.ne.s32.totalorder %s166, %s168
    %p175 = scmp.eq.s32.totalorder %s18, 1
    %p176 = por %p174, %p175
    %p177 = scmp.ne.s32.totalorder %s168, %s169
    %p178 = scmp.eq.s32.totalorder %s18, 0
    %p179 = por %p177, %p178
    %p180 = scmp.ne.s32.totalorder %s168, %s169
    %p181 = scmp.eq.s32.totalorder %s19, 1
    %p182 = por %p180, %p181
    %p184 = scmp.ne.s32.totalorder %s169, %s183
    %p185 = scmp.eq.s32.totalorder %s19, 0
    %p186 = por %p184, %p185
    %s187 = ssub.s32 %s20, %s32
    %p188 = scmp.eq.s32.totalorder %s187, 0
    %s190 = sadd.s32 %s189, 1
    %s191 = scalar_select %p188, %s189, %s190
    %p194 = pneg %p188
    %p195 = scmp.eq.s32.totalorder %s13, 1
    %p196 = por %p194, %p195
    %p197 = scmp.ne.s32.totalorder %s189, %s192
    %p198 = scmp.eq.s32.totalorder %s13, 0
    %p199 = por %p197, %p198
    %p200 = scmp.ne.s32.totalorder %s189, %s192
    %p201 = scmp.eq.s32.totalorder %s18, 1
    %p202 = por %p200, %p201
    %p203 = scmp.ne.s32.totalorder %s192, %s193
    %p204 = scmp.eq.s32.totalorder %s18, 0
    %p205 = por %p203, %p204
    %p206 = scmp.ne.s32.totalorder %s192, %s193
    %p207 = scmp.eq.s32.totalorder %s19, 1
    %p208 = por %p206, %p207
    %p210 = scmp.ne.s32.totalorder %s193, %s209
    %p211 = scmp.eq.s32.totalorder %s19, 0
    %p212 = por %p210, %p211
    %p213 = scmp.le.s32.totalorder 1, %s13
    %p214 = scmp.lt.s32.totalorder %s13, 3
    %p215 = pnand %p213, %p214
    %p216 = pneg %p215
    // Predicated region
    $region9: #{foldingnet_forward.12} parent=5 // pred_check
      _
    $region10: #{foldingnet_forward.12} parent=5 // pred_check_branch
      %218 = sbr.rel (%p215) target = $region12
    $region11: #{foldingnet_forward.12} parent=5 // pred_region
      %s219 = ssub.s32 %s13, 1
      // Predicated region
      $region13: #{foldingnet_forward.12} parent=11 // pred_check
        %p220 = pneg %p74
      $region14: #{foldingnet_forward.12} parent=11 // pred_check_branch
        %222 = sbr.rel (%p220) target = $region16
      $region15: #{foldingnet_forward.12} parent=11 // pred_region
        _
      $region16: #{foldingnet_forward.12} parent=11 // pred_fallthru
        _
      // Predicated region
      $region17: #{foldingnet_forward.12} parent=11 // pred_check
        %p223 = pneg %p95
      $region18: #{foldingnet_forward.12} parent=11 // pred_check_branch
        %225 = sbr.rel (%p223) target = $region20
      $region19: #{foldingnet_forward.12} parent=11 // pred_region
        _
      $region20: #{foldingnet_forward.12} parent=11 // pred_fallthru
        _
      // Predicated region
      $region21: #{foldingnet_forward.12} parent=11 // pred_check
        %p226 = pneg %p116
      $region22: #{foldingnet_forward.12} parent=11 // pred_check_branch
        %228 = sbr.rel (%p226) target = $region24
      $region23: #{foldingnet_forward.12} parent=11 // pred_region
        _
      $region24: #{foldingnet_forward.12} parent=11 // pred_fallthru
        _
      // Predicated region
      $region25: #{foldingnet_forward.12} parent=11 // pred_check
        %p229 = pneg %p137
      $region26: #{foldingnet_forward.12} parent=11 // pred_check_branch
        %231 = sbr.rel (%p229) target = $region28
      $region27: #{foldingnet_forward.12} parent=11 // pred_region
        _
      $region28: #{foldingnet_forward.12} parent=11 // pred_fallthru
        _
      // Predicated region
      $region29: #{foldingnet_forward.12} parent=11 // pred_check
        %p232 = pneg %p158
      $region30: #{foldingnet_forward.12} parent=11 // pred_check_branch
        %234 = sbr.rel (%p232) target = $region32
      $region31: #{foldingnet_forward.12} parent=11 // pred_region
        _
      $region32: #{foldingnet_forward.12} parent=11 // pred_fallthru
        _
      // Predicated region
      $region33: #{foldingnet_forward.12} parent=11 // pred_check
        %p235 = pneg %p179
      $region34: #{foldingnet_forward.12} parent=11 // pred_check_branch
        %237 = sbr.rel (%p235) target = $region36
      $region35: #{foldingnet_forward.12} parent=11 // pred_region
        _
      $region36: #{foldingnet_forward.12} parent=11 // pred_fallthru
        _
    $region12: #{foldingnet_forward.12} parent=5 // pred_fallthru
      _
    %p238 = scmp.lt.s32.totalorder %s13, 2
    // Predicated region
    $region37: #{foldingnet_forward.12} parent=5 // pred_check
      %p239 = pneg %p238
    $region38: #{foldingnet_forward.12} parent=5 // pred_check_branch
      %241 = sbr.rel (%p239) target = $region40
    $region39: #{foldingnet_forward.12} parent=5 // pred_region
      // Predicated region
      $region41: #{foldingnet_forward.12} parent=39 // pred_check
        %p242 = pneg %p47
      $region42: #{foldingnet_forward.12} parent=39 // pred_check_branch
        %244 = sbr.rel (%p242) target = $region44
      $region43: #{foldingnet_forward.12} parent=39 // pred_region
        %s245 = smul.u32 8, %s21
        %p246 = scmp.lt.s32.totalorder %s20, 1
        %s247 = scalar_select %p246, %s20, 1
        %p248 = scmp.lt.s32.totalorder %s245, 7
        %s249 = scalar_select %p248, %s245, 7
        %s250 = smul.addr %s247, 8
        %s251 = sadd.s32 %s249, %s250
        %s252 = smul.addr %s251, 8
        %s253 = scalar_lea.vmem %s0, %s252
        %s254 = smul.u32 8, %s21
      $region44: #{foldingnet_forward.12} parent=39 // pred_fallthru
        _
    $region40: #{foldingnet_forward.12} parent=5 // pred_fallthru
      _
    %p255 = scmp.le.s32.totalorder 1, %s13
    %p256 = scmp.lt.s32.totalorder %s13, 3
    %p257 = pnand %p255, %p256
    %p258 = pneg %p257
    // Predicated region
    $region45: #{foldingnet_forward.12} parent=5 // pred_check
      _
    $region46: #{foldingnet_forward.12} parent=5 // pred_check_branch
      %260 = sbr.rel (%p257) target = $region48
    $region47: #{foldingnet_forward.12} parent=5 // pred_region
      %s261 = ssub.s32 %s13, 1
      %s262 = smul.u32 8, %s23
      %p263 = scmp.lt.s32.totalorder %s22, 1
      %s264 = scalar_select %p263, %s22, 1
      %p265 = scmp.lt.s32.totalorder %s262, 7
      %s266 = scalar_select %p265, %s262, 7
      %s267 = smul.addr %s264, 8
      %s268 = sadd.s32 %s266, %s267
      %s269 = smul.addr %s268, 8
      %s270 = scalar_lea.vmem %s0, %s269
      %p271 = pneg %p53
      %p272 = pneg %p50
      %p273 = pneg %p74
      %p274 = pneg %p71
      %p275 = pneg %p95
      %p276 = pneg %p92
      %p277 = pneg %p116
      %p278 = pneg %p113
      %p279 = pneg %p137
      %p280 = pneg %p134
      %p281 = pneg %p158
      %p282 = pneg %p155
      %p283 = pneg %p179
      %p284 = pneg %p176
      %p285 = pneg %p205
      %p286 = pneg %p202
      %p287 = scmp.lt.s32.totalorder %s22, 1
      %s288 = scalar_select %p287, %s22, 1
      %s289 = smul.addr %s288, 4
      %s290 = scalar_lea.vmem %s7, %s289
      %s291 = smul.u32 8, %s23
      %p292 = scmp.lt.s32.totalorder %s22, 1
      %s293 = scalar_select %p292, %s22, 1
      %p294 = scmp.lt.s32.totalorder %s291, 7
      %s295 = scalar_select %p294, %s291, 7
      %s296 = smul.addr %s293, 8
      %s297 = sadd.s32 %s295, %s296
      %s298 = smul.addr %s297, 8
      %s299 = scalar_lea.vmem %s0, %s298
      %s300 = smul.u32 8, %s23
      %p301 = scmp.lt.s32.totalorder %s22, 1
      %s302 = scalar_select %p301, %s22, 1
      %s303 = smul.addr %s302, 4
      %s304 = scalar_lea.vmem %s7, %s303
      %p305 = scmp.eq.s32.totalorder %s23, 0
      // Predicated region
      $region49: #{foldingnet_forward.12} parent=47 // pred_check
        %p306 = pneg %p305
      $region50: #{foldingnet_forward.12} parent=47 // pred_check_branch
        %308 = sbr.rel (%p306) target = $region52
      $region51: #{foldingnet_forward.12} parent=47 // pred_region
        %309 = vst [vmem:[#allocation2] sm:$0xff] -inf
        %310 = vst [vmem:[#allocation2 + $0x8] sm:$0xff] -inf
        %311 = vst [vmem:[#allocation2 + $0x10] sm:$0xff] -inf
        %312 = vst [vmem:[#allocation2 + $0x18] sm:$0xff] -inf
        %313 = vst [vmem:[#allocation2 + $0x20] sm:$0xff] -inf
        %314 = vst [vmem:[#allocation2 + $0x28] sm:$0xff] -inf
        %315 = vst [vmem:[#allocation2 + $0x30] sm:$0xff] -inf
        %316 = vst [vmem:[#allocation2 + $0x38] sm:$0xff] -inf
      $region52: #{foldingnet_forward.12} parent=47 // pred_fallthru
        _
      %v317 = vld [vmem:[%s299] sm:$0xff]
      %v318 = vld [vmem:[%s299 + $0x8] sm:$0xff]
      %v319 = vld [vmem:[%s299 + $0x10] sm:$0xff]
      %v320 = vld [vmem:[%s299 + $0x18] sm:$0xff]
      %v321 = vld [vmem:[%s299 + $0x20] sm:$0xff]
      %v322 = vld [vmem:[%s299 + $0x28] sm:$0xff]
      %v323 = vld [vmem:[%s299 + $0x30] sm:$0xff]
      %v324 = vld [vmem:[%s299 + $0x38] sm:$0xff]
      %v325 = vpack.c.bf16 %v318, %v317
      %v326 = vpack.c.bf16 %v320, %v319
      %v327 = vpack.c.bf16 %v322, %v321
      %v328 = vpack.c.bf16 %v324, %v323
      %v329 = vld [vmem:[%s1] sm:$0xff]
      %v330 = vld [vmem:[%s1 + $0x8] sm:$0xff]
      %v331 = vld [vmem:[%s1 + $0x10] sm:$0xff]
      %v332 = vld [vmem:[%s1 + $0x18] sm:$0xff]
      %v333 = vld [vmem:[%s1 + $0x20] sm:$0xff]
      %v334 = vld [vmem:[%s1 + $0x28] sm:$0xff]
      %v335 = vld [vmem:[%s1 + $0x30] sm:$0xff]
      %v336 = vld [vmem:[%s1 + $0x38] sm:$0xff]
      %v337 = vld [vmem:[%s1 + $0x40] sm:$0xff]
      %v338 = vld [vmem:[%s1 + $0x48] sm:$0xff]
      %v339 = vld [vmem:[%s1 + $0x50] sm:$0xff]
      %v340 = vld [vmem:[%s1 + $0x58] sm:$0xff]
      %v341 = vld [vmem:[%s1 + $0x60] sm:$0xff]
      %v342 = vld [vmem:[%s1 + $0x68] sm:$0xff]
      %v343 = vld [vmem:[%s1 + $0x70] sm:$0xff]
      %v344 = vld [vmem:[%s1 + $0x78] sm:$0xff]
      %v345 = vld [vmem:[%s1 + $0x80] sm:$0xff]
      %v346 = vld [vmem:[%s1 + $0x88] sm:$0xff]
      %v347 = vld [vmem:[%s1 + $0x90] sm:$0xff]
      %v348 = vld [vmem:[%s1 + $0x98] sm:$0xff]
      %v349 = vld [vmem:[%s1 + $0xa0] sm:$0xff]
      %v350 = vld [vmem:[%s1 + $0xa8] sm:$0xff]
      %v351 = vld [vmem:[%s1 + $0xb0] sm:$0xff]
      %v352 = vld [vmem:[%s1 + $0xb8] sm:$0xff]
      %v353 = vld [vmem:[%s1 + $0xc0] sm:$0xff]
      %v354 = vld [vmem:[%s1 + $0xc8] sm:$0xff]
      %v355 = vld [vmem:[%s1 + $0xd0] sm:$0xff]
      %v356 = vld [vmem:[%s1 + $0xd8] sm:$0xff]
      %v357 = vld [vmem:[%s1 + $0xe0] sm:$0xff]
      %v358 = vld [vmem:[%s1 + $0xe8] sm:$0xff]
      %v359 = vld [vmem:[%s1 + $0xf0] sm:$0xff]
      %v360 = vld [vmem:[%s1 + $0xf8] sm:$0xff]
      %v361 = vld [vmem:[%s1 + $0x100] sm:$0xff]
      %v362 = vld [vmem:[%s1 + $0x108] sm:$0xff]
      %v363 = vld [vmem:[%s1 + $0x110] sm:$0xff]
      %v364 = vld [vmem:[%s1 + $0x118] sm:$0xff]
      %v365 = vld [vmem:[%s1 + $0x120] sm:$0xff]
      %v366 = vld [vmem:[%s1 + $0x128] sm:$0xff]
      %v367 = vld [vmem:[%s1 + $0x130] sm:$0xff]
      %v368 = vld [vmem:[%s1 + $0x138] sm:$0xff]
      %v369 = vld [vmem:[%s1 + $0x140] sm:$0xff]
      %v370 = vld [vmem:[%s1 + $0x148] sm:$0xff]
      %v371 = vld [vmem:[%s1 + $0x150] sm:$0xff]
      %v372 = vld [vmem:[%s1 + $0x158] sm:$0xff]
      %v373 = vld [vmem:[%s1 + $0x160] sm:$0xff]
      %v374 = vld [vmem:[%s1 + $0x168] sm:$0xff]
      %v375 = vld [vmem:[%s1 + $0x170] sm:$0xff]
      %v376 = vld [vmem:[%s1 + $0x178] sm:$0xff]
      %v377 = vld [vmem:[%s1 + $0x180] sm:$0xff]
      %v378 = vld [vmem:[%s1 + $0x188] sm:$0xff]
      %v379 = vld [vmem:[%s1 + $0x190] sm:$0xff]
      %v380 = vld [vmem:[%s1 + $0x198] sm:$0xff]
      %v381 = vld [vmem:[%s1 + $0x1a0] sm:$0xff]
      %v382 = vld [vmem:[%s1 + $0x1a8] sm:$0xff]
      %v383 = vld [vmem:[%s1 + $0x1b0] sm:$0xff]
      %v384 = vld [vmem:[%s1 + $0x1b8] sm:$0xff]
      %v385 = vld [vmem:[%s1 + $0x1c0] sm:$0xff]
      %v386 = vld [vmem:[%s1 + $0x1c8] sm:$0xff]
      %v387 = vld [vmem:[%s1 + $0x1d0] sm:$0xff]
      %v388 = vld [vmem:[%s1 + $0x1d8] sm:$0xff]
      %v389 = vld [vmem:[%s1 + $0x1e0] sm:$0xff]
      %v390 = vld [vmem:[%s1 + $0x1e8] sm:$0xff]
      %v391 = vld [vmem:[%s1 + $0x1f0] sm:$0xff]
      %v392 = vld [vmem:[%s1 + $0x1f8] sm:$0xff]
      %v457 = vunpack.c.l.b16 %v329
      %v458 = vunpack.c.h.b16 %v329
      %v459 = vunpack.c.l.b16 %v330
      %v460 = vunpack.c.h.b16 %v330
      %v461 = vunpack.c.l.b16 %v331
      %v462 = vunpack.c.h.b16 %v331
      %v463 = vunpack.c.l.b16 %v332
      %v464 = vunpack.c.h.b16 %v332
      %v465 = vunpack.c.l.b16 %v333
      %v466 = vunpack.c.h.b16 %v333
      %v467 = vunpack.c.l.b16 %v334
      %v468 = vunpack.c.h.b16 %v334
      %v469 = vunpack.c.l.b16 %v335
      %v470 = vunpack.c.h.b16 %v335
      %v471 = vunpack.c.l.b16 %v336
      %v472 = vunpack.c.h.b16 %v336
      %v473 = vunpack.c.l.b16 %v337
      %v474 = vunpack.c.h.b16 %v337
      %v475 = vunpack.c.l.b16 %v338
      %v476 = vunpack.c.h.b16 %v338
      %v477 = vunpack.c.l.b16 %v339
      %v478 = vunpack.c.h.b16 %v339
      %v479 = vunpack.c.l.b16 %v340
      %v480 = vunpack.c.h.b16 %v340
      %v481 = vunpack.c.l.b16 %v341
      %v482 = vunpack.c.h.b16 %v341
      %v483 = vunpack.c.l.b16 %v342
      %v484 = vunpack.c.h.b16 %v342
      %v485 = vunpack.c.l.b16 %v343
      %v486 = vunpack.c.h.b16 %v343
      %v487 = vunpack.c.l.b16 %v344
      %v488 = vunpack.c.h.b16 %v344
      %v489 = vunpack.c.l.b16 %v345
      %v490 = vunpack.c.h.b16 %v345
      %v491 = vunpack.c.l.b16 %v346
      %v492 = vunpack.c.h.b16 %v346
      %v493 = vunpack.c.l.b16 %v347
      %v494 = vunpack.c.h.b16 %v347
      %v495 = vunpack.c.l.b16 %v348
      %v496 = vunpack.c.h.b16 %v348
      %v497 = vunpack.c.l.b16 %v349
      %v498 = vunpack.c.h.b16 %v349
      %v499 = vunpack.c.l.b16 %v350
      %v500 = vunpack.c.h.b16 %v350
      %v501 = vunpack.c.l.b16 %v351
      %v502 = vunpack.c.h.b16 %v351
      %v503 = vunpack.c.l.b16 %v352
      %v504 = vunpack.c.h.b16 %v352
      %v505 = vunpack.c.l.b16 %v353
      %v506 = vunpack.c.h.b16 %v353
      %v507 = vunpack.c.l.b16 %v354
      %v508 = vunpack.c.h.b16 %v354
      %v509 = vunpack.c.l.b16 %v355
      %v510 = vunpack.c.h.b16 %v355
      %v511 = vunpack.c.l.b16 %v356
      %v512 = vunpack.c.h.b16 %v356
      %v513 = vunpack.c.l.b16 %v357
      %v514 = vunpack.c.h.b16 %v357
      %v515 = vunpack.c.l.b16 %v358
      %v516 = vunpack.c.h.b16 %v358
      %v517 = vunpack.c.l.b16 %v359
      %v518 = vunpack.c.h.b16 %v359
      %v519 = vunpack.c.l.b16 %v360
      %v520 = vunpack.c.h.b16 %v360
      %v521 = vunpack.c.l.b16 %v361
      %v522 = vunpack.c.h.b16 %v361
      %v523 = vunpack.c.l.b16 %v362
      %v524 = vunpack.c.h.b16 %v362
      %v525 = vunpack.c.l.b16 %v363
      %v526 = vunpack.c.h.b16 %v363
      %v527 = vunpack.c.l.b16 %v364
      %v528 = vunpack.c.h.b16 %v364
      %v529 = vunpack.c.l.b16 %v365
      %v530 = vunpack.c.h.b16 %v365
      %v531 = vunpack.c.l.b16 %v366
      %v532 = vunpack.c.h.b16 %v366
      %v533 = vunpack.c.l.b16 %v367
      %v534 = vunpack.c.h.b16 %v367
      %v535 = vunpack.c.l.b16 %v368
      %v536 = vunpack.c.h.b16 %v368
      %v537 = vunpack.c.l.b16 %v369
      %v538 = vunpack.c.h.b16 %v369
      %v539 = vunpack.c.l.b16 %v370
      %v540 = vunpack.c.h.b16 %v370
      %v541 = vunpack.c.l.b16 %v371
      %v542 = vunpack.c.h.b16 %v371
      %v543 = vunpack.c.l.b16 %v372
      %v544 = vunpack.c.h.b16 %v372
      %v545 = vunpack.c.l.b16 %v373
      %v546 = vunpack.c.h.b16 %v373
      %v547 = vunpack.c.l.b16 %v374
      %v548 = vunpack.c.h.b16 %v374
      %v549 = vunpack.c.l.b16 %v375
      %v550 = vunpack.c.h.b16 %v375
      %v551 = vunpack.c.l.b16 %v376
      %v552 = vunpack.c.h.b16 %v376
      %v553 = vunpack.c.l.b16 %v377
      %v554 = vunpack.c.h.b16 %v377
      %v555 = vunpack.c.l.b16 %v378
      %v556 = vunpack.c.h.b16 %v378
      %v557 = vunpack.c.l.b16 %v379
      %v558 = vunpack.c.h.b16 %v379
      %v559 = vunpack.c.l.b16 %v380
      %v560 = vunpack.c.h.b16 %v380
      %v561 = vunpack.c.l.b16 %v381
      %v562 = vunpack.c.h.b16 %v381
      %v563 = vunpack.c.l.b16 %v382
      %v564 = vunpack.c.h.b16 %v382
      %v565 = vunpack.c.l.b16 %v383
      %v566 = vunpack.c.h.b16 %v383
      %v567 = vunpack.c.l.b16 %v384
      %v568 = vunpack.c.h.b16 %v384
      %v569 = vunpack.c.l.b16 %v385
      %v570 = vunpack.c.h.b16 %v385
      %v571 = vunpack.c.l.b16 %v386
      %v572 = vunpack.c.h.b16 %v386
      %v573 = vunpack.c.l.b16 %v387
      %v574 = vunpack.c.h.b16 %v387
      %v575 = vunpack.c.l.b16 %v388
      %v576 = vunpack.c.h.b16 %v388
      %v577 = vunpack.c.l.b16 %v389
      %v578 = vunpack.c.h.b16 %v389
      %v579 = vunpack.c.l.b16 %v390
      %v580 = vunpack.c.h.b16 %v390
      %v581 = vunpack.c.l.b16 %v391
      %v582 = vunpack.c.h.b16 %v391
      %v583 = vunpack.c.l.b16 %v392
      %v584 = vunpack.c.h.b16 %v392
      %v585 = vpack.c.b16 %v465, %v457
      %v586 = vpack.c.b16 %v466, %v458
      %v587 = vpack.c.b16 %v467, %v459
      %v588 = vpack.c.b16 %v468, %v460
      %v589 = vpack.c.b16 %v469, %v461
      %v590 = vpack.c.b16 %v470, %v462
      %v591 = vpack.c.b16 %v471, %v463
      %v592 = vpack.c.b16 %v472, %v464
      %v593 = vpack.c.b16 %v481, %v473
      %v594 = vpack.c.b16 %v482, %v474
      %v595 = vpack.c.b16 %v483, %v475
      %v596 = vpack.c.b16 %v484, %v476
      %v597 = vpack.c.b16 %v485, %v477
      %v598 = vpack.c.b16 %v486, %v478
      %v599 = vpack.c.b16 %v487, %v479
      %v600 = vpack.c.b16 %v488, %v480
      %v601 = vpack.c.b16 %v497, %v489
      %v602 = vpack.c.b16 %v498, %v490
      %v603 = vpack.c.b16 %v499, %v491
      %v604 = vpack.c.b16 %v500, %v492
      %v605 = vpack.c.b16 %v501, %v493
      %v606 = vpack.c.b16 %v502, %v494
      %v607 = vpack.c.b16 %v503, %v495
      %v608 = vpack.c.b16 %v504, %v496
      %v609 = vpack.c.b16 %v513, %v505
      %v610 = vpack.c.b16 %v514, %v506
      %v611 = vpack.c.b16 %v515, %v507
      %v612 = vpack.c.b16 %v516, %v508
      %v613 = vpack.c.b16 %v517, %v509
      %v614 = vpack.c.b16 %v518, %v510
      %v615 = vpack.c.b16 %v519, %v511
      %v616 = vpack.c.b16 %v520, %v512
      %v617 = vpack.c.b16 %v529, %v521
      %v618 = vpack.c.b16 %v530, %v522
      %v619 = vpack.c.b16 %v531, %v523
      %v620 = vpack.c.b16 %v532, %v524
      %v621 = vpack.c.b16 %v533, %v525
      %v622 = vpack.c.b16 %v534, %v526
      %v623 = vpack.c.b16 %v535, %v527
      %v624 = vpack.c.b16 %v536, %v528
      %v625 = vpack.c.b16 %v545, %v537
      %v626 = vpack.c.b16 %v546, %v538
      %v627 = vpack.c.b16 %v547, %v539
      %v628 = vpack.c.b16 %v548, %v540
      %v629 = vpack.c.b16 %v549, %v541
      %v630 = vpack.c.b16 %v550, %v542
      %v631 = vpack.c.b16 %v551, %v543
      %v632 = vpack.c.b16 %v552, %v544
      %v633 = vpack.c.b16 %v561, %v553
      %v634 = vpack.c.b16 %v562, %v554
      %v635 = vpack.c.b16 %v563, %v555
      %v636 = vpack.c.b16 %v564, %v556
      %v637 = vpack.c.b16 %v565, %v557
      %v638 = vpack.c.b16 %v566, %v558
      %v639 = vpack.c.b16 %v567, %v559
      %v640 = vpack.c.b16 %v568, %v560
      %v641 = vpack.c.b16 %v577, %v569
      %v642 = vpack.c.b16 %v578, %v570
      %v643 = vpack.c.b16 %v579, %v571
      %v644 = vpack.c.b16 %v580, %v572
      %v645 = vpack.c.b16 %v581, %v573
      %v646 = vpack.c.b16 %v582, %v574
      %v647 = vpack.c.b16 %v583, %v575
      %v648 = vpack.c.b16 %v584, %v576
      %713 = vmatpush.bf16.msra.mxu0 %v641
      %714 = vmatpush.bf16.msra.mxu0 %v633
      %715 = vmatpush.bf16.msra.mxu0 %v625
      %716 = vmatpush.bf16.msra.mxu0 %v617
      %717 = vmatpush.bf16.msra.mxu0 %v609
      %718 = vmatpush.bf16.msra.mxu0 %v601
      %719 = vmatpush.bf16.msra.mxu0 %v593
      %720 = vmatpush.bf16.msra.mxu0 %v585
      %721 = vmatmul.bf16.gmra.mxu0 %v325
      %v722 = vpop.f32.mrf.mxu0
      %v723 = vadd.f32 0.0, %v722
      %v724 = vpop.f32.mrf.mxu0
      %v725 = vadd.f32 0.0, %v724
      %726 = vmatmul.bf16.gmra.mxu0 %v326
      %v727 = vpop.f32.mrf.mxu0
      %v728 = vadd.f32 0.0, %v727
      %v729 = vpop.f32.mrf.mxu0
      %v730 = vadd.f32 0.0, %v729
      %731 = vmatmul.bf16.gmra.mxu0 %v327
      %v732 = vpop.f32.mrf.mxu0
      %v733 = vadd.f32 0.0, %v732
      %v734 = vpop.f32.mrf.mxu0
      %v735 = vadd.f32 0.0, %v734
      %736 = vmatmul.bf16.gmra.mxu0 %v328
      %v737 = vpop.f32.mrf.mxu0
      %v738 = vadd.f32 0.0, %v737
      %v739 = vpop.f32.mrf.mxu0
      %v740 = vadd.f32 0.0, %v739
      %741 = vdwg.mxu0
      %742 = vmatpush.bf16.msra.mxu0 %v642
      %743 = vmatpush.bf16.msra.mxu0 %v634
      %744 = vmatpush.bf16.msra.mxu0 %v626
      %745 = vmatpush.bf16.msra.mxu0 %v618
      %746 = vmatpush.bf16.msra.mxu0 %v610
      %747 = vmatpush.bf16.msra.mxu0 %v602
      %748 = vmatpush.bf16.msra.mxu0 %v594
      %749 = vmatpush.bf16.msra.mxu0 %v586
      %750 = vmatmul.bf16.gmra.mxu0 %v325
      %v751 = vpop.f32.mrf.mxu0
      %v752 = vadd.f32 0.0, %v751
      %v753 = vpop.f32.mrf.mxu0
      %v754 = vadd.f32 0.0, %v753
      %755 = vmatmul.bf16.gmra.mxu0 %v326
      %v756 = vpop.f32.mrf.mxu0
      %v757 = vadd.f32 0.0, %v756
      %v758 = vpop.f32.mrf.mxu0
      %v759 = vadd.f32 0.0, %v758
      %760 = vmatmul.bf16.gmra.mxu0 %v327
      %v761 = vpop.f32.mrf.mxu0
      %v762 = vadd.f32 0.0, %v761
      %v763 = vpop.f32.mrf.mxu0
      %v764 = vadd.f32 0.0, %v763
      %765 = vmatmul.bf16.gmra.mxu0 %v328
      %v766 = vpop.f32.mrf.mxu0
      %v767 = vadd.f32 0.0, %v766
      %v768 = vpop.f32.mrf.mxu0
      %v769 = vadd.f32 0.0, %v768
      %770 = vdwg.mxu0
      %771 = vmatpush.bf16.msra.mxu0 %v643
      %772 = vmatpush.bf16.msra.mxu0 %v635
      %773 = vmatpush.bf16.msra.mxu0 %v627
      %774 = vmatpush.bf16.msra.mxu0 %v619
      %775 = vmatpush.bf16.msra.mxu0 %v611
      %776 = vmatpush.bf16.msra.mxu0 %v603
      %777 = vmatpush.bf16.msra.mxu0 %v595
      %778 = vmatpush.bf16.msra.mxu0 %v587
      %779 = vmatmul.bf16.gmra.mxu0 %v325
      %v780 = vpop.f32.mrf.mxu0
      %v781 = vadd.f32 0.0, %v780
      %v782 = vpop.f32.mrf.mxu0
      %v783 = vadd.f32 0.0, %v782
      %784 = vmatmul.bf16.gmra.mxu0 %v326
      %v785 = vpop.f32.mrf.mxu0
      %v786 = vadd.f32 0.0, %v785
      %v787 = vpop.f32.mrf.mxu0
      %v788 = vadd.f32 0.0, %v787
      %789 = vmatmul.bf16.gmra.mxu0 %v327
      %v790 = vpop.f32.mrf.mxu0
      %v791 = vadd.f32 0.0, %v790
      %v792 = vpop.f32.mrf.mxu0
      %v793 = vadd.f32 0.0, %v792
      %794 = vmatmul.bf16.gmra.mxu0 %v328
      %v795 = vpop.f32.mrf.mxu0
      %v796 = vadd.f32 0.0, %v795
      %v797 = vpop.f32.mrf.mxu0
      %v798 = vadd.f32 0.0, %v797
      %799 = vdwg.mxu0
      %800 = vmatpush.bf16.msra.mxu0 %v644
      %801 = vmatpush.bf16.msra.mxu0 %v636
      %802 = vmatpush.bf16.msra.mxu0 %v628
      %803 = vmatpush.bf16.msra.mxu0 %v620
      %804 = vmatpush.bf16.msra.mxu0 %v612
      %805 = vmatpush.bf16.msra.mxu0 %v604
      %806 = vmatpush.bf16.msra.mxu0 %v596
      %807 = vmatpush.bf16.msra.mxu0 %v588
      %808 = vmatmul.bf16.gmra.mxu0 %v325
      %v809 = vpop.f32.mrf.mxu0
      %v810 = vadd.f32 0.0, %v809
      %v811 = vpop.f32.mrf.mxu0
      %v812 = vadd.f32 0.0, %v811
      %813 = vmatmul.bf16.gmra.mxu0 %v326
      %v814 = vpop.f32.mrf.mxu0
      %v815 = vadd.f32 0.0, %v814
      %v816 = vpop.f32.mrf.mxu0
      %v817 = vadd.f32 0.0, %v816
      %818 = vmatmul.bf16.gmra.mxu0 %v327
      %v819 = vpop.f32.mrf.mxu0
      %v820 = vadd.f32 0.0, %v819
      %v821 = vpop.f32.mrf.mxu0
      %v822 = vadd.f32 0.0, %v821
      %823 = vmatmul.bf16.gmra.mxu0 %v328
      %v824 = vpop.f32.mrf.mxu0
      %v825 = vadd.f32 0.0, %v824
      %v826 = vpop.f32.mrf.mxu0
      %v827 = vadd.f32 0.0, %v826
      %828 = vdwg.mxu0
      %829 = vmatpush.bf16.msra.mxu0 %v645
      %830 = vmatpush.bf16.msra.mxu0 %v637
      %831 = vmatpush.bf16.msra.mxu0 %v629
      %832 = vmatpush.bf16.msra.mxu0 %v621
      %833 = vmatpush.bf16.msra.mxu0 %v613
      %834 = vmatpush.bf16.msra.mxu0 %v605
      %835 = vmatpush.bf16.msra.mxu0 %v597
      %836 = vmatpush.bf16.msra.mxu0 %v589
      %837 = vmatmul.bf16.gmra.mxu0 %v325
      %v838 = vpop.f32.mrf.mxu0
      %v839 = vadd.f32 0.0, %v838
      %v840 = vpop.f32.mrf.mxu0
      %v841 = vadd.f32 0.0, %v840
      %842 = vmatmul.bf16.gmra.mxu0 %v326
      %v843 = vpop.f32.mrf.mxu0
      %v844 = vadd.f32 0.0, %v843
      %v845 = vpop.f32.mrf.mxu0
      %v846 = vadd.f32 0.0, %v845
      %847 = vmatmul.bf16.gmra.mxu0 %v327
      %v848 = vpop.f32.mrf.mxu0
      %v849 = vadd.f32 0.0, %v848
      %v850 = vpop.f32.mrf.mxu0
      %v851 = vadd.f32 0.0, %v850
      %852 = vmatmul.bf16.gmra.mxu0 %v328
      %v853 = vpop.f32.mrf.mxu0
      %v854 = vadd.f32 0.0, %v853
      %v855 = vpop.f32.mrf.mxu0
      %v856 = vadd.f32 0.0, %v855
      %857 = vdwg.mxu0
      %858 = vmatpush.bf16.msra.mxu0 %v646
      %859 = vmatpush.bf16.msra.mxu0 %v638
      %860 = vmatpush.bf16.msra.mxu0 %v630
      %861 = vmatpush.bf16.msra.mxu0 %v622
      %862 = vmatpush.bf16.msra.mxu0 %v614
      %863 = vmatpush.bf16.msra.mxu0 %v606
      %864 = vmatpush.bf16.msra.mxu0 %v598
      %865 = vmatpush.bf16.msra.mxu0 %v590
      %866 = vmatmul.bf16.gmra.mxu0 %v325
      %v867 = vpop.f32.mrf.mxu0
      %v868 = vadd.f32 0.0, %v867
      %v869 = vpop.f32.mrf.mxu0
      %v870 = vadd.f32 0.0, %v869
      %871 = vmatmul.bf16.gmra.mxu0 %v326
      %v872 = vpop.f32.mrf.mxu0
      %v873 = vadd.f32 0.0, %v872
      %v874 = vpop.f32.mrf.mxu0
      %v875 = vadd.f32 0.0, %v874
      %876 = vmatmul.bf16.gmra.mxu0 %v327
      %v877 = vpop.f32.mrf.mxu0
      %v878 = vadd.f32 0.0, %v877
      %v879 = vpop.f32.mrf.mxu0
      %v880 = vadd.f32 0.0, %v879
      %881 = vmatmul.bf16.gmra.mxu0 %v328
      %v882 = vpop.f32.mrf.mxu0
      %v883 = vadd.f32 0.0, %v882
      %v884 = vpop.f32.mrf.mxu0
      %v885 = vadd.f32 0.0, %v884
      %886 = vdwg.mxu0
      %887 = vmatpush.bf16.msra.mxu0 %v647
      %888 = vmatpush.bf16.msra.mxu0 %v639
      %889 = vmatpush.bf16.msra.mxu0 %v631
      %890 = vmatpush.bf16.msra.mxu0 %v623
      %891 = vmatpush.bf16.msra.mxu0 %v615
      %892 = vmatpush.bf16.msra.mxu0 %v607
      %893 = vmatpush.bf16.msra.mxu0 %v599
      %894 = vmatpush.bf16.msra.mxu0 %v591
      %895 = vmatmul.bf16.gmra.mxu0 %v325
      %v896 = vpop.f32.mrf.mxu0
      %v897 = vadd.f32 0.0, %v896
      %v898 = vpop.f32.mrf.mxu0
      %v899 = vadd.f32 0.0, %v898
      %900 = vmatmul.bf16.gmra.mxu0 %v326
      %v901 = vpop.f32.mrf.mxu0
      %v902 = vadd.f32 0.0, %v901
      %v903 = vpop.f32.mrf.mxu0
      %v904 = vadd.f32 0.0, %v903
      %905 = vmatmul.bf16.gmra.mxu0 %v327
      %v906 = vpop.f32.mrf.mxu0
      %v907 = vadd.f32 0.0, %v906
      %v908 = vpop.f32.mrf.mxu0
      %v909 = vadd.f32 0.0, %v908
      %910 = vmatmul.bf16.gmra.mxu0 %v328
      %v911 = vpop.f32.mrf.mxu0
      %v912 = vadd.f32 0.0, %v911
      %v913 = vpop.f32.mrf.mxu0
      %v914 = vadd.f32 0.0, %v913
      %915 = vdwg.mxu0
      %916 = vmatpush.bf16.msra.mxu0 %v648
      %917 = vmatpush.bf16.msra.mxu0 %v640
      %918 = vmatpush.bf16.msra.mxu0 %v632
      %919 = vmatpush.bf16.msra.mxu0 %v624
      %920 = vmatpush.bf16.msra.mxu0 %v616
      %921 = vmatpush.bf16.msra.mxu0 %v608
      %922 = vmatpush.bf16.msra.mxu0 %v600
      %923 = vmatpush.bf16.msra.mxu0 %v592
      %924 = vmatmul.bf16.gmra.mxu0 %v325
      %v925 = vpop.f32.mrf.mxu0
      %v926 = vadd.f32 0.0, %v925
      %v927 = vpop.f32.mrf.mxu0
      %v928 = vadd.f32 0.0, %v927
      %929 = vmatmul.bf16.gmra.mxu0 %v326
      %v930 = vpop.f32.mrf.mxu0
      %v931 = vadd.f32 0.0, %v930
      %v932 = vpop.f32.mrf.mxu0
      %v933 = vadd.f32 0.0, %v932
      %934 = vmatmul.bf16.gmra.mxu0 %v327
      %v935 = vpop.f32.mrf.mxu0
      %v936 = vadd.f32 0.0, %v935
      %v937 = vpop.f32.mrf.mxu0
      %v938 = vadd.f32 0.0, %v937
      %939 = vmatmul.bf16.gmra.mxu0 %v328
      %v940 = vpop.f32.mrf.mxu0
      %v941 = vadd.f32 0.0, %v940
      %v942 = vpop.f32.mrf.mxu0
      %v943 = vadd.f32 0.0, %v942
      %944 = vdwg.mxu0
      %v945 = vld [vmem:[%s2] sm:$0xff]
      %v947 = vperm.slane %v945, 0
      %v948 = vperm.slane %v945, 1
      %v949 = vperm.slane %v945, 2
      %v950 = vperm.slane %v945, 3
      %v951 = vperm.slane %v945, 4
      %v952 = vperm.slane %v945, 5
      %v953 = vperm.slane %v945, 6
      %v954 = vperm.slane %v945, 7
      %v963 = vmul.f32 %v723, %v947
      %v964 = vmul.f32 %v752, %v948
      %v965 = vmul.f32 %v781, %v949
      %v966 = vmul.f32 %v810, %v950
      %v967 = vmul.f32 %v839, %v951
      %v968 = vmul.f32 %v868, %v952
      %v969 = vmul.f32 %v897, %v953
      %v970 = vmul.f32 %v926, %v954
      %v971 = vmul.f32 %v725, %v947
      %v972 = vmul.f32 %v754, %v948
      %v973 = vmul.f32 %v783, %v949
      %v974 = vmul.f32 %v812, %v950
      %v975 = vmul.f32 %v841, %v951
      %v976 = vmul.f32 %v870, %v952
      %v977 = vmul.f32 %v899, %v953
      %v978 = vmul.f32 %v928, %v954
      %v979 = vmul.f32 %v728, %v947
      %v980 = vmul.f32 %v757, %v948
      %v981 = vmul.f32 %v786, %v949
      %v982 = vmul.f32 %v815, %v950
      %v983 = vmul.f32 %v844, %v951
      %v984 = vmul.f32 %v873, %v952
      %v985 = vmul.f32 %v902, %v953
      %v986 = vmul.f32 %v931, %v954
      %v987 = vmul.f32 %v730, %v947
      %v988 = vmul.f32 %v759, %v948
      %v989 = vmul.f32 %v788, %v949
      %v990 = vmul.f32 %v817, %v950
      %v991 = vmul.f32 %v846, %v951
      %v992 = vmul.f32 %v875, %v952
      %v993 = vmul.f32 %v904, %v953
      %v994 = vmul.f32 %v933, %v954
      %v995 = vmul.f32 %v733, %v947
      %v996 = vmul.f32 %v762, %v948
      %v997 = vmul.f32 %v791, %v949
      %v998 = vmul.f32 %v820, %v950
      %v999 = vmul.f32 %v849, %v951
      %v1000 = vmul.f32 %v878, %v952
      %v1001 = vmul.f32 %v907, %v953
      %v1002 = vmul.f32 %v936, %v954
      %v1003 = vmul.f32 %v735, %v947
      %v1004 = vmul.f32 %v764, %v948
      %v1005 = vmul.f32 %v793, %v949
      %v1006 = vmul.f32 %v822, %v950
      %v1007 = vmul.f32 %v851, %v951
      %v1008 = vmul.f32 %v880, %v952
      %v1009 = vmul.f32 %v909, %v953
      %v1010 = vmul.f32 %v938, %v954
      %v1011 = vmul.f32 %v738, %v947
      %v1012 = vmul.f32 %v767, %v948
      %v1013 = vmul.f32 %v796, %v949
      %v1014 = vmul.f32 %v825, %v950
      %v1015 = vmul.f32 %v854, %v951
      %v1016 = vmul.f32 %v883, %v952
      %v1017 = vmul.f32 %v912, %v953
      %v1018 = vmul.f32 %v941, %v954
      %v1019 = vmul.f32 %v740, %v947
      %v1020 = vmul.f32 %v769, %v948
      %v1021 = vmul.f32 %v798, %v949
      %v1022 = vmul.f32 %v827, %v950
      %v1023 = vmul.f32 %v856, %v951
      %v1024 = vmul.f32 %v885, %v952
      %v1025 = vmul.f32 %v914, %v953
      %v1026 = vmul.f32 %v943, %v954
      %v1027 = vld [vmem:[%s3] sm:$0xff]
      %v1029 = vperm.slane %v1027, 0
      %v1030 = vperm.slane %v1027, 1
      %v1031 = vperm.slane %v1027, 2
      %v1032 = vperm.slane %v1027, 3
      %v1033 = vperm.slane %v1027, 4
      %v1034 = vperm.slane %v1027, 5
      %v1035 = vperm.slane %v1027, 6
      %v1036 = vperm.slane %v1027, 7
      %v1045 = vadd.f32 %v963, %v1029
      %v1046 = vadd.f32 %v964, %v1030
      %v1047 = vadd.f32 %v965, %v1031
      %v1048 = vadd.f32 %v966, %v1032
      %v1049 = vadd.f32 %v967, %v1033
      %v1050 = vadd.f32 %v968, %v1034
      %v1051 = vadd.f32 %v969, %v1035
      %v1052 = vadd.f32 %v970, %v1036
      %v1053 = vadd.f32 %v971, %v1029
      %v1054 = vadd.f32 %v972, %v1030
      %v1055 = vadd.f32 %v973, %v1031
      %v1056 = vadd.f32 %v974, %v1032
      %v1057 = vadd.f32 %v975, %v1033
      %v1058 = vadd.f32 %v976, %v1034
      %v1059 = vadd.f32 %v977, %v1035
      %v1060 = vadd.f32 %v978, %v1036
      %v1061 = vadd.f32 %v979, %v1029
      %v1062 = vadd.f32 %v980, %v1030
      %v1063 = vadd.f32 %v981, %v1031
      %v1064 = vadd.f32 %v982, %v1032
      %v1065 = vadd.f32 %v983, %v1033
      %v1066 = vadd.f32 %v984, %v1034
      %v1067 = vadd.f32 %v985, %v1035
      %v1068 = vadd.f32 %v986, %v1036
      %v1069 = vadd.f32 %v987, %v1029
      %v1070 = vadd.f32 %v988, %v1030
      %v1071 = vadd.f32 %v989, %v1031
      %v1072 = vadd.f32 %v990, %v1032
      %v1073 = vadd.f32 %v991, %v1033
      %v1074 = vadd.f32 %v992, %v1034
      %v1075 = vadd.f32 %v993, %v1035
      %v1076 = vadd.f32 %v994, %v1036
      %v1077 = vadd.f32 %v995, %v1029
      %v1078 = vadd.f32 %v996, %v1030
      %v1079 = vadd.f32 %v997, %v1031
      %v1080 = vadd.f32 %v998, %v1032
      %v1081 = vadd.f32 %v999, %v1033
      %v1082 = vadd.f32 %v1000, %v1034
      %v1083 = vadd.f32 %v1001, %v1035
      %v1084 = vadd.f32 %v1002, %v1036
      %v1085 = vadd.f32 %v1003, %v1029
      %v1086 = vadd.f32 %v1004, %v1030
      %v1087 = vadd.f32 %v1005, %v1031
      %v1088 = vadd.f32 %v1006, %v1032
      %v1089 = vadd.f32 %v1007, %v1033
      %v1090 = vadd.f32 %v1008, %v1034
      %v1091 = vadd.f32 %v1009, %v1035
      %v1092 = vadd.f32 %v1010, %v1036
      %v1093 = vadd.f32 %v1011, %v1029
      %v1094 = vadd.f32 %v1012, %v1030
      %v1095 = vadd.f32 %v1013, %v1031
      %v1096 = vadd.f32 %v1014, %v1032
      %v1097 = vadd.f32 %v1015, %v1033
      %v1098 = vadd.f32 %v1016, %v1034
      %v1099 = vadd.f32 %v1017, %v1035
      %v1100 = vadd.f32 %v1018, %v1036
      %v1101 = vadd.f32 %v1019, %v1029
      %v1102 = vadd.f32 %v1020, %v1030
      %v1103 = vadd.f32 %v1021, %v1031
      %v1104 = vadd.f32 %v1022, %v1032
      %v1105 = vadd.f32 %v1023, %v1033
      %v1106 = vadd.f32 %v1024, %v1034
      %v1107 = vadd.f32 %v1025, %v1035
      %v1108 = vadd.f32 %v1026, %v1036
      %v1109 = vmul.f32 %v1045, 0.01
      %v1110 = vmul.f32 %v1046, 0.01
      %v1111 = vmul.f32 %v1047, 0.01
      %v1112 = vmul.f32 %v1048, 0.01
      %v1113 = vmul.f32 %v1049, 0.01
      %v1114 = vmul.f32 %v1050, 0.01
      %v1115 = vmul.f32 %v1051, 0.01
      %v1116 = vmul.f32 %v1052, 0.01
      %v1117 = vmul.f32 %v1053, 0.01
      %v1118 = vmul.f32 %v1054, 0.01
      %v1119 = vmul.f32 %v1055, 0.01
      %v1120 = vmul.f32 %v1056, 0.01
      %v1121 = vmul.f32 %v1057, 0.01
      %v1122 = vmul.f32 %v1058, 0.01
      %v1123 = vmul.f32 %v1059, 0.01
      %v1124 = vmul.f32 %v1060, 0.01
      %v1125 = vmul.f32 %v1061, 0.01
      %v1126 = vmul.f32 %v1062, 0.01
      %v1127 = vmul.f32 %v1063, 0.01
      %v1128 = vmul.f32 %v1064, 0.01
      %v1129 = vmul.f32 %v1065, 0.01
      %v1130 = vmul.f32 %v1066, 0.01
      %v1131 = vmul.f32 %v1067, 0.01
      %v1132 = vmul.f32 %v1068, 0.01
      %v1133 = vmul.f32 %v1069, 0.01
      %v1134 = vmul.f32 %v1070, 0.01
      %v1135 = vmul.f32 %v1071, 0.01
      %v1136 = vmul.f32 %v1072, 0.01
      %v1137 = vmul.f32 %v1073, 0.01
      %v1138 = vmul.f32 %v1074, 0.01
      %v1139 = vmul.f32 %v1075, 0.01
      %v1140 = vmul.f32 %v1076, 0.01
      %v1141 = vmul.f32 %v1077, 0.01
      %v1142 = vmul.f32 %v1078, 0.01
      %v1143 = vmul.f32 %v1079, 0.01
      %v1144 = vmul.f32 %v1080, 0.01
      %v1145 = vmul.f32 %v1081, 0.01
      %v1146 = vmul.f32 %v1082, 0.01
      %v1147 = vmul.f32 %v1083, 0.01
      %v1148 = vmul.f32 %v1084, 0.01
      %v1149 = vmul.f32 %v1085, 0.01
      %v1150 = vmul.f32 %v1086, 0.01
      %v1151 = vmul.f32 %v1087, 0.01
      %v1152 = vmul.f32 %v1088, 0.01
      %v1153 = vmul.f32 %v1089, 0.01
      %v1154 = vmul.f32 %v1090, 0.01
      %v1155 = vmul.f32 %v1091, 0.01
      %v1156 = vmul.f32 %v1092, 0.01
      %v1157 = vmul.f32 %v1093, 0.01
      %v1158 = vmul.f32 %v1094, 0.01
      %v1159 = vmul.f32 %v1095, 0.01
      %v1160 = vmul.f32 %v1096, 0.01
      %v1161 = vmul.f32 %v1097, 0.01
      %v1162 = vmul.f32 %v1098, 0.01
      %v1163 = vmul.f32 %v1099, 0.01
      %v1164 = vmul.f32 %v1100, 0.01
      %v1165 = vmul.f32 %v1101, 0.01
      %v1166 = vmul.f32 %v1102, 0.01
      %v1167 = vmul.f32 %v1103, 0.01
      %v1168 = vmul.f32 %v1104, 0.01
      %v1169 = vmul.f32 %v1105, 0.01
      %v1170 = vmul.f32 %v1106, 0.01
      %v1171 = vmul.f32 %v1107, 0.01
      %v1172 = vmul.f32 %v1108, 0.01
      %v1173 = vmax.f32 %v1045, %v1109
      %v1174 = vmax.f32 %v1046, %v1110
      %v1175 = vmax.f32 %v1047, %v1111
      %v1176 = vmax.f32 %v1048, %v1112
      %v1177 = vmax.f32 %v1049, %v1113
      %v1178 = vmax.f32 %v1050, %v1114
      %v1179 = vmax.f32 %v1051, %v1115
      %v1180 = vmax.f32 %v1052, %v1116
      %v1181 = vmax.f32 %v1053, %v1117
      %v1182 = vmax.f32 %v1054, %v1118
      %v1183 = vmax.f32 %v1055, %v1119
      %v1184 = vmax.f32 %v1056, %v1120
      %v1185 = vmax.f32 %v1057, %v1121
      %v1186 = vmax.f32 %v1058, %v1122
      %v1187 = vmax.f32 %v1059, %v1123
      %v1188 = vmax.f32 %v1060, %v1124
      %v1189 = vmax.f32 %v1061, %v1125
      %v1190 = vmax.f32 %v1062, %v1126
      %v1191 = vmax.f32 %v1063, %v1127
      %v1192 = vmax.f32 %v1064, %v1128
      %v1193 = vmax.f32 %v1065, %v1129
      %v1194 = vmax.f32 %v1066, %v1130
      %v1195 = vmax.f32 %v1067, %v1131
      %v1196 = vmax.f32 %v1068, %v1132
      %v1197 = vmax.f32 %v1069, %v1133
      %v1198 = vmax.f32 %v1070, %v1134
      %v1199 = vmax.f32 %v1071, %v1135
      %v1200 = vmax.f32 %v1072, %v1136
      %v1201 = vmax.f32 %v1073, %v1137
      %v1202 = vmax.f32 %v1074, %v1138
      %v1203 = vmax.f32 %v1075, %v1139
      %v1204 = vmax.f32 %v1076, %v1140
      %v1205 = vmax.f32 %v1077, %v1141
      %v1206 = vmax.f32 %v1078, %v1142
      %v1207 = vmax.f32 %v1079, %v1143
      %v1208 = vmax.f32 %v1080, %v1144
      %v1209 = vmax.f32 %v1081, %v1145
      %v1210 = vmax.f32 %v1082, %v1146
      %v1211 = vmax.f32 %v1083, %v1147
      %v1212 = vmax.f32 %v1084, %v1148
      %v1213 = vmax.f32 %v1085, %v1149
      %v1214 = vmax.f32 %v1086, %v1150
      %v1215 = vmax.f32 %v1087, %v1151
      %v1216 = vmax.f32 %v1088, %v1152
      %v1217 = vmax.f32 %v1089, %v1153
      %v1218 = vmax.f32 %v1090, %v1154
      %v1219 = vmax.f32 %v1091, %v1155
      %v1220 = vmax.f32 %v1092, %v1156
      %v1221 = vmax.f32 %v1093, %v1157
      %v1222 = vmax.f32 %v1094, %v1158
      %v1223 = vmax.f32 %v1095, %v1159
      %v1224 = vmax.f32 %v1096, %v1160
      %v1225 = vmax.f32 %v1097, %v1161
      %v1226 = vmax.f32 %v1098, %v1162
      %v1227 = vmax.f32 %v1099, %v1163
      %v1228 = vmax.f32 %v1100, %v1164
      %v1229 = vmax.f32 %v1101, %v1165
      %v1230 = vmax.f32 %v1102, %v1166
      %v1231 = vmax.f32 %v1103, %v1167
      %v1232 = vmax.f32 %v1104, %v1168
      %v1233 = vmax.f32 %v1105, %v1169
      %v1234 = vmax.f32 %v1106, %v1170
      %v1235 = vmax.f32 %v1107, %v1171
      %v1236 = vmax.f32 %v1108, %v1172
      %v1237 = vld [vmem:[#allocation2] sm:$0xff]
      %v1238 = vld [vmem:[#allocation2 + $0x8] sm:$0xff]
      %v1239 = vld [vmem:[#allocation2 + $0x10] sm:$0xff]
      %v1240 = vld [vmem:[#allocation2 + $0x18] sm:$0xff]
      %v1241 = vld [vmem:[#allocation2 + $0x20] sm:$0xff]
      %v1242 = vld [vmem:[#allocation2 + $0x28] sm:$0xff]
      %v1243 = vld [vmem:[#allocation2 + $0x30] sm:$0xff]
      %v1244 = vld [vmem:[#allocation2 + $0x38] sm:$0xff]
      %v1245 = vmax.f32 %v1237, %v1173
      %v1246 = vmax.f32 %v1238, %v1174
      %v1247 = vmax.f32 %v1239, %v1175
      %v1248 = vmax.f32 %v1240, %v1176
      %v1249 = vmax.f32 %v1241, %v1177
      %v1250 = vmax.f32 %v1242, %v1178
      %v1251 = vmax.f32 %v1243, %v1179
      %v1252 = vmax.f32 %v1244, %v1180
      %v1253 = vmax.f32 %v1245, %v1181
      %v1254 = vmax.f32 %v1246, %v1182
      %v1255 = vmax.f32 %v1247, %v1183
      %v1256 = vmax.f32 %v1248, %v1184
      %v1257 = vmax.f32 %v1249, %v1185
      %v1258 = vmax.f32 %v1250, %v1186
      %v1259 = vmax.f32 %v1251, %v1187
      %v1260 = vmax.f32 %v1252, %v1188
      %v1261 = vmax.f32 %v1253, %v1189
      %v1262 = vmax.f32 %v1254, %v1190
      %v1263 = vmax.f32 %v1255, %v1191
      %v1264 = vmax.f32 %v1256, %v1192
      %v1265 = vmax.f32 %v1257, %v1193
      %v1266 = vmax.f32 %v1258, %v1194
      %v1267 = vmax.f32 %v1259, %v1195
      %v1268 = vmax.f32 %v1260, %v1196
      %v1269 = vmax.f32 %v1261, %v1197
      %v1270 = vmax.f32 %v1262, %v1198
      %v1271 = vmax.f32 %v1263, %v1199
      %v1272 = vmax.f32 %v1264, %v1200
      %v1273 = vmax.f32 %v1265, %v1201
      %v1274 = vmax.f32 %v1266, %v1202
      %v1275 = vmax.f32 %v1267, %v1203
      %v1276 = vmax.f32 %v1268, %v1204
      %v1277 = vmax.f32 %v1269, %v1205
      %v1278 = vmax.f32 %v1270, %v1206
      %v1279 = vmax.f32 %v1271, %v1207
      %v1280 = vmax.f32 %v1272, %v1208
      %v1281 = vmax.f32 %v1273, %v1209
      %v1282 = vmax.f32 %v1274, %v1210
      %v1283 = vmax.f32 %v1275, %v1211
      %v1284 = vmax.f32 %v1276, %v1212
      %v1285 = vmax.f32 %v1277, %v1213
      %v1286 = vmax.f32 %v1278, %v1214
      %v1287 = vmax.f32 %v1279, %v1215
      %v1288 = vmax.f32 %v1280, %v1216
      %v1289 = vmax.f32 %v1281, %v1217
      %v1290 = vmax.f32 %v1282, %v1218
      %v1291 = vmax.f32 %v1283, %v1219
      %v1292 = vmax.f32 %v1284, %v1220
      %v1293 = vmax.f32 %v1285, %v1221
      %v1294 = vmax.f32 %v1286, %v1222
      %v1295 = vmax.f32 %v1287, %v1223
      %v1296 = vmax.f32 %v1288, %v1224
      %v1297 = vmax.f32 %v1289, %v1225
      %v1298 = vmax.f32 %v1290, %v1226
      %v1299 = vmax.f32 %v1291, %v1227
      %v1300 = vmax.f32 %v1292, %v1228
      %v1301 = vmax.f32 %v1293, %v1229
      %v1302 = vmax.f32 %v1294, %v1230
      %v1303 = vmax.f32 %v1295, %v1231
      %v1304 = vmax.f32 %v1296, %v1232
      %v1305 = vmax.f32 %v1297, %v1233
      %v1306 = vmax.f32 %v1298, %v1234
      %v1307 = vmax.f32 %v1299, %v1235
      %v1308 = vmax.f32 %v1300, %v1236
      %1309 = vst [vmem:[#allocation2] sm:$0xff] %v1301
      %1310 = vst [vmem:[#allocation2 + $0x8] sm:$0xff] %v1302
      %1311 = vst [vmem:[#allocation2 + $0x10] sm:$0xff] %v1303
      %1312 = vst [vmem:[#allocation2 + $0x18] sm:$0xff] %v1304
      %1313 = vst [vmem:[#allocation2 + $0x20] sm:$0xff] %v1305
      %1314 = vst [vmem:[#allocation2 + $0x28] sm:$0xff] %v1306
      %1315 = vst [vmem:[#allocation2 + $0x30] sm:$0xff] %v1307
      %1316 = vst [vmem:[#allocation2 + $0x38] sm:$0xff] %v1308
      // Predicated region
      $region53: #{foldingnet_forward.12} parent=47 // pred_check
        %p1317 = pneg %p305
      $region54: #{foldingnet_forward.12} parent=47 // pred_check_branch
        %1319 = sbr.rel (%p1317) target = $region56
      $region55: #{foldingnet_forward.12} parent=47 // pred_region
        %v1320 = vld [vmem:[#allocation2] sm:$0xff]
        %v1321 = vld [vmem:[#allocation2 + $0x8] sm:$0xff]
        %v1322 = vld [vmem:[#allocation2 + $0x10] sm:$0xff]
        %v1323 = vld [vmem:[#allocation2 + $0x18] sm:$0xff]
        %v1324 = vld [vmem:[#allocation2 + $0x20] sm:$0xff]
        %v1325 = vld [vmem:[#allocation2 + $0x28] sm:$0xff]
        %v1326 = vld [vmem:[#allocation2 + $0x30] sm:$0xff]
        %v1327 = vld [vmem:[#allocation2 + $0x38] sm:$0xff]
        %v1328 = vrot.slane %v1320, 4
        %v1329 = vmax.f32 %v1320, %v1328
        %v1330 = vrot.slane %v1329, 2
        %v1331 = vmax.f32 %v1329, %v1330
        %v1332 = vrot.slane %v1331, 1
        %v1333 = vmax.f32 %v1331, %v1332
        %v1334 = vrot.slane %v1321, 4
        %v1335 = vmax.f32 %v1321, %v1334
        %v1336 = vrot.slane %v1335, 2
        %v1337 = vmax.f32 %v1335, %v1336
        %v1338 = vrot.slane %v1337, 1
        %v1339 = vmax.f32 %v1337, %v1338
        %v1340 = vrot.slane %v1322, 4
        %v1341 = vmax.f32 %v1322, %v1340
        %v1342 = vrot.slane %v1341, 2
        %v1343 = vmax.f32 %v1341, %v1342
        %v1344 = vrot.slane %v1343, 1
        %v1345 = vmax.f32 %v1343, %v1344
        %v1346 = vrot.slane %v1323, 4
        %v1347 = vmax.f32 %v1323, %v1346
        %v1348 = vrot.slane %v1347, 2
        %v1349 = vmax.f32 %v1347, %v1348
        %v1350 = vrot.slane %v1349, 1
        %v1351 = vmax.f32 %v1349, %v1350
        %v1352 = vrot.slane %v1324, 4
        %v1353 = vmax.f32 %v1324, %v1352
        %v1354 = vrot.slane %v1353, 2
        %v1355 = vmax.f32 %v1353, %v1354
        %v1356 = vrot.slane %v1355, 1
        %v1357 = vmax.f32 %v1355, %v1356
        %v1358 = vrot.slane %v1325, 4
        %v1359 = vmax.f32 %v1325, %v1358
        %v1360 = vrot.slane %v1359, 2
        %v1361 = vmax.f32 %v1359, %v1360
        %v1362 = vrot.slane %v1361, 1
        %v1363 = vmax.f32 %v1361, %v1362
        %v1364 = vrot.slane %v1326, 4
        %v1365 = vmax.f32 %v1326, %v1364
        %v1366 = vrot.slane %v1365, 2
        %v1367 = vmax.f32 %v1365, %v1366
        %v1368 = vrot.slane %v1367, 1
        %v1369 = vmax.f32 %v1367, %v1368
        %v1370 = vrot.slane %v1327, 4
        %v1371 = vmax.f32 %v1327, %v1370
        %v1372 = vrot.slane %v1371, 2
        %v1373 = vmax.f32 %v1371, %v1372
        %v1374 = vrot.slane %v1373, 1
        %v1375 = vmax.f32 %v1373, %v1374
        %v1376 = vpack.c.bf16 %v1333, %v1333
        %v1377 = vpack.c.bf16 %v1339, %v1339
        %v1378 = vpack.c.bf16 %v1345, %v1345
        %v1379 = vpack.c.bf16 %v1351, %v1351
        %v1380 = vpack.c.bf16 %v1357, %v1357
        %v1381 = vpack.c.bf16 %v1363, %v1363
        %v1382 = vpack.c.bf16 %v1369, %v1369
        %v1383 = vpack.c.bf16 %v1375, %v1375
        %v1384 = vld [vmem:[%s4] sm:$0xff]
        %v1385 = vld [vmem:[%s4 + $0x8] sm:$0xff]
        %v1386 = vld [vmem:[%s4 + $0x10] sm:$0xff]
        %v1387 = vld [vmem:[%s4 + $0x18] sm:$0xff]
        %v1388 = vld [vmem:[%s4 + $0x20] sm:$0xff]
        %v1389 = vld [vmem:[%s4 + $0x28] sm:$0xff]
        %v1390 = vld [vmem:[%s4 + $0x30] sm:$0xff]
        %v1391 = vld [vmem:[%s4 + $0x38] sm:$0xff]
        %v1392 = vld [vmem:[%s4 + $0x40] sm:$0xff]
        %v1393 = vld [vmem:[%s4 + $0x48] sm:$0xff]
        %v1394 = vld [vmem:[%s4 + $0x50] sm:$0xff]
        %v1395 = vld [vmem:[%s4 + $0x58] sm:$0xff]
        %v1396 = vld [vmem:[%s4 + $0x60] sm:$0xff]
        %v1397 = vld [vmem:[%s4 + $0x68] sm:$0xff]
        %v1398 = vld [vmem:[%s4 + $0x70] sm:$0xff]
        %v1399 = vld [vmem:[%s4 + $0x78] sm:$0xff]
        %v1400 = vld [vmem:[%s4 + $0x80] sm:$0xff]
        %v1401 = vld [vmem:[%s4 + $0x88] sm:$0xff]
        %v1402 = vld [vmem:[%s4 + $0x90] sm:$0xff]
        %v1403 = vld [vmem:[%s4 + $0x98] sm:$0xff]
        %v1404 = vld [vmem:[%s4 + $0xa0] sm:$0xff]
        %v1405 = vld [vmem:[%s4 + $0xa8] sm:$0xff]
        %v1406 = vld [vmem:[%s4 + $0xb0] sm:$0xff]
        %v1407 = vld [vmem:[%s4 + $0xb8] sm:$0xff]
        %v1408 = vld [vmem:[%s4 + $0xc0] sm:$0xff]
        %v1409 = vld [vmem:[%s4 + $0xc8] sm:$0xff]
        %v1410 = vld [vmem:[%s4 + $0xd0] sm:$0xff]
        %v1411 = vld [vmem:[%s4 + $0xd8] sm:$0xff]
        %v1412 = vld [vmem:[%s4 + $0xe0] sm:$0xff]
        %v1413 = vld [vmem:[%s4 + $0xe8] sm:$0xff]
        %v1414 = vld [vmem:[%s4 + $0xf0] sm:$0xff]
        %v1415 = vld [vmem:[%s4 + $0xf8] sm:$0xff]
        %v1416 = vld [vmem:[%s4 + $0x100] sm:$0xff]
        %v1417 = vld [vmem:[%s4 + $0x108] sm:$0xff]
        %v1418 = vld [vmem:[%s4 + $0x110] sm:$0xff]
        %v1419 = vld [vmem:[%s4 + $0x118] sm:$0xff]
        %v1420 = vld [vmem:[%s4 + $0x120] sm:$0xff]
        %v1421 = vld [vmem:[%s4 + $0x128] sm:$0xff]
        %v1422 = vld [vmem:[%s4 + $0x130] sm:$0xff]
        %v1423 = vld [vmem:[%s4 + $0x138] sm:$0xff]
        %v1424 = vld [vmem:[%s4 + $0x140] sm:$0xff]
        %v1425 = vld [vmem:[%s4 + $0x148] sm:$0xff]
        %v1426 = vld [vmem:[%s4 + $0x150] sm:$0xff]
        %v1427 = vld [vmem:[%s4 + $0x158] sm:$0xff]
        %v1428 = vld [vmem:[%s4 + $0x160] sm:$0xff]
        %v1429 = vld [vmem:[%s4 + $0x168] sm:$0xff]
        %v1430 = vld [vmem:[%s4 + $0x170] sm:$0xff]
        %v1431 = vld [vmem:[%s4 + $0x178] sm:$0xff]
        %v1432 = vld [vmem:[%s4 + $0x180] sm:$0xff]
        %v1433 = vld [vmem:[%s4 + $0x188] sm:$0xff]
        %v1434 = vld [vmem:[%s4 + $0x190] sm:$0xff]
        %v1435 = vld [vmem:[%s4 + $0x198] sm:$0xff]
        %v1436 = vld [vmem:[%s4 + $0x1a0] sm:$0xff]
        %v1437 = vld [vmem:[%s4 + $0x1a8] sm:$0xff]
        %v1438 = vld [vmem:[%s4 + $0x1b0] sm:$0xff]
        %v1439 = vld [vmem:[%s4 + $0x1b8] sm:$0xff]
        %v1440 = vld [vmem:[%s4 + $0x1c0] sm:$0xff]
        %v1441 = vld [vmem:[%s4 + $0x1c8] sm:$0xff]
        %v1442 = vld [vmem:[%s4 + $0x1d0] sm:$0xff]
        %v1443 = vld [vmem:[%s4 + $0x1d8] sm:$0xff]
        %v1444 = vld [vmem:[%s4 + $0x1e0] sm:$0xff]
        %v1445 = vld [vmem:[%s4 + $0x1e8] sm:$0xff]
        %v1446 = vld [vmem:[%s4 + $0x1f0] sm:$0xff]
        %v1447 = vld [vmem:[%s4 + $0x1f8] sm:$0xff]
        %v1448 = vld [vmem:[%s4 + $0x200] sm:$0xff]
        %v1449 = vld [vmem:[%s4 + $0x208] sm:$0xff]
        %v1450 = vld [vmem:[%s4 + $0x210] sm:$0xff]
        %v1451 = vld [vmem:[%s4 + $0x218] sm:$0xff]
        %v1452 = vld [vmem:[%s4 + $0x220] sm:$0xff]
        %v1453 = vld [vmem:[%s4 + $0x228] sm:$0xff]
        %v1454 = vld [vmem:[%s4 + $0x230] sm:$0xff]
        %v1455 = vld [vmem:[%s4 + $0x238] sm:$0xff]
        %v1456 = vld [vmem:[%s4 + $0x240] sm:$0xff]
        %v1457 = vld [vmem:[%s4 + $0x248] sm:$0xff]
        %v1458 = vld [vmem:[%s4 + $0x250] sm:$0xff]
        %v1459 = vld [vmem:[%s4 + $0x258] sm:$0xff]
        %v1460 = vld [vmem:[%s4 + $0x260] sm:$0xff]
        %v1461 = vld [vmem:[%s4 + $0x268] sm:$0xff]
        %v1462 = vld [vmem:[%s4 + $0x270] sm:$0xff]
        %v1463 = vld [vmem:[%s4 + $0x278] sm:$0xff]
        %v1464 = vld [vmem:[%s4 + $0x280] sm:$0xff]
        %v1465 = vld [vmem:[%s4 + $0x288] sm:$0xff]
        %v1466 = vld [vmem:[%s4 + $0x290] sm:$0xff]
        %v1467 = vld [vmem:[%s4 + $0x298] sm:$0xff]
        %v1468 = vld [vmem:[%s4 + $0x2a0] sm:$0xff]
        %v1469 = vld [vmem:[%s4 + $0x2a8] sm:$0xff]
        %v1470 = vld [vmem:[%s4 + $0x2b0] sm:$0xff]
        %v1471 = vld [vmem:[%s4 + $0x2b8] sm:$0xff]
        %v1472 = vld [vmem:[%s4 + $0x2c0] sm:$0xff]
        %v1473 = vld [vmem:[%s4 + $0x2c8] sm:$0xff]
        %v1474 = vld [vmem:[%s4 + $0x2d0] sm:$0xff]
        %v1475 = vld [vmem:[%s4 + $0x2d8] sm:$0xff]
        %v1476 = vld [vmem:[%s4 + $0x2e0] sm:$0xff]
        %v1477 = vld [vmem:[%s4 + $0x2e8] sm:$0xff]
        %v1478 = vld [vmem:[%s4 + $0x2f0] sm:$0xff]
        %v1479 = vld [vmem:[%s4 + $0x2f8] sm:$0xff]
        %v1480 = vld [vmem:[%s4 + $0x300] sm:$0xff]
        %v1481 = vld [vmem:[%s4 + $0x308] sm:$0xff]
        %v1482 = vld [vmem:[%s4 + $0x310] sm:$0xff]
        %v1483 = vld [vmem:[%s4 + $0x318] sm:$0xff]
        %v1484 = vld [vmem:[%s4 + $0x320] sm:$0xff]
        %v1485 = vld [vmem:[%s4 + $0x328] sm:$0xff]
        %v1486 = vld [vmem:[%s4 + $0x330] sm:$0xff]
        %v1487 = vld [vmem:[%s4 + $0x338] sm:$0xff]
        %v1488 = vld [vmem:[%s4 + $0x340] sm:$0xff]
        %v1489 = vld [vmem:[%s4 + $0x348] sm:$0xff]
        %v1490 = vld [vmem:[%s4 + $0x350] sm:$0xff]
        %v1491 = vld [vmem:[%s4 + $0x358] sm:$0xff]
        %v1492 = vld [vmem:[%s4 + $0x360] sm:$0xff]
        %v1493 = vld [vmem:[%s4 + $0x368] sm:$0xff]
        %v1494 = vld [vmem:[%s4 + $0x370] sm:$0xff]
        %v1495 = vld [vmem:[%s4 + $0x378] sm:$0xff]
        %v1496 = vld [vmem:[%s4 + $0x380] sm:$0xff]
        %v1497 = vld [vmem:[%s4 + $0x388] sm:$0xff]
        %v1498 = vld [vmem:[%s4 + $0x390] sm:$0xff]
        %v1499 = vld [vmem:[%s4 + $0x398] sm:$0xff]
        %v1500 = vld [vmem:[%s4 + $0x3a0] sm:$0xff]
        %v1501 = vld [vmem:[%s4 + $0x3a8] sm:$0xff]
        %v1502 = vld [vmem:[%s4 + $0x3b0] sm:$0xff]
        %v1503 = vld [vmem:[%s4 + $0x3b8] sm:$0xff]
        %v1504 = vld [vmem:[%s4 + $0x3c0] sm:$0xff]
        %v1505 = vld [vmem:[%s4 + $0x3c8] sm:$0xff]
        %v1506 = vld [vmem:[%s4 + $0x3d0] sm:$0xff]
        %v1507 = vld [vmem:[%s4 + $0x3d8] sm:$0xff]
        %v1508 = vld [vmem:[%s4 + $0x3e0] sm:$0xff]
        %v1509 = vld [vmem:[%s4 + $0x3e8] sm:$0xff]
        %v1510 = vld [vmem:[%s4 + $0x3f0] sm:$0xff]
        %v1511 = vld [vmem:[%s4 + $0x3f8] sm:$0xff]
        %v1512 = vld [vmem:[%s4 + $0x400] sm:$0xff]
        %v1513 = vld [vmem:[%s4 + $0x408] sm:$0xff]
        %v1514 = vld [vmem:[%s4 + $0x410] sm:$0xff]
        %v1515 = vld [vmem:[%s4 + $0x418] sm:$0xff]
        %v1516 = vld [vmem:[%s4 + $0x420] sm:$0xff]
        %v1517 = vld [vmem:[%s4 + $0x428] sm:$0xff]
        %v1518 = vld [vmem:[%s4 + $0x430] sm:$0xff]
        %v1519 = vld [vmem:[%s4 + $0x438] sm:$0xff]
        %v1520 = vld [vmem:[%s4 + $0x440] sm:$0xff]
        %v1521 = vld [vmem:[%s4 + $0x448] sm:$0xff]
        %v1522 = vld [vmem:[%s4 + $0x450] sm:$0xff]
        %v1523 = vld [vmem:[%s4 + $0x458] sm:$0xff]
        %v1524 = vld [vmem:[%s4 + $0x460] sm:$0xff]
        %v1525 = vld [vmem:[%s4 + $0x468] sm:$0xff]
        %v1526 = vld [vmem:[%s4 + $0x470] sm:$0xff]
        %v1527 = vld [vmem:[%s4 + $0x478] sm:$0xff]
        %v1528 = vld [vmem:[%s4 + $0x480] sm:$0xff]
        %v1529 = vld [vmem:[%s4 + $0x488] sm:$0xff]
        %v1530 = vld [vmem:[%s4 + $0x490] sm:$0xff]
        %v1531 = vld [vmem:[%s4 + $0x498] sm:$0xff]
        %v1532 = vld [vmem:[%s4 + $0x4a0] sm:$0xff]
        %v1533 = vld [vmem:[%s4 + $0x4a8] sm:$0xff]
        %v1534 = vld [vmem:[%s4 + $0x4b0] sm:$0xff]
        %v1535 = vld [vmem:[%s4 + $0x4b8] sm:$0xff]
        %v1536 = vld [vmem:[%s4 + $0x4c0] sm:$0xff]
        %v1537 = vld [vmem:[%s4 + $0x4c8] sm:$0xff]
        %v1538 = vld [vmem:[%s4 + $0x4d0] sm:$0xff]
        %v1539 = vld [vmem:[%s4 + $0x4d8] sm:$0xff]
        %v1540 = vld [vmem:[%s4 + $0x4e0] sm:$0xff]
        %v1541 = vld [vmem:[%s4 + $0x4e8] sm:$0xff]
        %v1542 = vld [vmem:[%s4 + $0x4f0] sm:$0xff]
        %v1543 = vld [vmem:[%s4 + $0x4f8] sm:$0xff]
        %v1544 = vld [vmem:[%s4 + $0x500] sm:$0xff]
        %v1545 = vld [vmem:[%s4 + $0x508] sm:$0xff]
        %v1546 = vld [vmem:[%s4 + $0x510] sm:$0xff]
        %v1547 = vld [vmem:[%s4 + $0x518] sm:$0xff]
        %v1548 = vld [vmem:[%s4 + $0x520] sm:$0xff]
        %v1549 = vld [vmem:[%s4 + $0x528] sm:$0xff]
        %v1550 = vld [vmem:[%s4 + $0x530] sm:$0xff]
        %v1551 = vld [vmem:[%s4 + $0x538] sm:$0xff]
        %v1552 = vld [vmem:[%s4 + $0x540] sm:$0xff]
        %v1553 = vld [vmem:[%s4 + $0x548] sm:$0xff]
        %v1554 = vld [vmem:[%s4 + $0x550] sm:$0xff]
        %v1555 = vld [vmem:[%s4 + $0x558] sm:$0xff]
        %v1556 = vld [vmem:[%s4 + $0x560] sm:$0xff]
        %v1557 = vld [vmem:[%s4 + $0x568] sm:$0xff]
        %v1558 = vld [vmem:[%s4 + $0x570] sm:$0xff]
        %v1559 = vld [vmem:[%s4 + $0x578] sm:$0xff]
        %v1560 = vld [vmem:[%s4 + $0x580] sm:$0xff]
        %v1561 = vld [vmem:[%s4 + $0x588] sm:$0xff]
        %v1562 = vld [vmem:[%s4 + $0x590] sm:$0xff]
        %v1563 = vld [vmem:[%s4 + $0x598] sm:$0xff]
        %v1564 = vld [vmem:[%s4 + $0x5a0] sm:$0xff]
        %v1565 = vld [vmem:[%s4 + $0x5a8] sm:$0xff]
        %v1566 = vld [vmem:[%s4 + $0x5b0] sm:$0xff]
        %v1567 = vld [vmem:[%s4 + $0x5b8] sm:$0xff]
        %v1568 = vld [vmem:[%s4 + $0x5c0] sm:$0xff]
        %v1569 = vld [vmem:[%s4 + $0x5c8] sm:$0xff]
        %v1570 = vld [vmem:[%s4 + $0x5d0] sm:$0xff]
        %v1571 = vld [vmem:[%s4 + $0x5d8] sm:$0xff]
        %v1572 = vld [vmem:[%s4 + $0x5e0] sm:$0xff]
        %v1573 = vld [vmem:[%s4 + $0x5e8] sm:$0xff]
        %v1574 = vld [vmem:[%s4 + $0x5f0] sm:$0xff]
        %v1575 = vld [vmem:[%s4 + $0x5f8] sm:$0xff]
        %v1576 = vld [vmem:[%s4 + $0x600] sm:$0xff]
        %v1577 = vld [vmem:[%s4 + $0x608] sm:$0xff]
        %v1578 = vld [vmem:[%s4 + $0x610] sm:$0xff]
        %v1579 = vld [vmem:[%s4 + $0x618] sm:$0xff]
        %v1580 = vld [vmem:[%s4 + $0x620] sm:$0xff]
        %v1581 = vld [vmem:[%s4 + $0x628] sm:$0xff]
        %v1582 = vld [vmem:[%s4 + $0x630] sm:$0xff]
        %v1583 = vld [vmem:[%s4 + $0x638] sm:$0xff]
        %v1584 = vld [vmem:[%s4 + $0x640] sm:$0xff]
        %v1585 = vld [vmem:[%s4 + $0x648] sm:$0xff]
        %v1586 = vld [vmem:[%s4 + $0x650] sm:$0xff]
        %v1587 = vld [vmem:[%s4 + $0x658] sm:$0xff]
        %v1588 = vld [vmem:[%s4 + $0x660] sm:$0xff]
        %v1589 = vld [vmem:[%s4 + $0x668] sm:$0xff]
        %v1590 = vld [vmem:[%s4 + $0x670] sm:$0xff]
        %v1591 = vld [vmem:[%s4 + $0x678] sm:$0xff]
        %v1592 = vld [vmem:[%s4 + $0x680] sm:$0xff]
        %v1593 = vld [vmem:[%s4 + $0x688] sm:$0xff]
        %v1594 = vld [vmem:[%s4 + $0x690] sm:$0xff]
        %v1595 = vld [vmem:[%s4 + $0x698] sm:$0xff]
        %v1596 = vld [vmem:[%s4 + $0x6a0] sm:$0xff]
        %v1597 = vld [vmem:[%s4 + $0x6a8] sm:$0xff]
        %v1598 = vld [vmem:[%s4 + $0x6b0] sm:$0xff]
        %v1599 = vld [vmem:[%s4 + $0x6b8] sm:$0xff]
        %v1600 = vld [vmem:[%s4 + $0x6c0] sm:$0xff]
        %v1601 = vld [vmem:[%s4 + $0x6c8] sm:$0xff]
        %v1602 = vld [vmem:[%s4 + $0x6d0] sm:$0xff]
        %v1603 = vld [vmem:[%s4 + $0x6d8] sm:$0xff]
        %v1604 = vld [vmem:[%s4 + $0x6e0] sm:$0xff]
        %v1605 = vld [vmem:[%s4 + $0x6e8] sm:$0xff]
        %v1606 = vld [vmem:[%s4 + $0x6f0] sm:$0xff]
        %v1607 = vld [vmem:[%s4 + $0x6f8] sm:$0xff]
        %v1608 = vld [vmem:[%s4 + $0x700] sm:$0xff]
        %v1609 = vld [vmem:[%s4 + $0x708] sm:$0xff]
        %v1610 = vld [vmem:[%s4 + $0x710] sm:$0xff]
        %v1611 = vld [vmem:[%s4 + $0x718] sm:$0xff]
        %v1612 = vld [vmem:[%s4 + $0x720] sm:$0xff]
        %v1613 = vld [vmem:[%s4 + $0x728] sm:$0xff]
        %v1614 = vld [vmem:[%s4 + $0x730] sm:$0xff]
        %v1615 = vld [vmem:[%s4 + $0x738] sm:$0xff]
        %v1616 = vld [vmem:[%s4 + $0x740] sm:$0xff]
        %v1617 = vld [vmem:[%s4 + $0x748] sm:$0xff]
        %v1618 = vld [vmem:[%s4 + $0x750] sm:$0xff]
        %v1619 = vld [vmem:[%s4 + $0x758] sm:$0xff]
        %v1620 = vld [vmem:[%s4 + $0x760] sm:$0xff]
        %v1621 = vld [vmem:[%s4 + $0x768] sm:$0xff]
        %v1622 = vld [vmem:[%s4 + $0x770] sm:$0xff]
        %v1623 = vld [vmem:[%s4 + $0x778] sm:$0xff]
        %v1624 = vld [vmem:[%s4 + $0x780] sm:$0xff]
        %v1625 = vld [vmem:[%s4 + $0x788] sm:$0xff]
        %v1626 = vld [vmem:[%s4 + $0x790] sm:$0xff]
        %v1627 = vld [vmem:[%s4 + $0x798] sm:$0xff]
        %v1628 = vld [vmem:[%s4 + $0x7a0] sm:$0xff]
        %v1629 = vld [vmem:[%s4 + $0x7a8] sm:$0xff]
        %v1630 = vld [vmem:[%s4 + $0x7b0] sm:$0xff]
        %v1631 = vld [vmem:[%s4 + $0x7b8] sm:$0xff]
        %v1632 = vld [vmem:[%s4 + $0x7c0] sm:$0xff]
        %v1633 = vld [vmem:[%s4 + $0x7c8] sm:$0xff]
        %v1634 = vld [vmem:[%s4 + $0x7d0] sm:$0xff]
        %v1635 = vld [vmem:[%s4 + $0x7d8] sm:$0xff]
        %v1636 = vld [vmem:[%s4 + $0x7e0] sm:$0xff]
        %v1637 = vld [vmem:[%s4 + $0x7e8] sm:$0xff]
        %v1638 = vld [vmem:[%s4 + $0x7f0] sm:$0xff]
        %v1639 = vld [vmem:[%s4 + $0x7f8] sm:$0xff]
        %v1896 = vunpack.c.l.b16 %v1384
        %v1897 = vunpack.c.h.b16 %v1384
        %v1898 = vunpack.c.l.b16 %v1385
        %v1899 = vunpack.c.h.b16 %v1385
        %v1900 = vunpack.c.l.b16 %v1386
        %v1901 = vunpack.c.h.b16 %v1386
        %v1902 = vunpack.c.l.b16 %v1387
        %v1903 = vunpack.c.h.b16 %v1387
        %v1904 = vunpack.c.l.b16 %v1388
        %v1905 = vunpack.c.h.b16 %v1388
        %v1906 = vunpack.c.l.b16 %v1389
        %v1907 = vunpack.c.h.b16 %v1389
        %v1908 = vunpack.c.l.b16 %v1390
        %v1909 = vunpack.c.h.b16 %v1390
        %v1910 = vunpack.c.l.b16 %v1391
        %v1911 = vunpack.c.h.b16 %v1391
        %v1912 = vunpack.c.l.b16 %v1392
        %v1913 = vunpack.c.h.b16 %v1392
        %v1914 = vunpack.c.l.b16 %v1393
        %v1915 = vunpack.c.h.b16 %v1393
        %v1916 = vunpack.c.l.b16 %v1394
        %v1917 = vunpack.c.h.b16 %v1394
        %v1918 = vunpack.c.l.b16 %v1395
        %v1919 = vunpack.c.h.b16 %v1395
        %v1920 = vunpack.c.l.b16 %v1396
        %v1921 = vunpack.c.h.b16 %v1396
        %v1922 = vunpack.c.l.b16 %v1397
        %v1923 = vunpack.c.h.b16 %v1397
        %v1924 = vunpack.c.l.b16 %v1398
        %v1925 = vunpack.c.h.b16 %v1398
        %v1926 = vunpack.c.l.b16 %v1399
        %v1927 = vunpack.c.h.b16 %v1399
        %v1928 = vunpack.c.l.b16 %v1400
        %v1929 = vunpack.c.h.b16 %v1400
        %v1930 = vunpack.c.l.b16 %v1401
        %v1931 = vunpack.c.h.b16 %v1401
        %v1932 = vunpack.c.l.b16 %v1402
        %v1933 = vunpack.c.h.b16 %v1402
        %v1934 = vunpack.c.l.b16 %v1403
        %v1935 = vunpack.c.h.b16 %v1403
        %v1936 = vunpack.c.l.b16 %v1404
        %v1937 = vunpack.c.h.b16 %v1404
        %v1938 = vunpack.c.l.b16 %v1405
        %v1939 = vunpack.c.h.b16 %v1405
        %v1940 = vunpack.c.l.b16 %v1406
        %v1941 = vunpack.c.h.b16 %v1406
        %v1942 = vunpack.c.l.b16 %v1407
        %v1943 = vunpack.c.h.b16 %v1407
        %v1944 = vunpack.c.l.b16 %v1408
        %v1945 = vunpack.c.h.b16 %v1408
        %v1946 = vunpack.c.l.b16 %v1409
        %v1947 = vunpack.c.h.b16 %v1409
        %v1948 = vunpack.c.l.b16 %v1410
        %v1949 = vunpack.c.h.b16 %v1410
        %v1950 = vunpack.c.l.b16 %v1411
        %v1951 = vunpack.c.h.b16 %v1411
        %v1952 = vunpack.c.l.b16 %v1412
        %v1953 = vunpack.c.h.b16 %v1412
        %v1954 = vunpack.c.l.b16 %v1413
        %v1955 = vunpack.c.h.b16 %v1413
        %v1956 = vunpack.c.l.b16 %v1414
        %v1957 = vunpack.c.h.b16 %v1414
        %v1958 = vunpack.c.l.b16 %v1415
        %v1959 = vunpack.c.h.b16 %v1415
        %v1960 = vunpack.c.l.b16 %v1416
        %v1961 = vunpack.c.h.b16 %v1416
        %v1962 = vunpack.c.l.b16 %v1417
        %v1963 = vunpack.c.h.b16 %v1417
        %v1964 = vunpack.c.l.b16 %v1418
        %v1965 = vunpack.c.h.b16 %v1418
        %v1966 = vunpack.c.l.b16 %v1419
        %v1967 = vunpack.c.h.b16 %v1419
        %v1968 = vunpack.c.l.b16 %v1420
        %v1969 = vunpack.c.h.b16 %v1420
        %v1970 = vunpack.c.l.b16 %v1421
        %v1971 = vunpack.c.h.b16 %v1421
        %v1972 = vunpack.c.l.b16 %v1422
        %v1973 = vunpack.c.h.b16 %v1422
        %v1974 = vunpack.c.l.b16 %v1423
        %v1975 = vunpack.c.h.b16 %v1423
        %v1976 = vunpack.c.l.b16 %v1424
        %v1977 = vunpack.c.h.b16 %v1424
        %v1978 = vunpack.c.l.b16 %v1425
        %v1979 = vunpack.c.h.b16 %v1425
        %v1980 = vunpack.c.l.b16 %v1426
        %v1981 = vunpack.c.h.b16 %v1426
        %v1982 = vunpack.c.l.b16 %v1427
        %v1983 = vunpack.c.h.b16 %v1427
        %v1984 = vunpack.c.l.b16 %v1428
        %v1985 = vunpack.c.h.b16 %v1428
        %v1986 = vunpack.c.l.b16 %v1429
        %v1987 = vunpack.c.h.b16 %v1429
        %v1988 = vunpack.c.l.b16 %v1430
        %v1989 = vunpack.c.h.b16 %v1430
        %v1990 = vunpack.c.l.b16 %v1431
        %v1991 = vunpack.c.h.b16 %v1431
        %v1992 = vunpack.c.l.b16 %v1432
        %v1993 = vunpack.c.h.b16 %v1432
        %v1994 = vunpack.c.l.b16 %v1433
        %v1995 = vunpack.c.h.b16 %v1433
        %v1996 = vunpack.c.l.b16 %v1434
        %v1997 = vunpack.c.h.b16 %v1434
        %v1998 = vunpack.c.l.b16 %v1435
        %v1999 = vunpack.c.h.b16 %v1435
        %v2000 = vunpack.c.l.b16 %v1436
        %v2001 = vunpack.c.h.b16 %v1436
        %v2002 = vunpack.c.l.b16 %v1437
        %v2003 = vunpack.c.h.b16 %v1437
        %v2004 = vunpack.c.l.b16 %v1438
        %v2005 = vunpack.c.h.b16 %v1438
        %v2006 = vunpack.c.l.b16 %v1439
        %v2007 = vunpack.c.h.b16 %v1439
        %v2008 = vunpack.c.l.b16 %v1440
        %v2009 = vunpack.c.h.b16 %v1440
        %v2010 = vunpack.c.l.b16 %v1441
        %v2011 = vunpack.c.h.b16 %v1441
        %v2012 = vunpack.c.l.b16 %v1442
        %v2013 = vunpack.c.h.b16 %v1442
        %v2014 = vunpack.c.l.b16 %v1443
        %v2015 = vunpack.c.h.b16 %v1443
        %v2016 = vunpack.c.l.b16 %v1444
        %v2017 = vunpack.c.h.b16 %v1444
        %v2018 = vunpack.c.l.b16 %v1445
        %v2019 = vunpack.c.h.b16 %v1445
        %v2020 = vunpack.c.l.b16 %v1446
        %v2021 = vunpack.c.h.b16 %v1446
        %v2022 = vunpack.c.l.b16 %v1447
        %v2023 = vunpack.c.h.b16 %v1447
        %v2024 = vunpack.c.l.b16 %v1448
        %v2025 = vunpack.c.h.b16 %v1448
        %v2026 = vunpack.c.l.b16 %v1449
        %v2027 = vunpack.c.h.b16 %v1449
        %v2028 = vunpack.c.l.b16 %v1450
        %v2029 = vunpack.c.h.b16 %v1450
        %v2030 = vunpack.c.l.b16 %v1451
        %v2031 = vunpack.c.h.b16 %v1451
        %v2032 = vunpack.c.l.b16 %v1452
        %v2033 = vunpack.c.h.b16 %v1452
        %v2034 = vunpack.c.l.b16 %v1453
        %v2035 = vunpack.c.h.b16 %v1453
        %v2036 = vunpack.c.l.b16 %v1454
        %v2037 = vunpack.c.h.b16 %v1454
        %v2038 = vunpack.c.l.b16 %v1455
        %v2039 = vunpack.c.h.b16 %v1455
        %v2040 = vunpack.c.l.b16 %v1456
        %v2041 = vunpack.c.h.b16 %v1456
        %v2042 = vunpack.c.l.b16 %v1457
        %v2043 = vunpack.c.h.b16 %v1457
        %v2044 = vunpack.c.l.b16 %v1458
        %v2045 = vunpack.c.h.b16 %v1458
        %v2046 = vunpack.c.l.b16 %v1459
        %v2047 = vunpack.c.h.b16 %v1459
        %v2048 = vunpack.c.l.b16 %v1460
        %v2049 = vunpack.c.h.b16 %v1460
        %v2050 = vunpack.c.l.b16 %v1461
        %v2051 = vunpack.c.h.b16 %v1461
        %v2052 = vunpack.c.l.b16 %v1462
        %v2053 = vunpack.c.h.b16 %v1462
        %v2054 = vunpack.c.l.b16 %v1463
        %v2055 = vunpack.c.h.b16 %v1463
        %v2056 = vunpack.c.l.b16 %v1464
        %v2057 = vunpack.c.h.b16 %v1464
        %v2058 = vunpack.c.l.b16 %v1465
        %v2059 = vunpack.c.h.b16 %v1465
        %v2060 = vunpack.c.l.b16 %v1466
        %v2061 = vunpack.c.h.b16 %v1466
        %v2062 = vunpack.c.l.b16 %v1467
        %v2063 = vunpack.c.h.b16 %v1467
        %v2064 = vunpack.c.l.b16 %v1468
        %v2065 = vunpack.c.h.b16 %v1468
        %v2066 = vunpack.c.l.b16 %v1469
        %v2067 = vunpack.c.h.b16 %v1469
        %v2068 = vunpack.c.l.b16 %v1470
        %v2069 = vunpack.c.h.b16 %v1470
        %v2070 = vunpack.c.l.b16 %v1471
        %v2071 = vunpack.c.h.b16 %v1471
        %v2072 = vunpack.c.l.b16 %v1472
        %v2073 = vunpack.c.h.b16 %v1472
        %v2074 = vunpack.c.l.b16 %v1473
        %v2075 = vunpack.c.h.b16 %v1473
        %v2076 = vunpack.c.l.b16 %v1474
        %v2077 = vunpack.c.h.b16 %v1474
        %v2078 = vunpack.c.l.b16 %v1475
        %v2079 = vunpack.c.h.b16 %v1475
        %v2080 = vunpack.c.l.b16 %v1476
        %v2081 = vunpack.c.h.b16 %v1476
        %v2082 = vunpack.c.l.b16 %v1477
        %v2083 = vunpack.c.h.b16 %v1477
        %v2084 = vunpack.c.l.b16 %v1478
        %v2085 = vunpack.c.h.b16 %v1478
        %v2086 = vunpack.c.l.b16 %v1479
        %v2087 = vunpack.c.h.b16 %v1479
        %v2088 = vunpack.c.l.b16 %v1480
        %v2089 = vunpack.c.h.b16 %v1480
        %v2090 = vunpack.c.l.b16 %v1481
        %v2091 = vunpack.c.h.b16 %v1481
        %v2092 = vunpack.c.l.b16 %v1482
        %v2093 = vunpack.c.h.b16 %v1482
        %v2094 = vunpack.c.l.b16 %v1483
        %v2095 = vunpack.c.h.b16 %v1483
        %v2096 = vunpack.c.l.b16 %v1484
        %v2097 = vunpack.c.h.b16 %v1484
        %v2098 = vunpack.c.l.b16 %v1485
        %v2099 = vunpack.c.h.b16 %v1485
        %v2100 = vunpack.c.l.b16 %v1486
        %v2101 = vunpack.c.h.b16 %v1486
        %v2102 = vunpack.c.l.b16 %v1487
        %v2103 = vunpack.c.h.b16 %v1487
        %v2104 = vunpack.c.l.b16 %v1488
        %v2105 = vunpack.c.h.b16 %v1488
        %v2106 = vunpack.c.l.b16 %v1489
        %v2107 = vunpack.c.h.b16 %v1489
        %v2108 = vunpack.c.l.b16 %v1490
        %v2109 = vunpack.c.h.b16 %v1490
        %v2110 = vunpack.c.l.b16 %v1491
        %v2111 = vunpack.c.h.b16 %v1491
        %v2112 = vunpack.c.l.b16 %v1492
        %v2113 = vunpack.c.h.b16 %v1492
        %v2114 = vunpack.c.l.b16 %v1493
        %v2115 = vunpack.c.h.b16 %v1493
        %v2116 = vunpack.c.l.b16 %v1494
        %v2117 = vunpack.c.h.b16 %v1494
        %v2118 = vunpack.c.l.b16 %v1495
        %v2119 = vunpack.c.h.b16 %v1495
        %v2120 = vunpack.c.l.b16 %v1496
        %v2121 = vunpack.c.h.b16 %v1496
        %v2122 = vunpack.c.l.b16 %v1497
        %v2123 = vunpack.c.h.b16 %v1497
        %v2124 = vunpack.c.l.b16 %v1498
        %v2125 = vunpack.c.h.b16 %v1498
        %v2126 = vunpack.c.l.b16 %v1499
        %v2127 = vunpack.c.h.b16 %v1499
        %v2128 = vunpack.c.l.b16 %v1500
        %v2129 = vunpack.c.h.b16 %v1500
        %v2130 = vunpack.c.l.b16 %v1501
        %v2131 = vunpack.c.h.b16 %v1501
        %v2132 = vunpack.c.l.b16 %v1502
        %v2133 = vunpack.c.h.b16 %v1502
        %v2134 = vunpack.c.l.b16 %v1503
        %v2135 = vunpack.c.h.b16 %v1503
        %v2136 = vunpack.c.l.b16 %v1504
        %v2137 = vunpack.c.h.b16 %v1504
        %v2138 = vunpack.c.l.b16 %v1505
        %v2139 = vunpack.c.h.b16 %v1505
        %v2140 = vunpack.c.l.b16 %v1506
        %v2141 = vunpack.c.h.b16 %v1506
        %v2142 = vunpack.c.l.b16 %v1507
        %v2143 = vunpack.c.h.b16 %v1507
        %v2144 = vunpack.c.l.b16 %v1508
        %v2145 = vunpack.c.h.b16 %v1508
        %v2146 = vunpack.c.l.b16 %v1509
        %v2147 = vunpack.c.h.b16 %v1509
        %v2148 = vunpack.c.l.b16 %v1510
        %v2149 = vunpack.c.h.b16 %v1510
        %v2150 = vunpack.c.l.b16 %v1511
        %v2151 = vunpack.c.h.b16 %v1511
        %v2152 = vunpack.c.l.b16 %v1512
        %v2153 = vunpack.c.h.b16 %v1512
        %v2154 = vunpack.c.l.b16 %v1513
        %v2155 = vunpack.c.h.b16 %v1513
        %v2156 = vunpack.c.l.b16 %v1514
        %v2157 = vunpack.c.h.b16 %v1514
        %v2158 = vunpack.c.l.b16 %v1515
        %v2159 = vunpack.c.h.b16 %v1515
        %v2160 = vunpack.c.l.b16 %v1516
        %v2161 = vunpack.c.h.b16 %v1516
        %v2162 = vunpack.c.l.b16 %v1517
        %v2163 = vunpack.c.h.b16 %v1517
        %v2164 = vunpack.c.l.b16 %v1518
        %v2165 = vunpack.c.h.b16 %v1518
        %v2166 = vunpack.c.l.b16 %v1519
        %v2167 = vunpack.c.h.b16 %v1519
        %v2168 = vunpack.c.l.b16 %v1520
        %v2169 = vunpack.c.h.b16 %v1520
        %v2170 = vunpack.c.l.b16 %v1521
        %v2171 = vunpack.c.h.b16 %v1521
        %v2172 = vunpack.c.l.b16 %v1522
        %v2173 = vunpack.c.h.b16 %v1522
        %v2174 = vunpack.c.l.b16 %v1523
        %v2175 = vunpack.c.h.b16 %v1523
        %v2176 = vunpack.c.l.b16 %v1524
        %v2177 = vunpack.c.h.b16 %v1524
        %v2178 = vunpack.c.l.b16 %v1525
        %v2179 = vunpack.c.h.b16 %v1525
        %v2180 = vunpack.c.l.b16 %v1526
        %v2181 = vunpack.c.h.b16 %v1526
        %v2182 = vunpack.c.l.b16 %v1527
        %v2183 = vunpack.c.h.b16 %v1527
        %v2184 = vunpack.c.l.b16 %v1528
        %v2185 = vunpack.c.h.b16 %v1528
        %v2186 = vunpack.c.l.b16 %v1529
        %v2187 = vunpack.c.h.b16 %v1529
        %v2188 = vunpack.c.l.b16 %v1530
        %v2189 = vunpack.c.h.b16 %v1530
        %v2190 = vunpack.c.l.b16 %v1531
        %v2191 = vunpack.c.h.b16 %v1531
        %v2192 = vunpack.c.l.b16 %v1532
        %v2193 = vunpack.c.h.b16 %v1532
        %v2194 = vunpack.c.l.b16 %v1533
        %v2195 = vunpack.c.h.b16 %v1533
        %v2196 = vunpack.c.l.b16 %v1534
        %v2197 = vunpack.c.h.b16 %v1534
        %v2198 = vunpack.c.l.b16 %v1535
        %v2199 = vunpack.c.h.b16 %v1535
        %v2200 = vunpack.c.l.b16 %v1536
        %v2201 = vunpack.c.h.b16 %v1536
        %v2202 = vunpack.c.l.b16 %v1537
        %v2203 = vunpack.c.h.b16 %v1537
        %v2204 = vunpack.c.l.b16 %v1538
        %v2205 = vunpack.c.h.b16 %v1538
        %v2206 = vunpack.c.l.b16 %v1539
        %v2207 = vunpack.c.h.b16 %v1539
        %v2208 = vunpack.c.l.b16 %v1540
        %v2209 = vunpack.c.h.b16 %v1540
        %v2210 = vunpack.c.l.b16 %v1541
        %v2211 = vunpack.c.h.b16 %v1541
        %v2212 = vunpack.c.l.b16 %v1542
        %v2213 = vunpack.c.h.b16 %v1542
        %v2214 = vunpack.c.l.b16 %v1543
        %v2215 = vunpack.c.h.b16 %v1543
        %v2216 = vunpack.c.l.b16 %v1544
        %v2217 = vunpack.c.h.b16 %v1544
        %v2218 = vunpack.c.l.b16 %v1545
        %v2219 = vunpack.c.h.b16 %v1545
        %v2220 = vunpack.c.l.b16 %v1546
        %v2221 = vunpack.c.h.b16 %v1546
        %v2222 = vunpack.c.l.b16 %v1547
        %v2223 = vunpack.c.h.b16 %v1547
        %v2224 = vunpack.c.l.b16 %v1548
        %v2225 = vunpack.c.h.b16 %v1548
        %v2226 = vunpack.c.l.b16 %v1549
        %v2227 = vunpack.c.h.b16 %v1549
        %v2228 = vunpack.c.l.b16 %v1550
        %v2229 = vunpack.c.h.b16 %v1550
        %v2230 = vunpack.c.l.b16 %v1551
        %v2231 = vunpack.c.h.b16 %v1551
        %v2232 = vunpack.c.l.b16 %v1552
        %v2233 = vunpack.c.h.b16 %v1552
        %v2234 = vunpack.c.l.b16 %v1553
        %v2235 = vunpack.c.h.b16 %v1553
        %v2236 = vunpack.c.l.b16 %v1554
        %v2237 = vunpack.c.h.b16 %v1554
        %v2238 = vunpack.c.l.b16 %v1555
        %v2239 = vunpack.c.h.b16 %v1555
        %v2240 = vunpack.c.l.b16 %v1556
        %v2241 = vunpack.c.h.b16 %v1556
        %v2242 = vunpack.c.l.b16 %v1557
        %v2243 = vunpack.c.h.b16 %v1557
        %v2244 = vunpack.c.l.b16 %v1558
        %v2245 = vunpack.c.h.b16 %v1558
        %v2246 = vunpack.c.l.b16 %v1559
        %v2247 = vunpack.c.h.b16 %v1559
        %v2248 = vunpack.c.l.b16 %v1560
        %v2249 = vunpack.c.h.b16 %v1560
        %v2250 = vunpack.c.l.b16 %v1561
        %v2251 = vunpack.c.h.b16 %v1561
        %v2252 = vunpack.c.l.b16 %v1562
        %v2253 = vunpack.c.h.b16 %v1562
        %v2254 = vunpack.c.l.b16 %v1563
        %v2255 = vunpack.c.h.b16 %v1563
        %v2256 = vunpack.c.l.b16 %v1564
        %v2257 = vunpack.c.h.b16 %v1564
        %v2258 = vunpack.c.l.b16 %v1565
        %v2259 = vunpack.c.h.b16 %v1565
        %v2260 = vunpack.c.l.b16 %v1566
        %v2261 = vunpack.c.h.b16 %v1566
        %v2262 = vunpack.c.l.b16 %v1567
        %v2263 = vunpack.c.h.b16 %v1567
        %v2264 = vunpack.c.l.b16 %v1568
        %v2265 = vunpack.c.h.b16 %v1568
        %v2266 = vunpack.c.l.b16 %v1569
        %v2267 = vunpack.c.h.b16 %v1569
        %v2268 = vunpack.c.l.b16 %v1570
        %v2269 = vunpack.c.h.b16 %v1570
        %v2270 = vunpack.c.l.b16 %v1571
        %v2271 = vunpack.c.h.b16 %v1571
        %v2272 = vunpack.c.l.b16 %v1572
        %v2273 = vunpack.c.h.b16 %v1572
        %v2274 = vunpack.c.l.b16 %v1573
        %v2275 = vunpack.c.h.b16 %v1573
        %v2276 = vunpack.c.l.b16 %v1574
        %v2277 = vunpack.c.h.b16 %v1574
        %v2278 = vunpack.c.l.b16 %v1575
        %v2279 = vunpack.c.h.b16 %v1575
        %v2280 = vunpack.c.l.b16 %v1576
        %v2281 = vunpack.c.h.b16 %v1576
        %v2282 = vunpack.c.l.b16 %v1577
        %v2283 = vunpack.c.h.b16 %v1577
        %v2284 = vunpack.c.l.b16 %v1578
        %v2285 = vunpack.c.h.b16 %v1578
        %v2286 = vunpack.c.l.b16 %v1579
        %v2287 = vunpack.c.h.b16 %v1579
        %v2288 = vunpack.c.l.b16 %v1580
        %v2289 = vunpack.c.h.b16 %v1580
        %v2290 = vunpack.c.l.b16 %v1581
        %v2291 = vunpack.c.h.b16 %v1581
        %v2292 = vunpack.c.l.b16 %v1582
        %v2293 = vunpack.c.h.b16 %v1582
        %v2294 = vunpack.c.l.b16 %v1583
        %v2295 = vunpack.c.h.b16 %v1583
        %v2296 = vunpack.c.l.b16 %v1584
        %v2297 = vunpack.c.h.b16 %v1584
        %v2298 = vunpack.c.l.b16 %v1585
        %v2299 = vunpack.c.h.b16 %v1585
        %v2300 = vunpack.c.l.b16 %v1586
        %v2301 = vunpack.c.h.b16 %v1586
        %v2302 = vunpack.c.l.b16 %v1587
        %v2303 = vunpack.c.h.b16 %v1587
        %v2304 = vunpack.c.l.b16 %v1588
        %v2305 = vunpack.c.h.b16 %v1588
        %v2306 = vunpack.c.l.b16 %v1589
        %v2307 = vunpack.c.h.b16 %v1589
        %v2308 = vunpack.c.l.b16 %v1590
        %v2309 = vunpack.c.h.b16 %v1590
        %v2310 = vunpack.c.l.b16 %v1591
        %v2311 = vunpack.c.h.b16 %v1591
        %v2312 = vunpack.c.l.b16 %v1592
        %v2313 = vunpack.c.h.b16 %v1592
        %v2314 = vunpack.c.l.b16 %v1593
        %v2315 = vunpack.c.h.b16 %v1593
        %v2316 = vunpack.c.l.b16 %v1594
        %v2317 = vunpack.c.h.b16 %v1594
        %v2318 = vunpack.c.l.b16 %v1595
        %v2319 = vunpack.c.h.b16 %v1595
        %v2320 = vunpack.c.l.b16 %v1596
        %v2321 = vunpack.c.h.b16 %v1596
        %v2322 = vunpack.c.l.b16 %v1597
        %v2323 = vunpack.c.h.b16 %v1597
        %v2324 = vunpack.c.l.b16 %v1598
        %v2325 = vunpack.c.h.b16 %v1598
        %v2326 = vunpack.c.l.b16 %v1599
        %v2327 = vunpack.c.h.b16 %v1599
        %v2328 = vunpack.c.l.b16 %v1600
        %v2329 = vunpack.c.h.b16 %v1600
        %v2330 = vunpack.c.l.b16 %v1601
        %v2331 = vunpack.c.h.b16 %v1601
        %v2332 = vunpack.c.l.b16 %v1602
        %v2333 = vunpack.c.h.b16 %v1602
        %v2334 = vunpack.c.l.b16 %v1603
        %v2335 = vunpack.c.h.b16 %v1603
        %v2336 = vunpack.c.l.b16 %v1604
        %v2337 = vunpack.c.h.b16 %v1604
        %v2338 = vunpack.c.l.b16 %v1605
        %v2339 = vunpack.c.h.b16 %v1605
        %v2340 = vunpack.c.l.b16 %v1606
        %v2341 = vunpack.c.h.b16 %v1606
        %v2342 = vunpack.c.l.b16 %v1607
        %v2343 = vunpack.c.h.b16 %v1607
        %v2344 = vunpack.c.l.b16 %v1608
        %v2345 = vunpack.c.h.b16 %v1608
        %v2346 = vunpack.c.l.b16 %v1609
        %v2347 = vunpack.c.h.b16 %v1609
        %v2348 = vunpack.c.l.b16 %v1610
        %v2349 = vunpack.c.h.b16 %v1610
        %v2350 = vunpack.c.l.b16 %v1611
        %v2351 = vunpack.c.h.b16 %v1611
        %v2352 = vunpack.c.l.b16 %v1612
        %v2353 = vunpack.c.h.b16 %v1612
        %v2354 = vunpack.c.l.b16 %v1613
        %v2355 = vunpack.c.h.b16 %v1613
        %v2356 = vunpack.c.l.b16 %v1614
        %v2357 = vunpack.c.h.b16 %v1614
        %v2358 = vunpack.c.l.b16 %v1615
        %v2359 = vunpack.c.h.b16 %v1615
        %v2360 = vunpack.c.l.b16 %v1616
        %v2361 = vunpack.c.h.b16 %v1616
        %v2362 = vunpack.c.l.b16 %v1617
        %v2363 = vunpack.c.h.b16 %v1617
        %v2364 = vunpack.c.l.b16 %v1618
        %v2365 = vunpack.c.h.b16 %v1618
        %v2366 = vunpack.c.l.b16 %v1619
        %v2367 = vunpack.c.h.b16 %v1619
        %v2368 = vunpack.c.l.b16 %v1620
        %v2369 = vunpack.c.h.b16 %v1620
        %v2370 = vunpack.c.l.b16 %v1621
        %v2371 = vunpack.c.h.b16 %v1621
        %v2372 = vunpack.c.l.b16 %v1622
        %v2373 = vunpack.c.h.b16 %v1622
        %v2374 = vunpack.c.l.b16 %v1623
        %v2375 = vunpack.c.h.b16 %v1623
        %v2376 = vunpack.c.l.b16 %v1624
        %v2377 = vunpack.c.h.b16 %v1624
        %v2378 = vunpack.c.l.b16 %v1625
        %v2379 = vunpack.c.h.b16 %v1625
        %v2380 = vunpack.c.l.b16 %v1626
        %v2381 = vunpack.c.h.b16 %v1626
        %v2382 = vunpack.c.l.b16 %v1627
        %v2383 = vunpack.c.h.b16 %v1627
        %v2384 = vunpack.c.l.b16 %v1628
        %v2385 = vunpack.c.h.b16 %v1628
        %v2386 = vunpack.c.l.b16 %v1629
        %v2387 = vunpack.c.h.b16 %v1629
        %v2388 = vunpack.c.l.b16 %v1630
        %v2389 = vunpack.c.h.b16 %v1630
        %v2390 = vunpack.c.l.b16 %v1631
        %v2391 = vunpack.c.h.b16 %v1631
        %v2392 = vunpack.c.l.b16 %v1632
        %v2393 = vunpack.c.h.b16 %v1632
        %v2394 = vunpack.c.l.b16 %v1633
        %v2395 = vunpack.c.h.b16 %v1633
        %v2396 = vunpack.c.l.b16 %v1634
        %v2397 = vunpack.c.h.b16 %v1634
        %v2398 = vunpack.c.l.b16 %v1635
        %v2399 = vunpack.c.h.b16 %v1635
        %v2400 = vunpack.c.l.b16 %v1636
        %v2401 = vunpack.c.h.b16 %v1636
        %v2402 = vunpack.c.l.b16 %v1637
        %v2403 = vunpack.c.h.b16 %v1637
        %v2404 = vunpack.c.l.b16 %v1638
        %v2405 = vunpack.c.h.b16 %v1638
        %v2406 = vunpack.c.l.b16 %v1639
        %v2407 = vunpack.c.h.b16 %v1639
        %v2408 = vpack.c.b16 %v1900, %v1896
        %v2409 = vpack.c.b16 %v1901, %v1897
        %v2410 = vpack.c.b16 %v1902, %v1898
        %v2411 = vpack.c.b16 %v1903, %v1899
        %v2412 = vpack.c.b16 %v1908, %v1904
        %v2413 = vpack.c.b16 %v1909, %v1905
        %v2414 = vpack.c.b16 %v1910, %v1906
        %v2415 = vpack.c.b16 %v1911, %v1907
        %v2416 = vpack.c.b16 %v1916, %v1912
        %v2417 = vpack.c.b16 %v1917, %v1913
        %v2418 = vpack.c.b16 %v1918, %v1914
        %v2419 = vpack.c.b16 %v1919, %v1915
        %v2420 = vpack.c.b16 %v1924, %v1920
        %v2421 = vpack.c.b16 %v1925, %v1921
        %v2422 = vpack.c.b16 %v1926, %v1922
        %v2423 = vpack.c.b16 %v1927, %v1923
        %v2424 = vpack.c.b16 %v1932, %v1928
        %v2425 = vpack.c.b16 %v1933, %v1929
        %v2426 = vpack.c.b16 %v1934, %v1930
        %v2427 = vpack.c.b16 %v1935, %v1931
        %v2428 = vpack.c.b16 %v1940, %v1936
        %v2429 = vpack.c.b16 %v1941, %v1937
        %v2430 = vpack.c.b16 %v1942, %v1938
        %v2431 = vpack.c.b16 %v1943, %v1939
        %v2432 = vpack.c.b16 %v1948, %v1944
        %v2433 = vpack.c.b16 %v1949, %v1945
        %v2434 = vpack.c.b16 %v1950, %v1946
        %v2435 = vpack.c.b16 %v1951, %v1947
        %v2436 = vpack.c.b16 %v1956, %v1952
        %v2437 = vpack.c.b16 %v1957, %v1953
        %v2438 = vpack.c.b16 %v1958, %v1954
        %v2439 = vpack.c.b16 %v1959, %v1955
        %v2440 = vpack.c.b16 %v1964, %v1960
        %v2441 = vpack.c.b16 %v1965, %v1961
        %v2442 = vpack.c.b16 %v1966, %v1962
        %v2443 = vpack.c.b16 %v1967, %v1963
        %v2444 = vpack.c.b16 %v1972, %v1968
        %v2445 = vpack.c.b16 %v1973, %v1969
        %v2446 = vpack.c.b16 %v1974, %v1970
        %v2447 = vpack.c.b16 %v1975, %v1971
        %v2448 = vpack.c.b16 %v1980, %v1976
        %v2449 = vpack.c.b16 %v1981, %v1977
        %v2450 = vpack.c.b16 %v1982, %v1978
        %v2451 = vpack.c.b16 %v1983, %v1979
        %v2452 = vpack.c.b16 %v1988, %v1984
        %v2453 = vpack.c.b16 %v1989, %v1985
        %v2454 = vpack.c.b16 %v1990, %v1986
        %v2455 = vpack.c.b16 %v1991, %v1987
        %v2456 = vpack.c.b16 %v1996, %v1992
        %v2457 = vpack.c.b16 %v1997, %v1993
        %v2458 = vpack.c.b16 %v1998, %v1994
        %v2459 = vpack.c.b16 %v1999, %v1995
        %v2460 = vpack.c.b16 %v2004, %v2000
        %v2461 = vpack.c.b16 %v2005, %v2001
        %v2462 = vpack.c.b16 %v2006, %v2002
        %v2463 = vpack.c.b16 %v2007, %v2003
        %v2464 = vpack.c.b16 %v2012, %v2008
        %v2465 = vpack.c.b16 %v2013, %v2009
        %v2466 = vpack.c.b16 %v2014, %v2010
        %v2467 = vpack.c.b16 %v2015, %v2011
        %v2468 = vpack.c.b16 %v2020, %v2016
        %v2469 = vpack.c.b16 %v2021, %v2017
        %v2470 = vpack.c.b16 %v2022, %v2018
        %v2471 = vpack.c.b16 %v2023, %v2019
        %v2472 = vpack.c.b16 %v2028, %v2024
        %v2473 = vpack.c.b16 %v2029, %v2025
        %v2474 = vpack.c.b16 %v2030, %v2026
        %v2475 = vpack.c.b16 %v2031, %v2027
        %v2476 = vpack.c.b16 %v2036, %v2032
        %v2477 = vpack.c.b16 %v2037, %v2033
        %v2478 = vpack.c.b16 %v2038, %v2034
        %v2479 = vpack.c.b16 %v2039, %v2035
        %v2480 = vpack.c.b16 %v2044, %v2040
        %v2481 = vpack.c.b16 %v2045, %v2041
        %v2482 = vpack.c.b16 %v2046, %v2042
        %v2483 = vpack.c.b16 %v2047, %v2043
        %v2484 = vpack.c.b16 %v2052, %v2048
        %v2485 = vpack.c.b16 %v2053, %v2049
        %v2486 = vpack.c.b16 %v2054, %v2050
        %v2487 = vpack.c.b16 %v2055, %v2051
        %v2488 = vpack.c.b16 %v2060, %v2056
        %v2489 = vpack.c.b16 %v2061, %v2057
        %v2490 = vpack.c.b16 %v2062, %v2058
        %v2491 = vpack.c.b16 %v2063, %v2059
        %v2492 = vpack.c.b16 %v2068, %v2064
        %v2493 = vpack.c.b16 %v2069, %v2065
        %v2494 = vpack.c.b16 %v2070, %v2066
        %v2495 = vpack.c.b16 %v2071, %v2067
        %v2496 = vpack.c.b16 %v2076, %v2072
        %v2497 = vpack.c.b16 %v2077, %v2073
        %v2498 = vpack.c.b16 %v2078, %v2074
        %v2499 = vpack.c.b16 %v2079, %v2075
        %v2500 = vpack.c.b16 %v2084, %v2080
        %v2501 = vpack.c.b16 %v2085, %v2081
        %v2502 = vpack.c.b16 %v2086, %v2082
        %v2503 = vpack.c.b16 %v2087, %v2083
        %v2504 = vpack.c.b16 %v2092, %v2088
        %v2505 = vpack.c.b16 %v2093, %v2089
        %v2506 = vpack.c.b16 %v2094, %v2090
        %v2507 = vpack.c.b16 %v2095, %v2091
        %v2508 = vpack.c.b16 %v2100, %v2096
        %v2509 = vpack.c.b16 %v2101, %v2097
        %v2510 = vpack.c.b16 %v2102, %v2098
        %v2511 = vpack.c.b16 %v2103, %v2099
        %v2512 = vpack.c.b16 %v2108, %v2104
        %v2513 = vpack.c.b16 %v2109, %v2105
        %v2514 = vpack.c.b16 %v2110, %v2106
        %v2515 = vpack.c.b16 %v2111, %v2107
        %v2516 = vpack.c.b16 %v2116, %v2112
        %v2517 = vpack.c.b16 %v2117, %v2113
        %v2518 = vpack.c.b16 %v2118, %v2114
        %v2519 = vpack.c.b16 %v2119, %v2115
        %v2520 = vpack.c.b16 %v2124, %v2120
        %v2521 = vpack.c.b16 %v2125, %v2121
        %v2522 = vpack.c.b16 %v2126, %v2122
        %v2523 = vpack.c.b16 %v2127, %v2123
        %v2524 = vpack.c.b16 %v2132, %v2128
        %v2525 = vpack.c.b16 %v2133, %v2129
        %v2526 = vpack.c.b16 %v2134, %v2130
        %v2527 = vpack.c.b16 %v2135, %v2131
        %v2528 = vpack.c.b16 %v2140, %v2136
        %v2529 = vpack.c.b16 %v2141, %v2137
        %v2530 = vpack.c.b16 %v2142, %v2138
        %v2531 = vpack.c.b16 %v2143, %v2139
        %v2532 = vpack.c.b16 %v2148, %v2144
        %v2533 = vpack.c.b16 %v2149, %v2145
        %v2534 = vpack.c.b16 %v2150, %v2146
        %v2535 = vpack.c.b16 %v2151, %v2147
        %v2536 = vpack.c.b16 %v2156, %v2152
        %v2537 = vpack.c.b16 %v2157, %v2153
        %v2538 = vpack.c.b16 %v2158, %v2154
        %v2539 = vpack.c.b16 %v2159, %v2155
        %v2540 = vpack.c.b16 %v2164, %v2160
        %v2541 = vpack.c.b16 %v2165, %v2161
        %v2542 = vpack.c.b16 %v2166, %v2162
        %v2543 = vpack.c.b16 %v2167, %v2163
        %v2544 = vpack.c.b16 %v2172, %v2168
        %v2545 = vpack.c.b16 %v2173, %v2169
        %v2546 = vpack.c.b16 %v2174, %v2170
        %v2547 = vpack.c.b16 %v2175, %v2171
        %v2548 = vpack.c.b16 %v2180, %v2176
        %v2549 = vpack.c.b16 %v2181, %v2177
        %v2550 = vpack.c.b16 %v2182, %v2178
        %v2551 = vpack.c.b16 %v2183, %v2179
        %v2552 = vpack.c.b16 %v2188, %v2184
        %v2553 = vpack.c.b16 %v2189, %v2185
        %v2554 = vpack.c.b16 %v2190, %v2186
        %v2555 = vpack.c.b16 %v2191, %v2187
        %v2556 = vpack.c.b16 %v2196, %v2192
        %v2557 = vpack.c.b16 %v2197, %v2193
        %v2558 = vpack.c.b16 %v2198, %v2194
        %v2559 = vpack.c.b16 %v2199, %v2195
        %v2560 = vpack.c.b16 %v2204, %v2200
        %v2561 = vpack.c.b16 %v2205, %v2201
        %v2562 = vpack.c.b16 %v2206, %v2202
        %v2563 = vpack.c.b16 %v2207, %v2203
        %v2564 = vpack.c.b16 %v2212, %v2208
        %v2565 = vpack.c.b16 %v2213, %v2209
        %v2566 = vpack.c.b16 %v2214, %v2210
        %v2567 = vpack.c.b16 %v2215, %v2211
        %v2568 = vpack.c.b16 %v2220, %v2216
        %v2569 = vpack.c.b16 %v2221, %v2217
        %v2570 = vpack.c.b16 %v2222, %v2218
        %v2571 = vpack.c.b16 %v2223, %v2219
        %v2572 = vpack.c.b16 %v2228, %v2224
        %v2573 = vpack.c.b16 %v2229, %v2225
        %v2574 = vpack.c.b16 %v2230, %v2226
        %v2575 = vpack.c.b16 %v2231, %v2227
        %v2576 = vpack.c.b16 %v2236, %v2232
        %v2577 = vpack.c.b16 %v2237, %v2233
        %v2578 = vpack.c.b16 %v2238, %v2234
        %v2579 = vpack.c.b16 %v2239, %v2235
        %v2580 = vpack.c.b16 %v2244, %v2240
        %v2581 = vpack.c.b16 %v2245, %v2241
        %v2582 = vpack.c.b16 %v2246, %v2242
        %v2583 = vpack.c.b16 %v2247, %v2243
        %v2584 = vpack.c.b16 %v2252, %v2248
        %v2585 = vpack.c.b16 %v2253, %v2249
        %v2586 = vpack.c.b16 %v2254, %v2250
        %v2587 = vpack.c.b16 %v2255, %v2251
        %v2588 = vpack.c.b16 %v2260, %v2256
        %v2589 = vpack.c.b16 %v2261, %v2257
        %v2590 = vpack.c.b16 %v2262, %v2258
        %v2591 = vpack.c.b16 %v2263, %v2259
        %v2592 = vpack.c.b16 %v2268, %v2264
        %v2593 = vpack.c.b16 %v2269, %v2265
        %v2594 = vpack.c.b16 %v2270, %v2266
        %v2595 = vpack.c.b16 %v2271, %v2267
        %v2596 = vpack.c.b16 %v2276, %v2272
        %v2597 = vpack.c.b16 %v2277, %v2273
        %v2598 = vpack.c.b16 %v2278, %v2274
        %v2599 = vpack.c.b16 %v2279, %v2275
        %v2600 = vpack.c.b16 %v2284, %v2280
        %v2601 = vpack.c.b16 %v2285, %v2281
        %v2602 = vpack.c.b16 %v2286, %v2282
        %v2603 = vpack.c.b16 %v2287, %v2283
        %v2604 = vpack.c.b16 %v2292, %v2288
        %v2605 = vpack.c.b16 %v2293, %v2289
        %v2606 = vpack.c.b16 %v2294, %v2290
        %v2607 = vpack.c.b16 %v2295, %v2291
        %v2608 = vpack.c.b16 %v2300, %v2296
        %v2609 = vpack.c.b16 %v2301, %v2297
        %v2610 = vpack.c.b16 %v2302, %v2298
        %v2611 = vpack.c.b16 %v2303, %v2299
        %v2612 = vpack.c.b16 %v2308, %v2304
        %v2613 = vpack.c.b16 %v2309, %v2305
        %v2614 = vpack.c.b16 %v2310, %v2306
        %v2615 = vpack.c.b16 %v2311, %v2307
        %v2616 = vpack.c.b16 %v2316, %v2312
        %v2617 = vpack.c.b16 %v2317, %v2313
        %v2618 = vpack.c.b16 %v2318, %v2314
        %v2619 = vpack.c.b16 %v2319, %v2315
        %v2620 = vpack.c.b16 %v2324, %v2320
        %v2621 = vpack.c.b16 %v2325, %v2321
        %v2622 = vpack.c.b16 %v2326, %v2322
        %v2623 = vpack.c.b16 %v2327, %v2323
        %v2624 = vpack.c.b16 %v2332, %v2328
        %v2625 = vpack.c.b16 %v2333, %v2329
        %v2626 = vpack.c.b16 %v2334, %v2330
        %v2627 = vpack.c.b16 %v2335, %v2331
        %v2628 = vpack.c.b16 %v2340, %v2336
        %v2629 = vpack.c.b16 %v2341, %v2337
        %v2630 = vpack.c.b16 %v2342, %v2338
        %v2631 = vpack.c.b16 %v2343, %v2339
        %v2632 = vpack.c.b16 %v2348, %v2344
        %v2633 = vpack.c.b16 %v2349, %v2345
        %v2634 = vpack.c.b16 %v2350, %v2346
        %v2635 = vpack.c.b16 %v2351, %v2347
        %v2636 = vpack.c.b16 %v2356, %v2352
        %v2637 = vpack.c.b16 %v2357, %v2353
        %v2638 = vpack.c.b16 %v2358, %v2354
        %v2639 = vpack.c.b16 %v2359, %v2355
        %v2640 = vpack.c.b16 %v2364, %v2360
        %v2641 = vpack.c.b16 %v2365, %v2361
        %v2642 = vpack.c.b16 %v2366, %v2362
        %v2643 = vpack.c.b16 %v2367, %v2363
        %v2644 = vpack.c.b16 %v2372, %v2368
        %v2645 = vpack.c.b16 %v2373, %v2369
        %v2646 = vpack.c.b16 %v2374, %v2370
        %v2647 = vpack.c.b16 %v2375, %v2371
        %v2648 = vpack.c.b16 %v2380, %v2376
        %v2649 = vpack.c.b16 %v2381, %v2377
        %v2650 = vpack.c.b16 %v2382, %v2378
        %v2651 = vpack.c.b16 %v2383, %v2379
        %v2652 = vpack.c.b16 %v2388, %v2384
        %v2653 = vpack.c.b16 %v2389, %v2385
        %v2654 = vpack.c.b16 %v2390, %v2386
        %v2655 = vpack.c.b16 %v2391, %v2387
        %v2656 = vpack.c.b16 %v2396, %v2392
        %v2657 = vpack.c.b16 %v2397, %v2393
        %v2658 = vpack.c.b16 %v2398, %v2394
        %v2659 = vpack.c.b16 %v2399, %v2395
        %v2660 = vpack.c.b16 %v2404, %v2400
        %v2661 = vpack.c.b16 %v2405, %v2401
        %v2662 = vpack.c.b16 %v2406, %v2402
        %v2663 = vpack.c.b16 %v2407, %v2403
        %2920 = vmatpush.bf16.msra.mxu0 %v2436
        %2921 = vmatpush.bf16.msra.mxu0 %v2432
        %2922 = vmatpush.bf16.msra.mxu0 %v2428
        %2923 = vmatpush.bf16.msra.mxu0 %v2424
        %2924 = vmatpush.bf16.msra.mxu0 %v2420
        %2925 = vmatpush.bf16.msra.mxu0 %v2416
        %2926 = vmatpush.bf16.msra.mxu0 %v2412
        %2927 = vmatpush.bf16.msra.mxu0 %v2408
        %2928 = vmatmul.bf16.gmra.mxu0 %v1376
        %v2929 = vpop.f32.mrf.mxu0
        %v2930 = vadd.f32 0.0, %v2929
        %v2931 = vpop.f32.mrf.mxu0
        %2932 = vdwg.mxu0
        %2933 = vmatpush.bf16.msra.mxu0 %v2468
        %2934 = vmatpush.bf16.msra.mxu0 %v2464
        %2935 = vmatpush.bf16.msra.mxu0 %v2460
        %2936 = vmatpush.bf16.msra.mxu0 %v2456
        %2937 = vmatpush.bf16.msra.mxu0 %v2452
        %2938 = vmatpush.bf16.msra.mxu0 %v2448
        %2939 = vmatpush.bf16.msra.mxu0 %v2444
        %2940 = vmatpush.bf16.msra.mxu0 %v2440
        %2941 = vmatmul.bf16.gmra.mxu0 %v1377
        %v2942 = vpop.f32.mrf.mxu0
        %v2943 = vadd.f32 %v2930, %v2942
        %v2944 = vpop.f32.mrf.mxu0
        %2945 = vdwg.mxu0
        %2946 = vmatpush.bf16.msra.mxu0 %v2500
        %2947 = vmatpush.bf16.msra.mxu0 %v2496
        %2948 = vmatpush.bf16.msra.mxu0 %v2492
        %2949 = vmatpush.bf16.msra.mxu0 %v2488
        %2950 = vmatpush.bf16.msra.mxu0 %v2484
        %2951 = vmatpush.bf16.msra.mxu0 %v2480
        %2952 = vmatpush.bf16.msra.mxu0 %v2476
        %2953 = vmatpush.bf16.msra.mxu0 %v2472
        %2954 = vmatmul.bf16.gmra.mxu0 %v1378
        %v2955 = vpop.f32.mrf.mxu0
        %v2956 = vadd.f32 %v2943, %v2955
        %v2957 = vpop.f32.mrf.mxu0
        %2958 = vdwg.mxu0
        %2959 = vmatpush.bf16.msra.mxu0 %v2532
        %2960 = vmatpush.bf16.msra.mxu0 %v2528
        %2961 = vmatpush.bf16.msra.mxu0 %v2524
        %2962 = vmatpush.bf16.msra.mxu0 %v2520
        %2963 = vmatpush.bf16.msra.mxu0 %v2516
        %2964 = vmatpush.bf16.msra.mxu0 %v2512
        %2965 = vmatpush.bf16.msra.mxu0 %v2508
        %2966 = vmatpush.bf16.msra.mxu0 %v2504
        %2967 = vmatmul.bf16.gmra.mxu0 %v1379
        %v2968 = vpop.f32.mrf.mxu0
        %v2969 = vadd.f32 %v2956, %v2968
        %v2970 = vpop.f32.mrf.mxu0
        %2971 = vdwg.mxu0
        %2972 = vmatpush.bf16.msra.mxu0 %v2564
        %2973 = vmatpush.bf16.msra.mxu0 %v2560
        %2974 = vmatpush.bf16.msra.mxu0 %v2556
        %2975 = vmatpush.bf16.msra.mxu0 %v2552
        %2976 = vmatpush.bf16.msra.mxu0 %v2548
        %2977 = vmatpush.bf16.msra.mxu0 %v2544
        %2978 = vmatpush.bf16.msra.mxu0 %v2540
        %2979 = vmatpush.bf16.msra.mxu0 %v2536
        %2980 = vmatmul.bf16.gmra.mxu0 %v1380
        %v2981 = vpop.f32.mrf.mxu0
        %v2982 = vadd.f32 %v2969, %v2981
        %v2983 = vpop.f32.mrf.mxu0
        %2984 = vdwg.mxu0
        %2985 = vmatpush.bf16.msra.mxu0 %v2596
        %2986 = vmatpush.bf16.msra.mxu0 %v2592
        %2987 = vmatpush.bf16.msra.mxu0 %v2588
        %2988 = vmatpush.bf16.msra.mxu0 %v2584
        %2989 = vmatpush.bf16.msra.mxu0 %v2580
        %2990 = vmatpush.bf16.msra.mxu0 %v2576
        %2991 = vmatpush.bf16.msra.mxu0 %v2572
        %2992 = vmatpush.bf16.msra.mxu0 %v2568
        %2993 = vmatmul.bf16.gmra.mxu0 %v1381
        %v2994 = vpop.f32.mrf.mxu0
        %v2995 = vadd.f32 %v2982, %v2994
        %v2996 = vpop.f32.mrf.mxu0
        %2997 = vdwg.mxu0
        %2998 = vmatpush.bf16.msra.mxu0 %v2628
        %2999 = vmatpush.bf16.msra.mxu0 %v2624
        %3000 = vmatpush.bf16.msra.mxu0 %v2620
        %3001 = vmatpush.bf16.msra.mxu0 %v2616
        %3002 = vmatpush.bf16.msra.mxu0 %v2612
        %3003 = vmatpush.bf16.msra.mxu0 %v2608
        %3004 = vmatpush.bf16.msra.mxu0 %v2604
        %3005 = vmatpush.bf16.msra.mxu0 %v2600
        %3006 = vmatmul.bf16.gmra.mxu0 %v1382
        %v3007 = vpop.f32.mrf.mxu0
        %v3008 = vadd.f32 %v2995, %v3007
        %v3009 = vpop.f32.mrf.mxu0
        %3010 = vdwg.mxu0
        %3011 = vmatpush.bf16.msra.mxu0 %v2660
        %3012 = vmatpush.bf16.msra.mxu0 %v2656
        %3013 = vmatpush.bf16.msra.mxu0 %v2652
        %3014 = vmatpush.bf16.msra.mxu0 %v2648
        %3015 = vmatpush.bf16.msra.mxu0 %v2644
        %3016 = vmatpush.bf16.msra.mxu0 %v2640
        %3017 = vmatpush.bf16.msra.mxu0 %v2636
        %3018 = vmatpush.bf16.msra.mxu0 %v2632
        %3019 = vmatmul.bf16.gmra.mxu0 %v1383
        %v3020 = vpop.f32.mrf.mxu0
        %v3021 = vadd.f32 %v3008, %v3020
        %v3022 = vpop.f32.mrf.mxu0
        %3023 = vdwg.mxu0
        %3024 = vmatpush.bf16.msra.mxu0 %v2437
        %3025 = vmatpush.bf16.msra.mxu0 %v2433
        %3026 = vmatpush.bf16.msra.mxu0 %v2429
        %3027 = vmatpush.bf16.msra.mxu0 %v2425
        %3028 = vmatpush.bf16.msra.mxu0 %v2421
        %3029 = vmatpush.bf16.msra.mxu0 %v2417
        %3030 = vmatpush.bf16.msra.mxu0 %v2413
        %3031 = vmatpush.bf16.msra.mxu0 %v2409
        %3032 = vmatmul.bf16.gmra.mxu0 %v1376
        %v3033 = vpop.f32.mrf.mxu0
        %v3034 = vadd.f32 0.0, %v3033
        %v3035 = vpop.f32.mrf.mxu0
        %3036 = vdwg.mxu0
        %3037 = vmatpush.bf16.msra.mxu0 %v2469
        %3038 = vmatpush.bf16.msra.mxu0 %v2465
        %3039 = vmatpush.bf16.msra.mxu0 %v2461
        %3040 = vmatpush.bf16.msra.mxu0 %v2457
        %3041 = vmatpush.bf16.msra.mxu0 %v2453
        %3042 = vmatpush.bf16.msra.mxu0 %v2449
        %3043 = vmatpush.bf16.msra.mxu0 %v2445
        %3044 = vmatpush.bf16.msra.mxu0 %v2441
        %3045 = vmatmul.bf16.gmra.mxu0 %v1377
        %v3046 = vpop.f32.mrf.mxu0
        %v3047 = vadd.f32 %v3034, %v3046
        %v3048 = vpop.f32.mrf.mxu0
        %3049 = vdwg.mxu0
        %3050 = vmatpush.bf16.msra.mxu0 %v2501
        %3051 = vmatpush.bf16.msra.mxu0 %v2497
        %3052 = vmatpush.bf16.msra.mxu0 %v2493
        %3053 = vmatpush.bf16.msra.mxu0 %v2489
        %3054 = vmatpush.bf16.msra.mxu0 %v2485
        %3055 = vmatpush.bf16.msra.mxu0 %v2481
        %3056 = vmatpush.bf16.msra.mxu0 %v2477
        %3057 = vmatpush.bf16.msra.mxu0 %v2473
        %3058 = vmatmul.bf16.gmra.mxu0 %v1378
        %v3059 = vpop.f32.mrf.mxu0
        %v3060 = vadd.f32 %v3047, %v3059
        %v3061 = vpop.f32.mrf.mxu0
        %3062 = vdwg.mxu0
        %3063 = vmatpush.bf16.msra.mxu0 %v2533
        %3064 = vmatpush.bf16.msra.mxu0 %v2529
        %3065 = vmatpush.bf16.msra.mxu0 %v2525
        %3066 = vmatpush.bf16.msra.mxu0 %v2521
        %3067 = vmatpush.bf16.msra.mxu0 %v2517
        %3068 = vmatpush.bf16.msra.mxu0 %v2513
        %3069 = vmatpush.bf16.msra.mxu0 %v2509
        %3070 = vmatpush.bf16.msra.mxu0 %v2505
        %3071 = vmatmul.bf16.gmra.mxu0 %v1379
        %v3072 = vpop.f32.mrf.mxu0
        %v3073 = vadd.f32 %v3060, %v3072
        %v3074 = vpop.f32.mrf.mxu0
        %3075 = vdwg.mxu0
        %3076 = vmatpush.bf16.msra.mxu0 %v2565
        %3077 = vmatpush.bf16.msra.mxu0 %v2561
        %3078 = vmatpush.bf16.msra.mxu0 %v2557
        %3079 = vmatpush.bf16.msra.mxu0 %v2553
        %3080 = vmatpush.bf16.msra.mxu0 %v2549
        %3081 = vmatpush.bf16.msra.mxu0 %v2545
        %3082 = vmatpush.bf16.msra.mxu0 %v2541
        %3083 = vmatpush.bf16.msra.mxu0 %v2537
        %3084 = vmatmul.bf16.gmra.mxu0 %v1380
        %v3085 = vpop.f32.mrf.mxu0
        %v3086 = vadd.f32 %v3073, %v3085
        %v3087 = vpop.f32.mrf.mxu0
        %3088 = vdwg.mxu0
        %3089 = vmatpush.bf16.msra.mxu0 %v2597
        %3090 = vmatpush.bf16.msra.mxu0 %v2593
        %3091 = vmatpush.bf16.msra.mxu0 %v2589
        %3092 = vmatpush.bf16.msra.mxu0 %v2585
        %3093 = vmatpush.bf16.msra.mxu0 %v2581
        %3094 = vmatpush.bf16.msra.mxu0 %v2577
        %3095 = vmatpush.bf16.msra.mxu0 %v2573
        %3096 = vmatpush.bf16.msra.mxu0 %v2569
        %3097 = vmatmul.bf16.gmra.mxu0 %v1381
        %v3098 = vpop.f32.mrf.mxu0
        %v3099 = vadd.f32 %v3086, %v3098
        %v3100 = vpop.f32.mrf.mxu0
        %3101 = vdwg.mxu0
        %3102 = vmatpush.bf16.msra.mxu0 %v2629
        %3103 = vmatpush.bf16.msra.mxu0 %v2625
        %3104 = vmatpush.bf16.msra.mxu0 %v2621
        %3105 = vmatpush.bf16.msra.mxu0 %v2617
        %3106 = vmatpush.bf16.msra.mxu0 %v2613
        %3107 = vmatpush.bf16.msra.mxu0 %v2609
        %3108 = vmatpush.bf16.msra.mxu0 %v2605
        %3109 = vmatpush.bf16.msra.mxu0 %v2601
        %3110 = vmatmul.bf16.gmra.mxu0 %v1382
        %v3111 = vpop.f32.mrf.mxu0
        %v3112 = vadd.f32 %v3099, %v3111
        %v3113 = vpop.f32.mrf.mxu0
        %3114 = vdwg.mxu0
        %3115 = vmatpush.bf16.msra.mxu0 %v2661
        %3116 = vmatpush.bf16.msra.mxu0 %v2657
        %3117 = vmatpush.bf16.msra.mxu0 %v2653
        %3118 = vmatpush.bf16.msra.mxu0 %v2649
        %3119 = vmatpush.bf16.msra.mxu0 %v2645
        %3120 = vmatpush.bf16.msra.mxu0 %v2641
        %3121 = vmatpush.bf16.msra.mxu0 %v2637
        %3122 = vmatpush.bf16.msra.mxu0 %v2633
        %3123 = vmatmul.bf16.gmra.mxu0 %v1383
        %v3124 = vpop.f32.mrf.mxu0
        %v3125 = vadd.f32 %v3112, %v3124
        %v3126 = vpop.f32.mrf.mxu0
        %3127 = vdwg.mxu0
        %3128 = vmatpush.bf16.msra.mxu0 %v2438
        %3129 = vmatpush.bf16.msra.mxu0 %v2434
        %3130 = vmatpush.bf16.msra.mxu0 %v2430
        %3131 = vmatpush.bf16.msra.mxu0 %v2426
        %3132 = vmatpush.bf16.msra.mxu0 %v2422
        %3133 = vmatpush.bf16.msra.mxu0 %v2418
        %3134 = vmatpush.bf16.msra.mxu0 %v2414
        %3135 = vmatpush.bf16.msra.mxu0 %v2410
        %3136 = vmatmul.bf16.gmra.mxu0 %v1376
        %v3137 = vpop.f32.mrf.mxu0
        %v3138 = vadd.f32 0.0, %v3137
        %v3139 = vpop.f32.mrf.mxu0
        %3140 = vdwg.mxu0
        %3141 = vmatpush.bf16.msra.mxu0 %v2470
        %3142 = vmatpush.bf16.msra.mxu0 %v2466
        %3143 = vmatpush.bf16.msra.mxu0 %v2462
        %3144 = vmatpush.bf16.msra.mxu0 %v2458
        %3145 = vmatpush.bf16.msra.mxu0 %v2454
        %3146 = vmatpush.bf16.msra.mxu0 %v2450
        %3147 = vmatpush.bf16.msra.mxu0 %v2446
        %3148 = vmatpush.bf16.msra.mxu0 %v2442
        %3149 = vmatmul.bf16.gmra.mxu0 %v1377
        %v3150 = vpop.f32.mrf.mxu0
        %v3151 = vadd.f32 %v3138, %v3150
        %v3152 = vpop.f32.mrf.mxu0
        %3153 = vdwg.mxu0
        %3154 = vmatpush.bf16.msra.mxu0 %v2502
        %3155 = vmatpush.bf16.msra.mxu0 %v2498
        %3156 = vmatpush.bf16.msra.mxu0 %v2494
        %3157 = vmatpush.bf16.msra.mxu0 %v2490
        %3158 = vmatpush.bf16.msra.mxu0 %v2486
        %3159 = vmatpush.bf16.msra.mxu0 %v2482
        %3160 = vmatpush.bf16.msra.mxu0 %v2478
        %3161 = vmatpush.bf16.msra.mxu0 %v2474
        %3162 = vmatmul.bf16.gmra.mxu0 %v1378
        %v3163 = vpop.f32.mrf.mxu0
        %v3164 = vadd.f32 %v3151, %v3163
        %v3165 = vpop.f32.mrf.mxu0
        %3166 = vdwg.mxu0
        %3167 = vmatpush.bf16.msra.mxu0 %v2534
        %3168 = vmatpush.bf16.msra.mxu0 %v2530
        %3169 = vmatpush.bf16.msra.mxu0 %v2526
        %3170 = vmatpush.bf16.msra.mxu0 %v2522
        %3171 = vmatpush.bf16.msra.mxu0 %v2518
        %3172 = vmatpush.bf16.msra.mxu0 %v2514
        %3173 = vmatpush.bf16.msra.mxu0 %v2510
        %3174 = vmatpush.bf16.msra.mxu0 %v2506
        %3175 = vmatmul.bf16.gmra.mxu0 %v1379
        %v3176 = vpop.f32.mrf.mxu0
        %v3177 = vadd.f32 %v3164, %v3176
        %v3178 = vpop.f32.mrf.mxu0
        %3179 = vdwg.mxu0
        %3180 = vmatpush.bf16.msra.mxu0 %v2566
        %3181 = vmatpush.bf16.msra.mxu0 %v2562
        %3182 = vmatpush.bf16.msra.mxu0 %v2558
        %3183 = vmatpush.bf16.msra.mxu0 %v2554
        %3184 = vmatpush.bf16.msra.mxu0 %v2550
        %3185 = vmatpush.bf16.msra.mxu0 %v2546
        %3186 = vmatpush.bf16.msra.mxu0 %v2542
        %3187 = vmatpush.bf16.msra.mxu0 %v2538
        %3188 = vmatmul.bf16.gmra.mxu0 %v1380
        %v3189 = vpop.f32.mrf.mxu0
        %v3190 = vadd.f32 %v3177, %v3189
        %v3191 = vpop.f32.mrf.mxu0
        %3192 = vdwg.mxu0
        %3193 = vmatpush.bf16.msra.mxu0 %v2598
        %3194 = vmatpush.bf16.msra.mxu0 %v2594
        %3195 = vmatpush.bf16.msra.mxu0 %v2590
        %3196 = vmatpush.bf16.msra.mxu0 %v2586
        %3197 = vmatpush.bf16.msra.mxu0 %v2582
        %3198 = vmatpush.bf16.msra.mxu0 %v2578
        %3199 = vmatpush.bf16.msra.mxu0 %v2574
        %3200 = vmatpush.bf16.msra.mxu0 %v2570
        %3201 = vmatmul.bf16.gmra.mxu0 %v1381
        %v3202 = vpop.f32.mrf.mxu0
        %v3203 = vadd.f32 %v3190, %v3202
        %v3204 = vpop.f32.mrf.mxu0
        %3205 = vdwg.mxu0
        %3206 = vmatpush.bf16.msra.mxu0 %v2630
        %3207 = vmatpush.bf16.msra.mxu0 %v2626
        %3208 = vmatpush.bf16.msra.mxu0 %v2622
        %3209 = vmatpush.bf16.msra.mxu0 %v2618
        %3210 = vmatpush.bf16.msra.mxu0 %v2614
        %3211 = vmatpush.bf16.msra.mxu0 %v2610
        %3212 = vmatpush.bf16.msra.mxu0 %v2606
        %3213 = vmatpush.bf16.msra.mxu0 %v2602
        %3214 = vmatmul.bf16.gmra.mxu0 %v1382
        %v3215 = vpop.f32.mrf.mxu0
        %v3216 = vadd.f32 %v3203, %v3215
        %v3217 = vpop.f32.mrf.mxu0
        %3218 = vdwg.mxu0
        %3219 = vmatpush.bf16.msra.mxu0 %v2662
        %3220 = vmatpush.bf16.msra.mxu0 %v2658
        %3221 = vmatpush.bf16.msra.mxu0 %v2654
        %3222 = vmatpush.bf16.msra.mxu0 %v2650
        %3223 = vmatpush.bf16.msra.mxu0 %v2646
        %3224 = vmatpush.bf16.msra.mxu0 %v2642
        %3225 = vmatpush.bf16.msra.mxu0 %v2638
        %3226 = vmatpush.bf16.msra.mxu0 %v2634
        %3227 = vmatmul.bf16.gmra.mxu0 %v1383
        %v3228 = vpop.f32.mrf.mxu0
        %v3229 = vadd.f32 %v3216, %v3228
        %v3230 = vpop.f32.mrf.mxu0
        %3231 = vdwg.mxu0
        %3232 = vmatpush.bf16.msra.mxu0 %v2439
        %3233 = vmatpush.bf16.msra.mxu0 %v2435
        %3234 = vmatpush.bf16.msra.mxu0 %v2431
        %3235 = vmatpush.bf16.msra.mxu0 %v2427
        %3236 = vmatpush.bf16.msra.mxu0 %v2423
        %3237 = vmatpush.bf16.msra.mxu0 %v2419
        %3238 = vmatpush.bf16.msra.mxu0 %v2415
        %3239 = vmatpush.bf16.msra.mxu0 %v2411
        %3240 = vmatmul.bf16.gmra.mxu0 %v1376
        %v3241 = vpop.f32.mrf.mxu0
        %v3242 = vadd.f32 0.0, %v3241
        %v3243 = vpop.f32.mrf.mxu0
        %3244 = vdwg.mxu0
        %3245 = vmatpush.bf16.msra.mxu0 %v2471
        %3246 = vmatpush.bf16.msra.mxu0 %v2467
        %3247 = vmatpush.bf16.msra.mxu0 %v2463
        %3248 = vmatpush.bf16.msra.mxu0 %v2459
        %3249 = vmatpush.bf16.msra.mxu0 %v2455
        %3250 = vmatpush.bf16.msra.mxu0 %v2451
        %3251 = vmatpush.bf16.msra.mxu0 %v2447
        %3252 = vmatpush.bf16.msra.mxu0 %v2443
        %3253 = vmatmul.bf16.gmra.mxu0 %v1377
        %v3254 = vpop.f32.mrf.mxu0
        %v3255 = vadd.f32 %v3242, %v3254
        %v3256 = vpop.f32.mrf.mxu0
        %3257 = vdwg.mxu0
        %3258 = vmatpush.bf16.msra.mxu0 %v2503
        %3259 = vmatpush.bf16.msra.mxu0 %v2499
        %3260 = vmatpush.bf16.msra.mxu0 %v2495
        %3261 = vmatpush.bf16.msra.mxu0 %v2491
        %3262 = vmatpush.bf16.msra.mxu0 %v2487
        %3263 = vmatpush.bf16.msra.mxu0 %v2483
        %3264 = vmatpush.bf16.msra.mxu0 %v2479
        %3265 = vmatpush.bf16.msra.mxu0 %v2475
        %3266 = vmatmul.bf16.gmra.mxu0 %v1378
        %v3267 = vpop.f32.mrf.mxu0
        %v3268 = vadd.f32 %v3255, %v3267
        %v3269 = vpop.f32.mrf.mxu0
        %3270 = vdwg.mxu0
        %3271 = vmatpush.bf16.msra.mxu0 %v2535
        %3272 = vmatpush.bf16.msra.mxu0 %v2531
        %3273 = vmatpush.bf16.msra.mxu0 %v2527
        %3274 = vmatpush.bf16.msra.mxu0 %v2523
        %3275 = vmatpush.bf16.msra.mxu0 %v2519
        %3276 = vmatpush.bf16.msra.mxu0 %v2515
        %3277 = vmatpush.bf16.msra.mxu0 %v2511
        %3278 = vmatpush.bf16.msra.mxu0 %v2507
        %3279 = vmatmul.bf16.gmra.mxu0 %v1379
        %v3280 = vpop.f32.mrf.mxu0
        %v3281 = vadd.f32 %v3268, %v3280
        %v3282 = vpop.f32.mrf.mxu0
        %3283 = vdwg.mxu0
        %3284 = vmatpush.bf16.msra.mxu0 %v2567
        %3285 = vmatpush.bf16.msra.mxu0 %v2563
        %3286 = vmatpush.bf16.msra.mxu0 %v2559
        %3287 = vmatpush.bf16.msra.mxu0 %v2555
        %3288 = vmatpush.bf16.msra.mxu0 %v2551
        %3289 = vmatpush.bf16.msra.mxu0 %v2547
        %3290 = vmatpush.bf16.msra.mxu0 %v2543
        %3291 = vmatpush.bf16.msra.mxu0 %v2539
        %3292 = vmatmul.bf16.gmra.mxu0 %v1380
        %v3293 = vpop.f32.mrf.mxu0
        %v3294 = vadd.f32 %v3281, %v3293
        %v3295 = vpop.f32.mrf.mxu0
        %3296 = vdwg.mxu0
        %3297 = vmatpush.bf16.msra.mxu0 %v2599
        %3298 = vmatpush.bf16.msra.mxu0 %v2595
        %3299 = vmatpush.bf16.msra.mxu0 %v2591
        %3300 = vmatpush.bf16.msra.mxu0 %v2587
        %3301 = vmatpush.bf16.msra.mxu0 %v2583
        %3302 = vmatpush.bf16.msra.mxu0 %v2579
        %3303 = vmatpush.bf16.msra.mxu0 %v2575
        %3304 = vmatpush.bf16.msra.mxu0 %v2571
        %3305 = vmatmul.bf16.gmra.mxu0 %v1381
        %v3306 = vpop.f32.mrf.mxu0
        %v3307 = vadd.f32 %v3294, %v3306
        %v3308 = vpop.f32.mrf.mxu0
        %3309 = vdwg.mxu0
        %3310 = vmatpush.bf16.msra.mxu0 %v2631
        %3311 = vmatpush.bf16.msra.mxu0 %v2627
        %3312 = vmatpush.bf16.msra.mxu0 %v2623
        %3313 = vmatpush.bf16.msra.mxu0 %v2619
        %3314 = vmatpush.bf16.msra.mxu0 %v2615
        %3315 = vmatpush.bf16.msra.mxu0 %v2611
        %3316 = vmatpush.bf16.msra.mxu0 %v2607
        %3317 = vmatpush.bf16.msra.mxu0 %v2603
        %3318 = vmatmul.bf16.gmra.mxu0 %v1382
        %v3319 = vpop.f32.mrf.mxu0
        %v3320 = vadd.f32 %v3307, %v3319
        %v3321 = vpop.f32.mrf.mxu0
        %3322 = vdwg.mxu0
        %3323 = vmatpush.bf16.msra.mxu0 %v2663
        %3324 = vmatpush.bf16.msra.mxu0 %v2659
        %3325 = vmatpush.bf16.msra.mxu0 %v2655
        %3326 = vmatpush.bf16.msra.mxu0 %v2651
        %3327 = vmatpush.bf16.msra.mxu0 %v2647
        %3328 = vmatpush.bf16.msra.mxu0 %v2643
        %3329 = vmatpush.bf16.msra.mxu0 %v2639
        %3330 = vmatpush.bf16.msra.mxu0 %v2635
        %3331 = vmatmul.bf16.gmra.mxu0 %v1383
        %v3332 = vpop.f32.mrf.mxu0
        %v3333 = vadd.f32 %v3320, %v3332
        %v3334 = vpop.f32.mrf.mxu0
        %3335 = vdwg.mxu0
        %v3336 = vld [vmem:[%s5] sm:$0xf]
        %v3338 = vperm.slane %v3336, 0
        %v3339 = vperm.slane %v3336, 1
        %v3340 = vperm.slane %v3336, 2
        %v3341 = vperm.slane %v3336, 3
        %v3346 = vmul.f32 %v3021, %v3338
        %v3347 = vmul.f32 %v3125, %v3339
        %v3348 = vmul.f32 %v3229, %v3340
        %v3349 = vmul.f32 %v3333, %v3341
        %v3350 = vld [vmem:[%s6] sm:$0xf]
        %v3352 = vperm.slane %v3350, 0
        %v3353 = vperm.slane %v3350, 1
        %v3354 = vperm.slane %v3350, 2
        %v3355 = vperm.slane %v3350, 3
        %v3360 = vadd.f32 %v3346, %v3352
        %v3361 = vadd.f32 %v3347, %v3353
        %v3362 = vadd.f32 %v3348, %v3354
        %v3363 = vadd.f32 %v3349, %v3355
        %v3364 = vmax.f32 %v3360, 0.0
        %v3365 = vmax.f32 %v3361, 0.0
        %v3366 = vmax.f32 %v3362, 0.0
        %v3367 = vmax.f32 %v3363, 0.0
        %v3372 = vrot.slane %v3365, 7
        %v3373 = vrot.slane %v3366, 6
        %v3374 = vrot.slane %v3367, 5
        %vm3375 = vcmask 1040384
        %v3376 = vsel %vm3375, %v3364, %v3372
        %vm3377 = vcmask 1042434
        %v3378 = vsel %vm3377, %v3373, %v3374
        %vm3379 = vcmask 1041408
        %v3380 = vsel %vm3379, %v3376, %v3378
        %v3382 = vlaneseq
        %vm3383 = vcmp.ge.s32.totalorder %v3382, 0
        %vm3384 = vcmp.lt.s32.totalorder %v3382, 512
        %vm3385 = vmand %vm3383, %vm3384
        %3386 = vst.msk [vmem:[%s304] sm:$0xf] %vm3385, %v3380
      $region56: #{foldingnet_forward.12} parent=47 // pred_fallthru
        _
      %p3387 = scmp.lt.s32.totalorder %s22, 1
      %s3388 = scalar_select %p3387, %s22, 1
      %s3389 = smul.addr %s3388, 4
      %s3390 = scalar_lea.vmem %s7, %s3389
      // Predicated region
      $region57: #{foldingnet_forward.12} parent=47 // pred_check
        %p3391 = pneg %p202
      $region58: #{foldingnet_forward.12} parent=47 // pred_check_branch
        %3393 = sbr.rel (%p3391) target = $region60
      $region59: #{foldingnet_forward.12} parent=47 // pred_region
        _
      $region60: #{foldingnet_forward.12} parent=47 // pred_fallthru
        _
    $region48: #{foldingnet_forward.12} parent=5 // pred_fallthru
      _
    %p3394 = scmp.le.s32.totalorder 2, %s13
    // Predicated region
    $region61: #{foldingnet_forward.12} parent=5 // pred_check
      %p3395 = pneg %p3394
    $region62: #{foldingnet_forward.12} parent=5 // pred_check_branch
      %3397 = sbr.rel (%p3395) target = $region64
    $region63: #{foldingnet_forward.12} parent=5 // pred_region
      %s3398 = ssub.s32 %s13, 2
      // Predicated region
      $region65: #{foldingnet_forward.12} parent=63 // pred_check
        %p3399 = pneg %p208
      $region66: #{foldingnet_forward.12} parent=63 // pred_check_branch
        %3401 = sbr.rel (%p3399) target = $region68
      $region67: #{foldingnet_forward.12} parent=63 // pred_region
        %p3402 = scmp.lt.s32.totalorder %s24, 1
        %s3403 = scalar_select %p3402, %s24, 1
        %s3404 = smul.addr %s3403, 4
        %s3405 = scalar_lea.vmem %s7, %s3404
      $region68: #{foldingnet_forward.12} parent=63 // pred_fallthru
        _
    $region64: #{foldingnet_forward.12} parent=5 // pred_fallthru
      _
  $region6: #{foldingnet_forward.12} parent=0 // loop_footer
    %s17 = sadd.s32 1, %s13
  $region7: #{foldingnet_forward.12} parent=0 // loop_footer_branch
    %12 = sbr.rel target = $region3
  $region8: #{foldingnet_forward.12} parent=0 // loop_exit
    _

// kernel: foldingnet_forward.13
$region0: #{foldingnet_forward.13}
  #allocation0 [shape = 'u32[]', space=smem, size = 0x4, offset = 0x4, fixed_abs, tag = 'smem constant byte address 0x4 - core index']
  #allocation1 [shape = 'u32[72,128]{1,0:T(1,128)}', space=vmem, size = 0x9000, scoped, tag = 'internal scratch']
  %s0 = inlined_call_operand.vmem [shape: f32[64,512], index: 0, kind: input, shape index: {}]
  %s1 = inlined_call_operand.vmem [shape: f32[2,1,512], index: 1, kind: input, shape index: {}]
  %s2 = inlined_call_operand.vmem [shape: f32[2,1,512], index: 2, kind: input, shape index: {}]
  %s3 = inlined_call_operand.vmem [shape: f32[3,512], index: 3, kind: input, shape index: {}]
  %s4 = inlined_call_operand.vmem [shape: bf16[512,512], index: 4, kind: input, shape index: {}]
  %s5 = inlined_call_operand.vmem [shape: f32[1,512], index: 5, kind: input, shape index: {}]
  %s6 = inlined_call_operand.vmem [shape: f32[1,512], index: 6, kind: input, shape index: {}]
  %s7 = inlined_call_operand.vmem [shape: bf16[512,3], index: 7, kind: input, shape index: {}]
  %s8 = inlined_call_operand.vmem [shape: f32[1,3], index: 8, kind: input, shape index: {}]
  %s9 = inlined_call_operand.vmem [shape: f32[1,3], index: 9, kind: input, shape index: {}]
  %s10 = inlined_call_operand.vmem [shape: bf16[512,512], index: 10, kind: input, shape index: {}]
  %s11 = inlined_call_operand.vmem [shape: f32[1,512], index: 11, kind: input, shape index: {}]
  %s12 = inlined_call_operand.vmem [shape: f32[1,512], index: 12, kind: input, shape index: {}]
  %s13 = inlined_call_operand.vmem [shape: bf16[512,128], index: 13, kind: input, shape index: {}]
  %s14 = inlined_call_operand.vmem [shape: f32[1,128], index: 14, kind: input, shape index: {}]
  %s15 = inlined_call_operand.vmem [shape: f32[1,128], index: 15, kind: input, shape index: {}]
  %s16 = inlined_call_operand.vmem [shape: f32[2,64,128], index: 16, kind: output, shape index: {}]
  %s17 = sld [smem:[#allocation0]]
  $region97: #{foldingnet_forward.13} parent=0
    _
  %s19 = ssub.s32 1, %s17
  %s20 = scalar_select 0, %s19, %s17
  loop: start=0, step=1, limit=4
  $region2: #{foldingnet_forward.13} parent=0 // loop_pre_header
    _
  $region3: #{foldingnet_forward.13} parent=0 // loop_header
    %s22 = sphi 0, %s26
    %p23 = scmp.ge.s32.totalorder %s22, 4
    %s29 = sphi 0, %s41
    %s30 = sphi 0, %s37
    %s31 = sphi 0, %s29
    %s32 = sphi 0, %s30
    %s33 = sphi 0, %s31
    %s34 = sphi 0, %s32
    %s44 = sphi 0, %s46
    %s47 = sphi 0, %s44
    %s48 = sphi 0, %s47
    %s64 = sphi 0, %s48
    %s70 = sphi 0, %s72
    %s73 = sphi 0, %s70
    %s74 = sphi 0, %s73
    %s90 = sphi 0, %s74
    %s96 = sphi 0, %s98
    %s99 = sphi 0, %s96
    %s100 = sphi 0, %s99
    %s116 = sphi 0, %s100
    %s120 = sphi 0, %s120
    %s122 = sphi 0, %s120
    %s123 = sphi 0, %s122
    %s137 = sphi 0, %s123
    %s141 = sphi 0, %s141
    %s143 = sphi 0, %s141
    %s144 = sphi 0, %s143
    %s158 = sphi 0, %s144
    %s162 = sphi 0, %s162
    %s164 = sphi 0, %s162
    %s165 = sphi 0, %s164
    %s179 = sphi 0, %s165
    %s183 = sphi 0, %s183
    %s185 = sphi 0, %s183
    %s186 = sphi 0, %s185
    %s200 = sphi 0, %s186
    %s204 = sphi 0, %s204
    %s206 = sphi 0, %s204
    %s207 = sphi 0, %s206
    %s221 = sphi 0, %s207
    %s225 = sphi 0, %s225
    %s227 = sphi 0, %s225
    %s228 = sphi 0, %s227
    %s242 = sphi 0, %s228
    %s246 = sphi 0, %s246
    %s248 = sphi 0, %s246
    %s249 = sphi 0, %s248
    %s263 = sphi 0, %s249
    %s267 = sphi 0, %s267
    %s269 = sphi 0, %s267
    %s270 = sphi 0, %s269
    %s284 = sphi 0, %s270
    %s288 = sphi 0, %s288
    %s290 = sphi 0, %s288
    %s291 = sphi 0, %s290
    %s305 = sphi 0, %s291
    %s309 = sphi 0, %s309
    %s311 = sphi 0, %s309
    %s312 = sphi 0, %s311
    %s326 = sphi 0, %s312
    %s330 = sphi 0, %s330
    %s332 = sphi 0, %s330
    %s333 = sphi 0, %s332
    %s347 = sphi 0, %s333
    %s351 = sphi 0, %s351
    %s353 = sphi 0, %s351
    %s354 = sphi 0, %s353
    %s368 = sphi 0, %s354
    %s372 = sphi 0, %s372
    %s374 = sphi 0, %s372
    %s375 = sphi 0, %s374
    %s389 = sphi 0, %s375
    %s397 = sphi 0, %s399
    %s400 = sphi 0, %s397
    %s401 = sphi 0, %s400
    %s417 = sphi 0, %s401
  $region4: #{foldingnet_forward.13} parent=0 // loop_header_branch
    %25 = sbr.rel (%p23) target = $region8
  $region5: #{foldingnet_forward.13} parent=0 // loop_body
    %s27 = ssub.s32 %s22, 1
    %s28 = ssub.s32 %s22, 2
    %s35 = sadd.s32 1, %s30
    %p36 = scmp.ge.s32.totalorder %s35, 1
    %s37 = scalar_select %p36, 0, %s35
    %s38 = sadd.s32 1, %s29
    %s39 = scalar_select %p36, %s38, %s29
    %p40 = scmp.ge.s32.totalorder %s39, 2
    %s41 = scalar_select %p40, 0, %s39
    %s42 = ssub.s32 %s30, %s37
    %p43 = scmp.eq.s32.totalorder %s42, 0
    %s45 = sadd.s32 %s44, 1
    %s46 = scalar_select %p43, %s44, %s45
    %p49 = pneg %p43
    %p50 = scmp.eq.s32.totalorder %s22, 1
    %p51 = por %p49, %p50
    %p52 = scmp.ne.s32.totalorder %s44, %s47
    %p53 = scmp.eq.s32.totalorder %s22, 0
    %p54 = por %p52, %p53
    %p55 = scmp.ne.s32.totalorder %s44, %s47
    %p56 = scmp.eq.s32.totalorder %s27, 1
    %p57 = por %p55, %p56
    %p58 = scmp.ne.s32.totalorder %s47, %s48
    %p59 = scmp.eq.s32.totalorder %s27, 0
    %p60 = por %p58, %p59
    %p61 = scmp.ne.s32.totalorder %s47, %s48
    %p62 = scmp.eq.s32.totalorder %s28, 1
    %p63 = por %p61, %p62
    %p65 = scmp.ne.s32.totalorder %s48, %s64
    %p66 = scmp.eq.s32.totalorder %s28, 0
    %p67 = por %p65, %p66
    %s68 = ssub.s32 %s29, %s41
    %p69 = scmp.eq.s32.totalorder %s68, 0
    %s71 = sadd.s32 %s70, 1
    %s72 = scalar_select %p69, %s70, %s71
    %p75 = pneg %p69
    %p76 = scmp.eq.s32.totalorder %s22, 1
    %p77 = por %p75, %p76
    %p78 = scmp.ne.s32.totalorder %s70, %s73
    %p79 = scmp.eq.s32.totalorder %s22, 0
    %p80 = por %p78, %p79
    %p81 = scmp.ne.s32.totalorder %s70, %s73
    %p82 = scmp.eq.s32.totalorder %s27, 1
    %p83 = por %p81, %p82
    %p84 = scmp.ne.s32.totalorder %s73, %s74
    %p85 = scmp.eq.s32.totalorder %s27, 0
    %p86 = por %p84, %p85
    %p87 = scmp.ne.s32.totalorder %s73, %s74
    %p88 = scmp.eq.s32.totalorder %s28, 1
    %p89 = por %p87, %p88
    %p91 = scmp.ne.s32.totalorder %s74, %s90
    %p92 = scmp.eq.s32.totalorder %s28, 0
    %p93 = por %p91, %p92
    %s94 = ssub.s32 %s29, %s41
    %p95 = scmp.eq.s32.totalorder %s94, 0
    %s97 = sadd.s32 %s96, 1
    %s98 = scalar_select %p95, %s96, %s97
    %p101 = pneg %p95
    %p102 = scmp.eq.s32.totalorder %s22, 1
    %p103 = por %p101, %p102
    %p104 = scmp.ne.s32.totalorder %s96, %s99
    %p105 = scmp.eq.s32.totalorder %s22, 0
    %p106 = por %p104, %p105
    %p107 = scmp.ne.s32.totalorder %s96, %s99
    %p108 = scmp.eq.s32.totalorder %s27, 1
    %p109 = por %p107, %p108
    %p110 = scmp.ne.s32.totalorder %s99, %s100
    %p111 = scmp.eq.s32.totalorder %s27, 0
    %p112 = por %p110, %p111
    %p113 = scmp.ne.s32.totalorder %s99, %s100
    %p114 = scmp.eq.s32.totalorder %s28, 1
    %p115 = por %p113, %p114
    %p117 = scmp.ne.s32.totalorder %s100, %s116
    %p118 = scmp.eq.s32.totalorder %s28, 0
    %p119 = por %p117, %p118
    %s121 = sadd.s32 %s120, 1
    %p124 = scmp.eq.s32.totalorder %s22, 1
    %p125 = scmp.ne.s32.totalorder %s120, %s122
    %p126 = scmp.eq.s32.totalorder %s22, 0
    %p127 = por %p125, %p126
    %p128 = scmp.ne.s32.totalorder %s120, %s122
    %p129 = scmp.eq.s32.totalorder %s27, 1
    %p130 = por %p128, %p129
    %p131 = scmp.ne.s32.totalorder %s122, %s123
    %p132 = scmp.eq.s32.totalorder %s27, 0
    %p133 = por %p131, %p132
    %p134 = scmp.ne.s32.totalorder %s122, %s123
    %p135 = scmp.eq.s32.totalorder %s28, 1
    %p136 = por %p134, %p135
    %p138 = scmp.ne.s32.totalorder %s123, %s137
    %p139 = scmp.eq.s32.totalorder %s28, 0
    %p140 = por %p138, %p139
    %s142 = sadd.s32 %s141, 1
    %p145 = scmp.eq.s32.totalorder %s22, 1
    %p146 = scmp.ne.s32.totalorder %s141, %s143
    %p147 = scmp.eq.s32.totalorder %s22, 0
    %p148 = por %p146, %p147
    %p149 = scmp.ne.s32.totalorder %s141, %s143
    %p150 = scmp.eq.s32.totalorder %s27, 1
    %p151 = por %p149, %p150
    %p152 = scmp.ne.s32.totalorder %s143, %s144
    %p153 = scmp.eq.s32.totalorder %s27, 0
    %p154 = por %p152, %p153
    %p155 = scmp.ne.s32.totalorder %s143, %s144
    %p156 = scmp.eq.s32.totalorder %s28, 1
    %p157 = por %p155, %p156
    %p159 = scmp.ne.s32.totalorder %s144, %s158
    %p160 = scmp.eq.s32.totalorder %s28, 0
    %p161 = por %p159, %p160
    %s163 = sadd.s32 %s162, 1
    %p166 = scmp.eq.s32.totalorder %s22, 1
    %p167 = scmp.ne.s32.totalorder %s162, %s164
    %p168 = scmp.eq.s32.totalorder %s22, 0
    %p169 = por %p167, %p168
    %p170 = scmp.ne.s32.totalorder %s162, %s164
    %p171 = scmp.eq.s32.totalorder %s27, 1
    %p172 = por %p170, %p171
    %p173 = scmp.ne.s32.totalorder %s164, %s165
    %p174 = scmp.eq.s32.totalorder %s27, 0
    %p175 = por %p173, %p174
    %p176 = scmp.ne.s32.totalorder %s164, %s165
    %p177 = scmp.eq.s32.totalorder %s28, 1
    %p178 = por %p176, %p177
    %p180 = scmp.ne.s32.totalorder %s165, %s179
    %p181 = scmp.eq.s32.totalorder %s28, 0
    %p182 = por %p180, %p181
    %s184 = sadd.s32 %s183, 1
    %p187 = scmp.eq.s32.totalorder %s22, 1
    %p188 = scmp.ne.s32.totalorder %s183, %s185
    %p189 = scmp.eq.s32.totalorder %s22, 0
    %p190 = por %p188, %p189
    %p191 = scmp.ne.s32.totalorder %s183, %s185
    %p192 = scmp.eq.s32.totalorder %s27, 1
    %p193 = por %p191, %p192
    %p194 = scmp.ne.s32.totalorder %s185, %s186
    %p195 = scmp.eq.s32.totalorder %s27, 0
    %p196 = por %p194, %p195
    %p197 = scmp.ne.s32.totalorder %s185, %s186
    %p198 = scmp.eq.s32.totalorder %s28, 1
    %p199 = por %p197, %p198
    %p201 = scmp.ne.s32.totalorder %s186, %s200
    %p202 = scmp.eq.s32.totalorder %s28, 0
    %p203 = por %p201, %p202
    %s205 = sadd.s32 %s204, 1
    %p208 = scmp.eq.s32.totalorder %s22, 1
    %p209 = scmp.ne.s32.totalorder %s204, %s206
    %p210 = scmp.eq.s32.totalorder %s22, 0
    %p211 = por %p209, %p210
    %p212 = scmp.ne.s32.totalorder %s204, %s206
    %p213 = scmp.eq.s32.totalorder %s27, 1
    %p214 = por %p212, %p213
    %p215 = scmp.ne.s32.totalorder %s206, %s207
    %p216 = scmp.eq.s32.totalorder %s27, 0
    %p217 = por %p215, %p216
    %p218 = scmp.ne.s32.totalorder %s206, %s207
    %p219 = scmp.eq.s32.totalorder %s28, 1
    %p220 = por %p218, %p219
    %p222 = scmp.ne.s32.totalorder %s207, %s221
    %p223 = scmp.eq.s32.totalorder %s28, 0
    %p224 = por %p222, %p223
    %s226 = sadd.s32 %s225, 1
    %p229 = scmp.eq.s32.totalorder %s22, 1
    %p230 = scmp.ne.s32.totalorder %s225, %s227
    %p231 = scmp.eq.s32.totalorder %s22, 0
    %p232 = por %p230, %p231
    %p233 = scmp.ne.s32.totalorder %s225, %s227
    %p234 = scmp.eq.s32.totalorder %s27, 1
    %p235 = por %p233, %p234
    %p236 = scmp.ne.s32.totalorder %s227, %s228
    %p237 = scmp.eq.s32.totalorder %s27, 0
    %p238 = por %p236, %p237
    %p239 = scmp.ne.s32.totalorder %s227, %s228
    %p240 = scmp.eq.s32.totalorder %s28, 1
    %p241 = por %p239, %p240
    %p243 = scmp.ne.s32.totalorder %s228, %s242
    %p244 = scmp.eq.s32.totalorder %s28, 0
    %p245 = por %p243, %p244
    %s247 = sadd.s32 %s246, 1
    %p250 = scmp.eq.s32.totalorder %s22, 1
    %p251 = scmp.ne.s32.totalorder %s246, %s248
    %p252 = scmp.eq.s32.totalorder %s22, 0
    %p253 = por %p251, %p252
    %p254 = scmp.ne.s32.totalorder %s246, %s248
    %p255 = scmp.eq.s32.totalorder %s27, 1
    %p256 = por %p254, %p255
    %p257 = scmp.ne.s32.totalorder %s248, %s249
    %p258 = scmp.eq.s32.totalorder %s27, 0
    %p259 = por %p257, %p258
    %p260 = scmp.ne.s32.totalorder %s248, %s249
    %p261 = scmp.eq.s32.totalorder %s28, 1
    %p262 = por %p260, %p261
    %p264 = scmp.ne.s32.totalorder %s249, %s263
    %p265 = scmp.eq.s32.totalorder %s28, 0
    %p266 = por %p264, %p265
    %s268 = sadd.s32 %s267, 1
    %p271 = scmp.eq.s32.totalorder %s22, 1
    %p272 = scmp.ne.s32.totalorder %s267, %s269
    %p273 = scmp.eq.s32.totalorder %s22, 0
    %p274 = por %p272, %p273
    %p275 = scmp.ne.s32.totalorder %s267, %s269
    %p276 = scmp.eq.s32.totalorder %s27, 1
    %p277 = por %p275, %p276
    %p278 = scmp.ne.s32.totalorder %s269, %s270
    %p279 = scmp.eq.s32.totalorder %s27, 0
    %p280 = por %p278, %p279
    %p281 = scmp.ne.s32.totalorder %s269, %s270
    %p282 = scmp.eq.s32.totalorder %s28, 1
    %p283 = por %p281, %p282
    %p285 = scmp.ne.s32.totalorder %s270, %s284
    %p286 = scmp.eq.s32.totalorder %s28, 0
    %p287 = por %p285, %p286
    %s289 = sadd.s32 %s288, 1
    %p292 = scmp.eq.s32.totalorder %s22, 1
    %p293 = scmp.ne.s32.totalorder %s288, %s290
    %p294 = scmp.eq.s32.totalorder %s22, 0
    %p295 = por %p293, %p294
    %p296 = scmp.ne.s32.totalorder %s288, %s290
    %p297 = scmp.eq.s32.totalorder %s27, 1
    %p298 = por %p296, %p297
    %p299 = scmp.ne.s32.totalorder %s290, %s291
    %p300 = scmp.eq.s32.totalorder %s27, 0
    %p301 = por %p299, %p300
    %p302 = scmp.ne.s32.totalorder %s290, %s291
    %p303 = scmp.eq.s32.totalorder %s28, 1
    %p304 = por %p302, %p303
    %p306 = scmp.ne.s32.totalorder %s291, %s305
    %p307 = scmp.eq.s32.totalorder %s28, 0
    %p308 = por %p306, %p307
    %s310 = sadd.s32 %s309, 1
    %p313 = scmp.eq.s32.totalorder %s22, 1
    %p314 = scmp.ne.s32.totalorder %s309, %s311
    %p315 = scmp.eq.s32.totalorder %s22, 0
    %p316 = por %p314, %p315
    %p317 = scmp.ne.s32.totalorder %s309, %s311
    %p318 = scmp.eq.s32.totalorder %s27, 1
    %p319 = por %p317, %p318
    %p320 = scmp.ne.s32.totalorder %s311, %s312
    %p321 = scmp.eq.s32.totalorder %s27, 0
    %p322 = por %p320, %p321
    %p323 = scmp.ne.s32.totalorder %s311, %s312
    %p324 = scmp.eq.s32.totalorder %s28, 1
    %p325 = por %p323, %p324
    %p327 = scmp.ne.s32.totalorder %s312, %s326
    %p328 = scmp.eq.s32.totalorder %s28, 0
    %p329 = por %p327, %p328
    %s331 = sadd.s32 %s330, 1
    %p334 = scmp.eq.s32.totalorder %s22, 1
    %p335 = scmp.ne.s32.totalorder %s330, %s332
    %p336 = scmp.eq.s32.totalorder %s22, 0
    %p337 = por %p335, %p336
    %p338 = scmp.ne.s32.totalorder %s330, %s332
    %p339 = scmp.eq.s32.totalorder %s27, 1
    %p340 = por %p338, %p339
    %p341 = scmp.ne.s32.totalorder %s332, %s333
    %p342 = scmp.eq.s32.totalorder %s27, 0
    %p343 = por %p341, %p342
    %p344 = scmp.ne.s32.totalorder %s332, %s333
    %p345 = scmp.eq.s32.totalorder %s28, 1
    %p346 = por %p344, %p345
    %p348 = scmp.ne.s32.totalorder %s333, %s347
    %p349 = scmp.eq.s32.totalorder %s28, 0
    %p350 = por %p348, %p349
    %s352 = sadd.s32 %s351, 1
    %p355 = scmp.eq.s32.totalorder %s22, 1
    %p356 = scmp.ne.s32.totalorder %s351, %s353
    %p357 = scmp.eq.s32.totalorder %s22, 0
    %p358 = por %p356, %p357
    %p359 = scmp.ne.s32.totalorder %s351, %s353
    %p360 = scmp.eq.s32.totalorder %s27, 1
    %p361 = por %p359, %p360
    %p362 = scmp.ne.s32.totalorder %s353, %s354
    %p363 = scmp.eq.s32.totalorder %s27, 0
    %p364 = por %p362, %p363
    %p365 = scmp.ne.s32.totalorder %s353, %s354
    %p366 = scmp.eq.s32.totalorder %s28, 1
    %p367 = por %p365, %p366
    %p369 = scmp.ne.s32.totalorder %s354, %s368
    %p370 = scmp.eq.s32.totalorder %s28, 0
    %p371 = por %p369, %p370
    %s373 = sadd.s32 %s372, 1
    %p376 = scmp.eq.s32.totalorder %s22, 1
    %p377 = scmp.ne.s32.totalorder %s372, %s374
    %p378 = scmp.eq.s32.totalorder %s22, 0
    %p379 = por %p377, %p378
    %p380 = scmp.ne.s32.totalorder %s372, %s374
    %p381 = scmp.eq.s32.totalorder %s27, 1
    %p382 = por %p380, %p381
    %p383 = scmp.ne.s32.totalorder %s374, %s375
    %p384 = scmp.eq.s32.totalorder %s27, 0
    %p385 = por %p383, %p384
    %p386 = scmp.ne.s32.totalorder %s374, %s375
    %p387 = scmp.eq.s32.totalorder %s28, 1
    %p388 = por %p386, %p387
    %p390 = scmp.ne.s32.totalorder %s375, %s389
    %p391 = scmp.eq.s32.totalorder %s28, 0
    %p392 = por %p390, %p391
    %s393 = ssub.s32 %s29, %s41
    %s394 = ssub.s32 %s30, %s37
    %s395 = sor.u32 %s393, %s394
    %p396 = scmp.eq.s32.totalorder %s395, 0
    %s398 = sadd.s32 %s397, 1
    %s399 = scalar_select %p396, %s397, %s398
    %p402 = pneg %p396
    %p403 = scmp.eq.s32.totalorder %s22, 1
    %p404 = por %p402, %p403
    %p405 = scmp.ne.s32.totalorder %s397, %s400
    %p406 = scmp.eq.s32.totalorder %s22, 0
    %p407 = por %p405, %p406
    %p408 = scmp.ne.s32.totalorder %s397, %s400
    %p409 = scmp.eq.s32.totalorder %s27, 1
    %p410 = por %p408, %p409
    %p411 = scmp.ne.s32.totalorder %s400, %s401
    %p412 = scmp.eq.s32.totalorder %s27, 0
    %p413 = por %p411, %p412
    %p414 = scmp.ne.s32.totalorder %s400, %s401
    %p415 = scmp.eq.s32.totalorder %s28, 1
    %p416 = por %p414, %p415
    %p418 = scmp.ne.s32.totalorder %s401, %s417
    %p419 = scmp.eq.s32.totalorder %s28, 0
    %p420 = por %p418, %p419
    %p421 = scmp.le.s32.totalorder 1, %s22
    %p422 = scmp.lt.s32.totalorder %s22, 3
    %p423 = pnand %p421, %p422
    %p424 = pneg %p423
    // Predicated region
    $region9: #{foldingnet_forward.13} parent=5 // pred_check
      _
    $region10: #{foldingnet_forward.13} parent=5 // pred_check_branch
      %426 = sbr.rel (%p423) target = $region12
    $region11: #{foldingnet_forward.13} parent=5 // pred_region
      %s427 = ssub.s32 %s22, 1
      // Predicated region
      $region13: #{foldingnet_forward.13} parent=11 // pred_check
        %p428 = pneg %p60
      $region14: #{foldingnet_forward.13} parent=11 // pred_check_branch
        %430 = sbr.rel (%p428) target = $region16
      $region15: #{foldingnet_forward.13} parent=11 // pred_region
        %s431 = smul.u32 8, %s32
        %p432 = scmp.lt.s32.totalorder %s431, 7
        %s433 = scalar_select %p432, %s431, 7
        %s434 = smul.addr %s433, 4
        %s435 = smul.addr %s434, 8
        %s436 = scalar_lea.vmem %s0, %s435
        %s437 = smul.u32 8, %s32
      $region16: #{foldingnet_forward.13} parent=11 // pred_fallthru
        _
      // Predicated region
      $region17: #{foldingnet_forward.13} parent=11 // pred_check
        %p438 = pneg %p133
      $region18: #{foldingnet_forward.13} parent=11 // pred_check_branch
        %440 = sbr.rel (%p438) target = $region20
      $region19: #{foldingnet_forward.13} parent=11 // pred_region
        _
      $region20: #{foldingnet_forward.13} parent=11 // pred_fallthru
        _
      // Predicated region
      $region21: #{foldingnet_forward.13} parent=11 // pred_check
        %p441 = pneg %p154
      $region22: #{foldingnet_forward.13} parent=11 // pred_check_branch
        %443 = sbr.rel (%p441) target = $region24
      $region23: #{foldingnet_forward.13} parent=11 // pred_region
        _
      $region24: #{foldingnet_forward.13} parent=11 // pred_fallthru
        _
      // Predicated region
      $region25: #{foldingnet_forward.13} parent=11 // pred_check
        %p444 = pneg %p175
      $region26: #{foldingnet_forward.13} parent=11 // pred_check_branch
        %446 = sbr.rel (%p444) target = $region28
      $region27: #{foldingnet_forward.13} parent=11 // pred_region
        _
      $region28: #{foldingnet_forward.13} parent=11 // pred_fallthru
        _
      // Predicated region
      $region29: #{foldingnet_forward.13} parent=11 // pred_check
        %p447 = pneg %p196
      $region30: #{foldingnet_forward.13} parent=11 // pred_check_branch
        %449 = sbr.rel (%p447) target = $region32
      $region31: #{foldingnet_forward.13} parent=11 // pred_region
        _
      $region32: #{foldingnet_forward.13} parent=11 // pred_fallthru
        _
      // Predicated region
      $region33: #{foldingnet_forward.13} parent=11 // pred_check
        %p450 = pneg %p217
      $region34: #{foldingnet_forward.13} parent=11 // pred_check_branch
        %452 = sbr.rel (%p450) target = $region36
      $region35: #{foldingnet_forward.13} parent=11 // pred_region
        _
      $region36: #{foldingnet_forward.13} parent=11 // pred_fallthru
        _
      // Predicated region
      $region37: #{foldingnet_forward.13} parent=11 // pred_check
        %p453 = pneg %p238
      $region38: #{foldingnet_forward.13} parent=11 // pred_check_branch
        %455 = sbr.rel (%p453) target = $region40
      $region39: #{foldingnet_forward.13} parent=11 // pred_region
        _
      $region40: #{foldingnet_forward.13} parent=11 // pred_fallthru
        _
      // Predicated region
      $region41: #{foldingnet_forward.13} parent=11 // pred_check
        %p456 = pneg %p259
      $region42: #{foldingnet_forward.13} parent=11 // pred_check_branch
        %458 = sbr.rel (%p456) target = $region44
      $region43: #{foldingnet_forward.13} parent=11 // pred_region
        _
      $region44: #{foldingnet_forward.13} parent=11 // pred_fallthru
        _
      // Predicated region
      $region45: #{foldingnet_forward.13} parent=11 // pred_check
        %p459 = pneg %p280
      $region46: #{foldingnet_forward.13} parent=11 // pred_check_branch
        %461 = sbr.rel (%p459) target = $region48
      $region47: #{foldingnet_forward.13} parent=11 // pred_region
        _
      $region48: #{foldingnet_forward.13} parent=11 // pred_fallthru
        _
      // Predicated region
      $region49: #{foldingnet_forward.13} parent=11 // pred_check
        %p462 = pneg %p301
      $region50: #{foldingnet_forward.13} parent=11 // pred_check_branch
        %464 = sbr.rel (%p462) target = $region52
      $region51: #{foldingnet_forward.13} parent=11 // pred_region
        _
      $region52: #{foldingnet_forward.13} parent=11 // pred_fallthru
        _
      // Predicated region
      $region53: #{foldingnet_forward.13} parent=11 // pred_check
        %p465 = pneg %p322
      $region54: #{foldingnet_forward.13} parent=11 // pred_check_branch
        %467 = sbr.rel (%p465) target = $region56
      $region55: #{foldingnet_forward.13} parent=11 // pred_region
        _
      $region56: #{foldingnet_forward.13} parent=11 // pred_fallthru
        _
      // Predicated region
      $region57: #{foldingnet_forward.13} parent=11 // pred_check
        %p468 = pneg %p343
      $region58: #{foldingnet_forward.13} parent=11 // pred_check_branch
        %470 = sbr.rel (%p468) target = $region60
      $region59: #{foldingnet_forward.13} parent=11 // pred_region
        _
      $region60: #{foldingnet_forward.13} parent=11 // pred_fallthru
        _
      // Predicated region
      $region61: #{foldingnet_forward.13} parent=11 // pred_check
        %p471 = pneg %p364
      $region62: #{foldingnet_forward.13} parent=11 // pred_check_branch
        %473 = sbr.rel (%p471) target = $region64
      $region63: #{foldingnet_forward.13} parent=11 // pred_region
        _
      $region64: #{foldingnet_forward.13} parent=11 // pred_fallthru
        _
      // Predicated region
      $region65: #{foldingnet_forward.13} parent=11 // pred_check
        %p474 = pneg %p385
      $region66: #{foldingnet_forward.13} parent=11 // pred_check_branch
        %476 = sbr.rel (%p474) target = $region68
      $region67: #{foldingnet_forward.13} parent=11 // pred_region
        _
      $region68: #{foldingnet_forward.13} parent=11 // pred_fallthru
        _
    $region12: #{foldingnet_forward.13} parent=5 // pred_fallthru
      _
    %p477 = scmp.lt.s32.totalorder %s22, 2
    // Predicated region
    $region69: #{foldingnet_forward.13} parent=5 // pred_check
      %p478 = pneg %p477
    $region70: #{foldingnet_forward.13} parent=5 // pred_check_branch
      %480 = sbr.rel (%p478) target = $region72
    $region71: #{foldingnet_forward.13} parent=5 // pred_region
      // Predicated region
      $region73: #{foldingnet_forward.13} parent=71 // pred_check
        %p481 = pneg %p80
      $region74: #{foldingnet_forward.13} parent=71 // pred_check_branch
        %483 = sbr.rel (%p481) target = $region76
      $region75: #{foldingnet_forward.13} parent=71 // pred_region
        %p484 = scmp.lt.s32.totalorder %s29, 1
        %s485 = scalar_select %p484, %s29, 1
        %s486 = smul.addr %s485, 4
        %s487 = scalar_lea.vmem %s1, %s486
      $region76: #{foldingnet_forward.13} parent=71 // pred_fallthru
        _
      // Predicated region
      $region77: #{foldingnet_forward.13} parent=71 // pred_check
        %p488 = pneg %p106
      $region78: #{foldingnet_forward.13} parent=71 // pred_check_branch
        %490 = sbr.rel (%p488) target = $region80
      $region79: #{foldingnet_forward.13} parent=71 // pred_region
        %p491 = scmp.lt.s32.totalorder %s29, 1
        %s492 = scalar_select %p491, %s29, 1
        %s493 = smul.addr %s492, 4
        %s494 = scalar_lea.vmem %s2, %s493
      $region80: #{foldingnet_forward.13} parent=71 // pred_fallthru
        _
    $region72: #{foldingnet_forward.13} parent=5 // pred_fallthru
      _
    %p495 = scmp.le.s32.totalorder 1, %s22
    %p496 = scmp.lt.s32.totalorder %s22, 3
    %p497 = pnand %p495, %p496
    %p498 = pneg %p497
    // Predicated region
    $region81: #{foldingnet_forward.13} parent=5 // pred_check
      _
    $region82: #{foldingnet_forward.13} parent=5 // pred_check_branch
      %500 = sbr.rel (%p497) target = $region84
    $region83: #{foldingnet_forward.13} parent=5 // pred_region
      %s501 = ssub.s32 %s22, 1
      %s502 = smul.u32 8, %s32
      %p503 = scmp.lt.s32.totalorder %s502, 7
      %s504 = scalar_select %p503, %s502, 7
      %s505 = smul.addr %s504, 4
      %s506 = smul.addr %s505, 8
      %s507 = scalar_lea.vmem %s0, %s506
      %p508 = pneg %p60
      %p509 = pneg %p57
      %p510 = scmp.lt.s32.totalorder %s31, 1
      %s511 = scalar_select %p510, %s31, 1
      %s512 = smul.addr %s511, 4
      %s513 = scalar_lea.vmem %s1, %s512
      %p514 = pneg %p86
      %p515 = pneg %p83
      %p516 = scmp.lt.s32.totalorder %s31, 1
      %s517 = scalar_select %p516, %s31, 1
      %s518 = smul.addr %s517, 4
      %s519 = scalar_lea.vmem %s2, %s518
      %p520 = pneg %p112
      %p521 = pneg %p109
      %p522 = pneg %p133
      %p523 = pneg %p130
      %p524 = pneg %p154
      %p525 = pneg %p151
      %p526 = pneg %p175
      %p527 = pneg %p172
      %p528 = pneg %p196
      %p529 = pneg %p193
      %p530 = pneg %p217
      %p531 = pneg %p214
      %p532 = pneg %p238
      %p533 = pneg %p235
      %p534 = pneg %p259
      %p535 = pneg %p256
      %p536 = pneg %p280
      %p537 = pneg %p277
      %p538 = pneg %p301
      %p539 = pneg %p298
      %p540 = pneg %p322
      %p541 = pneg %p319
      %p542 = pneg %p343
      %p543 = pneg %p340
      %p544 = pneg %p364
      %p545 = pneg %p361
      %p546 = pneg %p385
      %p547 = pneg %p382
      %p548 = pneg %p413
      %p549 = pneg %p410
      %s550 = smul.u32 8, %s32
      %p551 = scmp.lt.s32.totalorder %s31, 1
      %s552 = scalar_select %p551, %s31, 1
      %p553 = scmp.lt.s32.totalorder %s550, 7
      %s554 = scalar_select %p553, %s550, 7
      %s555 = smul.addr %s552, 8
      %s556 = sadd.s32 %s554, %s555
      %s557 = smul.addr %s556, 8
      %s558 = scalar_lea.vmem %s16, %s557
      %s559 = smul.u32 8, %s32
      %p560 = scmp.lt.s32.totalorder %s559, 7
      %s561 = scalar_select %p560, %s559, 7
      %s562 = smul.addr %s561, 4
      %s563 = smul.addr %s562, 8
      %s564 = scalar_lea.vmem %s0, %s563
      %s565 = smul.u32 8, %s32
      %p566 = scmp.lt.s32.totalorder %s31, 1
      %s567 = scalar_select %p566, %s31, 1
      %s568 = smul.addr %s567, 4
      %s569 = scalar_lea.vmem %s1, %s568
      %p570 = scmp.lt.s32.totalorder %s31, 1
      %s571 = scalar_select %p570, %s31, 1
      %s572 = smul.addr %s571, 4
      %s573 = scalar_lea.vmem %s2, %s572
      %s574 = smul.u32 8, %s32
      %p575 = scmp.lt.s32.totalorder %s31, 1
      %s576 = scalar_select %p575, %s31, 1
      %p577 = scmp.lt.s32.totalorder %s574, 7
      %s578 = scalar_select %p577, %s574, 7
      %s579 = smul.addr %s576, 8
      %s580 = sadd.s32 %s578, %s579
      %s581 = smul.addr %s580, 8
      %s582 = scalar_lea.vmem %s16, %s581
      %s583 = smul.u32 8, %s32
      %v584 = vld [vmem:[%s564] sm:$0xff]
      %v585 = vld [vmem:[%s564 + $0x8] sm:$0xff]
      %v586 = vld [vmem:[%s564 + $0x10] sm:$0xff]
      %v587 = vld [vmem:[%s564 + $0x18] sm:$0xff]
      %v588 = vld [vmem:[%s564 + $0x20] sm:$0xff]
      %v589 = vld [vmem:[%s564 + $0x28] sm:$0xff]
      %v590 = vld [vmem:[%s564 + $0x30] sm:$0xff]
      %v591 = vld [vmem:[%s564 + $0x38] sm:$0xff]
      %v592 = vld [vmem:[%s564 + $0x40] sm:$0xff]
      %v593 = vld [vmem:[%s564 + $0x48] sm:$0xff]
      %v594 = vld [vmem:[%s564 + $0x50] sm:$0xff]
      %v595 = vld [vmem:[%s564 + $0x58] sm:$0xff]
      %v596 = vld [vmem:[%s564 + $0x60] sm:$0xff]
      %v597 = vld [vmem:[%s564 + $0x68] sm:$0xff]
      %v598 = vld [vmem:[%s564 + $0x70] sm:$0xff]
      %v599 = vld [vmem:[%s564 + $0x78] sm:$0xff]
      %v600 = vld [vmem:[%s564 + $0x80] sm:$0xff]
      %v601 = vld [vmem:[%s564 + $0x88] sm:$0xff]
      %v602 = vld [vmem:[%s564 + $0x90] sm:$0xff]
      %v603 = vld [vmem:[%s564 + $0x98] sm:$0xff]
      %v604 = vld [vmem:[%s564 + $0xa0] sm:$0xff]
      %v605 = vld [vmem:[%s564 + $0xa8] sm:$0xff]
      %v606 = vld [vmem:[%s564 + $0xb0] sm:$0xff]
      %v607 = vld [vmem:[%s564 + $0xb8] sm:$0xff]
      %v608 = vld [vmem:[%s564 + $0xc0] sm:$0xff]
      %v609 = vld [vmem:[%s564 + $0xc8] sm:$0xff]
      %v610 = vld [vmem:[%s564 + $0xd0] sm:$0xff]
      %v611 = vld [vmem:[%s564 + $0xd8] sm:$0xff]
      %v612 = vld [vmem:[%s564 + $0xe0] sm:$0xff]
      %v613 = vld [vmem:[%s564 + $0xe8] sm:$0xff]
      %v614 = vld [vmem:[%s564 + $0xf0] sm:$0xff]
      %v615 = vld [vmem:[%s564 + $0xf8] sm:$0xff]
      %v616 = vld [vmem:[%s569] sm:$0xf]
      %v618 = vperm.slane %v616, 0
      %v619 = vperm.slane %v616, 1
      %v620 = vperm.slane %v616, 2
      %v621 = vperm.slane %v616, 3
      %v626 = vadd.f32 %v584, %v618
      %v627 = vadd.f32 %v585, %v619
      %v628 = vadd.f32 %v586, %v620
      %v629 = vadd.f32 %v587, %v621
      %v630 = vadd.f32 %v588, %v618
      %v631 = vadd.f32 %v589, %v619
      %v632 = vadd.f32 %v590, %v620
      %v633 = vadd.f32 %v591, %v621
      %v634 = vadd.f32 %v592, %v618
      %v635 = vadd.f32 %v593, %v619
      %v636 = vadd.f32 %v594, %v620
      %v637 = vadd.f32 %v595, %v621
      %v638 = vadd.f32 %v596, %v618
      %v639 = vadd.f32 %v597, %v619
      %v640 = vadd.f32 %v598, %v620
      %v641 = vadd.f32 %v599, %v621
      %v642 = vadd.f32 %v600, %v618
      %v643 = vadd.f32 %v601, %v619
      %v644 = vadd.f32 %v602, %v620
      %v645 = vadd.f32 %v603, %v621
      %v646 = vadd.f32 %v604, %v618
      %v647 = vadd.f32 %v605, %v619
      %v648 = vadd.f32 %v606, %v620
      %v649 = vadd.f32 %v607, %v621
      %v650 = vadd.f32 %v608, %v618
      %v651 = vadd.f32 %v609, %v619
      %v652 = vadd.f32 %v610, %v620
      %v653 = vadd.f32 %v611, %v621
      %v654 = vadd.f32 %v612, %v618
      %v655 = vadd.f32 %v613, %v619
      %v656 = vadd.f32 %v614, %v620
      %v657 = vadd.f32 %v615, %v621
      %v658 = vmul.f32 %v626, 0.01
      %v659 = vmul.f32 %v627, 0.01
      %v660 = vmul.f32 %v628, 0.01
      %v661 = vmul.f32 %v629, 0.01
      %v662 = vmul.f32 %v630, 0.01
      %v663 = vmul.f32 %v631, 0.01
      %v664 = vmul.f32 %v632, 0.01
      %v665 = vmul.f32 %v633, 0.01
      %v666 = vmul.f32 %v634, 0.01
      %v667 = vmul.f32 %v635, 0.01
      %v668 = vmul.f32 %v636, 0.01
      %v669 = vmul.f32 %v637, 0.01
      %v670 = vmul.f32 %v638, 0.01
      %v671 = vmul.f32 %v639, 0.01
      %v672 = vmul.f32 %v640, 0.01
      %v673 = vmul.f32 %v641, 0.01
      %v674 = vmul.f32 %v642, 0.01
      %v675 = vmul.f32 %v643, 0.01
      %v676 = vmul.f32 %v644, 0.01
      %v677 = vmul.f32 %v645, 0.01
      %v678 = vmul.f32 %v646, 0.01
      %v679 = vmul.f32 %v647, 0.01
      %v680 = vmul.f32 %v648, 0.01
      %v681 = vmul.f32 %v649, 0.01
      %v682 = vmul.f32 %v650, 0.01
      %v683 = vmul.f32 %v651, 0.01
      %v684 = vmul.f32 %v652, 0.01
      %v685 = vmul.f32 %v653, 0.01
      %v686 = vmul.f32 %v654, 0.01
      %v687 = vmul.f32 %v655, 0.01
      %v688 = vmul.f32 %v656, 0.01
      %v689 = vmul.f32 %v657, 0.01
      %v690 = vmax.f32 %v626, %v658
      %v691 = vmax.f32 %v627, %v659
      %v692 = vmax.f32 %v628, %v660
      %v693 = vmax.f32 %v629, %v661
      %v694 = vmax.f32 %v630, %v662
      %v695 = vmax.f32 %v631, %v663
      %v696 = vmax.f32 %v632, %v664
      %v697 = vmax.f32 %v633, %v665
      %v698 = vmax.f32 %v634, %v666
      %v699 = vmax.f32 %v635, %v667
      %v700 = vmax.f32 %v636, %v668
      %v701 = vmax.f32 %v637, %v669
      %v702 = vmax.f32 %v638, %v670
      %v703 = vmax.f32 %v639, %v671
      %v704 = vmax.f32 %v640, %v672
      %v705 = vmax.f32 %v641, %v673
      %v706 = vmax.f32 %v642, %v674
      %v707 = vmax.f32 %v643, %v675
      %v708 = vmax.f32 %v644, %v676
      %v709 = vmax.f32 %v645, %v677
      %v710 = vmax.f32 %v646, %v678
      %v711 = vmax.f32 %v647, %v679
      %v712 = vmax.f32 %v648, %v680
      %v713 = vmax.f32 %v649, %v681
      %v714 = vmax.f32 %v650, %v682
      %v715 = vmax.f32 %v651, %v683
      %v716 = vmax.f32 %v652, %v684
      %v717 = vmax.f32 %v653, %v685
      %v718 = vmax.f32 %v654, %v686
      %v719 = vmax.f32 %v655, %v687
      %v720 = vmax.f32 %v656, %v688
      %v721 = vmax.f32 %v657, %v689
      %v722 = vpack.c.bf16 %v694, %v690
      %v723 = vpack.c.bf16 %v695, %v691
      %v724 = vpack.c.bf16 %v696, %v692
      %v725 = vpack.c.bf16 %v697, %v693
      %v726 = vpack.c.bf16 %v702, %v698
      %v727 = vpack.c.bf16 %v703, %v699
      %v728 = vpack.c.bf16 %v704, %v700
      %v729 = vpack.c.bf16 %v705, %v701
      %v730 = vpack.c.bf16 %v710, %v706
      %v731 = vpack.c.bf16 %v711, %v707
      %v732 = vpack.c.bf16 %v712, %v708
      %v733 = vpack.c.bf16 %v713, %v709
      %v734 = vpack.c.bf16 %v718, %v714
      %v735 = vpack.c.bf16 %v719, %v715
      %v736 = vpack.c.bf16 %v720, %v716
      %v737 = vpack.c.bf16 %v721, %v717
      %v738 = vld [vmem:[%s4] sm:$0xff]
      %v739 = vld [vmem:[%s4 + $0x8] sm:$0xff]
      %v740 = vld [vmem:[%s4 + $0x10] sm:$0xff]
      %v741 = vld [vmem:[%s4 + $0x18] sm:$0xff]
      %v742 = vld [vmem:[%s4 + $0x20] sm:$0xff]
      %v743 = vld [vmem:[%s4 + $0x28] sm:$0xff]
      %v744 = vld [vmem:[%s4 + $0x30] sm:$0xff]
      %v745 = vld [vmem:[%s4 + $0x38] sm:$0xff]
      %v746 = vld [vmem:[%s4 + $0x40] sm:$0xff]
      %v747 = vld [vmem:[%s4 + $0x48] sm:$0xff]
      %v748 = vld [vmem:[%s4 + $0x50] sm:$0xff]
      %v749 = vld [vmem:[%s4 + $0x58] sm:$0xff]
      %v750 = vld [vmem:[%s4 + $0x60] sm:$0xff]
      %v751 = vld [vmem:[%s4 + $0x68] sm:$0xff]
      %v752 = vld [vmem:[%s4 + $0x70] sm:$0xff]
      %v753 = vld [vmem:[%s4 + $0x78] sm:$0xff]
      %v754 = vld [vmem:[%s4 + $0x80] sm:$0xff]
      %v755 = vld [vmem:[%s4 + $0x88] sm:$0xff]
      %v756 = vld [vmem:[%s4 + $0x90] sm:$0xff]
      %v757 = vld [vmem:[%s4 + $0x98] sm:$0xff]
      %v758 = vld [vmem:[%s4 + $0xa0] sm:$0xff]
      %v759 = vld [vmem:[%s4 + $0xa8] sm:$0xff]
      %v760 = vld [vmem:[%s4 + $0xb0] sm:$0xff]
      %v761 = vld [vmem:[%s4 + $0xb8] sm:$0xff]
      %v762 = vld [vmem:[%s4 + $0xc0] sm:$0xff]
      %v763 = vld [vmem:[%s4 + $0xc8] sm:$0xff]
      %v764 = vld [vmem:[%s4 + $0xd0] sm:$0xff]
      %v765 = vld [vmem:[%s4 + $0xd8] sm:$0xff]
      %v766 = vld [vmem:[%s4 + $0xe0] sm:$0xff]
      %v767 = vld [vmem:[%s4 + $0xe8] sm:$0xff]
      %v768 = vld [vmem:[%s4 + $0xf0] sm:$0xff]
      %v769 = vld [vmem:[%s4 + $0xf8] sm:$0xff]
      %v770 = vld [vmem:[%s4 + $0x100] sm:$0xff]
      %v771 = vld [vmem:[%s4 + $0x108] sm:$0xff]
      %v772 = vld [vmem:[%s4 + $0x110] sm:$0xff]
      %v773 = vld [vmem:[%s4 + $0x118] sm:$0xff]
      %v774 = vld [vmem:[%s4 + $0x120] sm:$0xff]
      %v775 = vld [vmem:[%s4 + $0x128] sm:$0xff]
      %v776 = vld [vmem:[%s4 + $0x130] sm:$0xff]
      %v777 = vld [vmem:[%s4 + $0x138] sm:$0xff]
      %v778 = vld [vmem:[%s4 + $0x140] sm:$0xff]
      %v779 = vld [vmem:[%s4 + $0x148] sm:$0xff]
      %v780 = vld [vmem:[%s4 + $0x150] sm:$0xff]
      %v781 = vld [vmem:[%s4 + $0x158] sm:$0xff]
      %v782 = vld [vmem:[%s4 + $0x160] sm:$0xff]
      %v783 = vld [vmem:[%s4 + $0x168] sm:$0xff]
      %v784 = vld [vmem:[%s4 + $0x170] sm:$0xff]
      %v785 = vld [vmem:[%s4 + $0x178] sm:$0xff]
      %v786 = vld [vmem:[%s4 + $0x180] sm:$0xff]
      %v787 = vld [vmem:[%s4 + $0x188] sm:$0xff]
      %v788 = vld [vmem:[%s4 + $0x190] sm:$0xff]
      %v789 = vld [vmem:[%s4 + $0x198] sm:$0xff]
      %v790 = vld [vmem:[%s4 + $0x1a0] sm:$0xff]
      %v791 = vld [vmem:[%s4 + $0x1a8] sm:$0xff]
      %v792 = vld [vmem:[%s4 + $0x1b0] sm:$0xff]
      %v793 = vld [vmem:[%s4 + $0x1b8] sm:$0xff]
      %v794 = vld [vmem:[%s4 + $0x1c0] sm:$0xff]
      %v795 = vld [vmem:[%s4 + $0x1c8] sm:$0xff]
      %v796 = vld [vmem:[%s4 + $0x1d0] sm:$0xff]
      %v797 = vld [vmem:[%s4 + $0x1d8] sm:$0xff]
      %v798 = vld [vmem:[%s4 + $0x1e0] sm:$0xff]
      %v799 = vld [vmem:[%s4 + $0x1e8] sm:$0xff]
      %v800 = vld [vmem:[%s4 + $0x1f0] sm:$0xff]
      %v801 = vld [vmem:[%s4 + $0x1f8] sm:$0xff]
      %v802 = vld [vmem:[%s4 + $0x200] sm:$0xff]
      %v803 = vld [vmem:[%s4 + $0x208] sm:$0xff]
      %v804 = vld [vmem:[%s4 + $0x210] sm:$0xff]
      %v805 = vld [vmem:[%s4 + $0x218] sm:$0xff]
      %v806 = vld [vmem:[%s4 + $0x220] sm:$0xff]
      %v807 = vld [vmem:[%s4 + $0x228] sm:$0xff]
      %v808 = vld [vmem:[%s4 + $0x230] sm:$0xff]
      %v809 = vld [vmem:[%s4 + $0x238] sm:$0xff]
      %v810 = vld [vmem:[%s4 + $0x240] sm:$0xff]
      %v811 = vld [vmem:[%s4 + $0x248] sm:$0xff]
      %v812 = vld [vmem:[%s4 + $0x250] sm:$0xff]
      %v813 = vld [vmem:[%s4 + $0x258] sm:$0xff]
      %v814 = vld [vmem:[%s4 + $0x260] sm:$0xff]
      %v815 = vld [vmem:[%s4 + $0x268] sm:$0xff]
      %v816 = vld [vmem:[%s4 + $0x270] sm:$0xff]
      %v817 = vld [vmem:[%s4 + $0x278] sm:$0xff]
      %v818 = vld [vmem:[%s4 + $0x280] sm:$0xff]
      %v819 = vld [vmem:[%s4 + $0x288] sm:$0xff]
      %v820 = vld [vmem:[%s4 + $0x290] sm:$0xff]
      %v821 = vld [vmem:[%s4 + $0x298] sm:$0xff]
      %v822 = vld [vmem:[%s4 + $0x2a0] sm:$0xff]
      %v823 = vld [vmem:[%s4 + $0x2a8] sm:$0xff]
      %v824 = vld [vmem:[%s4 + $0x2b0] sm:$0xff]
      %v825 = vld [vmem:[%s4 + $0x2b8] sm:$0xff]
      %v826 = vld [vmem:[%s4 + $0x2c0] sm:$0xff]
      %v827 = vld [vmem:[%s4 + $0x2c8] sm:$0xff]
      %v828 = vld [vmem:[%s4 + $0x2d0] sm:$0xff]
      %v829 = vld [vmem:[%s4 + $0x2d8] sm:$0xff]
      %v830 = vld [vmem:[%s4 + $0x2e0] sm:$0xff]
      %v831 = vld [vmem:[%s4 + $0x2e8] sm:$0xff]
      %v832 = vld [vmem:[%s4 + $0x2f0] sm:$0xff]
      %v833 = vld [vmem:[%s4 + $0x2f8] sm:$0xff]
      %v834 = vld [vmem:[%s4 + $0x300] sm:$0xff]
      %v835 = vld [vmem:[%s4 + $0x308] sm:$0xff]
      %v836 = vld [vmem:[%s4 + $0x310] sm:$0xff]
      %v837 = vld [vmem:[%s4 + $0x318] sm:$0xff]
      %v838 = vld [vmem:[%s4 + $0x320] sm:$0xff]
      %v839 = vld [vmem:[%s4 + $0x328] sm:$0xff]
      %v840 = vld [vmem:[%s4 + $0x330] sm:$0xff]
      %v841 = vld [vmem:[%s4 + $0x338] sm:$0xff]
      %v842 = vld [vmem:[%s4 + $0x340] sm:$0xff]
      %v843 = vld [vmem:[%s4 + $0x348] sm:$0xff]
      %v844 = vld [vmem:[%s4 + $0x350] sm:$0xff]
      %v845 = vld [vmem:[%s4 + $0x358] sm:$0xff]
      %v846 = vld [vmem:[%s4 + $0x360] sm:$0xff]
      %v847 = vld [vmem:[%s4 + $0x368] sm:$0xff]
      %v848 = vld [vmem:[%s4 + $0x370] sm:$0xff]
      %v849 = vld [vmem:[%s4 + $0x378] sm:$0xff]
      %v850 = vld [vmem:[%s4 + $0x380] sm:$0xff]
      %v851 = vld [vmem:[%s4 + $0x388] sm:$0xff]
      %v852 = vld [vmem:[%s4 + $0x390] sm:$0xff]
      %v853 = vld [vmem:[%s4 + $0x398] sm:$0xff]
      %v854 = vld [vmem:[%s4 + $0x3a0] sm:$0xff]
      %v855 = vld [vmem:[%s4 + $0x3a8] sm:$0xff]
      %v856 = vld [vmem:[%s4 + $0x3b0] sm:$0xff]
      %v857 = vld [vmem:[%s4 + $0x3b8] sm:$0xff]
      %v858 = vld [vmem:[%s4 + $0x3c0] sm:$0xff]
      %v859 = vld [vmem:[%s4 + $0x3c8] sm:$0xff]
      %v860 = vld [vmem:[%s4 + $0x3d0] sm:$0xff]
      %v861 = vld [vmem:[%s4 + $0x3d8] sm:$0xff]
      %v862 = vld [vmem:[%s4 + $0x3e0] sm:$0xff]
      %v863 = vld [vmem:[%s4 + $0x3e8] sm:$0xff]
      %v864 = vld [vmem:[%s4 + $0x3f0] sm:$0xff]
      %v865 = vld [vmem:[%s4 + $0x3f8] sm:$0xff]
      %v994 = vunpack.c.l.b16 %v738
      %v995 = vunpack.c.h.b16 %v738
      %v996 = vunpack.c.l.b16 %v739
      %v997 = vunpack.c.h.b16 %v739
      %v998 = vunpack.c.l.b16 %v740
      %v999 = vunpack.c.h.b16 %v740
      %v1000 = vunpack.c.l.b16 %v741
      %v1001 = vunpack.c.h.b16 %v741
      %v1002 = vunpack.c.l.b16 %v742
      %v1003 = vunpack.c.h.b16 %v742
      %v1004 = vunpack.c.l.b16 %v743
      %v1005 = vunpack.c.h.b16 %v743
      %v1006 = vunpack.c.l.b16 %v744
      %v1007 = vunpack.c.h.b16 %v744
      %v1008 = vunpack.c.l.b16 %v745
      %v1009 = vunpack.c.h.b16 %v745
      %v1010 = vunpack.c.l.b16 %v746
      %v1011 = vunpack.c.h.b16 %v746
      %v1012 = vunpack.c.l.b16 %v747
      %v1013 = vunpack.c.h.b16 %v747
      %v1014 = vunpack.c.l.b16 %v748
      %v1015 = vunpack.c.h.b16 %v748
      %v1016 = vunpack.c.l.b16 %v749
      %v1017 = vunpack.c.h.b16 %v749
      %v1018 = vunpack.c.l.b16 %v750
      %v1019 = vunpack.c.h.b16 %v750
      %v1020 = vunpack.c.l.b16 %v751
      %v1021 = vunpack.c.h.b16 %v751
      %v1022 = vunpack.c.l.b16 %v752
      %v1023 = vunpack.c.h.b16 %v752
      %v1024 = vunpack.c.l.b16 %v753
      %v1025 = vunpack.c.h.b16 %v753
      %v1026 = vunpack.c.l.b16 %v754
      %v1027 = vunpack.c.h.b16 %v754
      %v1028 = vunpack.c.l.b16 %v755
      %v1029 = vunpack.c.h.b16 %v755
      %v1030 = vunpack.c.l.b16 %v756
      %v1031 = vunpack.c.h.b16 %v756
      %v1032 = vunpack.c.l.b16 %v757
      %v1033 = vunpack.c.h.b16 %v757
      %v1034 = vunpack.c.l.b16 %v758
      %v1035 = vunpack.c.h.b16 %v758
      %v1036 = vunpack.c.l.b16 %v759
      %v1037 = vunpack.c.h.b16 %v759
      %v1038 = vunpack.c.l.b16 %v760
      %v1039 = vunpack.c.h.b16 %v760
      %v1040 = vunpack.c.l.b16 %v761
      %v1041 = vunpack.c.h.b16 %v761
      %v1042 = vunpack.c.l.b16 %v762
      %v1043 = vunpack.c.h.b16 %v762
      %v1044 = vunpack.c.l.b16 %v763
      %v1045 = vunpack.c.h.b16 %v763
      %v1046 = vunpack.c.l.b16 %v764
      %v1047 = vunpack.c.h.b16 %v764
      %v1048 = vunpack.c.l.b16 %v765
      %v1049 = vunpack.c.h.b16 %v765
      %v1050 = vunpack.c.l.b16 %v766
      %v1051 = vunpack.c.h.b16 %v766
      %v1052 = vunpack.c.l.b16 %v767
      %v1053 = vunpack.c.h.b16 %v767
      %v1054 = vunpack.c.l.b16 %v768
      %v1055 = vunpack.c.h.b16 %v768
      %v1056 = vunpack.c.l.b16 %v769
      %v1057 = vunpack.c.h.b16 %v769
      %v1058 = vunpack.c.l.b16 %v770
      %v1059 = vunpack.c.h.b16 %v770
      %v1060 = vunpack.c.l.b16 %v771
      %v1061 = vunpack.c.h.b16 %v771
      %v1062 = vunpack.c.l.b16 %v772
      %v1063 = vunpack.c.h.b16 %v772
      %v1064 = vunpack.c.l.b16 %v773
      %v1065 = vunpack.c.h.b16 %v773
      %v1066 = vunpack.c.l.b16 %v774
      %v1067 = vunpack.c.h.b16 %v774
      %v1068 = vunpack.c.l.b16 %v775
      %v1069 = vunpack.c.h.b16 %v775
      %v1070 = vunpack.c.l.b16 %v776
      %v1071 = vunpack.c.h.b16 %v776
      %v1072 = vunpack.c.l.b16 %v777
      %v1073 = vunpack.c.h.b16 %v777
      %v1074 = vunpack.c.l.b16 %v778
      %v1075 = vunpack.c.h.b16 %v778
      %v1076 = vunpack.c.l.b16 %v779
      %v1077 = vunpack.c.h.b16 %v779
      %v1078 = vunpack.c.l.b16 %v780
      %v1079 = vunpack.c.h.b16 %v780
      %v1080 = vunpack.c.l.b16 %v781
      %v1081 = vunpack.c.h.b16 %v781
      %v1082 = vunpack.c.l.b16 %v782
      %v1083 = vunpack.c.h.b16 %v782
      %v1084 = vunpack.c.l.b16 %v783
      %v1085 = vunpack.c.h.b16 %v783
      %v1086 = vunpack.c.l.b16 %v784
      %v1087 = vunpack.c.h.b16 %v784
      %v1088 = vunpack.c.l.b16 %v785
      %v1089 = vunpack.c.h.b16 %v785
      %v1090 = vunpack.c.l.b16 %v786
      %v1091 = vunpack.c.h.b16 %v786
      %v1092 = vunpack.c.l.b16 %v787
      %v1093 = vunpack.c.h.b16 %v787
      %v1094 = vunpack.c.l.b16 %v788
      %v1095 = vunpack.c.h.b16 %v788
      %v1096 = vunpack.c.l.b16 %v789
      %v1097 = vunpack.c.h.b16 %v789
      %v1098 = vunpack.c.l.b16 %v790
      %v1099 = vunpack.c.h.b16 %v790
      %v1100 = vunpack.c.l.b16 %v791
      %v1101 = vunpack.c.h.b16 %v791
      %v1102 = vunpack.c.l.b16 %v792
      %v1103 = vunpack.c.h.b16 %v792
      %v1104 = vunpack.c.l.b16 %v793
      %v1105 = vunpack.c.h.b16 %v793
      %v1106 = vunpack.c.l.b16 %v794
      %v1107 = vunpack.c.h.b16 %v794
      %v1108 = vunpack.c.l.b16 %v795
      %v1109 = vunpack.c.h.b16 %v795
      %v1110 = vunpack.c.l.b16 %v796
      %v1111 = vunpack.c.h.b16 %v796
      %v1112 = vunpack.c.l.b16 %v797
      %v1113 = vunpack.c.h.b16 %v797
      %v1114 = vunpack.c.l.b16 %v798
      %v1115 = vunpack.c.h.b16 %v798
      %v1116 = vunpack.c.l.b16 %v799
      %v1117 = vunpack.c.h.b16 %v799
      %v1118 = vunpack.c.l.b16 %v800
      %v1119 = vunpack.c.h.b16 %v800
      %v1120 = vunpack.c.l.b16 %v801
      %v1121 = vunpack.c.h.b16 %v801
      %v1122 = vunpack.c.l.b16 %v802
      %v1123 = vunpack.c.h.b16 %v802
      %v1124 = vunpack.c.l.b16 %v803
      %v1125 = vunpack.c.h.b16 %v803
      %v1126 = vunpack.c.l.b16 %v804
      %v1127 = vunpack.c.h.b16 %v804
      %v1128 = vunpack.c.l.b16 %v805
      %v1129 = vunpack.c.h.b16 %v805
      %v1130 = vunpack.c.l.b16 %v806
      %v1131 = vunpack.c.h.b16 %v806
      %v1132 = vunpack.c.l.b16 %v807
      %v1133 = vunpack.c.h.b16 %v807
      %v1134 = vunpack.c.l.b16 %v808
      %v1135 = vunpack.c.h.b16 %v808
      %v1136 = vunpack.c.l.b16 %v809
      %v1137 = vunpack.c.h.b16 %v809
      %v1138 = vunpack.c.l.b16 %v810
      %v1139 = vunpack.c.h.b16 %v810
      %v1140 = vunpack.c.l.b16 %v811
      %v1141 = vunpack.c.h.b16 %v811
      %v1142 = vunpack.c.l.b16 %v812
      %v1143 = vunpack.c.h.b16 %v812
      %v1144 = vunpack.c.l.b16 %v813
      %v1145 = vunpack.c.h.b16 %v813
      %v1146 = vunpack.c.l.b16 %v814
      %v1147 = vunpack.c.h.b16 %v814
      %v1148 = vunpack.c.l.b16 %v815
      %v1149 = vunpack.c.h.b16 %v815
      %v1150 = vunpack.c.l.b16 %v816
      %v1151 = vunpack.c.h.b16 %v816
      %v1152 = vunpack.c.l.b16 %v817
      %v1153 = vunpack.c.h.b16 %v817
      %v1154 = vunpack.c.l.b16 %v818
      %v1155 = vunpack.c.h.b16 %v818
      %v1156 = vunpack.c.l.b16 %v819
      %v1157 = vunpack.c.h.b16 %v819
      %v1158 = vunpack.c.l.b16 %v820
      %v1159 = vunpack.c.h.b16 %v820
      %v1160 = vunpack.c.l.b16 %v821
      %v1161 = vunpack.c.h.b16 %v821
      %v1162 = vunpack.c.l.b16 %v822
      %v1163 = vunpack.c.h.b16 %v822
      %v1164 = vunpack.c.l.b16 %v823
      %v1165 = vunpack.c.h.b16 %v823
      %v1166 = vunpack.c.l.b16 %v824
      %v1167 = vunpack.c.h.b16 %v824
      %v1168 = vunpack.c.l.b16 %v825
      %v1169 = vunpack.c.h.b16 %v825
      %v1170 = vunpack.c.l.b16 %v826
      %v1171 = vunpack.c.h.b16 %v826
      %v1172 = vunpack.c.l.b16 %v827
      %v1173 = vunpack.c.h.b16 %v827
      %v1174 = vunpack.c.l.b16 %v828
      %v1175 = vunpack.c.h.b16 %v828
      %v1176 = vunpack.c.l.b16 %v829
      %v1177 = vunpack.c.h.b16 %v829
      %v1178 = vunpack.c.l.b16 %v830
      %v1179 = vunpack.c.h.b16 %v830
      %v1180 = vunpack.c.l.b16 %v831
      %v1181 = vunpack.c.h.b16 %v831
      %v1182 = vunpack.c.l.b16 %v832
      %v1183 = vunpack.c.h.b16 %v832
      %v1184 = vunpack.c.l.b16 %v833
      %v1185 = vunpack.c.h.b16 %v833
      %v1186 = vunpack.c.l.b16 %v834
      %v1187 = vunpack.c.h.b16 %v834
      %v1188 = vunpack.c.l.b16 %v835
      %v1189 = vunpack.c.h.b16 %v835
      %v1190 = vunpack.c.l.b16 %v836
      %v1191 = vunpack.c.h.b16 %v836
      %v1192 = vunpack.c.l.b16 %v837
      %v1193 = vunpack.c.h.b16 %v837
      %v1194 = vunpack.c.l.b16 %v838
      %v1195 = vunpack.c.h.b16 %v838
      %v1196 = vunpack.c.l.b16 %v839
      %v1197 = vunpack.c.h.b16 %v839
      %v1198 = vunpack.c.l.b16 %v840
      %v1199 = vunpack.c.h.b16 %v840
      %v1200 = vunpack.c.l.b16 %v841
      %v1201 = vunpack.c.h.b16 %v841
      %v1202 = vunpack.c.l.b16 %v842
      %v1203 = vunpack.c.h.b16 %v842
      %v1204 = vunpack.c.l.b16 %v843
      %v1205 = vunpack.c.h.b16 %v843
      %v1206 = vunpack.c.l.b16 %v844
      %v1207 = vunpack.c.h.b16 %v844
      %v1208 = vunpack.c.l.b16 %v845
      %v1209 = vunpack.c.h.b16 %v845
      %v1210 = vunpack.c.l.b16 %v846
      %v1211 = vunpack.c.h.b16 %v846
      %v1212 = vunpack.c.l.b16 %v847
      %v1213 = vunpack.c.h.b16 %v847
      %v1214 = vunpack.c.l.b16 %v848
      %v1215 = vunpack.c.h.b16 %v848
      %v1216 = vunpack.c.l.b16 %v849
      %v1217 = vunpack.c.h.b16 %v849
      %v1218 = vunpack.c.l.b16 %v850
      %v1219 = vunpack.c.h.b16 %v850
      %v1220 = vunpack.c.l.b16 %v851
      %v1221 = vunpack.c.h.b16 %v851
      %v1222 = vunpack.c.l.b16 %v852
      %v1223 = vunpack.c.h.b16 %v852
      %v1224 = vunpack.c.l.b16 %v853
      %v1225 = vunpack.c.h.b16 %v853
      %v1226 = vunpack.c.l.b16 %v854
      %v1227 = vunpack.c.h.b16 %v854
      %v1228 = vunpack.c.l.b16 %v855
      %v1229 = vunpack.c.h.b16 %v855
      %v1230 = vunpack.c.l.b16 %v856
      %v1231 = vunpack.c.h.b16 %v856
      %v1232 = vunpack.c.l.b16 %v857
      %v1233 = vunpack.c.h.b16 %v857
      %v1234 = vunpack.c.l.b16 %v858
      %v1235 = vunpack.c.h.b16 %v858
      %v1236 = vunpack.c.l.b16 %v859
      %v1237 = vunpack.c.h.b16 %v859
      %v1238 = vunpack.c.l.b16 %v860
      %v1239 = vunpack.c.h.b16 %v860
      %v1240 = vunpack.c.l.b16 %v861
      %v1241 = vunpack.c.h.b16 %v861
      %v1242 = vunpack.c.l.b16 %v862
      %v1243 = vunpack.c.h.b16 %v862
      %v1244 = vunpack.c.l.b16 %v863
      %v1245 = vunpack.c.h.b16 %v863
      %v1246 = vunpack.c.l.b16 %v864
      %v1247 = vunpack.c.h.b16 %v864
      %v1248 = vunpack.c.l.b16 %v865
      %v1249 = vunpack.c.h.b16 %v865
      %v1250 = vpack.c.b16 %v998, %v994
      %v1251 = vpack.c.b16 %v999, %v995
      %v1252 = vpack.c.b16 %v1000, %v996
      %v1253 = vpack.c.b16 %v1001, %v997
      %v1254 = vpack.c.b16 %v1006, %v1002
      %v1255 = vpack.c.b16 %v1007, %v1003
      %v1256 = vpack.c.b16 %v1008, %v1004
      %v1257 = vpack.c.b16 %v1009, %v1005
      %v1258 = vpack.c.b16 %v1014, %v1010
      %v1259 = vpack.c.b16 %v1015, %v1011
      %v1260 = vpack.c.b16 %v1016, %v1012
      %v1261 = vpack.c.b16 %v1017, %v1013
      %v1262 = vpack.c.b16 %v1022, %v1018
      %v1263 = vpack.c.b16 %v1023, %v1019
      %v1264 = vpack.c.b16 %v1024, %v1020
      %v1265 = vpack.c.b16 %v1025, %v1021
      %v1266 = vpack.c.b16 %v1030, %v1026
      %v1267 = vpack.c.b16 %v1031, %v1027
      %v1268 = vpack.c.b16 %v1032, %v1028
      %v1269 = vpack.c.b16 %v1033, %v1029
      %v1270 = vpack.c.b16 %v1038, %v1034
      %v1271 = vpack.c.b16 %v1039, %v1035
      %v1272 = vpack.c.b16 %v1040, %v1036
      %v1273 = vpack.c.b16 %v1041, %v1037
      %v1274 = vpack.c.b16 %v1046, %v1042
      %v1275 = vpack.c.b16 %v1047, %v1043
      %v1276 = vpack.c.b16 %v1048, %v1044
      %v1277 = vpack.c.b16 %v1049, %v1045
      %v1278 = vpack.c.b16 %v1054, %v1050
      %v1279 = vpack.c.b16 %v1055, %v1051
      %v1280 = vpack.c.b16 %v1056, %v1052
      %v1281 = vpack.c.b16 %v1057, %v1053
      %v1282 = vpack.c.b16 %v1062, %v1058
      %v1283 = vpack.c.b16 %v1063, %v1059
      %v1284 = vpack.c.b16 %v1064, %v1060
      %v1285 = vpack.c.b16 %v1065, %v1061
      %v1286 = vpack.c.b16 %v1070, %v1066
      %v1287 = vpack.c.b16 %v1071, %v1067
      %v1288 = vpack.c.b16 %v1072, %v1068
      %v1289 = vpack.c.b16 %v1073, %v1069
      %v1290 = vpack.c.b16 %v1078, %v1074
      %v1291 = vpack.c.b16 %v1079, %v1075
      %v1292 = vpack.c.b16 %v1080, %v1076
      %v1293 = vpack.c.b16 %v1081, %v1077
      %v1294 = vpack.c.b16 %v1086, %v1082
      %v1295 = vpack.c.b16 %v1087, %v1083
      %v1296 = vpack.c.b16 %v1088, %v1084
      %v1297 = vpack.c.b16 %v1089, %v1085
      %v1298 = vpack.c.b16 %v1094, %v1090
      %v1299 = vpack.c.b16 %v1095, %v1091
      %v1300 = vpack.c.b16 %v1096, %v1092
      %v1301 = vpack.c.b16 %v1097, %v1093
      %v1302 = vpack.c.b16 %v1102, %v1098
      %v1303 = vpack.c.b16 %v1103, %v1099
      %v1304 = vpack.c.b16 %v1104, %v1100
      %v1305 = vpack.c.b16 %v1105, %v1101
      %v1306 = vpack.c.b16 %v1110, %v1106
      %v1307 = vpack.c.b16 %v1111, %v1107
      %v1308 = vpack.c.b16 %v1112, %v1108
      %v1309 = vpack.c.b16 %v1113, %v1109
      %v1310 = vpack.c.b16 %v1118, %v1114
      %v1311 = vpack.c.b16 %v1119, %v1115
      %v1312 = vpack.c.b16 %v1120, %v1116
      %v1313 = vpack.c.b16 %v1121, %v1117
      %v1314 = vpack.c.b16 %v1126, %v1122
      %v1315 = vpack.c.b16 %v1127, %v1123
      %v1316 = vpack.c.b16 %v1128, %v1124
      %v1317 = vpack.c.b16 %v1129, %v1125
      %v1318 = vpack.c.b16 %v1134, %v1130
      %v1319 = vpack.c.b16 %v1135, %v1131
      %v1320 = vpack.c.b16 %v1136, %v1132
      %v1321 = vpack.c.b16 %v1137, %v1133
      %v1322 = vpack.c.b16 %v1142, %v1138
      %v1323 = vpack.c.b16 %v1143, %v1139
      %v1324 = vpack.c.b16 %v1144, %v1140
      %v1325 = vpack.c.b16 %v1145, %v1141
      %v1326 = vpack.c.b16 %v1150, %v1146
      %v1327 = vpack.c.b16 %v1151, %v1147
      %v1328 = vpack.c.b16 %v1152, %v1148
      %v1329 = vpack.c.b16 %v1153, %v1149
      %v1330 = vpack.c.b16 %v1158, %v1154
      %v1331 = vpack.c.b16 %v1159, %v1155
      %v1332 = vpack.c.b16 %v1160, %v1156
      %v1333 = vpack.c.b16 %v1161, %v1157
      %v1334 = vpack.c.b16 %v1166, %v1162
      %v1335 = vpack.c.b16 %v1167, %v1163
      %v1336 = vpack.c.b16 %v1168, %v1164
      %v1337 = vpack.c.b16 %v1169, %v1165
      %v1338 = vpack.c.b16 %v1174, %v1170
      %v1339 = vpack.c.b16 %v1175, %v1171
      %v1340 = vpack.c.b16 %v1176, %v1172
      %v1341 = vpack.c.b16 %v1177, %v1173
      %v1342 = vpack.c.b16 %v1182, %v1178
      %v1343 = vpack.c.b16 %v1183, %v1179
      %v1344 = vpack.c.b16 %v1184, %v1180
      %v1345 = vpack.c.b16 %v1185, %v1181
      %v1346 = vpack.c.b16 %v1190, %v1186
      %v1347 = vpack.c.b16 %v1191, %v1187
      %v1348 = vpack.c.b16 %v1192, %v1188
      %v1349 = vpack.c.b16 %v1193, %v1189
      %v1350 = vpack.c.b16 %v1198, %v1194
      %v1351 = vpack.c.b16 %v1199, %v1195
      %v1352 = vpack.c.b16 %v1200, %v1196
      %v1353 = vpack.c.b16 %v1201, %v1197
      %v1354 = vpack.c.b16 %v1206, %v1202
      %v1355 = vpack.c.b16 %v1207, %v1203
      %v1356 = vpack.c.b16 %v1208, %v1204
      %v1357 = vpack.c.b16 %v1209, %v1205
      %v1358 = vpack.c.b16 %v1214, %v1210
      %v1359 = vpack.c.b16 %v1215, %v1211
      %v1360 = vpack.c.b16 %v1216, %v1212
      %v1361 = vpack.c.b16 %v1217, %v1213
      %v1362 = vpack.c.b16 %v1222, %v1218
      %v1363 = vpack.c.b16 %v1223, %v1219
      %v1364 = vpack.c.b16 %v1224, %v1220
      %v1365 = vpack.c.b16 %v1225, %v1221
      %v1366 = vpack.c.b16 %v1230, %v1226
      %v1367 = vpack.c.b16 %v1231, %v1227
      %v1368 = vpack.c.b16 %v1232, %v1228
      %v1369 = vpack.c.b16 %v1233, %v1229
      %v1370 = vpack.c.b16 %v1238, %v1234
      %v1371 = vpack.c.b16 %v1239, %v1235
      %v1372 = vpack.c.b16 %v1240, %v1236
      %v1373 = vpack.c.b16 %v1241, %v1237
      %v1374 = vpack.c.b16 %v1246, %v1242
      %v1375 = vpack.c.b16 %v1247, %v1243
      %v1376 = vpack.c.b16 %v1248, %v1244
      %v1377 = vpack.c.b16 %v1249, %v1245
      %1506 = vmatpush.bf16.msra.mxu0 %v1278
      %1507 = vmatpush.bf16.msra.mxu0 %v1274
      %1508 = vmatpush.bf16.msra.mxu0 %v1270
      %1509 = vmatpush.bf16.msra.mxu0 %v1266
      %1510 = vmatpush.bf16.msra.mxu0 %v1262
      %1511 = vmatpush.bf16.msra.mxu0 %v1258
      %1512 = vmatpush.bf16.msra.mxu0 %v1254
      %1513 = vmatpush.bf16.msra.mxu0 %v1250
      %1514 = vmatmul.bf16.gmra.mxu0 %v722
      %v1515 = vpop.f32.mrf.mxu0
      %v1516 = vadd.f32 0.0, %v1515
      %v1517 = vpop.f32.mrf.mxu0
      %v1518 = vadd.f32 0.0, %v1517
      %1519 = vmatmul.bf16.gmra.mxu0 %v726
      %v1520 = vpop.f32.mrf.mxu0
      %v1521 = vadd.f32 0.0, %v1520
      %v1522 = vpop.f32.mrf.mxu0
      %v1523 = vadd.f32 0.0, %v1522
      %1524 = vmatmul.bf16.gmra.mxu0 %v730
      %v1525 = vpop.f32.mrf.mxu0
      %v1526 = vadd.f32 0.0, %v1525
      %v1527 = vpop.f32.mrf.mxu0
      %v1528 = vadd.f32 0.0, %v1527
      %1529 = vmatmul.bf16.gmra.mxu0 %v734
      %v1530 = vpop.f32.mrf.mxu0
      %v1531 = vadd.f32 0.0, %v1530
      %v1532 = vpop.f32.mrf.mxu0
      %v1533 = vadd.f32 0.0, %v1532
      %1534 = vdwg.mxu0
      %1535 = vmatpush.bf16.msra.mxu0 %v1310
      %1536 = vmatpush.bf16.msra.mxu0 %v1306
      %1537 = vmatpush.bf16.msra.mxu0 %v1302
      %1538 = vmatpush.bf16.msra.mxu0 %v1298
      %1539 = vmatpush.bf16.msra.mxu0 %v1294
      %1540 = vmatpush.bf16.msra.mxu0 %v1290
      %1541 = vmatpush.bf16.msra.mxu0 %v1286
      %1542 = vmatpush.bf16.msra.mxu0 %v1282
      %1543 = vmatmul.bf16.gmra.mxu0 %v723
      %v1544 = vpop.f32.mrf.mxu0
      %v1545 = vadd.f32 %v1516, %v1544
      %v1546 = vpop.f32.mrf.mxu0
      %v1547 = vadd.f32 %v1518, %v1546
      %1548 = vmatmul.bf16.gmra.mxu0 %v727
      %v1549 = vpop.f32.mrf.mxu0
      %v1550 = vadd.f32 %v1521, %v1549
      %v1551 = vpop.f32.mrf.mxu0
      %v1552 = vadd.f32 %v1523, %v1551
      %1553 = vmatmul.bf16.gmra.mxu0 %v731
      %v1554 = vpop.f32.mrf.mxu0
      %v1555 = vadd.f32 %v1526, %v1554
      %v1556 = vpop.f32.mrf.mxu0
      %v1557 = vadd.f32 %v1528, %v1556
      %1558 = vmatmul.bf16.gmra.mxu0 %v735
      %v1559 = vpop.f32.mrf.mxu0
      %v1560 = vadd.f32 %v1531, %v1559
      %v1561 = vpop.f32.mrf.mxu0
      %v1562 = vadd.f32 %v1533, %v1561
      %1563 = vdwg.mxu0
      %1564 = vmatpush.bf16.msra.mxu0 %v1342
      %1565 = vmatpush.bf16.msra.mxu0 %v1338
      %1566 = vmatpush.bf16.msra.mxu0 %v1334
      %1567 = vmatpush.bf16.msra.mxu0 %v1330
      %1568 = vmatpush.bf16.msra.mxu0 %v1326
      %1569 = vmatpush.bf16.msra.mxu0 %v1322
      %1570 = vmatpush.bf16.msra.mxu0 %v1318
      %1571 = vmatpush.bf16.msra.mxu0 %v1314
      %1572 = vmatmul.bf16.gmra.mxu0 %v724
      %v1573 = vpop.f32.mrf.mxu0
      %v1574 = vadd.f32 %v1545, %v1573
      %v1575 = vpop.f32.mrf.mxu0
      %v1576 = vadd.f32 %v1547, %v1575
      %1577 = vmatmul.bf16.gmra.mxu0 %v728
      %v1578 = vpop.f32.mrf.mxu0
      %v1579 = vadd.f32 %v1550, %v1578
      %v1580 = vpop.f32.mrf.mxu0
      %v1581 = vadd.f32 %v1552, %v1580
      %1582 = vmatmul.bf16.gmra.mxu0 %v732
      %v1583 = vpop.f32.mrf.mxu0
      %v1584 = vadd.f32 %v1555, %v1583
      %v1585 = vpop.f32.mrf.mxu0
      %v1586 = vadd.f32 %v1557, %v1585
      %1587 = vmatmul.bf16.gmra.mxu0 %v736
      %v1588 = vpop.f32.mrf.mxu0
      %v1589 = vadd.f32 %v1560, %v1588
      %v1590 = vpop.f32.mrf.mxu0
      %v1591 = vadd.f32 %v1562, %v1590
      %1592 = vdwg.mxu0
      %1593 = vmatpush.bf16.msra.mxu0 %v1374
      %1594 = vmatpush.bf16.msra.mxu0 %v1370
      %1595 = vmatpush.bf16.msra.mxu0 %v1366
      %1596 = vmatpush.bf16.msra.mxu0 %v1362
      %1597 = vmatpush.bf16.msra.mxu0 %v1358
      %1598 = vmatpush.bf16.msra.mxu0 %v1354
      %1599 = vmatpush.bf16.msra.mxu0 %v1350
      %1600 = vmatpush.bf16.msra.mxu0 %v1346
      %1601 = vmatmul.bf16.gmra.mxu0 %v725
      %v1602 = vpop.f32.mrf.mxu0
      %v1603 = vadd.f32 %v1574, %v1602
      %v1604 = vpop.f32.mrf.mxu0
      %v1605 = vadd.f32 %v1576, %v1604
      %1606 = vmatmul.bf16.gmra.mxu0 %v729
      %v1607 = vpop.f32.mrf.mxu0
      %v1608 = vadd.f32 %v1579, %v1607
      %v1609 = vpop.f32.mrf.mxu0
      %v1610 = vadd.f32 %v1581, %v1609
      %1611 = vmatmul.bf16.gmra.mxu0 %v733
      %v1612 = vpop.f32.mrf.mxu0
      %v1613 = vadd.f32 %v1584, %v1612
      %v1614 = vpop.f32.mrf.mxu0
      %v1615 = vadd.f32 %v1586, %v1614
      %1616 = vmatmul.bf16.gmra.mxu0 %v737
      %v1617 = vpop.f32.mrf.mxu0
      %v1618 = vadd.f32 %v1589, %v1617
      %v1619 = vpop.f32.mrf.mxu0
      %v1620 = vadd.f32 %v1591, %v1619
      %1621 = vdwg.mxu0
      %1622 = vmatpush.bf16.msra.mxu0 %v1279
      %1623 = vmatpush.bf16.msra.mxu0 %v1275
      %1624 = vmatpush.bf16.msra.mxu0 %v1271
      %1625 = vmatpush.bf16.msra.mxu0 %v1267
      %1626 = vmatpush.bf16.msra.mxu0 %v1263
      %1627 = vmatpush.bf16.msra.mxu0 %v1259
      %1628 = vmatpush.bf16.msra.mxu0 %v1255
      %1629 = vmatpush.bf16.msra.mxu0 %v1251
      %1630 = vmatmul.bf16.gmra.mxu0 %v722
      %v1631 = vpop.f32.mrf.mxu0
      %v1632 = vadd.f32 0.0, %v1631
      %v1633 = vpop.f32.mrf.mxu0
      %v1634 = vadd.f32 0.0, %v1633
      %1635 = vmatmul.bf16.gmra.mxu0 %v726
      %v1636 = vpop.f32.mrf.mxu0
      %v1637 = vadd.f32 0.0, %v1636
      %v1638 = vpop.f32.mrf.mxu0
      %v1639 = vadd.f32 0.0, %v1638
      %1640 = vmatmul.bf16.gmra.mxu0 %v730
      %v1641 = vpop.f32.mrf.mxu0
      %v1642 = vadd.f32 0.0, %v1641
      %v1643 = vpop.f32.mrf.mxu0
      %v1644 = vadd.f32 0.0, %v1643
      %1645 = vmatmul.bf16.gmra.mxu0 %v734
      %v1646 = vpop.f32.mrf.mxu0
      %v1647 = vadd.f32 0.0, %v1646
      %v1648 = vpop.f32.mrf.mxu0
      %v1649 = vadd.f32 0.0, %v1648
      %1650 = vdwg.mxu0
      %1651 = vmatpush.bf16.msra.mxu0 %v1311
      %1652 = vmatpush.bf16.msra.mxu0 %v1307
      %1653 = vmatpush.bf16.msra.mxu0 %v1303
      %1654 = vmatpush.bf16.msra.mxu0 %v1299
      %1655 = vmatpush.bf16.msra.mxu0 %v1295
      %1656 = vmatpush.bf16.msra.mxu0 %v1291
      %1657 = vmatpush.bf16.msra.mxu0 %v1287
      %1658 = vmatpush.bf16.msra.mxu0 %v1283
      %1659 = vmatmul.bf16.gmra.mxu0 %v723
      %v1660 = vpop.f32.mrf.mxu0
      %v1661 = vadd.f32 %v1632, %v1660
      %v1662 = vpop.f32.mrf.mxu0
      %v1663 = vadd.f32 %v1634, %v1662
      %1664 = vmatmul.bf16.gmra.mxu0 %v727
      %v1665 = vpop.f32.mrf.mxu0
      %v1666 = vadd.f32 %v1637, %v1665
      %v1667 = vpop.f32.mrf.mxu0
      %v1668 = vadd.f32 %v1639, %v1667
      %1669 = vmatmul.bf16.gmra.mxu0 %v731
      %v1670 = vpop.f32.mrf.mxu0
      %v1671 = vadd.f32 %v1642, %v1670
      %v1672 = vpop.f32.mrf.mxu0
      %v1673 = vadd.f32 %v1644, %v1672
      %1674 = vmatmul.bf16.gmra.mxu0 %v735
      %v1675 = vpop.f32.mrf.mxu0
      %v1676 = vadd.f32 %v1647, %v1675
      %v1677 = vpop.f32.mrf.mxu0
      %v1678 = vadd.f32 %v1649, %v1677
      %1679 = vdwg.mxu0
      %1680 = vmatpush.bf16.msra.mxu0 %v1343
      %1681 = vmatpush.bf16.msra.mxu0 %v1339
      %1682 = vmatpush.bf16.msra.mxu0 %v1335
      %1683 = vmatpush.bf16.msra.mxu0 %v1331
      %1684 = vmatpush.bf16.msra.mxu0 %v1327
      %1685 = vmatpush.bf16.msra.mxu0 %v1323
      %1686 = vmatpush.bf16.msra.mxu0 %v1319
      %1687 = vmatpush.bf16.msra.mxu0 %v1315
      %1688 = vmatmul.bf16.gmra.mxu0 %v724
      %v1689 = vpop.f32.mrf.mxu0
      %v1690 = vadd.f32 %v1661, %v1689
      %v1691 = vpop.f32.mrf.mxu0
      %v1692 = vadd.f32 %v1663, %v1691
      %1693 = vmatmul.bf16.gmra.mxu0 %v728
      %v1694 = vpop.f32.mrf.mxu0
      %v1695 = vadd.f32 %v1666, %v1694
      %v1696 = vpop.f32.mrf.mxu0
      %v1697 = vadd.f32 %v1668, %v1696
      %1698 = vmatmul.bf16.gmra.mxu0 %v732
      %v1699 = vpop.f32.mrf.mxu0
      %v1700 = vadd.f32 %v1671, %v1699
      %v1701 = vpop.f32.mrf.mxu0
      %v1702 = vadd.f32 %v1673, %v1701
      %1703 = vmatmul.bf16.gmra.mxu0 %v736
      %v1704 = vpop.f32.mrf.mxu0
      %v1705 = vadd.f32 %v1676, %v1704
      %v1706 = vpop.f32.mrf.mxu0
      %v1707 = vadd.f32 %v1678, %v1706
      %1708 = vdwg.mxu0
      %1709 = vmatpush.bf16.msra.mxu0 %v1375
      %1710 = vmatpush.bf16.msra.mxu0 %v1371
      %1711 = vmatpush.bf16.msra.mxu0 %v1367
      %1712 = vmatpush.bf16.msra.mxu0 %v1363
      %1713 = vmatpush.bf16.msra.mxu0 %v1359
      %1714 = vmatpush.bf16.msra.mxu0 %v1355
      %1715 = vmatpush.bf16.msra.mxu0 %v1351
      %1716 = vmatpush.bf16.msra.mxu0 %v1347
      %1717 = vmatmul.bf16.gmra.mxu0 %v725
      %v1718 = vpop.f32.mrf.mxu0
      %v1719 = vadd.f32 %v1690, %v1718
      %v1720 = vpop.f32.mrf.mxu0
      %v1721 = vadd.f32 %v1692, %v1720
      %1722 = vmatmul.bf16.gmra.mxu0 %v729
      %v1723 = vpop.f32.mrf.mxu0
      %v1724 = vadd.f32 %v1695, %v1723
      %v1725 = vpop.f32.mrf.mxu0
      %v1726 = vadd.f32 %v1697, %v1725
      %1727 = vmatmul.bf16.gmra.mxu0 %v733
      %v1728 = vpop.f32.mrf.mxu0
      %v1729 = vadd.f32 %v1700, %v1728
      %v1730 = vpop.f32.mrf.mxu0
      %v1731 = vadd.f32 %v1702, %v1730
      %1732 = vmatmul.bf16.gmra.mxu0 %v737
      %v1733 = vpop.f32.mrf.mxu0
      %v1734 = vadd.f32 %v1705, %v1733
      %v1735 = vpop.f32.mrf.mxu0
      %v1736 = vadd.f32 %v1707, %v1735
      %1737 = vdwg.mxu0
      %1738 = vmatpush.bf16.msra.mxu0 %v1280
      %1739 = vmatpush.bf16.msra.mxu0 %v1276
      %1740 = vmatpush.bf16.msra.mxu0 %v1272
      %1741 = vmatpush.bf16.msra.mxu0 %v1268
      %1742 = vmatpush.bf16.msra.mxu0 %v1264
      %1743 = vmatpush.bf16.msra.mxu0 %v1260
      %1744 = vmatpush.bf16.msra.mxu0 %v1256
      %1745 = vmatpush.bf16.msra.mxu0 %v1252
      %1746 = vmatmul.bf16.gmra.mxu0 %v722
      %v1747 = vpop.f32.mrf.mxu0
      %v1748 = vadd.f32 0.0, %v1747
      %v1749 = vpop.f32.mrf.mxu0
      %v1750 = vadd.f32 0.0, %v1749
      %1751 = vmatmul.bf16.gmra.mxu0 %v726
      %v1752 = vpop.f32.mrf.mxu0
      %v1753 = vadd.f32 0.0, %v1752
      %v1754 = vpop.f32.mrf.mxu0
      %v1755 = vadd.f32 0.0, %v1754
      %1756 = vmatmul.bf16.gmra.mxu0 %v730
      %v1757 = vpop.f32.mrf.mxu0
      %v1758 = vadd.f32 0.0, %v1757
      %v1759 = vpop.f32.mrf.mxu0
      %v1760 = vadd.f32 0.0, %v1759
      %1761 = vmatmul.bf16.gmra.mxu0 %v734
      %v1762 = vpop.f32.mrf.mxu0
      %v1763 = vadd.f32 0.0, %v1762
      %v1764 = vpop.f32.mrf.mxu0
      %v1765 = vadd.f32 0.0, %v1764
      %1766 = vdwg.mxu0
      %1767 = vmatpush.bf16.msra.mxu0 %v1312
      %1768 = vmatpush.bf16.msra.mxu0 %v1308
      %1769 = vmatpush.bf16.msra.mxu0 %v1304
      %1770 = vmatpush.bf16.msra.mxu0 %v1300
      %1771 = vmatpush.bf16.msra.mxu0 %v1296
      %1772 = vmatpush.bf16.msra.mxu0 %v1292
      %1773 = vmatpush.bf16.msra.mxu0 %v1288
      %1774 = vmatpush.bf16.msra.mxu0 %v1284
      %1775 = vmatmul.bf16.gmra.mxu0 %v723
      %v1776 = vpop.f32.mrf.mxu0
      %v1777 = vadd.f32 %v1748, %v1776
      %v1778 = vpop.f32.mrf.mxu0
      %v1779 = vadd.f32 %v1750, %v1778
      %1780 = vmatmul.bf16.gmra.mxu0 %v727
      %v1781 = vpop.f32.mrf.mxu0
      %v1782 = vadd.f32 %v1753, %v1781
      %v1783 = vpop.f32.mrf.mxu0
      %v1784 = vadd.f32 %v1755, %v1783
      %1785 = vmatmul.bf16.gmra.mxu0 %v731
      %v1786 = vpop.f32.mrf.mxu0
      %v1787 = vadd.f32 %v1758, %v1786
      %v1788 = vpop.f32.mrf.mxu0
      %v1789 = vadd.f32 %v1760, %v1788
      %1790 = vmatmul.bf16.gmra.mxu0 %v735
      %v1791 = vpop.f32.mrf.mxu0
      %v1792 = vadd.f32 %v1763, %v1791
      %v1793 = vpop.f32.mrf.mxu0
      %v1794 = vadd.f32 %v1765, %v1793
      %1795 = vdwg.mxu0
      %1796 = vmatpush.bf16.msra.mxu0 %v1344
      %1797 = vmatpush.bf16.msra.mxu0 %v1340
      %1798 = vmatpush.bf16.msra.mxu0 %v1336
      %1799 = vmatpush.bf16.msra.mxu0 %v1332
      %1800 = vmatpush.bf16.msra.mxu0 %v1328
      %1801 = vmatpush.bf16.msra.mxu0 %v1324
      %1802 = vmatpush.bf16.msra.mxu0 %v1320
      %1803 = vmatpush.bf16.msra.mxu0 %v1316
      %1804 = vmatmul.bf16.gmra.mxu0 %v724
      %v1805 = vpop.f32.mrf.mxu0
      %v1806 = vadd.f32 %v1777, %v1805
      %v1807 = vpop.f32.mrf.mxu0
      %v1808 = vadd.f32 %v1779, %v1807
      %1809 = vmatmul.bf16.gmra.mxu0 %v728
      %v1810 = vpop.f32.mrf.mxu0
      %v1811 = vadd.f32 %v1782, %v1810
      %v1812 = vpop.f32.mrf.mxu0
      %v1813 = vadd.f32 %v1784, %v1812
      %1814 = vmatmul.bf16.gmra.mxu0 %v732
      %v1815 = vpop.f32.mrf.mxu0
      %v1816 = vadd.f32 %v1787, %v1815
      %v1817 = vpop.f32.mrf.mxu0
      %v1818 = vadd.f32 %v1789, %v1817
      %1819 = vmatmul.bf16.gmra.mxu0 %v736
      %v1820 = vpop.f32.mrf.mxu0
      %v1821 = vadd.f32 %v1792, %v1820
      %v1822 = vpop.f32.mrf.mxu0
      %v1823 = vadd.f32 %v1794, %v1822
      %1824 = vdwg.mxu0
      %1825 = vmatpush.bf16.msra.mxu0 %v1376
      %1826 = vmatpush.bf16.msra.mxu0 %v1372
      %1827 = vmatpush.bf16.msra.mxu0 %v1368
      %1828 = vmatpush.bf16.msra.mxu0 %v1364
      %1829 = vmatpush.bf16.msra.mxu0 %v1360
      %1830 = vmatpush.bf16.msra.mxu0 %v1356
      %1831 = vmatpush.bf16.msra.mxu0 %v1352
      %1832 = vmatpush.bf16.msra.mxu0 %v1348
      %1833 = vmatmul.bf16.gmra.mxu0 %v725
      %v1834 = vpop.f32.mrf.mxu0
      %v1835 = vadd.f32 %v1806, %v1834
      %v1836 = vpop.f32.mrf.mxu0
      %v1837 = vadd.f32 %v1808, %v1836
      %1838 = vmatmul.bf16.gmra.mxu0 %v729
      %v1839 = vpop.f32.mrf.mxu0
      %v1840 = vadd.f32 %v1811, %v1839
      %v1841 = vpop.f32.mrf.mxu0
      %v1842 = vadd.f32 %v1813, %v1841
      %1843 = vmatmul.bf16.gmra.mxu0 %v733
      %v1844 = vpop.f32.mrf.mxu0
      %v1845 = vadd.f32 %v1816, %v1844
      %v1846 = vpop.f32.mrf.mxu0
      %v1847 = vadd.f32 %v1818, %v1846
      %1848 = vmatmul.bf16.gmra.mxu0 %v737
      %v1849 = vpop.f32.mrf.mxu0
      %v1850 = vadd.f32 %v1821, %v1849
      %v1851 = vpop.f32.mrf.mxu0
      %v1852 = vadd.f32 %v1823, %v1851
      %1853 = vdwg.mxu0
      %1854 = vmatpush.bf16.msra.mxu0 %v1281
      %1855 = vmatpush.bf16.msra.mxu0 %v1277
      %1856 = vmatpush.bf16.msra.mxu0 %v1273
      %1857 = vmatpush.bf16.msra.mxu0 %v1269
      %1858 = vmatpush.bf16.msra.mxu0 %v1265
      %1859 = vmatpush.bf16.msra.mxu0 %v1261
      %1860 = vmatpush.bf16.msra.mxu0 %v1257
      %1861 = vmatpush.bf16.msra.mxu0 %v1253
      %1862 = vmatmul.bf16.gmra.mxu0 %v722
      %v1863 = vpop.f32.mrf.mxu0
      %v1864 = vadd.f32 0.0, %v1863
      %v1865 = vpop.f32.mrf.mxu0
      %v1866 = vadd.f32 0.0, %v1865
      %1867 = vmatmul.bf16.gmra.mxu0 %v726
      %v1868 = vpop.f32.mrf.mxu0
      %v1869 = vadd.f32 0.0, %v1868
      %v1870 = vpop.f32.mrf.mxu0
      %v1871 = vadd.f32 0.0, %v1870
      %1872 = vmatmul.bf16.gmra.mxu0 %v730
      %v1873 = vpop.f32.mrf.mxu0
      %v1874 = vadd.f32 0.0, %v1873
      %v1875 = vpop.f32.mrf.mxu0
      %v1876 = vadd.f32 0.0, %v1875
      %1877 = vmatmul.bf16.gmra.mxu0 %v734
      %v1878 = vpop.f32.mrf.mxu0
      %v1879 = vadd.f32 0.0, %v1878
      %v1880 = vpop.f32.mrf.mxu0
      %v1881 = vadd.f32 0.0, %v1880
      %1882 = vdwg.mxu0
      %1883 = vmatpush.bf16.msra.mxu0 %v1313
      %1884 = vmatpush.bf16.msra.mxu0 %v1309
      %1885 = vmatpush.bf16.msra.mxu0 %v1305
      %1886 = vmatpush.bf16.msra.mxu0 %v1301
      %1887 = vmatpush.bf16.msra.mxu0 %v1297
      %1888 = vmatpush.bf16.msra.mxu0 %v1293
      %1889 = vmatpush.bf16.msra.mxu0 %v1289
      %1890 = vmatpush.bf16.msra.mxu0 %v1285
      %1891 = vmatmul.bf16.gmra.mxu0 %v723
      %v1892 = vpop.f32.mrf.mxu0
      %v1893 = vadd.f32 %v1864, %v1892
      %v1894 = vpop.f32.mrf.mxu0
      %v1895 = vadd.f32 %v1866, %v1894
      %1896 = vmatmul.bf16.gmra.mxu0 %v727
      %v1897 = vpop.f32.mrf.mxu0
      %v1898 = vadd.f32 %v1869, %v1897
      %v1899 = vpop.f32.mrf.mxu0
      %v1900 = vadd.f32 %v1871, %v1899
      %1901 = vmatmul.bf16.gmra.mxu0 %v731
      %v1902 = vpop.f32.mrf.mxu0
      %v1903 = vadd.f32 %v1874, %v1902
      %v1904 = vpop.f32.mrf.mxu0
      %v1905 = vadd.f32 %v1876, %v1904
      %1906 = vmatmul.bf16.gmra.mxu0 %v735
      %v1907 = vpop.f32.mrf.mxu0
      %v1908 = vadd.f32 %v1879, %v1907
      %v1909 = vpop.f32.mrf.mxu0
      %v1910 = vadd.f32 %v1881, %v1909
      %1911 = vdwg.mxu0
      %1912 = vmatpush.bf16.msra.mxu0 %v1345
      %1913 = vmatpush.bf16.msra.mxu0 %v1341
      %1914 = vmatpush.bf16.msra.mxu0 %v1337
      %1915 = vmatpush.bf16.msra.mxu0 %v1333
      %1916 = vmatpush.bf16.msra.mxu0 %v1329
      %1917 = vmatpush.bf16.msra.mxu0 %v1325
      %1918 = vmatpush.bf16.msra.mxu0 %v1321
      %1919 = vmatpush.bf16.msra.mxu0 %v1317
      %1920 = vmatmul.bf16.gmra.mxu0 %v724
      %v1921 = vpop.f32.mrf.mxu0
      %v1922 = vadd.f32 %v1893, %v1921
      %v1923 = vpop.f32.mrf.mxu0
      %v1924 = vadd.f32 %v1895, %v1923
      %1925 = vmatmul.bf16.gmra.mxu0 %v728
      %v1926 = vpop.f32.mrf.mxu0
      %v1927 = vadd.f32 %v1898, %v1926
      %v1928 = vpop.f32.mrf.mxu0
      %v1929 = vadd.f32 %v1900, %v1928
      %1930 = vmatmul.bf16.gmra.mxu0 %v732
      %v1931 = vpop.f32.mrf.mxu0
      %v1932 = vadd.f32 %v1903, %v1931
      %v1933 = vpop.f32.mrf.mxu0
      %v1934 = vadd.f32 %v1905, %v1933
      %1935 = vmatmul.bf16.gmra.mxu0 %v736
      %v1936 = vpop.f32.mrf.mxu0
      %v1937 = vadd.f32 %v1908, %v1936
      %v1938 = vpop.f32.mrf.mxu0
      %v1939 = vadd.f32 %v1910, %v1938
      %1940 = vdwg.mxu0
      %1941 = vmatpush.bf16.msra.mxu0 %v1377
      %1942 = vmatpush.bf16.msra.mxu0 %v1373
      %1943 = vmatpush.bf16.msra.mxu0 %v1369
      %1944 = vmatpush.bf16.msra.mxu0 %v1365
      %1945 = vmatpush.bf16.msra.mxu0 %v1361
      %1946 = vmatpush.bf16.msra.mxu0 %v1357
      %1947 = vmatpush.bf16.msra.mxu0 %v1353
      %1948 = vmatpush.bf16.msra.mxu0 %v1349
      %1949 = vmatmul.bf16.gmra.mxu0 %v725
      %v1950 = vpop.f32.mrf.mxu0
      %v1951 = vadd.f32 %v1922, %v1950
      %v1952 = vpop.f32.mrf.mxu0
      %v1953 = vadd.f32 %v1924, %v1952
      %1954 = vmatmul.bf16.gmra.mxu0 %v729
      %v1955 = vpop.f32.mrf.mxu0
      %v1956 = vadd.f32 %v1927, %v1955
      %v1957 = vpop.f32.mrf.mxu0
      %v1958 = vadd.f32 %v1929, %v1957
      %1959 = vmatmul.bf16.gmra.mxu0 %v733
      %v1960 = vpop.f32.mrf.mxu0
      %v1961 = vadd.f32 %v1932, %v1960
      %v1962 = vpop.f32.mrf.mxu0
      %v1963 = vadd.f32 %v1934, %v1962
      %1964 = vmatmul.bf16.gmra.mxu0 %v737
      %v1965 = vpop.f32.mrf.mxu0
      %v1966 = vadd.f32 %v1937, %v1965
      %v1967 = vpop.f32.mrf.mxu0
      %v1968 = vadd.f32 %v1939, %v1967
      %1969 = vdwg.mxu0
      %v1970 = vld [vmem:[%s5] sm:$0xf]
      %v1972 = vperm.slane %v1970, 0
      %v1973 = vperm.slane %v1970, 1
      %v1974 = vperm.slane %v1970, 2
      %v1975 = vperm.slane %v1970, 3
      %v1980 = vmul.f32 %v1603, %v1972
      %v1981 = vmul.f32 %v1719, %v1973
      %v1982 = vmul.f32 %v1835, %v1974
      %v1983 = vmul.f32 %v1951, %v1975
      %v1984 = vmul.f32 %v1605, %v1972
      %v1985 = vmul.f32 %v1721, %v1973
      %v1986 = vmul.f32 %v1837, %v1974
      %v1987 = vmul.f32 %v1953, %v1975
      %v1988 = vmul.f32 %v1608, %v1972
      %v1989 = vmul.f32 %v1724, %v1973
      %v1990 = vmul.f32 %v1840, %v1974
      %v1991 = vmul.f32 %v1956, %v1975
      %v1992 = vmul.f32 %v1610, %v1972
      %v1993 = vmul.f32 %v1726, %v1973
      %v1994 = vmul.f32 %v1842, %v1974
      %v1995 = vmul.f32 %v1958, %v1975
      %v1996 = vmul.f32 %v1613, %v1972
      %v1997 = vmul.f32 %v1729, %v1973
      %v1998 = vmul.f32 %v1845, %v1974
      %v1999 = vmul.f32 %v1961, %v1975
      %v2000 = vmul.f32 %v1615, %v1972
      %v2001 = vmul.f32 %v1731, %v1973
      %v2002 = vmul.f32 %v1847, %v1974
      %v2003 = vmul.f32 %v1963, %v1975
      %v2004 = vmul.f32 %v1618, %v1972
      %v2005 = vmul.f32 %v1734, %v1973
      %v2006 = vmul.f32 %v1850, %v1974
      %v2007 = vmul.f32 %v1966, %v1975
      %v2008 = vmul.f32 %v1620, %v1972
      %v2009 = vmul.f32 %v1736, %v1973
      %v2010 = vmul.f32 %v1852, %v1974
      %v2011 = vmul.f32 %v1968, %v1975
      %v2012 = vld [vmem:[%s6] sm:$0xf]
      %v2014 = vperm.slane %v2012, 0
      %v2015 = vperm.slane %v2012, 1
      %v2016 = vperm.slane %v2012, 2
      %v2017 = vperm.slane %v2012, 3
      %v2022 = vadd.f32 %v1980, %v2014
      %v2023 = vadd.f32 %v1981, %v2015
      %v2024 = vadd.f32 %v1982, %v2016
      %v2025 = vadd.f32 %v1983, %v2017
      %v2026 = vadd.f32 %v1984, %v2014
      %v2027 = vadd.f32 %v1985, %v2015
      %v2028 = vadd.f32 %v1986, %v2016
      %v2029 = vadd.f32 %v1987, %v2017
      %v2030 = vadd.f32 %v1988, %v2014
      %v2031 = vadd.f32 %v1989, %v2015
      %v2032 = vadd.f32 %v1990, %v2016
      %v2033 = vadd.f32 %v1991, %v2017
      %v2034 = vadd.f32 %v1992, %v2014
      %v2035 = vadd.f32 %v1993, %v2015
      %v2036 = vadd.f32 %v1994, %v2016
      %v2037 = vadd.f32 %v1995, %v2017
      %v2038 = vadd.f32 %v1996, %v2014
      %v2039 = vadd.f32 %v1997, %v2015
      %v2040 = vadd.f32 %v1998, %v2016
      %v2041 = vadd.f32 %v1999, %v2017
      %v2042 = vadd.f32 %v2000, %v2014
      %v2043 = vadd.f32 %v2001, %v2015
      %v2044 = vadd.f32 %v2002, %v2016
      %v2045 = vadd.f32 %v2003, %v2017
      %v2046 = vadd.f32 %v2004, %v2014
      %v2047 = vadd.f32 %v2005, %v2015
      %v2048 = vadd.f32 %v2006, %v2016
      %v2049 = vadd.f32 %v2007, %v2017
      %v2050 = vadd.f32 %v2008, %v2014
      %v2051 = vadd.f32 %v2009, %v2015
      %v2052 = vadd.f32 %v2010, %v2016
      %v2053 = vadd.f32 %v2011, %v2017
      %v2054 = vmul.f32 %v2022, 0.01
      %v2055 = vmul.f32 %v2023, 0.01
      %v2056 = vmul.f32 %v2024, 0.01
      %v2057 = vmul.f32 %v2025, 0.01
      %v2058 = vmul.f32 %v2026, 0.01
      %v2059 = vmul.f32 %v2027, 0.01
      %v2060 = vmul.f32 %v2028, 0.01
      %v2061 = vmul.f32 %v2029, 0.01
      %v2062 = vmul.f32 %v2030, 0.01
      %v2063 = vmul.f32 %v2031, 0.01
      %v2064 = vmul.f32 %v2032, 0.01
      %v2065 = vmul.f32 %v2033, 0.01
      %v2066 = vmul.f32 %v2034, 0.01
      %v2067 = vmul.f32 %v2035, 0.01
      %v2068 = vmul.f32 %v2036, 0.01
      %v2069 = vmul.f32 %v2037, 0.01
      %v2070 = vmul.f32 %v2038, 0.01
      %v2071 = vmul.f32 %v2039, 0.01
      %v2072 = vmul.f32 %v2040, 0.01
      %v2073 = vmul.f32 %v2041, 0.01
      %v2074 = vmul.f32 %v2042, 0.01
      %v2075 = vmul.f32 %v2043, 0.01
      %v2076 = vmul.f32 %v2044, 0.01
      %v2077 = vmul.f32 %v2045, 0.01
      %v2078 = vmul.f32 %v2046, 0.01
      %v2079 = vmul.f32 %v2047, 0.01
      %v2080 = vmul.f32 %v2048, 0.01
      %v2081 = vmul.f32 %v2049, 0.01
      %v2082 = vmul.f32 %v2050, 0.01
      %v2083 = vmul.f32 %v2051, 0.01
      %v2084 = vmul.f32 %v2052, 0.01
      %v2085 = vmul.f32 %v2053, 0.01
      %v2086 = vmax.f32 %v2022, %v2054
      %v2087 = vmax.f32 %v2023, %v2055
      %v2088 = vmax.f32 %v2024, %v2056
      %v2089 = vmax.f32 %v2025, %v2057
      %v2090 = vmax.f32 %v2026, %v2058
      %v2091 = vmax.f32 %v2027, %v2059
      %v2092 = vmax.f32 %v2028, %v2060
      %v2093 = vmax.f32 %v2029, %v2061
      %v2094 = vmax.f32 %v2030, %v2062
      %v2095 = vmax.f32 %v2031, %v2063
      %v2096 = vmax.f32 %v2032, %v2064
      %v2097 = vmax.f32 %v2033, %v2065
      %v2098 = vmax.f32 %v2034, %v2066
      %v2099 = vmax.f32 %v2035, %v2067
      %v2100 = vmax.f32 %v2036, %v2068
      %v2101 = vmax.f32 %v2037, %v2069
      %v2102 = vmax.f32 %v2038, %v2070
      %v2103 = vmax.f32 %v2039, %v2071
      %v2104 = vmax.f32 %v2040, %v2072
      %v2105 = vmax.f32 %v2041, %v2073
      %v2106 = vmax.f32 %v2042, %v2074
      %v2107 = vmax.f32 %v2043, %v2075
      %v2108 = vmax.f32 %v2044, %v2076
      %v2109 = vmax.f32 %v2045, %v2077
      %v2110 = vmax.f32 %v2046, %v2078
      %v2111 = vmax.f32 %v2047, %v2079
      %v2112 = vmax.f32 %v2048, %v2080
      %v2113 = vmax.f32 %v2049, %v2081
      %v2114 = vmax.f32 %v2050, %v2082
      %v2115 = vmax.f32 %v2051, %v2083
      %v2116 = vmax.f32 %v2052, %v2084
      %v2117 = vmax.f32 %v2053, %v2085
      %v2118 = vpack.c.bf16 %v2090, %v2086
      %v2119 = vpack.c.bf16 %v2091, %v2087
      %v2120 = vpack.c.bf16 %v2092, %v2088
      %v2121 = vpack.c.bf16 %v2093, %v2089
      %v2122 = vpack.c.bf16 %v2098, %v2094
      %v2123 = vpack.c.bf16 %v2099, %v2095
      %v2124 = vpack.c.bf16 %v2100, %v2096
      %v2125 = vpack.c.bf16 %v2101, %v2097
      %v2126 = vpack.c.bf16 %v2106, %v2102
      %v2127 = vpack.c.bf16 %v2107, %v2103
      %v2128 = vpack.c.bf16 %v2108, %v2104
      %v2129 = vpack.c.bf16 %v2109, %v2105
      %v2130 = vpack.c.bf16 %v2114, %v2110
      %v2131 = vpack.c.bf16 %v2115, %v2111
      %v2132 = vpack.c.bf16 %v2116, %v2112
      %v2133 = vpack.c.bf16 %v2117, %v2113
      %v2134 = vld [vmem:[%s7] sm:$0xf]
      %v2135 = vld [vmem:[%s7 + $0x4] sm:$0xf]
      %v2136 = vld [vmem:[%s7 + $0x8] sm:$0xf]
      %v2137 = vld [vmem:[%s7 + $0xc] sm:$0xf]
      %v2138 = vld [vmem:[%s7 + $0x10] sm:$0xf]
      %v2139 = vld [vmem:[%s7 + $0x14] sm:$0xf]
      %v2140 = vld [vmem:[%s7 + $0x18] sm:$0xf]
      %v2141 = vld [vmem:[%s7 + $0x1c] sm:$0xf]
      %v2142 = vld [vmem:[%s7 + $0x20] sm:$0xf]
      %v2143 = vld [vmem:[%s7 + $0x24] sm:$0xf]
      %v2144 = vld [vmem:[%s7 + $0x28] sm:$0xf]
      %v2145 = vld [vmem:[%s7 + $0x2c] sm:$0xf]
      %v2146 = vld [vmem:[%s7 + $0x30] sm:$0xf]
      %v2147 = vld [vmem:[%s7 + $0x34] sm:$0xf]
      %v2148 = vld [vmem:[%s7 + $0x38] sm:$0xf]
      %v2149 = vld [vmem:[%s7 + $0x3c] sm:$0xf]
      %v2150 = vld [vmem:[%s7 + $0x40] sm:$0xf]
      %v2151 = vld [vmem:[%s7 + $0x44] sm:$0xf]
      %v2152 = vld [vmem:[%s7 + $0x48] sm:$0xf]
      %v2153 = vld [vmem:[%s7 + $0x4c] sm:$0xf]
      %v2154 = vld [vmem:[%s7 + $0x50] sm:$0xf]
      %v2155 = vld [vmem:[%s7 + $0x54] sm:$0xf]
      %v2156 = vld [vmem:[%s7 + $0x58] sm:$0xf]
      %v2157 = vld [vmem:[%s7 + $0x5c] sm:$0xf]
      %v2158 = vld [vmem:[%s7 + $0x60] sm:$0xf]
      %v2159 = vld [vmem:[%s7 + $0x64] sm:$0xf]
      %v2160 = vld [vmem:[%s7 + $0x68] sm:$0xf]
      %v2161 = vld [vmem:[%s7 + $0x6c] sm:$0xf]
      %v2162 = vld [vmem:[%s7 + $0x70] sm:$0xf]
      %v2163 = vld [vmem:[%s7 + $0x74] sm:$0xf]
      %v2164 = vld [vmem:[%s7 + $0x78] sm:$0xf]
      %v2165 = vld [vmem:[%s7 + $0x7c] sm:$0xf]
      %v2166 = vld [vmem:[%s7 + $0x80] sm:$0xf]
      %v2167 = vld [vmem:[%s7 + $0x84] sm:$0xf]
      %v2168 = vld [vmem:[%s7 + $0x88] sm:$0xf]
      %v2169 = vld [vmem:[%s7 + $0x8c] sm:$0xf]
      %v2170 = vld [vmem:[%s7 + $0x90] sm:$0xf]
      %v2171 = vld [vmem:[%s7 + $0x94] sm:$0xf]
      %v2172 = vld [vmem:[%s7 + $0x98] sm:$0xf]
      %v2173 = vld [vmem:[%s7 + $0x9c] sm:$0xf]
      %v2174 = vld [vmem:[%s7 + $0xa0] sm:$0xf]
      %v2175 = vld [vmem:[%s7 + $0xa4] sm:$0xf]
      %v2176 = vld [vmem:[%s7 + $0xa8] sm:$0xf]
      %v2177 = vld [vmem:[%s7 + $0xac] sm:$0xf]
      %v2178 = vld [vmem:[%s7 + $0xb0] sm:$0xf]
      %v2179 = vld [vmem:[%s7 + $0xb4] sm:$0xf]
      %v2180 = vld [vmem:[%s7 + $0xb8] sm:$0xf]
      %v2181 = vld [vmem:[%s7 + $0xbc] sm:$0xf]
      %v2182 = vld [vmem:[%s7 + $0xc0] sm:$0xf]
      %v2183 = vld [vmem:[%s7 + $0xc4] sm:$0xf]
      %v2184 = vld [vmem:[%s7 + $0xc8] sm:$0xf]
      %v2185 = vld [vmem:[%s7 + $0xcc] sm:$0xf]
      %v2186 = vld [vmem:[%s7 + $0xd0] sm:$0xf]
      %v2187 = vld [vmem:[%s7 + $0xd4] sm:$0xf]
      %v2188 = vld [vmem:[%s7 + $0xd8] sm:$0xf]
      %v2189 = vld [vmem:[%s7 + $0xdc] sm:$0xf]
      %v2190 = vld [vmem:[%s7 + $0xe0] sm:$0xf]
      %v2191 = vld [vmem:[%s7 + $0xe4] sm:$0xf]
      %v2192 = vld [vmem:[%s7 + $0xe8] sm:$0xf]
      %v2193 = vld [vmem:[%s7 + $0xec] sm:$0xf]
      %v2194 = vld [vmem:[%s7 + $0xf0] sm:$0xf]
      %v2195 = vld [vmem:[%s7 + $0xf4] sm:$0xf]
      %v2196 = vld [vmem:[%s7 + $0xf8] sm:$0xf]
      %v2197 = vld [vmem:[%s7 + $0xfc] sm:$0xf]
      %v2262 = vunpack.c.l.b16 %v2134
      %v2263 = vunpack.c.l.b16 %v2135
      %v2264 = vunpack.c.l.b16 %v2136
      %v2265 = vunpack.c.l.b16 %v2137
      %v2266 = vunpack.c.l.b16 %v2138
      %v2267 = vunpack.c.l.b16 %v2139
      %v2268 = vunpack.c.l.b16 %v2140
      %v2269 = vunpack.c.l.b16 %v2141
      %v2270 = vunpack.c.l.b16 %v2142
      %v2271 = vunpack.c.l.b16 %v2143
      %v2272 = vunpack.c.l.b16 %v2144
      %v2273 = vunpack.c.l.b16 %v2145
      %v2274 = vunpack.c.l.b16 %v2146
      %v2275 = vunpack.c.l.b16 %v2147
      %v2276 = vunpack.c.l.b16 %v2148
      %v2277 = vunpack.c.l.b16 %v2149
      %v2278 = vunpack.c.l.b16 %v2150
      %v2279 = vunpack.c.l.b16 %v2151
      %v2280 = vunpack.c.l.b16 %v2152
      %v2281 = vunpack.c.l.b16 %v2153
      %v2282 = vunpack.c.l.b16 %v2154
      %v2283 = vunpack.c.l.b16 %v2155
      %v2284 = vunpack.c.l.b16 %v2156
      %v2285 = vunpack.c.l.b16 %v2157
      %v2286 = vunpack.c.l.b16 %v2158
      %v2287 = vunpack.c.l.b16 %v2159
      %v2288 = vunpack.c.l.b16 %v2160
      %v2289 = vunpack.c.l.b16 %v2161
      %v2290 = vunpack.c.l.b16 %v2162
      %v2291 = vunpack.c.l.b16 %v2163
      %v2292 = vunpack.c.l.b16 %v2164
      %v2293 = vunpack.c.l.b16 %v2165
      %v2294 = vunpack.c.l.b16 %v2166
      %v2295 = vunpack.c.l.b16 %v2167
      %v2296 = vunpack.c.l.b16 %v2168
      %v2297 = vunpack.c.l.b16 %v2169
      %v2298 = vunpack.c.l.b16 %v2170
      %v2299 = vunpack.c.l.b16 %v2171
      %v2300 = vunpack.c.l.b16 %v2172
      %v2301 = vunpack.c.l.b16 %v2173
      %v2302 = vunpack.c.l.b16 %v2174
      %v2303 = vunpack.c.l.b16 %v2175
      %v2304 = vunpack.c.l.b16 %v2176
      %v2305 = vunpack.c.l.b16 %v2177
      %v2306 = vunpack.c.l.b16 %v2178
      %v2307 = vunpack.c.l.b16 %v2179
      %v2308 = vunpack.c.l.b16 %v2180
      %v2309 = vunpack.c.l.b16 %v2181
      %v2310 = vunpack.c.l.b16 %v2182
      %v2311 = vunpack.c.l.b16 %v2183
      %v2312 = vunpack.c.l.b16 %v2184
      %v2313 = vunpack.c.l.b16 %v2185
      %v2314 = vunpack.c.l.b16 %v2186
      %v2315 = vunpack.c.l.b16 %v2187
      %v2316 = vunpack.c.l.b16 %v2188
      %v2317 = vunpack.c.l.b16 %v2189
      %v2318 = vunpack.c.l.b16 %v2190
      %v2319 = vunpack.c.l.b16 %v2191
      %v2320 = vunpack.c.l.b16 %v2192
      %v2321 = vunpack.c.l.b16 %v2193
      %v2322 = vunpack.c.l.b16 %v2194
      %v2323 = vunpack.c.l.b16 %v2195
      %v2324 = vunpack.c.l.b16 %v2196
      %v2325 = vunpack.c.l.b16 %v2197
      %v2326 = vpack.c.b16 %v2263, %v2262
      %v2327 = vpack.c.b16 %v2265, %v2264
      %v2328 = vpack.c.b16 %v2267, %v2266
      %v2329 = vpack.c.b16 %v2269, %v2268
      %v2330 = vpack.c.b16 %v2271, %v2270
      %v2331 = vpack.c.b16 %v2273, %v2272
      %v2332 = vpack.c.b16 %v2275, %v2274
      %v2333 = vpack.c.b16 %v2277, %v2276
      %v2334 = vpack.c.b16 %v2279, %v2278
      %v2335 = vpack.c.b16 %v2281, %v2280
      %v2336 = vpack.c.b16 %v2283, %v2282
      %v2337 = vpack.c.b16 %v2285, %v2284
      %v2338 = vpack.c.b16 %v2287, %v2286
      %v2339 = vpack.c.b16 %v2289, %v2288
      %v2340 = vpack.c.b16 %v2291, %v2290
      %v2341 = vpack.c.b16 %v2293, %v2292
      %v2342 = vpack.c.b16 %v2295, %v2294
      %v2343 = vpack.c.b16 %v2297, %v2296
      %v2344 = vpack.c.b16 %v2299, %v2298
      %v2345 = vpack.c.b16 %v2301, %v2300
      %v2346 = vpack.c.b16 %v2303, %v2302
      %v2347 = vpack.c.b16 %v2305, %v2304
      %v2348 = vpack.c.b16 %v2307, %v2306
      %v2349 = vpack.c.b16 %v2309, %v2308
      %v2350 = vpack.c.b16 %v2311, %v2310
      %v2351 = vpack.c.b16 %v2313, %v2312
      %v2352 = vpack.c.b16 %v2315, %v2314
      %v2353 = vpack.c.b16 %v2317, %v2316
      %v2354 = vpack.c.b16 %v2319, %v2318
      %v2355 = vpack.c.b16 %v2321, %v2320
      %v2356 = vpack.c.b16 %v2323, %v2322
      %v2357 = vpack.c.b16 %v2325, %v2324
      %2390 = vmatpush.bf16.msra.mxu0 %v2333
      %2391 = vmatpush.bf16.msra.mxu0 %v2332
      %2392 = vmatpush.bf16.msra.mxu0 %v2331
      %2393 = vmatpush.bf16.msra.mxu0 %v2330
      %2394 = vmatpush.bf16.msra.mxu0 %v2329
      %2395 = vmatpush.bf16.msra.mxu0 %v2328
      %2396 = vmatpush.bf16.msra.mxu0 %v2327
      %2397 = vmatpush.bf16.msra.mxu0 %v2326
      %2398 = vmatmul.bf16.gmra.mxu0 %v2118
      %v2399 = vpop.f32.mrf.mxu0
      %v2400 = vadd.f32 0.0, %v2399
      %v2401 = vpop.f32.mrf.mxu0
      %v2402 = vadd.f32 0.0, %v2401
      %2403 = vmatmul.bf16.gmra.mxu0 %v2122
      %v2404 = vpop.f32.mrf.mxu0
      %v2405 = vadd.f32 0.0, %v2404
      %v2406 = vpop.f32.mrf.mxu0
      %v2407 = vadd.f32 0.0, %v2406
      %2408 = vmatmul.bf16.gmra.mxu0 %v2126
      %v2409 = vpop.f32.mrf.mxu0
      %v2410 = vadd.f32 0.0, %v2409
      %v2411 = vpop.f32.mrf.mxu0
      %v2412 = vadd.f32 0.0, %v2411
      %2413 = vmatmul.bf16.gmra.mxu0 %v2130
      %v2414 = vpop.f32.mrf.mxu0
      %v2415 = vadd.f32 0.0, %v2414
      %v2416 = vpop.f32.mrf.mxu0
      %v2417 = vadd.f32 0.0, %v2416
      %2418 = vdwg.mxu0
      %2419 = vmatpush.bf16.msra.mxu0 %v2341
      %2420 = vmatpush.bf16.msra.mxu0 %v2340
      %2421 = vmatpush.bf16.msra.mxu0 %v2339
      %2422 = vmatpush.bf16.msra.mxu0 %v2338
      %2423 = vmatpush.bf16.msra.mxu0 %v2337
      %2424 = vmatpush.bf16.msra.mxu0 %v2336
      %2425 = vmatpush.bf16.msra.mxu0 %v2335
      %2426 = vmatpush.bf16.msra.mxu0 %v2334
      %2427 = vmatmul.bf16.gmra.mxu0 %v2119
      %v2428 = vpop.f32.mrf.mxu0
      %v2429 = vadd.f32 %v2400, %v2428
      %v2430 = vpop.f32.mrf.mxu0
      %v2431 = vadd.f32 %v2402, %v2430
      %2432 = vmatmul.bf16.gmra.mxu0 %v2123
      %v2433 = vpop.f32.mrf.mxu0
      %v2434 = vadd.f32 %v2405, %v2433
      %v2435 = vpop.f32.mrf.mxu0
      %v2436 = vadd.f32 %v2407, %v2435
      %2437 = vmatmul.bf16.gmra.mxu0 %v2127
      %v2438 = vpop.f32.mrf.mxu0
      %v2439 = vadd.f32 %v2410, %v2438
      %v2440 = vpop.f32.mrf.mxu0
      %v2441 = vadd.f32 %v2412, %v2440
      %2442 = vmatmul.bf16.gmra.mxu0 %v2131
      %v2443 = vpop.f32.mrf.mxu0
      %v2444 = vadd.f32 %v2415, %v2443
      %v2445 = vpop.f32.mrf.mxu0
      %v2446 = vadd.f32 %v2417, %v2445
      %2447 = vdwg.mxu0
      %2448 = vmatpush.bf16.msra.mxu0 %v2349
      %2449 = vmatpush.bf16.msra.mxu0 %v2348
      %2450 = vmatpush.bf16.msra.mxu0 %v2347
      %2451 = vmatpush.bf16.msra.mxu0 %v2346
      %2452 = vmatpush.bf16.msra.mxu0 %v2345
      %2453 = vmatpush.bf16.msra.mxu0 %v2344
      %2454 = vmatpush.bf16.msra.mxu0 %v2343
      %2455 = vmatpush.bf16.msra.mxu0 %v2342
      %2456 = vmatmul.bf16.gmra.mxu0 %v2120
      %v2457 = vpop.f32.mrf.mxu0
      %v2458 = vadd.f32 %v2429, %v2457
      %v2459 = vpop.f32.mrf.mxu0
      %v2460 = vadd.f32 %v2431, %v2459
      %2461 = vmatmul.bf16.gmra.mxu0 %v2124
      %v2462 = vpop.f32.mrf.mxu0
      %v2463 = vadd.f32 %v2434, %v2462
      %v2464 = vpop.f32.mrf.mxu0
      %v2465 = vadd.f32 %v2436, %v2464
      %2466 = vmatmul.bf16.gmra.mxu0 %v2128
      %v2467 = vpop.f32.mrf.mxu0
      %v2468 = vadd.f32 %v2439, %v2467
      %v2469 = vpop.f32.mrf.mxu0
      %v2470 = vadd.f32 %v2441, %v2469
      %2471 = vmatmul.bf16.gmra.mxu0 %v2132
      %v2472 = vpop.f32.mrf.mxu0
      %v2473 = vadd.f32 %v2444, %v2472
      %v2474 = vpop.f32.mrf.mxu0
      %v2475 = vadd.f32 %v2446, %v2474
      %2476 = vdwg.mxu0
      %2477 = vmatpush.bf16.msra.mxu0 %v2357
      %2478 = vmatpush.bf16.msra.mxu0 %v2356
      %2479 = vmatpush.bf16.msra.mxu0 %v2355
      %2480 = vmatpush.bf16.msra.mxu0 %v2354
      %2481 = vmatpush.bf16.msra.mxu0 %v2353
      %2482 = vmatpush.bf16.msra.mxu0 %v2352
      %2483 = vmatpush.bf16.msra.mxu0 %v2351
      %2484 = vmatpush.bf16.msra.mxu0 %v2350
      %2485 = vmatmul.bf16.gmra.mxu0 %v2121
      %v2486 = vpop.f32.mrf.mxu0
      %v2487 = vadd.f32 %v2458, %v2486
      %v2488 = vpop.f32.mrf.mxu0
      %v2489 = vadd.f32 %v2460, %v2488
      %2490 = vmatmul.bf16.gmra.mxu0 %v2125
      %v2491 = vpop.f32.mrf.mxu0
      %v2492 = vadd.f32 %v2463, %v2491
      %v2493 = vpop.f32.mrf.mxu0
      %v2494 = vadd.f32 %v2465, %v2493
      %2495 = vmatmul.bf16.gmra.mxu0 %v2129
      %v2496 = vpop.f32.mrf.mxu0
      %v2497 = vadd.f32 %v2468, %v2496
      %v2498 = vpop.f32.mrf.mxu0
      %v2499 = vadd.f32 %v2470, %v2498
      %2500 = vmatmul.bf16.gmra.mxu0 %v2133
      %v2501 = vpop.f32.mrf.mxu0
      %v2502 = vadd.f32 %v2473, %v2501
      %v2503 = vpop.f32.mrf.mxu0
      %v2504 = vadd.f32 %v2475, %v2503
      %2505 = vdwg.mxu0
      %v2506 = vld [vmem:[%s8] sm:$0x1]
      %v2508 = vperm.slane %v2506, 0
      %v2510 = vmul.f32 %v2487, %v2508
      %v2511 = vmul.f32 %v2489, %v2508
      %v2512 = vmul.f32 %v2492, %v2508
      %v2513 = vmul.f32 %v2494, %v2508
      %v2514 = vmul.f32 %v2497, %v2508
      %v2515 = vmul.f32 %v2499, %v2508
      %v2516 = vmul.f32 %v2502, %v2508
      %v2517 = vmul.f32 %v2504, %v2508
      %v2518 = vld [vmem:[%s9] sm:$0x1]
      %v2520 = vperm.slane %v2518, 0
      %v2522 = vadd.f32 %v2510, %v2520
      %v2523 = vadd.f32 %v2511, %v2520
      %v2524 = vadd.f32 %v2512, %v2520
      %v2525 = vadd.f32 %v2513, %v2520
      %v2526 = vadd.f32 %v2514, %v2520
      %v2527 = vadd.f32 %v2515, %v2520
      %v2528 = vadd.f32 %v2516, %v2520
      %v2529 = vadd.f32 %v2517, %v2520
      %v2530 = vmul.f32 %v2522, 0.01
      %v2531 = vmul.f32 %v2523, 0.01
      %v2532 = vmul.f32 %v2524, 0.01
      %v2533 = vmul.f32 %v2525, 0.01
      %v2534 = vmul.f32 %v2526, 0.01
      %v2535 = vmul.f32 %v2527, 0.01
      %v2536 = vmul.f32 %v2528, 0.01
      %v2537 = vmul.f32 %v2529, 0.01
      %v2538 = vmax.f32 %v2522, %v2530
      %v2539 = vmax.f32 %v2523, %v2531
      %v2540 = vmax.f32 %v2524, %v2532
      %v2541 = vmax.f32 %v2525, %v2533
      %v2542 = vmax.f32 %v2526, %v2534
      %v2543 = vmax.f32 %v2527, %v2535
      %v2544 = vmax.f32 %v2528, %v2536
      %v2545 = vmax.f32 %v2529, %v2537
      %v2546 = vld [vmem:[%s3] sm:$0x77]
      %v2547 = vld [vmem:[%s3 + $0x8] sm:$0x77]
      %v2548 = vld [vmem:[%s573] sm:$0xf]
      %2550 = vset.pattern.permute.xlu0 0
      %2551 = vperm.xlu0 %2550, %v2538
      %v2552 = vpop.permute.xlu0 %2551
      %2555 = vset.pattern.permute.xlu0 0
      %2556 = vperm.xlu0 %2555, %v2539
      %v2557 = vpop.permute.xlu0 %2556
      %2560 = vset.pattern.permute.xlu0 0
      %2561 = vperm.xlu0 %2560, %v2540
      %v2562 = vpop.permute.xlu0 %2561
      %2565 = vset.pattern.permute.xlu0 0
      %2566 = vperm.xlu0 %2565, %v2541
      %v2567 = vpop.permute.xlu0 %2566
      %2570 = vset.pattern.permute.xlu0 0
      %2571 = vperm.xlu0 %2570, %v2542
      %v2572 = vpop.permute.xlu0 %2571
      %2575 = vset.pattern.permute.xlu0 0
      %2576 = vperm.xlu0 %2575, %v2543
      %v2577 = vpop.permute.xlu0 %2576
      %2580 = vset.pattern.permute.xlu0 0
      %2581 = vperm.xlu0 %2580, %v2544
      %v2582 = vpop.permute.xlu0 %2581
      %2585 = vset.pattern.permute.xlu0 0
      %2586 = vperm.xlu0 %2585, %v2545
      %v2587 = vpop.permute.xlu0 %2586
      %v2591 = vperm.slane %v2546, 0
      %v2592 = vperm.slane %v2546, 4
      %v2593 = vperm.slane %v2547, 0
      %v2594 = vperm.slane %v2547, 4
      %v2599 = vperm.slane %v2591, 0
      %v2600 = vperm.slane %v2592, 0
      %v2601 = vperm.slane %v2593, 0
      %v2602 = vperm.slane %v2594, 0
      %v2603 = vmul.f32 %v2552, %v2599
      %v2604 = vmul.f32 %v2552, %v2600
      %v2605 = vmul.f32 %v2552, %v2601
      %v2606 = vmul.f32 %v2552, %v2602
      %v2607 = vmul.f32 %v2557, %v2599
      %v2608 = vmul.f32 %v2557, %v2600
      %v2609 = vmul.f32 %v2557, %v2601
      %v2610 = vmul.f32 %v2557, %v2602
      %v2611 = vmul.f32 %v2562, %v2599
      %v2612 = vmul.f32 %v2562, %v2600
      %v2613 = vmul.f32 %v2562, %v2601
      %v2614 = vmul.f32 %v2562, %v2602
      %v2615 = vmul.f32 %v2567, %v2599
      %v2616 = vmul.f32 %v2567, %v2600
      %v2617 = vmul.f32 %v2567, %v2601
      %v2618 = vmul.f32 %v2567, %v2602
      %v2619 = vmul.f32 %v2572, %v2599
      %v2620 = vmul.f32 %v2572, %v2600
      %v2621 = vmul.f32 %v2572, %v2601
      %v2622 = vmul.f32 %v2572, %v2602
      %v2623 = vmul.f32 %v2577, %v2599
      %v2624 = vmul.f32 %v2577, %v2600
      %v2625 = vmul.f32 %v2577, %v2601
      %v2626 = vmul.f32 %v2577, %v2602
      %v2627 = vmul.f32 %v2582, %v2599
      %v2628 = vmul.f32 %v2582, %v2600
      %v2629 = vmul.f32 %v2582, %v2601
      %v2630 = vmul.f32 %v2582, %v2602
      %v2631 = vmul.f32 %v2587, %v2599
      %v2632 = vmul.f32 %v2587, %v2600
      %v2633 = vmul.f32 %v2587, %v2601
      %v2634 = vmul.f32 %v2587, %v2602
      %v2636 = vperm.slane %v2548, 0
      %v2637 = vperm.slane %v2548, 1
      %v2638 = vperm.slane %v2548, 2
      %v2639 = vperm.slane %v2548, 3
      %v2644 = vadd.f32 %v2636, %v2603
      %v2645 = vadd.f32 %v2637, %v2604
      %v2646 = vadd.f32 %v2638, %v2605
      %v2647 = vadd.f32 %v2639, %v2606
      %v2648 = vadd.f32 %v2636, %v2607
      %v2649 = vadd.f32 %v2637, %v2608
      %v2650 = vadd.f32 %v2638, %v2609
      %v2651 = vadd.f32 %v2639, %v2610
      %v2652 = vadd.f32 %v2636, %v2611
      %v2653 = vadd.f32 %v2637, %v2612
      %v2654 = vadd.f32 %v2638, %v2613
      %v2655 = vadd.f32 %v2639, %v2614
      %v2656 = vadd.f32 %v2636, %v2615
      %v2657 = vadd.f32 %v2637, %v2616
      %v2658 = vadd.f32 %v2638, %v2617
      %v2659 = vadd.f32 %v2639, %v2618
      %v2660 = vadd.f32 %v2636, %v2619
      %v2661 = vadd.f32 %v2637, %v2620
      %v2662 = vadd.f32 %v2638, %v2621
      %v2663 = vadd.f32 %v2639, %v2622
      %v2664 = vadd.f32 %v2636, %v2623
      %v2665 = vadd.f32 %v2637, %v2624
      %v2666 = vadd.f32 %v2638, %v2625
      %v2667 = vadd.f32 %v2639, %v2626
      %v2668 = vadd.f32 %v2636, %v2627
      %v2669 = vadd.f32 %v2637, %v2628
      %v2670 = vadd.f32 %v2638, %v2629
      %v2671 = vadd.f32 %v2639, %v2630
      %v2672 = vadd.f32 %v2636, %v2631
      %v2673 = vadd.f32 %v2637, %v2632
      %v2674 = vadd.f32 %v2638, %v2633
      %v2675 = vadd.f32 %v2639, %v2634
      %2676 = vset.pattern.permute.xlu0 1
      %2677 = vperm.xlu0 %2676, %v2538
      %v2678 = vpop.permute.xlu0 %2677
      %2680 = vset.pattern.permute.xlu0 1
      %2681 = vperm.xlu0 %2680, %v2539
      %v2682 = vpop.permute.xlu0 %2681
      %2684 = vset.pattern.permute.xlu0 1
      %2685 = vperm.xlu0 %2684, %v2540
      %v2686 = vpop.permute.xlu0 %2685
      %2688 = vset.pattern.permute.xlu0 1
      %2689 = vperm.xlu0 %2688, %v2541
      %v2690 = vpop.permute.xlu0 %2689
      %2692 = vset.pattern.permute.xlu0 1
      %2693 = vperm.xlu0 %2692, %v2542
      %v2694 = vpop.permute.xlu0 %2693
      %2696 = vset.pattern.permute.xlu0 1
      %2697 = vperm.xlu0 %2696, %v2543
      %v2698 = vpop.permute.xlu0 %2697
      %2700 = vset.pattern.permute.xlu0 1
      %2701 = vperm.xlu0 %2700, %v2544
      %v2702 = vpop.permute.xlu0 %2701
      %2704 = vset.pattern.permute.xlu0 1
      %2705 = vperm.xlu0 %2704, %v2545
      %v2706 = vpop.permute.xlu0 %2705
      %v2708 = vperm.slane %v2546, 1
      %v2709 = vperm.slane %v2546, 5
      %v2710 = vperm.slane %v2547, 1
      %v2711 = vperm.slane %v2547, 5
      %v2716 = vperm.slane %v2708, 1
      %v2717 = vperm.slane %v2709, 1
      %v2718 = vperm.slane %v2710, 1
      %v2719 = vperm.slane %v2711, 1
      %v2720 = vmul.f32 %v2678, %v2716
      %v2721 = vmul.f32 %v2678, %v2717
      %v2722 = vmul.f32 %v2678, %v2718
      %v2723 = vmul.f32 %v2678, %v2719
      %v2724 = vmul.f32 %v2682, %v2716
      %v2725 = vmul.f32 %v2682, %v2717
      %v2726 = vmul.f32 %v2682, %v2718
      %v2727 = vmul.f32 %v2682, %v2719
      %v2728 = vmul.f32 %v2686, %v2716
      %v2729 = vmul.f32 %v2686, %v2717
      %v2730 = vmul.f32 %v2686, %v2718
      %v2731 = vmul.f32 %v2686, %v2719
      %v2732 = vmul.f32 %v2690, %v2716
      %v2733 = vmul.f32 %v2690, %v2717
      %v2734 = vmul.f32 %v2690, %v2718
      %v2735 = vmul.f32 %v2690, %v2719
      %v2736 = vmul.f32 %v2694, %v2716
      %v2737 = vmul.f32 %v2694, %v2717
      %v2738 = vmul.f32 %v2694, %v2718
      %v2739 = vmul.f32 %v2694, %v2719
      %v2740 = vmul.f32 %v2698, %v2716
      %v2741 = vmul.f32 %v2698, %v2717
      %v2742 = vmul.f32 %v2698, %v2718
      %v2743 = vmul.f32 %v2698, %v2719
      %v2744 = vmul.f32 %v2702, %v2716
      %v2745 = vmul.f32 %v2702, %v2717
      %v2746 = vmul.f32 %v2702, %v2718
      %v2747 = vmul.f32 %v2702, %v2719
      %v2748 = vmul.f32 %v2706, %v2716
      %v2749 = vmul.f32 %v2706, %v2717
      %v2750 = vmul.f32 %v2706, %v2718
      %v2751 = vmul.f32 %v2706, %v2719
      %v2752 = vadd.f32 %v2644, %v2720
      %v2753 = vadd.f32 %v2645, %v2721
      %v2754 = vadd.f32 %v2646, %v2722
      %v2755 = vadd.f32 %v2647, %v2723
      %v2756 = vadd.f32 %v2648, %v2724
      %v2757 = vadd.f32 %v2649, %v2725
      %v2758 = vadd.f32 %v2650, %v2726
      %v2759 = vadd.f32 %v2651, %v2727
      %v2760 = vadd.f32 %v2652, %v2728
      %v2761 = vadd.f32 %v2653, %v2729
      %v2762 = vadd.f32 %v2654, %v2730
      %v2763 = vadd.f32 %v2655, %v2731
      %v2764 = vadd.f32 %v2656, %v2732
      %v2765 = vadd.f32 %v2657, %v2733
      %v2766 = vadd.f32 %v2658, %v2734
      %v2767 = vadd.f32 %v2659, %v2735
      %v2768 = vadd.f32 %v2660, %v2736
      %v2769 = vadd.f32 %v2661, %v2737
      %v2770 = vadd.f32 %v2662, %v2738
      %v2771 = vadd.f32 %v2663, %v2739
      %v2772 = vadd.f32 %v2664, %v2740
      %v2773 = vadd.f32 %v2665, %v2741
      %v2774 = vadd.f32 %v2666, %v2742
      %v2775 = vadd.f32 %v2667, %v2743
      %v2776 = vadd.f32 %v2668, %v2744
      %v2777 = vadd.f32 %v2669, %v2745
      %v2778 = vadd.f32 %v2670, %v2746
      %v2779 = vadd.f32 %v2671, %v2747
      %v2780 = vadd.f32 %v2672, %v2748
      %v2781 = vadd.f32 %v2673, %v2749
      %v2782 = vadd.f32 %v2674, %v2750
      %v2783 = vadd.f32 %v2675, %v2751
      %2784 = vset.pattern.permute.xlu0 2
      %2785 = vperm.xlu0 %2784, %v2538
      %v2786 = vpop.permute.xlu0 %2785
      %2788 = vset.pattern.permute.xlu0 2
      %2789 = vperm.xlu0 %2788, %v2539
      %v2790 = vpop.permute.xlu0 %2789
      %2792 = vset.pattern.permute.xlu0 2
      %2793 = vperm.xlu0 %2792, %v2540
      %v2794 = vpop.permute.xlu0 %2793
      %2796 = vset.pattern.permute.xlu0 2
      %2797 = vperm.xlu0 %2796, %v2541
      %v2798 = vpop.permute.xlu0 %2797
      %2800 = vset.pattern.permute.xlu0 2
      %2801 = vperm.xlu0 %2800, %v2542
      %v2802 = vpop.permute.xlu0 %2801
      %2804 = vset.pattern.permute.xlu0 2
      %2805 = vperm.xlu0 %2804, %v2543
      %v2806 = vpop.permute.xlu0 %2805
      %2808 = vset.pattern.permute.xlu0 2
      %2809 = vperm.xlu0 %2808, %v2544
      %v2810 = vpop.permute.xlu0 %2809
      %2812 = vset.pattern.permute.xlu0 2
      %2813 = vperm.xlu0 %2812, %v2545
      %v2814 = vpop.permute.xlu0 %2813
      %v2816 = vperm.slane %v2546, 2
      %v2817 = vperm.slane %v2546, 6
      %v2818 = vperm.slane %v2547, 2
      %v2819 = vperm.slane %v2547, 6
      %v2824 = vperm.slane %v2816, 2
      %v2825 = vperm.slane %v2817, 2
      %v2826 = vperm.slane %v2818, 2
      %v2827 = vperm.slane %v2819, 2
      %v2828 = vmul.f32 %v2786, %v2824
      %v2829 = vmul.f32 %v2786, %v2825
      %v2830 = vmul.f32 %v2786, %v2826
      %v2831 = vmul.f32 %v2786, %v2827
      %v2832 = vmul.f32 %v2790, %v2824
      %v2833 = vmul.f32 %v2790, %v2825
      %v2834 = vmul.f32 %v2790, %v2826
      %v2835 = vmul.f32 %v2790, %v2827
      %v2836 = vmul.f32 %v2794, %v2824
      %v2837 = vmul.f32 %v2794, %v2825
      %v2838 = vmul.f32 %v2794, %v2826
      %v2839 = vmul.f32 %v2794, %v2827
      %v2840 = vmul.f32 %v2798, %v2824
      %v2841 = vmul.f32 %v2798, %v2825
      %v2842 = vmul.f32 %v2798, %v2826
      %v2843 = vmul.f32 %v2798, %v2827
      %v2844 = vmul.f32 %v2802, %v2824
      %v2845 = vmul.f32 %v2802, %v2825
      %v2846 = vmul.f32 %v2802, %v2826
      %v2847 = vmul.f32 %v2802, %v2827
      %v2848 = vmul.f32 %v2806, %v2824
      %v2849 = vmul.f32 %v2806, %v2825
      %v2850 = vmul.f32 %v2806, %v2826
      %v2851 = vmul.f32 %v2806, %v2827
      %v2852 = vmul.f32 %v2810, %v2824
      %v2853 = vmul.f32 %v2810, %v2825
      %v2854 = vmul.f32 %v2810, %v2826
      %v2855 = vmul.f32 %v2810, %v2827
      %v2856 = vmul.f32 %v2814, %v2824
      %v2857 = vmul.f32 %v2814, %v2825
      %v2858 = vmul.f32 %v2814, %v2826
      %v2859 = vmul.f32 %v2814, %v2827
      %v2860 = vadd.f32 %v2752, %v2828
      %v2861 = vadd.f32 %v2753, %v2829
      %v2862 = vadd.f32 %v2754, %v2830
      %v2863 = vadd.f32 %v2755, %v2831
      %v2864 = vadd.f32 %v2756, %v2832
      %v2865 = vadd.f32 %v2757, %v2833
      %v2866 = vadd.f32 %v2758, %v2834
      %v2867 = vadd.f32 %v2759, %v2835
      %v2868 = vadd.f32 %v2760, %v2836
      %v2869 = vadd.f32 %v2761, %v2837
      %v2870 = vadd.f32 %v2762, %v2838
      %v2871 = vadd.f32 %v2763, %v2839
      %v2872 = vadd.f32 %v2764, %v2840
      %v2873 = vadd.f32 %v2765, %v2841
      %v2874 = vadd.f32 %v2766, %v2842
      %v2875 = vadd.f32 %v2767, %v2843
      %v2876 = vadd.f32 %v2768, %v2844
      %v2877 = vadd.f32 %v2769, %v2845
      %v2878 = vadd.f32 %v2770, %v2846
      %v2879 = vadd.f32 %v2771, %v2847
      %v2880 = vadd.f32 %v2772, %v2848
      %v2881 = vadd.f32 %v2773, %v2849
      %v2882 = vadd.f32 %v2774, %v2850
      %v2883 = vadd.f32 %v2775, %v2851
      %v2884 = vadd.f32 %v2776, %v2852
      %v2885 = vadd.f32 %v2777, %v2853
      %v2886 = vadd.f32 %v2778, %v2854
      %v2887 = vadd.f32 %v2779, %v2855
      %v2888 = vadd.f32 %v2780, %v2856
      %v2889 = vadd.f32 %v2781, %v2857
      %v2890 = vadd.f32 %v2782, %v2858
      %v2891 = vadd.f32 %v2783, %v2859
      %v2892 = vmul.f32 %v2860, 0.01
      %v2893 = vmul.f32 %v2861, 0.01
      %v2894 = vmul.f32 %v2862, 0.01
      %v2895 = vmul.f32 %v2863, 0.01
      %v2896 = vmul.f32 %v2864, 0.01
      %v2897 = vmul.f32 %v2865, 0.01
      %v2898 = vmul.f32 %v2866, 0.01
      %v2899 = vmul.f32 %v2867, 0.01
      %v2900 = vmul.f32 %v2868, 0.01
      %v2901 = vmul.f32 %v2869, 0.01
      %v2902 = vmul.f32 %v2870, 0.01
      %v2903 = vmul.f32 %v2871, 0.01
      %v2904 = vmul.f32 %v2872, 0.01
      %v2905 = vmul.f32 %v2873, 0.01
      %v2906 = vmul.f32 %v2874, 0.01
      %v2907 = vmul.f32 %v2875, 0.01
      %v2908 = vmul.f32 %v2876, 0.01
      %v2909 = vmul.f32 %v2877, 0.01
      %v2910 = vmul.f32 %v2878, 0.01
      %v2911 = vmul.f32 %v2879, 0.01
      %v2912 = vmul.f32 %v2880, 0.01
      %v2913 = vmul.f32 %v2881, 0.01
      %v2914 = vmul.f32 %v2882, 0.01
      %v2915 = vmul.f32 %v2883, 0.01
      %v2916 = vmul.f32 %v2884, 0.01
      %v2917 = vmul.f32 %v2885, 0.01
      %v2918 = vmul.f32 %v2886, 0.01
      %v2919 = vmul.f32 %v2887, 0.01
      %v2920 = vmul.f32 %v2888, 0.01
      %v2921 = vmul.f32 %v2889, 0.01
      %v2922 = vmul.f32 %v2890, 0.01
      %v2923 = vmul.f32 %v2891, 0.01
      %v2924 = vmax.f32 %v2860, %v2892
      %v2925 = vmax.f32 %v2861, %v2893
      %v2926 = vmax.f32 %v2862, %v2894
      %v2927 = vmax.f32 %v2863, %v2895
      %v2928 = vmax.f32 %v2864, %v2896
      %v2929 = vmax.f32 %v2865, %v2897
      %v2930 = vmax.f32 %v2866, %v2898
      %v2931 = vmax.f32 %v2867, %v2899
      %v2932 = vmax.f32 %v2868, %v2900
      %v2933 = vmax.f32 %v2869, %v2901
      %v2934 = vmax.f32 %v2870, %v2902
      %v2935 = vmax.f32 %v2871, %v2903
      %v2936 = vmax.f32 %v2872, %v2904
      %v2937 = vmax.f32 %v2873, %v2905
      %v2938 = vmax.f32 %v2874, %v2906
      %v2939 = vmax.f32 %v2875, %v2907
      %v2940 = vmax.f32 %v2876, %v2908
      %v2941 = vmax.f32 %v2877, %v2909
      %v2942 = vmax.f32 %v2878, %v2910
      %v2943 = vmax.f32 %v2879, %v2911
      %v2944 = vmax.f32 %v2880, %v2912
      %v2945 = vmax.f32 %v2881, %v2913
      %v2946 = vmax.f32 %v2882, %v2914
      %v2947 = vmax.f32 %v2883, %v2915
      %v2948 = vmax.f32 %v2884, %v2916
      %v2949 = vmax.f32 %v2885, %v2917
      %v2950 = vmax.f32 %v2886, %v2918
      %v2951 = vmax.f32 %v2887, %v2919
      %v2952 = vmax.f32 %v2888, %v2920
      %v2953 = vmax.f32 %v2889, %v2921
      %v2954 = vmax.f32 %v2890, %v2922
      %v2955 = vmax.f32 %v2891, %v2923
      %v2956 = vpack.c.bf16 %v2928, %v2924
      %v2957 = vpack.c.bf16 %v2929, %v2925
      %v2958 = vpack.c.bf16 %v2930, %v2926
      %v2959 = vpack.c.bf16 %v2931, %v2927
      %v2960 = vpack.c.bf16 %v2936, %v2932
      %v2961 = vpack.c.bf16 %v2937, %v2933
      %v2962 = vpack.c.bf16 %v2938, %v2934
      %v2963 = vpack.c.bf16 %v2939, %v2935
      %v2964 = vpack.c.bf16 %v2944, %v2940
      %v2965 = vpack.c.bf16 %v2945, %v2941
      %v2966 = vpack.c.bf16 %v2946, %v2942
      %v2967 = vpack.c.bf16 %v2947, %v2943
      %v2968 = vpack.c.bf16 %v2952, %v2948
      %v2969 = vpack.c.bf16 %v2953, %v2949
      %v2970 = vpack.c.bf16 %v2954, %v2950
      %v2971 = vpack.c.bf16 %v2955, %v2951
      %v2972 = vld [vmem:[%s10] sm:$0xff]
      %v2973 = vld [vmem:[%s10 + $0x8] sm:$0xff]
      %v2974 = vld [vmem:[%s10 + $0x10] sm:$0xff]
      %v2975 = vld [vmem:[%s10 + $0x18] sm:$0xff]
      %v2976 = vld [vmem:[%s10 + $0x20] sm:$0xff]
      %v2977 = vld [vmem:[%s10 + $0x28] sm:$0xff]
      %v2978 = vld [vmem:[%s10 + $0x30] sm:$0xff]
      %v2979 = vld [vmem:[%s10 + $0x38] sm:$0xff]
      %v2980 = vld [vmem:[%s10 + $0x40] sm:$0xff]
      %v2981 = vld [vmem:[%s10 + $0x48] sm:$0xff]
      %v2982 = vld [vmem:[%s10 + $0x50] sm:$0xff]
      %v2983 = vld [vmem:[%s10 + $0x58] sm:$0xff]
      %v2984 = vld [vmem:[%s10 + $0x60] sm:$0xff]
      %v2985 = vld [vmem:[%s10 + $0x68] sm:$0xff]
      %v2986 = vld [vmem:[%s10 + $0x70] sm:$0xff]
      %v2987 = vld [vmem:[%s10 + $0x78] sm:$0xff]
      %v2988 = vld [vmem:[%s10 + $0x80] sm:$0xff]
      %v2989 = vld [vmem:[%s10 + $0x88] sm:$0xff]
      %v2990 = vld [vmem:[%s10 + $0x90] sm:$0xff]
      %v2991 = vld [vmem:[%s10 + $0x98] sm:$0xff]
      %v2992 = vld [vmem:[%s10 + $0xa0] sm:$0xff]
      %v2993 = vld [vmem:[%s10 + $0xa8] sm:$0xff]
      %v2994 = vld [vmem:[%s10 + $0xb0] sm:$0xff]
      %v2995 = vld [vmem:[%s10 + $0xb8] sm:$0xff]
      %v2996 = vld [vmem:[%s10 + $0xc0] sm:$0xff]
      %v2997 = vld [vmem:[%s10 + $0xc8] sm:$0xff]
      %v2998 = vld [vmem:[%s10 + $0xd0] sm:$0xff]
      %v2999 = vld [vmem:[%s10 + $0xd8] sm:$0xff]
      %v3000 = vld [vmem:[%s10 + $0xe0] sm:$0xff]
      %v3001 = vld [vmem:[%s10 + $0xe8] sm:$0xff]
      %v3002 = vld [vmem:[%s10 + $0xf0] sm:$0xff]
      %v3003 = vld [vmem:[%s10 + $0xf8] sm:$0xff]
      %v3004 = vld [vmem:[%s10 + $0x100] sm:$0xff]
      %v3005 = vld [vmem:[%s10 + $0x108] sm:$0xff]
      %v3006 = vld [vmem:[%s10 + $0x110] sm:$0xff]
      %v3007 = vld [vmem:[%s10 + $0x118] sm:$0xff]
      %v3008 = vld [vmem:[%s10 + $0x120] sm:$0xff]
      %v3009 = vld [vmem:[%s10 + $0x128] sm:$0xff]
      %v3010 = vld [vmem:[%s10 + $0x130] sm:$0xff]
      %v3011 = vld [vmem:[%s10 + $0x138] sm:$0xff]
      %v3012 = vld [vmem:[%s10 + $0x140] sm:$0xff]
      %v3013 = vld [vmem:[%s10 + $0x148] sm:$0xff]
      %v3014 = vld [vmem:[%s10 + $0x150] sm:$0xff]
      %v3015 = vld [vmem:[%s10 + $0x158] sm:$0xff]
      %v3016 = vld [vmem:[%s10 + $0x160] sm:$0xff]
      %v3017 = vld [vmem:[%s10 + $0x168] sm:$0xff]
      %v3018 = vld [vmem:[%s10 + $0x170] sm:$0xff]
      %v3019 = vld [vmem:[%s10 + $0x178] sm:$0xff]
      %v3020 = vld [vmem:[%s10 + $0x180] sm:$0xff]
      %v3021 = vld [vmem:[%s10 + $0x188] sm:$0xff]
      %v3022 = vld [vmem:[%s10 + $0x190] sm:$0xff]
      %v3023 = vld [vmem:[%s10 + $0x198] sm:$0xff]
      %v3024 = vld [vmem:[%s10 + $0x1a0] sm:$0xff]
      %v3025 = vld [vmem:[%s10 + $0x1a8] sm:$0xff]
      %v3026 = vld [vmem:[%s10 + $0x1b0] sm:$0xff]
      %v3027 = vld [vmem:[%s10 + $0x1b8] sm:$0xff]
      %v3028 = vld [vmem:[%s10 + $0x1c0] sm:$0xff]
      %v3029 = vld [vmem:[%s10 + $0x1c8] sm:$0xff]
      %v3030 = vld [vmem:[%s10 + $0x1d0] sm:$0xff]
      %v3031 = vld [vmem:[%s10 + $0x1d8] sm:$0xff]
      %v3032 = vld [vmem:[%s10 + $0x1e0] sm:$0xff]
      %v3033 = vld [vmem:[%s10 + $0x1e8] sm:$0xff]
      %v3034 = vld [vmem:[%s10 + $0x1f0] sm:$0xff]
      %v3035 = vld [vmem:[%s10 + $0x1f8] sm:$0xff]
      %v3036 = vld [vmem:[%s10 + $0x200] sm:$0xff]
      %v3037 = vld [vmem:[%s10 + $0x208] sm:$0xff]
      %v3038 = vld [vmem:[%s10 + $0x210] sm:$0xff]
      %v3039 = vld [vmem:[%s10 + $0x218] sm:$0xff]
      %v3040 = vld [vmem:[%s10 + $0x220] sm:$0xff]
      %v3041 = vld [vmem:[%s10 + $0x228] sm:$0xff]
      %v3042 = vld [vmem:[%s10 + $0x230] sm:$0xff]
      %v3043 = vld [vmem:[%s10 + $0x238] sm:$0xff]
      %v3044 = vld [vmem:[%s10 + $0x240] sm:$0xff]
      %v3045 = vld [vmem:[%s10 + $0x248] sm:$0xff]
      %v3046 = vld [vmem:[%s10 + $0x250] sm:$0xff]
      %v3047 = vld [vmem:[%s10 + $0x258] sm:$0xff]
      %v3048 = vld [vmem:[%s10 + $0x260] sm:$0xff]
      %v3049 = vld [vmem:[%s10 + $0x268] sm:$0xff]
      %v3050 = vld [vmem:[%s10 + $0x270] sm:$0xff]
      %v3051 = vld [vmem:[%s10 + $0x278] sm:$0xff]
      %v3052 = vld [vmem:[%s10 + $0x280] sm:$0xff]
      %v3053 = vld [vmem:[%s10 + $0x288] sm:$0xff]
      %v3054 = vld [vmem:[%s10 + $0x290] sm:$0xff]
      %v3055 = vld [vmem:[%s10 + $0x298] sm:$0xff]
      %v3056 = vld [vmem:[%s10 + $0x2a0] sm:$0xff]
      %v3057 = vld [vmem:[%s10 + $0x2a8] sm:$0xff]
      %v3058 = vld [vmem:[%s10 + $0x2b0] sm:$0xff]
      %v3059 = vld [vmem:[%s10 + $0x2b8] sm:$0xff]
      %v3060 = vld [vmem:[%s10 + $0x2c0] sm:$0xff]
      %v3061 = vld [vmem:[%s10 + $0x2c8] sm:$0xff]
      %v3062 = vld [vmem:[%s10 + $0x2d0] sm:$0xff]
      %v3063 = vld [vmem:[%s10 + $0x2d8] sm:$0xff]
      %v3064 = vld [vmem:[%s10 + $0x2e0] sm:$0xff]
      %v3065 = vld [vmem:[%s10 + $0x2e8] sm:$0xff]
      %v3066 = vld [vmem:[%s10 + $0x2f0] sm:$0xff]
      %v3067 = vld [vmem:[%s10 + $0x2f8] sm:$0xff]
      %v3068 = vld [vmem:[%s10 + $0x300] sm:$0xff]
      %v3069 = vld [vmem:[%s10 + $0x308] sm:$0xff]
      %v3070 = vld [vmem:[%s10 + $0x310] sm:$0xff]
      %v3071 = vld [vmem:[%s10 + $0x318] sm:$0xff]
      %v3072 = vld [vmem:[%s10 + $0x320] sm:$0xff]
      %v3073 = vld [vmem:[%s10 + $0x328] sm:$0xff]
      %v3074 = vld [vmem:[%s10 + $0x330] sm:$0xff]
      %v3075 = vld [vmem:[%s10 + $0x338] sm:$0xff]
      %v3076 = vld [vmem:[%s10 + $0x340] sm:$0xff]
      %v3077 = vld [vmem:[%s10 + $0x348] sm:$0xff]
      %v3078 = vld [vmem:[%s10 + $0x350] sm:$0xff]
      %v3079 = vld [vmem:[%s10 + $0x358] sm:$0xff]
      %v3080 = vld [vmem:[%s10 + $0x360] sm:$0xff]
      %v3081 = vld [vmem:[%s10 + $0x368] sm:$0xff]
      %v3082 = vld [vmem:[%s10 + $0x370] sm:$0xff]
      %v3083 = vld [vmem:[%s10 + $0x378] sm:$0xff]
      %v3084 = vld [vmem:[%s10 + $0x380] sm:$0xff]
      %v3085 = vld [vmem:[%s10 + $0x388] sm:$0xff]
      %v3086 = vld [vmem:[%s10 + $0x390] sm:$0xff]
      %v3087 = vld [vmem:[%s10 + $0x398] sm:$0xff]
      %v3088 = vld [vmem:[%s10 + $0x3a0] sm:$0xff]
      %v3089 = vld [vmem:[%s10 + $0x3a8] sm:$0xff]
      %v3090 = vld [vmem:[%s10 + $0x3b0] sm:$0xff]
      %v3091 = vld [vmem:[%s10 + $0x3b8] sm:$0xff]
      %v3092 = vld [vmem:[%s10 + $0x3c0] sm:$0xff]
      %v3093 = vld [vmem:[%s10 + $0x3c8] sm:$0xff]
      %v3094 = vld [vmem:[%s10 + $0x3d0] sm:$0xff]
      %v3095 = vld [vmem:[%s10 + $0x3d8] sm:$0xff]
      %v3096 = vld [vmem:[%s10 + $0x3e0] sm:$0xff]
      %v3097 = vld [vmem:[%s10 + $0x3e8] sm:$0xff]
      %v3098 = vld [vmem:[%s10 + $0x3f0] sm:$0xff]
      %v3099 = vld [vmem:[%s10 + $0x3f8] sm:$0xff]
      %v3228 = vunpack.c.l.b16 %v2972
      %v3229 = vunpack.c.h.b16 %v2972
      %v3230 = vunpack.c.l.b16 %v2973
      %v3231 = vunpack.c.h.b16 %v2973
      %v3232 = vunpack.c.l.b16 %v2974
      %v3233 = vunpack.c.h.b16 %v2974
      %v3234 = vunpack.c.l.b16 %v2975
      %v3235 = vunpack.c.h.b16 %v2975
      %v3236 = vunpack.c.l.b16 %v2976
      %v3237 = vunpack.c.h.b16 %v2976
      %v3238 = vunpack.c.l.b16 %v2977
      %v3239 = vunpack.c.h.b16 %v2977
      %v3240 = vunpack.c.l.b16 %v2978
      %v3241 = vunpack.c.h.b16 %v2978
      %v3242 = vunpack.c.l.b16 %v2979
      %v3243 = vunpack.c.h.b16 %v2979
      %v3244 = vunpack.c.l.b16 %v2980
      %v3245 = vunpack.c.h.b16 %v2980
      %v3246 = vunpack.c.l.b16 %v2981
      %v3247 = vunpack.c.h.b16 %v2981
      %v3248 = vunpack.c.l.b16 %v2982
      %v3249 = vunpack.c.h.b16 %v2982
      %v3250 = vunpack.c.l.b16 %v2983
      %v3251 = vunpack.c.h.b16 %v2983
      %v3252 = vunpack.c.l.b16 %v2984
      %v3253 = vunpack.c.h.b16 %v2984
      %v3254 = vunpack.c.l.b16 %v2985
      %v3255 = vunpack.c.h.b16 %v2985
      %v3256 = vunpack.c.l.b16 %v2986
      %v3257 = vunpack.c.h.b16 %v2986
      %v3258 = vunpack.c.l.b16 %v2987
      %v3259 = vunpack.c.h.b16 %v2987
      %v3260 = vunpack.c.l.b16 %v2988
      %v3261 = vunpack.c.h.b16 %v2988
      %v3262 = vunpack.c.l.b16 %v2989
      %v3263 = vunpack.c.h.b16 %v2989
      %v3264 = vunpack.c.l.b16 %v2990
      %v3265 = vunpack.c.h.b16 %v2990
      %v3266 = vunpack.c.l.b16 %v2991
      %v3267 = vunpack.c.h.b16 %v2991
      %v3268 = vunpack.c.l.b16 %v2992
      %v3269 = vunpack.c.h.b16 %v2992
      %v3270 = vunpack.c.l.b16 %v2993
      %v3271 = vunpack.c.h.b16 %v2993
      %v3272 = vunpack.c.l.b16 %v2994
      %v3273 = vunpack.c.h.b16 %v2994
      %v3274 = vunpack.c.l.b16 %v2995
      %v3275 = vunpack.c.h.b16 %v2995
      %v3276 = vunpack.c.l.b16 %v2996
      %v3277 = vunpack.c.h.b16 %v2996
      %v3278 = vunpack.c.l.b16 %v2997
      %v3279 = vunpack.c.h.b16 %v2997
      %v3280 = vunpack.c.l.b16 %v2998
      %v3281 = vunpack.c.h.b16 %v2998
      %v3282 = vunpack.c.l.b16 %v2999
      %v3283 = vunpack.c.h.b16 %v2999
      %v3284 = vunpack.c.l.b16 %v3000
      %v3285 = vunpack.c.h.b16 %v3000
      %v3286 = vunpack.c.l.b16 %v3001
      %v3287 = vunpack.c.h.b16 %v3001
      %v3288 = vunpack.c.l.b16 %v3002
      %v3289 = vunpack.c.h.b16 %v3002
      %v3290 = vunpack.c.l.b16 %v3003
      %v3291 = vunpack.c.h.b16 %v3003
      %v3292 = vunpack.c.l.b16 %v3004
      %v3293 = vunpack.c.h.b16 %v3004
      %v3294 = vunpack.c.l.b16 %v3005
      %v3295 = vunpack.c.h.b16 %v3005
      %v3296 = vunpack.c.l.b16 %v3006
      %v3297 = vunpack.c.h.b16 %v3006
      %v3298 = vunpack.c.l.b16 %v3007
      %v3299 = vunpack.c.h.b16 %v3007
      %v3300 = vunpack.c.l.b16 %v3008
      %v3301 = vunpack.c.h.b16 %v3008
      %v3302 = vunpack.c.l.b16 %v3009
      %v3303 = vunpack.c.h.b16 %v3009
      %v3304 = vunpack.c.l.b16 %v3010
      %v3305 = vunpack.c.h.b16 %v3010
      %v3306 = vunpack.c.l.b16 %v3011
      %v3307 = vunpack.c.h.b16 %v3011
      %v3308 = vunpack.c.l.b16 %v3012
      %v3309 = vunpack.c.h.b16 %v3012
      %v3310 = vunpack.c.l.b16 %v3013
      %v3311 = vunpack.c.h.b16 %v3013
      %v3312 = vunpack.c.l.b16 %v3014
      %v3313 = vunpack.c.h.b16 %v3014
      %v3314 = vunpack.c.l.b16 %v3015
      %v3315 = vunpack.c.h.b16 %v3015
      %v3316 = vunpack.c.l.b16 %v3016
      %v3317 = vunpack.c.h.b16 %v3016
      %v3318 = vunpack.c.l.b16 %v3017
      %v3319 = vunpack.c.h.b16 %v3017
      %v3320 = vunpack.c.l.b16 %v3018
      %v3321 = vunpack.c.h.b16 %v3018
      %v3322 = vunpack.c.l.b16 %v3019
      %v3323 = vunpack.c.h.b16 %v3019
      %v3324 = vunpack.c.l.b16 %v3020
      %v3325 = vunpack.c.h.b16 %v3020
      %v3326 = vunpack.c.l.b16 %v3021
      %v3327 = vunpack.c.h.b16 %v3021
      %v3328 = vunpack.c.l.b16 %v3022
      %v3329 = vunpack.c.h.b16 %v3022
      %v3330 = vunpack.c.l.b16 %v3023
      %v3331 = vunpack.c.h.b16 %v3023
      %v3332 = vunpack.c.l.b16 %v3024
      %v3333 = vunpack.c.h.b16 %v3024
      %v3334 = vunpack.c.l.b16 %v3025
      %v3335 = vunpack.c.h.b16 %v3025
      %v3336 = vunpack.c.l.b16 %v3026
      %v3337 = vunpack.c.h.b16 %v3026
      %v3338 = vunpack.c.l.b16 %v3027
      %v3339 = vunpack.c.h.b16 %v3027
      %v3340 = vunpack.c.l.b16 %v3028
      %v3341 = vunpack.c.h.b16 %v3028
      %v3342 = vunpack.c.l.b16 %v3029
      %v3343 = vunpack.c.h.b16 %v3029
      %v3344 = vunpack.c.l.b16 %v3030
      %v3345 = vunpack.c.h.b16 %v3030
      %v3346 = vunpack.c.l.b16 %v3031
      %v3347 = vunpack.c.h.b16 %v3031
      %v3348 = vunpack.c.l.b16 %v3032
      %v3349 = vunpack.c.h.b16 %v3032
      %v3350 = vunpack.c.l.b16 %v3033
      %v3351 = vunpack.c.h.b16 %v3033
      %v3352 = vunpack.c.l.b16 %v3034
      %v3353 = vunpack.c.h.b16 %v3034
      %v3354 = vunpack.c.l.b16 %v3035
      %v3355 = vunpack.c.h.b16 %v3035
      %v3356 = vunpack.c.l.b16 %v3036
      %v3357 = vunpack.c.h.b16 %v3036
      %v3358 = vunpack.c.l.b16 %v3037
      %v3359 = vunpack.c.h.b16 %v3037
      %v3360 = vunpack.c.l.b16 %v3038
      %v3361 = vunpack.c.h.b16 %v3038
      %v3362 = vunpack.c.l.b16 %v3039
      %v3363 = vunpack.c.h.b16 %v3039
      %v3364 = vunpack.c.l.b16 %v3040
      %v3365 = vunpack.c.h.b16 %v3040
      %v3366 = vunpack.c.l.b16 %v3041
      %v3367 = vunpack.c.h.b16 %v3041
      %v3368 = vunpack.c.l.b16 %v3042
      %v3369 = vunpack.c.h.b16 %v3042
      %v3370 = vunpack.c.l.b16 %v3043
      %v3371 = vunpack.c.h.b16 %v3043
      %v3372 = vunpack.c.l.b16 %v3044
      %v3373 = vunpack.c.h.b16 %v3044
      %v3374 = vunpack.c.l.b16 %v3045
      %v3375 = vunpack.c.h.b16 %v3045
      %v3376 = vunpack.c.l.b16 %v3046
      %v3377 = vunpack.c.h.b16 %v3046
      %v3378 = vunpack.c.l.b16 %v3047
      %v3379 = vunpack.c.h.b16 %v3047
      %v3380 = vunpack.c.l.b16 %v3048
      %v3381 = vunpack.c.h.b16 %v3048
      %v3382 = vunpack.c.l.b16 %v3049
      %v3383 = vunpack.c.h.b16 %v3049
      %v3384 = vunpack.c.l.b16 %v3050
      %v3385 = vunpack.c.h.b16 %v3050
      %v3386 = vunpack.c.l.b16 %v3051
      %v3387 = vunpack.c.h.b16 %v3051
      %v3388 = vunpack.c.l.b16 %v3052
      %v3389 = vunpack.c.h.b16 %v3052
      %v3390 = vunpack.c.l.b16 %v3053
      %v3391 = vunpack.c.h.b16 %v3053
      %v3392 = vunpack.c.l.b16 %v3054
      %v3393 = vunpack.c.h.b16 %v3054
      %v3394 = vunpack.c.l.b16 %v3055
      %v3395 = vunpack.c.h.b16 %v3055
      %v3396 = vunpack.c.l.b16 %v3056
      %v3397 = vunpack.c.h.b16 %v3056
      %v3398 = vunpack.c.l.b16 %v3057
      %v3399 = vunpack.c.h.b16 %v3057
      %v3400 = vunpack.c.l.b16 %v3058
      %v3401 = vunpack.c.h.b16 %v3058
      %v3402 = vunpack.c.l.b16 %v3059
      %v3403 = vunpack.c.h.b16 %v3059
      %v3404 = vunpack.c.l.b16 %v3060
      %v3405 = vunpack.c.h.b16 %v3060
      %v3406 = vunpack.c.l.b16 %v3061
      %v3407 = vunpack.c.h.b16 %v3061
      %v3408 = vunpack.c.l.b16 %v3062
      %v3409 = vunpack.c.h.b16 %v3062
      %v3410 = vunpack.c.l.b16 %v3063
      %v3411 = vunpack.c.h.b16 %v3063
      %v3412 = vunpack.c.l.b16 %v3064
      %v3413 = vunpack.c.h.b16 %v3064
      %v3414 = vunpack.c.l.b16 %v3065
      %v3415 = vunpack.c.h.b16 %v3065
      %v3416 = vunpack.c.l.b16 %v3066
      %v3417 = vunpack.c.h.b16 %v3066
      %v3418 = vunpack.c.l.b16 %v3067
      %v3419 = vunpack.c.h.b16 %v3067
      %v3420 = vunpack.c.l.b16 %v3068
      %v3421 = vunpack.c.h.b16 %v3068
      %v3422 = vunpack.c.l.b16 %v3069
      %v3423 = vunpack.c.h.b16 %v3069
      %v3424 = vunpack.c.l.b16 %v3070
      %v3425 = vunpack.c.h.b16 %v3070
      %v3426 = vunpack.c.l.b16 %v3071
      %v3427 = vunpack.c.h.b16 %v3071
      %v3428 = vunpack.c.l.b16 %v3072
      %v3429 = vunpack.c.h.b16 %v3072
      %v3430 = vunpack.c.l.b16 %v3073
      %v3431 = vunpack.c.h.b16 %v3073
      %v3432 = vunpack.c.l.b16 %v3074
      %v3433 = vunpack.c.h.b16 %v3074
      %v3434 = vunpack.c.l.b16 %v3075
      %v3435 = vunpack.c.h.b16 %v3075
      %v3436 = vunpack.c.l.b16 %v3076
      %v3437 = vunpack.c.h.b16 %v3076
      %v3438 = vunpack.c.l.b16 %v3077
      %v3439 = vunpack.c.h.b16 %v3077
      %v3440 = vunpack.c.l.b16 %v3078
      %v3441 = vunpack.c.h.b16 %v3078
      %v3442 = vunpack.c.l.b16 %v3079
      %v3443 = vunpack.c.h.b16 %v3079
      %v3444 = vunpack.c.l.b16 %v3080
      %v3445 = vunpack.c.h.b16 %v3080
      %v3446 = vunpack.c.l.b16 %v3081
      %v3447 = vunpack.c.h.b16 %v3081
      %v3448 = vunpack.c.l.b16 %v3082
      %v3449 = vunpack.c.h.b16 %v3082
      %v3450 = vunpack.c.l.b16 %v3083
      %v3451 = vunpack.c.h.b16 %v3083
      %v3452 = vunpack.c.l.b16 %v3084
      %v3453 = vunpack.c.h.b16 %v3084
      %v3454 = vunpack.c.l.b16 %v3085
      %v3455 = vunpack.c.h.b16 %v3085
      %v3456 = vunpack.c.l.b16 %v3086
      %v3457 = vunpack.c.h.b16 %v3086
      %v3458 = vunpack.c.l.b16 %v3087
      %v3459 = vunpack.c.h.b16 %v3087
      %v3460 = vunpack.c.l.b16 %v3088
      %v3461 = vunpack.c.h.b16 %v3088
      %v3462 = vunpack.c.l.b16 %v3089
      %v3463 = vunpack.c.h.b16 %v3089
      %v3464 = vunpack.c.l.b16 %v3090
      %v3465 = vunpack.c.h.b16 %v3090
      %v3466 = vunpack.c.l.b16 %v3091
      %v3467 = vunpack.c.h.b16 %v3091
      %v3468 = vunpack.c.l.b16 %v3092
      %v3469 = vunpack.c.h.b16 %v3092
      %v3470 = vunpack.c.l.b16 %v3093
      %v3471 = vunpack.c.h.b16 %v3093
      %v3472 = vunpack.c.l.b16 %v3094
      %v3473 = vunpack.c.h.b16 %v3094
      %v3474 = vunpack.c.l.b16 %v3095
      %v3475 = vunpack.c.h.b16 %v3095
      %v3476 = vunpack.c.l.b16 %v3096
      %v3477 = vunpack.c.h.b16 %v3096
      %v3478 = vunpack.c.l.b16 %v3097
      %v3479 = vunpack.c.h.b16 %v3097
      %v3480 = vunpack.c.l.b16 %v3098
      %v3481 = vunpack.c.h.b16 %v3098
      %v3482 = vunpack.c.l.b16 %v3099
      %v3483 = vunpack.c.h.b16 %v3099
      %v3484 = vpack.c.b16 %v3232, %v3228
      %v3485 = vpack.c.b16 %v3233, %v3229
      %v3486 = vpack.c.b16 %v3234, %v3230
      %v3487 = vpack.c.b16 %v3235, %v3231
      %v3488 = vpack.c.b16 %v3240, %v3236
      %v3489 = vpack.c.b16 %v3241, %v3237
      %v3490 = vpack.c.b16 %v3242, %v3238
      %v3491 = vpack.c.b16 %v3243, %v3239
      %v3492 = vpack.c.b16 %v3248, %v3244
      %v3493 = vpack.c.b16 %v3249, %v3245
      %v3494 = vpack.c.b16 %v3250, %v3246
      %v3495 = vpack.c.b16 %v3251, %v3247
      %v3496 = vpack.c.b16 %v3256, %v3252
      %v3497 = vpack.c.b16 %v3257, %v3253
      %v3498 = vpack.c.b16 %v3258, %v3254
      %v3499 = vpack.c.b16 %v3259, %v3255
      %v3500 = vpack.c.b16 %v3264, %v3260
      %v3501 = vpack.c.b16 %v3265, %v3261
      %v3502 = vpack.c.b16 %v3266, %v3262
      %v3503 = vpack.c.b16 %v3267, %v3263
      %v3504 = vpack.c.b16 %v3272, %v3268
      %v3505 = vpack.c.b16 %v3273, %v3269
      %v3506 = vpack.c.b16 %v3274, %v3270
      %v3507 = vpack.c.b16 %v3275, %v3271
      %v3508 = vpack.c.b16 %v3280, %v3276
      %v3509 = vpack.c.b16 %v3281, %v3277
      %v3510 = vpack.c.b16 %v3282, %v3278
      %v3511 = vpack.c.b16 %v3283, %v3279
      %v3512 = vpack.c.b16 %v3288, %v3284
      %v3513 = vpack.c.b16 %v3289, %v3285
      %v3514 = vpack.c.b16 %v3290, %v3286
      %v3515 = vpack.c.b16 %v3291, %v3287
      %v3516 = vpack.c.b16 %v3296, %v3292
      %v3517 = vpack.c.b16 %v3297, %v3293
      %v3518 = vpack.c.b16 %v3298, %v3294
      %v3519 = vpack.c.b16 %v3299, %v3295
      %v3520 = vpack.c.b16 %v3304, %v3300
      %v3521 = vpack.c.b16 %v3305, %v3301
      %v3522 = vpack.c.b16 %v3306, %v3302
      %v3523 = vpack.c.b16 %v3307, %v3303
      %v3524 = vpack.c.b16 %v3312, %v3308
      %v3525 = vpack.c.b16 %v3313, %v3309
      %v3526 = vpack.c.b16 %v3314, %v3310
      %v3527 = vpack.c.b16 %v3315, %v3311
      %v3528 = vpack.c.b16 %v3320, %v3316
      %v3529 = vpack.c.b16 %v3321, %v3317
      %v3530 = vpack.c.b16 %v3322, %v3318
      %v3531 = vpack.c.b16 %v3323, %v3319
      %v3532 = vpack.c.b16 %v3328, %v3324
      %v3533 = vpack.c.b16 %v3329, %v3325
      %v3534 = vpack.c.b16 %v3330, %v3326
      %v3535 = vpack.c.b16 %v3331, %v3327
      %v3536 = vpack.c.b16 %v3336, %v3332
      %v3537 = vpack.c.b16 %v3337, %v3333
      %v3538 = vpack.c.b16 %v3338, %v3334
      %v3539 = vpack.c.b16 %v3339, %v3335
      %v3540 = vpack.c.b16 %v3344, %v3340
      %v3541 = vpack.c.b16 %v3345, %v3341
      %v3542 = vpack.c.b16 %v3346, %v3342
      %v3543 = vpack.c.b16 %v3347, %v3343
      %v3544 = vpack.c.b16 %v3352, %v3348
      %v3545 = vpack.c.b16 %v3353, %v3349
      %v3546 = vpack.c.b16 %v3354, %v3350
      %v3547 = vpack.c.b16 %v3355, %v3351
      %v3548 = vpack.c.b16 %v3360, %v3356
      %v3549 = vpack.c.b16 %v3361, %v3357
      %v3550 = vpack.c.b16 %v3362, %v3358
      %v3551 = vpack.c.b16 %v3363, %v3359
      %v3552 = vpack.c.b16 %v3368, %v3364
      %v3553 = vpack.c.b16 %v3369, %v3365
      %v3554 = vpack.c.b16 %v3370, %v3366
      %v3555 = vpack.c.b16 %v3371, %v3367
      %v3556 = vpack.c.b16 %v3376, %v3372
      %v3557 = vpack.c.b16 %v3377, %v3373
      %v3558 = vpack.c.b16 %v3378, %v3374
      %v3559 = vpack.c.b16 %v3379, %v3375
      %v3560 = vpack.c.b16 %v3384, %v3380
      %v3561 = vpack.c.b16 %v3385, %v3381
      %v3562 = vpack.c.b16 %v3386, %v3382
      %v3563 = vpack.c.b16 %v3387, %v3383
      %v3564 = vpack.c.b16 %v3392, %v3388
      %v3565 = vpack.c.b16 %v3393, %v3389
      %v3566 = vpack.c.b16 %v3394, %v3390
      %v3567 = vpack.c.b16 %v3395, %v3391
      %v3568 = vpack.c.b16 %v3400, %v3396
      %v3569 = vpack.c.b16 %v3401, %v3397
      %v3570 = vpack.c.b16 %v3402, %v3398
      %v3571 = vpack.c.b16 %v3403, %v3399
      %v3572 = vpack.c.b16 %v3408, %v3404
      %v3573 = vpack.c.b16 %v3409, %v3405
      %v3574 = vpack.c.b16 %v3410, %v3406
      %v3575 = vpack.c.b16 %v3411, %v3407
      %v3576 = vpack.c.b16 %v3416, %v3412
      %v3577 = vpack.c.b16 %v3417, %v3413
      %v3578 = vpack.c.b16 %v3418, %v3414
      %v3579 = vpack.c.b16 %v3419, %v3415
      %v3580 = vpack.c.b16 %v3424, %v3420
      %v3581 = vpack.c.b16 %v3425, %v3421
      %v3582 = vpack.c.b16 %v3426, %v3422
      %v3583 = vpack.c.b16 %v3427, %v3423
      %v3584 = vpack.c.b16 %v3432, %v3428
      %v3585 = vpack.c.b16 %v3433, %v3429
      %v3586 = vpack.c.b16 %v3434, %v3430
      %v3587 = vpack.c.b16 %v3435, %v3431
      %v3588 = vpack.c.b16 %v3440, %v3436
      %v3589 = vpack.c.b16 %v3441, %v3437
      %v3590 = vpack.c.b16 %v3442, %v3438
      %v3591 = vpack.c.b16 %v3443, %v3439
      %v3592 = vpack.c.b16 %v3448, %v3444
      %v3593 = vpack.c.b16 %v3449, %v3445
      %v3594 = vpack.c.b16 %v3450, %v3446
      %v3595 = vpack.c.b16 %v3451, %v3447
      %v3596 = vpack.c.b16 %v3456, %v3452
      %v3597 = vpack.c.b16 %v3457, %v3453
      %v3598 = vpack.c.b16 %v3458, %v3454
      %v3599 = vpack.c.b16 %v3459, %v3455
      %v3600 = vpack.c.b16 %v3464, %v3460
      %v3601 = vpack.c.b16 %v3465, %v3461
      %v3602 = vpack.c.b16 %v3466, %v3462
      %v3603 = vpack.c.b16 %v3467, %v3463
      %v3604 = vpack.c.b16 %v3472, %v3468
      %v3605 = vpack.c.b16 %v3473, %v3469
      %v3606 = vpack.c.b16 %v3474, %v3470
      %v3607 = vpack.c.b16 %v3475, %v3471
      %v3608 = vpack.c.b16 %v3480, %v3476
      %v3609 = vpack.c.b16 %v3481, %v3477
      %v3610 = vpack.c.b16 %v3482, %v3478
      %v3611 = vpack.c.b16 %v3483, %v3479
      %3740 = vmatpush.bf16.msra.mxu0 %v3512
      %3741 = vmatpush.bf16.msra.mxu0 %v3508
      %3742 = vmatpush.bf16.msra.mxu0 %v3504
      %3743 = vmatpush.bf16.msra.mxu0 %v3500
      %3744 = vmatpush.bf16.msra.mxu0 %v3496
      %3745 = vmatpush.bf16.msra.mxu0 %v3492
      %3746 = vmatpush.bf16.msra.mxu0 %v3488
      %3747 = vmatpush.bf16.msra.mxu0 %v3484
      %3748 = vmatmul.bf16.gmra.mxu0 %v2956
      %v3749 = vpop.f32.mrf.mxu0
      %v3750 = vadd.f32 0.0, %v3749
      %v3751 = vpop.f32.mrf.mxu0
      %v3752 = vadd.f32 0.0, %v3751
      %3753 = vmatmul.bf16.gmra.mxu0 %v2960
      %v3754 = vpop.f32.mrf.mxu0
      %v3755 = vadd.f32 0.0, %v3754
      %v3756 = vpop.f32.mrf.mxu0
      %v3757 = vadd.f32 0.0, %v3756
      %3758 = vmatmul.bf16.gmra.mxu0 %v2964
      %v3759 = vpop.f32.mrf.mxu0
      %v3760 = vadd.f32 0.0, %v3759
      %v3761 = vpop.f32.mrf.mxu0
      %v3762 = vadd.f32 0.0, %v3761
      %3763 = vmatmul.bf16.gmra.mxu0 %v2968
      %v3764 = vpop.f32.mrf.mxu0
      %v3765 = vadd.f32 0.0, %v3764
      %v3766 = vpop.f32.mrf.mxu0
      %v3767 = vadd.f32 0.0, %v3766
      %3768 = vdwg.mxu0
      %3769 = vmatpush.bf16.msra.mxu0 %v3544
      %3770 = vmatpush.bf16.msra.mxu0 %v3540
      %3771 = vmatpush.bf16.msra.mxu0 %v3536
      %3772 = vmatpush.bf16.msra.mxu0 %v3532
      %3773 = vmatpush.bf16.msra.mxu0 %v3528
      %3774 = vmatpush.bf16.msra.mxu0 %v3524
      %3775 = vmatpush.bf16.msra.mxu0 %v3520
      %3776 = vmatpush.bf16.msra.mxu0 %v3516
      %3777 = vmatmul.bf16.gmra.mxu0 %v2957
      %v3778 = vpop.f32.mrf.mxu0
      %v3779 = vadd.f32 %v3750, %v3778
      %v3780 = vpop.f32.mrf.mxu0
      %v3781 = vadd.f32 %v3752, %v3780
      %3782 = vmatmul.bf16.gmra.mxu0 %v2961
      %v3783 = vpop.f32.mrf.mxu0
      %v3784 = vadd.f32 %v3755, %v3783
      %v3785 = vpop.f32.mrf.mxu0
      %v3786 = vadd.f32 %v3757, %v3785
      %3787 = vmatmul.bf16.gmra.mxu0 %v2965
      %v3788 = vpop.f32.mrf.mxu0
      %v3789 = vadd.f32 %v3760, %v3788
      %v3790 = vpop.f32.mrf.mxu0
      %v3791 = vadd.f32 %v3762, %v3790
      %3792 = vmatmul.bf16.gmra.mxu0 %v2969
      %v3793 = vpop.f32.mrf.mxu0
      %v3794 = vadd.f32 %v3765, %v3793
      %v3795 = vpop.f32.mrf.mxu0
      %v3796 = vadd.f32 %v3767, %v3795
      %3797 = vdwg.mxu0
      %3798 = vmatpush.bf16.msra.mxu0 %v3576
      %3799 = vmatpush.bf16.msra.mxu0 %v3572
      %3800 = vmatpush.bf16.msra.mxu0 %v3568
      %3801 = vmatpush.bf16.msra.mxu0 %v3564
      %3802 = vmatpush.bf16.msra.mxu0 %v3560
      %3803 = vmatpush.bf16.msra.mxu0 %v3556
      %3804 = vmatpush.bf16.msra.mxu0 %v3552
      %3805 = vmatpush.bf16.msra.mxu0 %v3548
      %3806 = vmatmul.bf16.gmra.mxu0 %v2958
      %v3807 = vpop.f32.mrf.mxu0
      %v3808 = vadd.f32 %v3779, %v3807
      %v3809 = vpop.f32.mrf.mxu0
      %v3810 = vadd.f32 %v3781, %v3809
      %3811 = vmatmul.bf16.gmra.mxu0 %v2962
      %v3812 = vpop.f32.mrf.mxu0
      %v3813 = vadd.f32 %v3784, %v3812
      %v3814 = vpop.f32.mrf.mxu0
      %v3815 = vadd.f32 %v3786, %v3814
      %3816 = vmatmul.bf16.gmra.mxu0 %v2966
      %v3817 = vpop.f32.mrf.mxu0
      %v3818 = vadd.f32 %v3789, %v3817
      %v3819 = vpop.f32.mrf.mxu0
      %v3820 = vadd.f32 %v3791, %v3819
      %3821 = vmatmul.bf16.gmra.mxu0 %v2970
      %v3822 = vpop.f32.mrf.mxu0
      %v3823 = vadd.f32 %v3794, %v3822
      %v3824 = vpop.f32.mrf.mxu0
      %v3825 = vadd.f32 %v3796, %v3824
      %3826 = vdwg.mxu0
      %3827 = vmatpush.bf16.msra.mxu0 %v3608
      %3828 = vmatpush.bf16.msra.mxu0 %v3604
      %3829 = vmatpush.bf16.msra.mxu0 %v3600
      %3830 = vmatpush.bf16.msra.mxu0 %v3596
      %3831 = vmatpush.bf16.msra.mxu0 %v3592
      %3832 = vmatpush.bf16.msra.mxu0 %v3588
      %3833 = vmatpush.bf16.msra.mxu0 %v3584
      %3834 = vmatpush.bf16.msra.mxu0 %v3580
      %3835 = vmatmul.bf16.gmra.mxu0 %v2959
      %v3836 = vpop.f32.mrf.mxu0
      %v3837 = vadd.f32 %v3808, %v3836
      %v3838 = vpop.f32.mrf.mxu0
      %v3839 = vadd.f32 %v3810, %v3838
      %3840 = vmatmul.bf16.gmra.mxu0 %v2963
      %v3841 = vpop.f32.mrf.mxu0
      %v3842 = vadd.f32 %v3813, %v3841
      %v3843 = vpop.f32.mrf.mxu0
      %v3844 = vadd.f32 %v3815, %v3843
      %3845 = vmatmul.bf16.gmra.mxu0 %v2967
      %v3846 = vpop.f32.mrf.mxu0
      %v3847 = vadd.f32 %v3818, %v3846
      %v3848 = vpop.f32.mrf.mxu0
      %v3849 = vadd.f32 %v3820, %v3848
      %3850 = vmatmul.bf16.gmra.mxu0 %v2971
      %v3851 = vpop.f32.mrf.mxu0
      %v3852 = vadd.f32 %v3823, %v3851
      %v3853 = vpop.f32.mrf.mxu0
      %v3854 = vadd.f32 %v3825, %v3853
      %3855 = vdwg.mxu0
      %3856 = vmatpush.bf16.msra.mxu0 %v3513
      %3857 = vmatpush.bf16.msra.mxu0 %v3509
      %3858 = vmatpush.bf16.msra.mxu0 %v3505
      %3859 = vmatpush.bf16.msra.mxu0 %v3501
      %3860 = vmatpush.bf16.msra.mxu0 %v3497
      %3861 = vmatpush.bf16.msra.mxu0 %v3493
      %3862 = vmatpush.bf16.msra.mxu0 %v3489
      %3863 = vmatpush.bf16.msra.mxu0 %v3485
      %3864 = vmatmul.bf16.gmra.mxu0 %v2956
      %v3865 = vpop.f32.mrf.mxu0
      %v3866 = vadd.f32 0.0, %v3865
      %v3867 = vpop.f32.mrf.mxu0
      %v3868 = vadd.f32 0.0, %v3867
      %3869 = vmatmul.bf16.gmra.mxu0 %v2960
      %v3870 = vpop.f32.mrf.mxu0
      %v3871 = vadd.f32 0.0, %v3870
      %v3872 = vpop.f32.mrf.mxu0
      %v3873 = vadd.f32 0.0, %v3872
      %3874 = vmatmul.bf16.gmra.mxu0 %v2964
      %v3875 = vpop.f32.mrf.mxu0
      %v3876 = vadd.f32 0.0, %v3875
      %v3877 = vpop.f32.mrf.mxu0
      %v3878 = vadd.f32 0.0, %v3877
      %3879 = vmatmul.bf16.gmra.mxu0 %v2968
      %v3880 = vpop.f32.mrf.mxu0
      %v3881 = vadd.f32 0.0, %v3880
      %v3882 = vpop.f32.mrf.mxu0
      %v3883 = vadd.f32 0.0, %v3882
      %3884 = vdwg.mxu0
      %3885 = vmatpush.bf16.msra.mxu0 %v3545
      %3886 = vmatpush.bf16.msra.mxu0 %v3541
      %3887 = vmatpush.bf16.msra.mxu0 %v3537
      %3888 = vmatpush.bf16.msra.mxu0 %v3533
      %3889 = vmatpush.bf16.msra.mxu0 %v3529
      %3890 = vmatpush.bf16.msra.mxu0 %v3525
      %3891 = vmatpush.bf16.msra.mxu0 %v3521
      %3892 = vmatpush.bf16.msra.mxu0 %v3517
      %3893 = vmatmul.bf16.gmra.mxu0 %v2957
      %v3894 = vpop.f32.mrf.mxu0
      %v3895 = vadd.f32 %v3866, %v3894
      %v3896 = vpop.f32.mrf.mxu0
      %v3897 = vadd.f32 %v3868, %v3896
      %3898 = vmatmul.bf16.gmra.mxu0 %v2961
      %v3899 = vpop.f32.mrf.mxu0
      %v3900 = vadd.f32 %v3871, %v3899
      %v3901 = vpop.f32.mrf.mxu0
      %v3902 = vadd.f32 %v3873, %v3901
      %3903 = vmatmul.bf16.gmra.mxu0 %v2965
      %v3904 = vpop.f32.mrf.mxu0
      %v3905 = vadd.f32 %v3876, %v3904
      %v3906 = vpop.f32.mrf.mxu0
      %v3907 = vadd.f32 %v3878, %v3906
      %3908 = vmatmul.bf16.gmra.mxu0 %v2969
      %v3909 = vpop.f32.mrf.mxu0
      %v3910 = vadd.f32 %v3881, %v3909
      %v3911 = vpop.f32.mrf.mxu0
      %v3912 = vadd.f32 %v3883, %v3911
      %3913 = vdwg.mxu0
      %3914 = vmatpush.bf16.msra.mxu0 %v3577
      %3915 = vmatpush.bf16.msra.mxu0 %v3573
      %3916 = vmatpush.bf16.msra.mxu0 %v3569
      %3917 = vmatpush.bf16.msra.mxu0 %v3565
      %3918 = vmatpush.bf16.msra.mxu0 %v3561
      %3919 = vmatpush.bf16.msra.mxu0 %v3557
      %3920 = vmatpush.bf16.msra.mxu0 %v3553
      %3921 = vmatpush.bf16.msra.mxu0 %v3549
      %3922 = vmatmul.bf16.gmra.mxu0 %v2958
      %v3923 = vpop.f32.mrf.mxu0
      %v3924 = vadd.f32 %v3895, %v3923
      %v3925 = vpop.f32.mrf.mxu0
      %v3926 = vadd.f32 %v3897, %v3925
      %3927 = vmatmul.bf16.gmra.mxu0 %v2962
      %v3928 = vpop.f32.mrf.mxu0
      %v3929 = vadd.f32 %v3900, %v3928
      %v3930 = vpop.f32.mrf.mxu0
      %v3931 = vadd.f32 %v3902, %v3930
      %3932 = vmatmul.bf16.gmra.mxu0 %v2966
      %v3933 = vpop.f32.mrf.mxu0
      %v3934 = vadd.f32 %v3905, %v3933
      %v3935 = vpop.f32.mrf.mxu0
      %v3936 = vadd.f32 %v3907, %v3935
      %3937 = vmatmul.bf16.gmra.mxu0 %v2970
      %v3938 = vpop.f32.mrf.mxu0
      %v3939 = vadd.f32 %v3910, %v3938
      %v3940 = vpop.f32.mrf.mxu0
      %v3941 = vadd.f32 %v3912, %v3940
      %3942 = vdwg.mxu0
      %3943 = vmatpush.bf16.msra.mxu0 %v3609
      %3944 = vmatpush.bf16.msra.mxu0 %v3605
      %3945 = vmatpush.bf16.msra.mxu0 %v3601
      %3946 = vmatpush.bf16.msra.mxu0 %v3597
      %3947 = vmatpush.bf16.msra.mxu0 %v3593
      %3948 = vmatpush.bf16.msra.mxu0 %v3589
      %3949 = vmatpush.bf16.msra.mxu0 %v3585
      %3950 = vmatpush.bf16.msra.mxu0 %v3581
      %3951 = vmatmul.bf16.gmra.mxu0 %v2959
      %v3952 = vpop.f32.mrf.mxu0
      %v3953 = vadd.f32 %v3924, %v3952
      %v3954 = vpop.f32.mrf.mxu0
      %v3955 = vadd.f32 %v3926, %v3954
      %3956 = vmatmul.bf16.gmra.mxu0 %v2963
      %v3957 = vpop.f32.mrf.mxu0
      %v3958 = vadd.f32 %v3929, %v3957
      %v3959 = vpop.f32.mrf.mxu0
      %v3960 = vadd.f32 %v3931, %v3959
      %3961 = vmatmul.bf16.gmra.mxu0 %v2967
      %v3962 = vpop.f32.mrf.mxu0
      %v3963 = vadd.f32 %v3934, %v3962
      %v3964 = vpop.f32.mrf.mxu0
      %v3965 = vadd.f32 %v3936, %v3964
      %3966 = vmatmul.bf16.gmra.mxu0 %v2971
      %v3967 = vpop.f32.mrf.mxu0
      %v3968 = vadd.f32 %v3939, %v3967
      %v3969 = vpop.f32.mrf.mxu0
      %v3970 = vadd.f32 %v3941, %v3969
      %3971 = vdwg.mxu0
      %3972 = vmatpush.bf16.msra.mxu0 %v3514
      %3973 = vmatpush.bf16.msra.mxu0 %v3510
      %3974 = vmatpush.bf16.msra.mxu0 %v3506
      %3975 = vmatpush.bf16.msra.mxu0 %v3502
      %3976 = vmatpush.bf16.msra.mxu0 %v3498
      %3977 = vmatpush.bf16.msra.mxu0 %v3494
      %3978 = vmatpush.bf16.msra.mxu0 %v3490
      %3979 = vmatpush.bf16.msra.mxu0 %v3486
      %3980 = vmatmul.bf16.gmra.mxu0 %v2956
      %v3981 = vpop.f32.mrf.mxu0
      %v3982 = vadd.f32 0.0, %v3981
      %v3983 = vpop.f32.mrf.mxu0
      %v3984 = vadd.f32 0.0, %v3983
      %3985 = vmatmul.bf16.gmra.mxu0 %v2960
      %v3986 = vpop.f32.mrf.mxu0
      %v3987 = vadd.f32 0.0, %v3986
      %v3988 = vpop.f32.mrf.mxu0
      %v3989 = vadd.f32 0.0, %v3988
      %3990 = vmatmul.bf16.gmra.mxu0 %v2964
      %v3991 = vpop.f32.mrf.mxu0
      %v3992 = vadd.f32 0.0, %v3991
      %v3993 = vpop.f32.mrf.mxu0
      %v3994 = vadd.f32 0.0, %v3993
      %3995 = vmatmul.bf16.gmra.mxu0 %v2968
      %v3996 = vpop.f32.mrf.mxu0
      %v3997 = vadd.f32 0.0, %v3996
      %v3998 = vpop.f32.mrf.mxu0
      %v3999 = vadd.f32 0.0, %v3998
      %4000 = vdwg.mxu0
      %4001 = vmatpush.bf16.msra.mxu0 %v3546
      %4002 = vmatpush.bf16.msra.mxu0 %v3542
      %4003 = vmatpush.bf16.msra.mxu0 %v3538
      %4004 = vmatpush.bf16.msra.mxu0 %v3534
      %4005 = vmatpush.bf16.msra.mxu0 %v3530
      %4006 = vmatpush.bf16.msra.mxu0 %v3526
      %4007 = vmatpush.bf16.msra.mxu0 %v3522
      %4008 = vmatpush.bf16.msra.mxu0 %v3518
      %4009 = vmatmul.bf16.gmra.mxu0 %v2957
      %v4010 = vpop.f32.mrf.mxu0
      %v4011 = vadd.f32 %v3982, %v4010
      %v4012 = vpop.f32.mrf.mxu0
      %v4013 = vadd.f32 %v3984, %v4012
      %4014 = vmatmul.bf16.gmra.mxu0 %v2961
      %v4015 = vpop.f32.mrf.mxu0
      %v4016 = vadd.f32 %v3987, %v4015
      %v4017 = vpop.f32.mrf.mxu0
      %v4018 = vadd.f32 %v3989, %v4017
      %4019 = vmatmul.bf16.gmra.mxu0 %v2965
      %v4020 = vpop.f32.mrf.mxu0
      %v4021 = vadd.f32 %v3992, %v4020
      %v4022 = vpop.f32.mrf.mxu0
      %v4023 = vadd.f32 %v3994, %v4022
      %4024 = vmatmul.bf16.gmra.mxu0 %v2969
      %v4025 = vpop.f32.mrf.mxu0
      %v4026 = vadd.f32 %v3997, %v4025
      %v4027 = vpop.f32.mrf.mxu0
      %v4028 = vadd.f32 %v3999, %v4027
      %4029 = vdwg.mxu0
      %4030 = vmatpush.bf16.msra.mxu0 %v3578
      %4031 = vmatpush.bf16.msra.mxu0 %v3574
      %4032 = vmatpush.bf16.msra.mxu0 %v3570
      %4033 = vmatpush.bf16.msra.mxu0 %v3566
      %4034 = vmatpush.bf16.msra.mxu0 %v3562
      %4035 = vmatpush.bf16.msra.mxu0 %v3558
      %4036 = vmatpush.bf16.msra.mxu0 %v3554
      %4037 = vmatpush.bf16.msra.mxu0 %v3550
      %4038 = vmatmul.bf16.gmra.mxu0 %v2958
      %v4039 = vpop.f32.mrf.mxu0
      %v4040 = vadd.f32 %v4011, %v4039
      %v4041 = vpop.f32.mrf.mxu0
      %v4042 = vadd.f32 %v4013, %v4041
      %4043 = vmatmul.bf16.gmra.mxu0 %v2962
      %v4044 = vpop.f32.mrf.mxu0
      %v4045 = vadd.f32 %v4016, %v4044
      %v4046 = vpop.f32.mrf.mxu0
      %v4047 = vadd.f32 %v4018, %v4046
      %4048 = vmatmul.bf16.gmra.mxu0 %v2966
      %v4049 = vpop.f32.mrf.mxu0
      %v4050 = vadd.f32 %v4021, %v4049
      %v4051 = vpop.f32.mrf.mxu0
      %v4052 = vadd.f32 %v4023, %v4051
      %4053 = vmatmul.bf16.gmra.mxu0 %v2970
      %v4054 = vpop.f32.mrf.mxu0
      %v4055 = vadd.f32 %v4026, %v4054
      %v4056 = vpop.f32.mrf.mxu0
      %v4057 = vadd.f32 %v4028, %v4056
      %4058 = vdwg.mxu0
      %4059 = vmatpush.bf16.msra.mxu0 %v3610
      %4060 = vmatpush.bf16.msra.mxu0 %v3606
      %4061 = vmatpush.bf16.msra.mxu0 %v3602
      %4062 = vmatpush.bf16.msra.mxu0 %v3598
      %4063 = vmatpush.bf16.msra.mxu0 %v3594
      %4064 = vmatpush.bf16.msra.mxu0 %v3590
      %4065 = vmatpush.bf16.msra.mxu0 %v3586
      %4066 = vmatpush.bf16.msra.mxu0 %v3582
      %4067 = vmatmul.bf16.gmra.mxu0 %v2959
      %v4068 = vpop.f32.mrf.mxu0
      %v4069 = vadd.f32 %v4040, %v4068
      %v4070 = vpop.f32.mrf.mxu0
      %v4071 = vadd.f32 %v4042, %v4070
      %4072 = vmatmul.bf16.gmra.mxu0 %v2963
      %v4073 = vpop.f32.mrf.mxu0
      %v4074 = vadd.f32 %v4045, %v4073
      %v4075 = vpop.f32.mrf.mxu0
      %v4076 = vadd.f32 %v4047, %v4075
      %4077 = vmatmul.bf16.gmra.mxu0 %v2967
      %v4078 = vpop.f32.mrf.mxu0
      %v4079 = vadd.f32 %v4050, %v4078
      %v4080 = vpop.f32.mrf.mxu0
      %v4081 = vadd.f32 %v4052, %v4080
      %4082 = vmatmul.bf16.gmra.mxu0 %v2971
      %v4083 = vpop.f32.mrf.mxu0
      %v4084 = vadd.f32 %v4055, %v4083
      %v4085 = vpop.f32.mrf.mxu0
      %v4086 = vadd.f32 %v4057, %v4085
      %4087 = vdwg.mxu0
      %4088 = vmatpush.bf16.msra.mxu0 %v3515
      %4089 = vmatpush.bf16.msra.mxu0 %v3511
      %4090 = vmatpush.bf16.msra.mxu0 %v3507
      %4091 = vmatpush.bf16.msra.mxu0 %v3503
      %4092 = vmatpush.bf16.msra.mxu0 %v3499
      %4093 = vmatpush.bf16.msra.mxu0 %v3495
      %4094 = vmatpush.bf16.msra.mxu0 %v3491
      %4095 = vmatpush.bf16.msra.mxu0 %v3487
      %4096 = vmatmul.bf16.gmra.mxu0 %v2956
      %v4097 = vpop.f32.mrf.mxu0
      %v4098 = vadd.f32 0.0, %v4097
      %v4099 = vpop.f32.mrf.mxu0
      %v4100 = vadd.f32 0.0, %v4099
      %4101 = vmatmul.bf16.gmra.mxu0 %v2960
      %v4102 = vpop.f32.mrf.mxu0
      %v4103 = vadd.f32 0.0, %v4102
      %v4104 = vpop.f32.mrf.mxu0
      %v4105 = vadd.f32 0.0, %v4104
      %4106 = vmatmul.bf16.gmra.mxu0 %v2964
      %v4107 = vpop.f32.mrf.mxu0
      %v4108 = vadd.f32 0.0, %v4107
      %v4109 = vpop.f32.mrf.mxu0
      %v4110 = vadd.f32 0.0, %v4109
      %4111 = vmatmul.bf16.gmra.mxu0 %v2968
      %v4112 = vpop.f32.mrf.mxu0
      %v4113 = vadd.f32 0.0, %v4112
      %v4114 = vpop.f32.mrf.mxu0
      %v4115 = vadd.f32 0.0, %v4114
      %4116 = vdwg.mxu0
      %4117 = vmatpush.bf16.msra.mxu0 %v3547
      %4118 = vmatpush.bf16.msra.mxu0 %v3543
      %4119 = vmatpush.bf16.msra.mxu0 %v3539
      %4120 = vmatpush.bf16.msra.mxu0 %v3535
      %4121 = vmatpush.bf16.msra.mxu0 %v3531
      %4122 = vmatpush.bf16.msra.mxu0 %v3527
      %4123 = vmatpush.bf16.msra.mxu0 %v3523
      %4124 = vmatpush.bf16.msra.mxu0 %v3519
      %4125 = vmatmul.bf16.gmra.mxu0 %v2957
      %v4126 = vpop.f32.mrf.mxu0
      %v4127 = vadd.f32 %v4098, %v4126
      %v4128 = vpop.f32.mrf.mxu0
      %v4129 = vadd.f32 %v4100, %v4128
      %4130 = vmatmul.bf16.gmra.mxu0 %v2961
      %v4131 = vpop.f32.mrf.mxu0
      %v4132 = vadd.f32 %v4103, %v4131
      %v4133 = vpop.f32.mrf.mxu0
      %v4134 = vadd.f32 %v4105, %v4133
      %4135 = vmatmul.bf16.gmra.mxu0 %v2965
      %v4136 = vpop.f32.mrf.mxu0
      %v4137 = vadd.f32 %v4108, %v4136
      %v4138 = vpop.f32.mrf.mxu0
      %v4139 = vadd.f32 %v4110, %v4138
      %4140 = vmatmul.bf16.gmra.mxu0 %v2969
      %v4141 = vpop.f32.mrf.mxu0
      %v4142 = vadd.f32 %v4113, %v4141
      %v4143 = vpop.f32.mrf.mxu0
      %v4144 = vadd.f32 %v4115, %v4143
      %4145 = vdwg.mxu0
      %4146 = vmatpush.bf16.msra.mxu0 %v3579
      %4147 = vmatpush.bf16.msra.mxu0 %v3575
      %4148 = vmatpush.bf16.msra.mxu0 %v3571
      %4149 = vmatpush.bf16.msra.mxu0 %v3567
      %4150 = vmatpush.bf16.msra.mxu0 %v3563
      %4151 = vmatpush.bf16.msra.mxu0 %v3559
      %4152 = vmatpush.bf16.msra.mxu0 %v3555
      %4153 = vmatpush.bf16.msra.mxu0 %v3551
      %4154 = vmatmul.bf16.gmra.mxu0 %v2958
      %v4155 = vpop.f32.mrf.mxu0
      %v4156 = vadd.f32 %v4127, %v4155
      %v4157 = vpop.f32.mrf.mxu0
      %v4158 = vadd.f32 %v4129, %v4157
      %4159 = vmatmul.bf16.gmra.mxu0 %v2962
      %v4160 = vpop.f32.mrf.mxu0
      %v4161 = vadd.f32 %v4132, %v4160
      %v4162 = vpop.f32.mrf.mxu0
      %v4163 = vadd.f32 %v4134, %v4162
      %4164 = vmatmul.bf16.gmra.mxu0 %v2966
      %v4165 = vpop.f32.mrf.mxu0
      %v4166 = vadd.f32 %v4137, %v4165
      %v4167 = vpop.f32.mrf.mxu0
      %v4168 = vadd.f32 %v4139, %v4167
      %4169 = vmatmul.bf16.gmra.mxu0 %v2970
      %v4170 = vpop.f32.mrf.mxu0
      %v4171 = vadd.f32 %v4142, %v4170
      %v4172 = vpop.f32.mrf.mxu0
      %v4173 = vadd.f32 %v4144, %v4172
      %4174 = vdwg.mxu0
      %4175 = vmatpush.bf16.msra.mxu0 %v3611
      %4176 = vmatpush.bf16.msra.mxu0 %v3607
      %4177 = vmatpush.bf16.msra.mxu0 %v3603
      %4178 = vmatpush.bf16.msra.mxu0 %v3599
      %4179 = vmatpush.bf16.msra.mxu0 %v3595
      %4180 = vmatpush.bf16.msra.mxu0 %v3591
      %4181 = vmatpush.bf16.msra.mxu0 %v3587
      %4182 = vmatpush.bf16.msra.mxu0 %v3583
      %4183 = vmatmul.bf16.gmra.mxu0 %v2959
      %v4184 = vpop.f32.mrf.mxu0
      %v4185 = vadd.f32 %v4156, %v4184
      %v4186 = vpop.f32.mrf.mxu0
      %v4187 = vadd.f32 %v4158, %v4186
      %4188 = vmatmul.bf16.gmra.mxu0 %v2963
      %v4189 = vpop.f32.mrf.mxu0
      %v4190 = vadd.f32 %v4161, %v4189
      %v4191 = vpop.f32.mrf.mxu0
      %v4192 = vadd.f32 %v4163, %v4191
      %4193 = vmatmul.bf16.gmra.mxu0 %v2967
      %v4194 = vpop.f32.mrf.mxu0
      %v4195 = vadd.f32 %v4166, %v4194
      %v4196 = vpop.f32.mrf.mxu0
      %v4197 = vadd.f32 %v4168, %v4196
      %4198 = vmatmul.bf16.gmra.mxu0 %v2971
      %v4199 = vpop.f32.mrf.mxu0
      %v4200 = vadd.f32 %v4171, %v4199
      %v4201 = vpop.f32.mrf.mxu0
      %v4202 = vadd.f32 %v4173, %v4201
      %4203 = vdwg.mxu0
      %v4204 = vld [vmem:[%s11] sm:$0xf]
      %v4206 = vperm.slane %v4204, 0
      %v4207 = vperm.slane %v4204, 1
      %v4208 = vperm.slane %v4204, 2
      %v4209 = vperm.slane %v4204, 3
      %v4214 = vmul.f32 %v3837, %v4206
      %v4215 = vmul.f32 %v3953, %v4207
      %v4216 = vmul.f32 %v4069, %v4208
      %v4217 = vmul.f32 %v4185, %v4209
      %v4218 = vmul.f32 %v3839, %v4206
      %v4219 = vmul.f32 %v3955, %v4207
      %v4220 = vmul.f32 %v4071, %v4208
      %v4221 = vmul.f32 %v4187, %v4209
      %v4222 = vmul.f32 %v3842, %v4206
      %v4223 = vmul.f32 %v3958, %v4207
      %v4224 = vmul.f32 %v4074, %v4208
      %v4225 = vmul.f32 %v4190, %v4209
      %v4226 = vmul.f32 %v3844, %v4206
      %v4227 = vmul.f32 %v3960, %v4207
      %v4228 = vmul.f32 %v4076, %v4208
      %v4229 = vmul.f32 %v4192, %v4209
      %v4230 = vmul.f32 %v3847, %v4206
      %v4231 = vmul.f32 %v3963, %v4207
      %v4232 = vmul.f32 %v4079, %v4208
      %v4233 = vmul.f32 %v4195, %v4209
      %v4234 = vmul.f32 %v3849, %v4206
      %v4235 = vmul.f32 %v3965, %v4207
      %v4236 = vmul.f32 %v4081, %v4208
      %v4237 = vmul.f32 %v4197, %v4209
      %v4238 = vmul.f32 %v3852, %v4206
      %v4239 = vmul.f32 %v3968, %v4207
      %v4240 = vmul.f32 %v4084, %v4208
      %v4241 = vmul.f32 %v4200, %v4209
      %v4242 = vmul.f32 %v3854, %v4206
      %v4243 = vmul.f32 %v3970, %v4207
      %v4244 = vmul.f32 %v4086, %v4208
      %v4245 = vmul.f32 %v4202, %v4209
      %v4246 = vld [vmem:[%s12] sm:$0xf]
      %v4248 = vperm.slane %v4246, 0
      %v4249 = vperm.slane %v4246, 1
      %v4250 = vperm.slane %v4246, 2
      %v4251 = vperm.slane %v4246, 3
      %v4256 = vadd.f32 %v4214, %v4248
      %v4257 = vadd.f32 %v4215, %v4249
      %v4258 = vadd.f32 %v4216, %v4250
      %v4259 = vadd.f32 %v4217, %v4251
      %v4260 = vadd.f32 %v4218, %v4248
      %v4261 = vadd.f32 %v4219, %v4249
      %v4262 = vadd.f32 %v4220, %v4250
      %v4263 = vadd.f32 %v4221, %v4251
      %v4264 = vadd.f32 %v4222, %v4248
      %v4265 = vadd.f32 %v4223, %v4249
      %v4266 = vadd.f32 %v4224, %v4250
      %v4267 = vadd.f32 %v4225, %v4251
      %v4268 = vadd.f32 %v4226, %v4248
      %v4269 = vadd.f32 %v4227, %v4249
      %v4270 = vadd.f32 %v4228, %v4250
      %v4271 = vadd.f32 %v4229, %v4251
      %v4272 = vadd.f32 %v4230, %v4248
      %v4273 = vadd.f32 %v4231, %v4249
      %v4274 = vadd.f32 %v4232, %v4250
      %v4275 = vadd.f32 %v4233, %v4251
      %v4276 = vadd.f32 %v4234, %v4248
      %v4277 = vadd.f32 %v4235, %v4249
      %v4278 = vadd.f32 %v4236, %v4250
      %v4279 = vadd.f32 %v4237, %v4251
      %v4280 = vadd.f32 %v4238, %v4248
      %v4281 = vadd.f32 %v4239, %v4249
      %v4282 = vadd.f32 %v4240, %v4250
      %v4283 = vadd.f32 %v4241, %v4251
      %v4284 = vadd.f32 %v4242, %v4248
      %v4285 = vadd.f32 %v4243, %v4249
      %v4286 = vadd.f32 %v4244, %v4250
      %v4287 = vadd.f32 %v4245, %v4251
      %v4288 = vmul.f32 %v4256, 0.01
      %v4289 = vmul.f32 %v4257, 0.01
      %v4290 = vmul.f32 %v4258, 0.01
      %v4291 = vmul.f32 %v4259, 0.01
      %v4292 = vmul.f32 %v4260, 0.01
      %v4293 = vmul.f32 %v4261, 0.01
      %v4294 = vmul.f32 %v4262, 0.01
      %v4295 = vmul.f32 %v4263, 0.01
      %v4296 = vmul.f32 %v4264, 0.01
      %v4297 = vmul.f32 %v4265, 0.01
      %v4298 = vmul.f32 %v4266, 0.01
      %v4299 = vmul.f32 %v4267, 0.01
      %v4300 = vmul.f32 %v4268, 0.01
      %v4301 = vmul.f32 %v4269, 0.01
      %v4302 = vmul.f32 %v4270, 0.01
      %v4303 = vmul.f32 %v4271, 0.01
      %v4304 = vmul.f32 %v4272, 0.01
      %v4305 = vmul.f32 %v4273, 0.01
      %v4306 = vmul.f32 %v4274, 0.01
      %v4307 = vmul.f32 %v4275, 0.01
      %v4308 = vmul.f32 %v4276, 0.01
      %v4309 = vmul.f32 %v4277, 0.01
      %v4310 = vmul.f32 %v4278, 0.01
      %v4311 = vmul.f32 %v4279, 0.01
      %v4312 = vmul.f32 %v4280, 0.01
      %v4313 = vmul.f32 %v4281, 0.01
      %v4314 = vmul.f32 %v4282, 0.01
      %v4315 = vmul.f32 %v4283, 0.01
      %v4316 = vmul.f32 %v4284, 0.01
      %v4317 = vmul.f32 %v4285, 0.01
      %v4318 = vmul.f32 %v4286, 0.01
      %v4319 = vmul.f32 %v4287, 0.01
      %v4320 = vmax.f32 %v4256, %v4288
      %v4321 = vmax.f32 %v4257, %v4289
      %v4322 = vmax.f32 %v4258, %v4290
      %v4323 = vmax.f32 %v4259, %v4291
      %v4324 = vmax.f32 %v4260, %v4292
      %v4325 = vmax.f32 %v4261, %v4293
      %v4326 = vmax.f32 %v4262, %v4294
      %v4327 = vmax.f32 %v4263, %v4295
      %v4328 = vmax.f32 %v4264, %v4296
      %v4329 = vmax.f32 %v4265, %v4297
      %v4330 = vmax.f32 %v4266, %v4298
      %v4331 = vmax.f32 %v4267, %v4299
      %v4332 = vmax.f32 %v4268, %v4300
      %v4333 = vmax.f32 %v4269, %v4301
      %v4334 = vmax.f32 %v4270, %v4302
      %v4335 = vmax.f32 %v4271, %v4303
      %v4336 = vmax.f32 %v4272, %v4304
      %v4337 = vmax.f32 %v4273, %v4305
      %v4338 = vmax.f32 %v4274, %v4306
      %v4339 = vmax.f32 %v4275, %v4307
      %v4340 = vmax.f32 %v4276, %v4308
      %v4341 = vmax.f32 %v4277, %v4309
      %v4342 = vmax.f32 %v4278, %v4310
      %v4343 = vmax.f32 %v4279, %v4311
      %v4344 = vmax.f32 %v4280, %v4312
      %v4345 = vmax.f32 %v4281, %v4313
      %v4346 = vmax.f32 %v4282, %v4314
      %v4347 = vmax.f32 %v4283, %v4315
      %v4348 = vmax.f32 %v4284, %v4316
      %v4349 = vmax.f32 %v4285, %v4317
      %v4350 = vmax.f32 %v4286, %v4318
      %v4351 = vmax.f32 %v4287, %v4319
      %v4352 = vpack.c.bf16 %v4324, %v4320
      %v4353 = vpack.c.bf16 %v4325, %v4321
      %v4354 = vpack.c.bf16 %v4326, %v4322
      %v4355 = vpack.c.bf16 %v4327, %v4323
      %v4356 = vpack.c.bf16 %v4332, %v4328
      %v4357 = vpack.c.bf16 %v4333, %v4329
      %v4358 = vpack.c.bf16 %v4334, %v4330
      %v4359 = vpack.c.bf16 %v4335, %v4331
      %v4360 = vpack.c.bf16 %v4340, %v4336
      %v4361 = vpack.c.bf16 %v4341, %v4337
      %v4362 = vpack.c.bf16 %v4342, %v4338
      %v4363 = vpack.c.bf16 %v4343, %v4339
      %v4364 = vpack.c.bf16 %v4348, %v4344
      %v4365 = vpack.c.bf16 %v4349, %v4345
      %v4366 = vpack.c.bf16 %v4350, %v4346
      %v4367 = vpack.c.bf16 %v4351, %v4347
      %v4368 = vld [vmem:[%s13] sm:$0xf]
      %v4369 = vld [vmem:[%s13 + $0x4] sm:$0xf]
      %v4370 = vld [vmem:[%s13 + $0x8] sm:$0xf]
      %v4371 = vld [vmem:[%s13 + $0xc] sm:$0xf]
      %v4372 = vld [vmem:[%s13 + $0x10] sm:$0xf]
      %v4373 = vld [vmem:[%s13 + $0x14] sm:$0xf]
      %v4374 = vld [vmem:[%s13 + $0x18] sm:$0xf]
      %v4375 = vld [vmem:[%s13 + $0x1c] sm:$0xf]
      %v4376 = vld [vmem:[%s13 + $0x20] sm:$0xf]
      %v4377 = vld [vmem:[%s13 + $0x24] sm:$0xf]
      %v4378 = vld [vmem:[%s13 + $0x28] sm:$0xf]
      %v4379 = vld [vmem:[%s13 + $0x2c] sm:$0xf]
      %v4380 = vld [vmem:[%s13 + $0x30] sm:$0xf]
      %v4381 = vld [vmem:[%s13 + $0x34] sm:$0xf]
      %v4382 = vld [vmem:[%s13 + $0x38] sm:$0xf]
      %v4383 = vld [vmem:[%s13 + $0x3c] sm:$0xf]
      %v4384 = vld [vmem:[%s13 + $0x40] sm:$0xf]
      %v4385 = vld [vmem:[%s13 + $0x44] sm:$0xf]
      %v4386 = vld [vmem:[%s13 + $0x48] sm:$0xf]
      %v4387 = vld [vmem:[%s13 + $0x4c] sm:$0xf]
      %v4388 = vld [vmem:[%s13 + $0x50] sm:$0xf]
      %v4389 = vld [vmem:[%s13 + $0x54] sm:$0xf]
      %v4390 = vld [vmem:[%s13 + $0x58] sm:$0xf]
      %v4391 = vld [vmem:[%s13 + $0x5c] sm:$0xf]
      %v4392 = vld [vmem:[%s13 + $0x60] sm:$0xf]
      %v4393 = vld [vmem:[%s13 + $0x64] sm:$0xf]
      %v4394 = vld [vmem:[%s13 + $0x68] sm:$0xf]
      %v4395 = vld [vmem:[%s13 + $0x6c] sm:$0xf]
      %v4396 = vld [vmem:[%s13 + $0x70] sm:$0xf]
      %v4397 = vld [vmem:[%s13 + $0x74] sm:$0xf]
      %v4398 = vld [vmem:[%s13 + $0x78] sm:$0xf]
      %v4399 = vld [vmem:[%s13 + $0x7c] sm:$0xf]
      %v4400 = vld [vmem:[%s13 + $0x80] sm:$0xf]
      %v4401 = vld [vmem:[%s13 + $0x84] sm:$0xf]
      %v4402 = vld [vmem:[%s13 + $0x88] sm:$0xf]
      %v4403 = vld [vmem:[%s13 + $0x8c] sm:$0xf]
      %v4404 = vld [vmem:[%s13 + $0x90] sm:$0xf]
      %v4405 = vld [vmem:[%s13 + $0x94] sm:$0xf]
      %v4406 = vld [vmem:[%s13 + $0x98] sm:$0xf]
      %v4407 = vld [vmem:[%s13 + $0x9c] sm:$0xf]
      %v4408 = vld [vmem:[%s13 + $0xa0] sm:$0xf]
      %v4409 = vld [vmem:[%s13 + $0xa4] sm:$0xf]
      %v4410 = vld [vmem:[%s13 + $0xa8] sm:$0xf]
      %v4411 = vld [vmem:[%s13 + $0xac] sm:$0xf]
      %v4412 = vld [vmem:[%s13 + $0xb0] sm:$0xf]
      %v4413 = vld [vmem:[%s13 + $0xb4] sm:$0xf]
      %v4414 = vld [vmem:[%s13 + $0xb8] sm:$0xf]
      %v4415 = vld [vmem:[%s13 + $0xbc] sm:$0xf]
      %v4416 = vld [vmem:[%s13 + $0xc0] sm:$0xf]
      %v4417 = vld [vmem:[%s13 + $0xc4] sm:$0xf]
      %v4418 = vld [vmem:[%s13 + $0xc8] sm:$0xf]
      %v4419 = vld [vmem:[%s13 + $0xcc] sm:$0xf]
      %v4420 = vld [vmem:[%s13 + $0xd0] sm:$0xf]
      %v4421 = vld [vmem:[%s13 + $0xd4] sm:$0xf]
      %v4422 = vld [vmem:[%s13 + $0xd8] sm:$0xf]
      %v4423 = vld [vmem:[%s13 + $0xdc] sm:$0xf]
      %v4424 = vld [vmem:[%s13 + $0xe0] sm:$0xf]
      %v4425 = vld [vmem:[%s13 + $0xe4] sm:$0xf]
      %v4426 = vld [vmem:[%s13 + $0xe8] sm:$0xf]
      %v4427 = vld [vmem:[%s13 + $0xec] sm:$0xf]
      %v4428 = vld [vmem:[%s13 + $0xf0] sm:$0xf]
      %v4429 = vld [vmem:[%s13 + $0xf4] sm:$0xf]
      %v4430 = vld [vmem:[%s13 + $0xf8] sm:$0xf]
      %v4431 = vld [vmem:[%s13 + $0xfc] sm:$0xf]
      %v4496 = vunpack.c.l.b16 %v4368
      %v4497 = vunpack.c.l.b16 %v4369
      %v4498 = vunpack.c.l.b16 %v4370
      %v4499 = vunpack.c.l.b16 %v4371
      %v4500 = vunpack.c.l.b16 %v4372
      %v4501 = vunpack.c.l.b16 %v4373
      %v4502 = vunpack.c.l.b16 %v4374
      %v4503 = vunpack.c.l.b16 %v4375
      %v4504 = vunpack.c.l.b16 %v4376
      %v4505 = vunpack.c.l.b16 %v4377
      %v4506 = vunpack.c.l.b16 %v4378
      %v4507 = vunpack.c.l.b16 %v4379
      %v4508 = vunpack.c.l.b16 %v4380
      %v4509 = vunpack.c.l.b16 %v4381
      %v4510 = vunpack.c.l.b16 %v4382
      %v4511 = vunpack.c.l.b16 %v4383
      %v4512 = vunpack.c.l.b16 %v4384
      %v4513 = vunpack.c.l.b16 %v4385
      %v4514 = vunpack.c.l.b16 %v4386
      %v4515 = vunpack.c.l.b16 %v4387
      %v4516 = vunpack.c.l.b16 %v4388
      %v4517 = vunpack.c.l.b16 %v4389
      %v4518 = vunpack.c.l.b16 %v4390
      %v4519 = vunpack.c.l.b16 %v4391
      %v4520 = vunpack.c.l.b16 %v4392
      %v4521 = vunpack.c.l.b16 %v4393
      %v4522 = vunpack.c.l.b16 %v4394
      %v4523 = vunpack.c.l.b16 %v4395
      %v4524 = vunpack.c.l.b16 %v4396
      %v4525 = vunpack.c.l.b16 %v4397
      %v4526 = vunpack.c.l.b16 %v4398
      %v4527 = vunpack.c.l.b16 %v4399
      %v4528 = vunpack.c.l.b16 %v4400
      %v4529 = vunpack.c.l.b16 %v4401
      %v4530 = vunpack.c.l.b16 %v4402
      %v4531 = vunpack.c.l.b16 %v4403
      %v4532 = vunpack.c.l.b16 %v4404
      %v4533 = vunpack.c.l.b16 %v4405
      %v4534 = vunpack.c.l.b16 %v4406
      %v4535 = vunpack.c.l.b16 %v4407
      %v4536 = vunpack.c.l.b16 %v4408
      %v4537 = vunpack.c.l.b16 %v4409
      %v4538 = vunpack.c.l.b16 %v4410
      %v4539 = vunpack.c.l.b16 %v4411
      %v4540 = vunpack.c.l.b16 %v4412
      %v4541 = vunpack.c.l.b16 %v4413
      %v4542 = vunpack.c.l.b16 %v4414
      %v4543 = vunpack.c.l.b16 %v4415
      %v4544 = vunpack.c.l.b16 %v4416
      %v4545 = vunpack.c.l.b16 %v4417
      %v4546 = vunpack.c.l.b16 %v4418
      %v4547 = vunpack.c.l.b16 %v4419
      %v4548 = vunpack.c.l.b16 %v4420
      %v4549 = vunpack.c.l.b16 %v4421
      %v4550 = vunpack.c.l.b16 %v4422
      %v4551 = vunpack.c.l.b16 %v4423
      %v4552 = vunpack.c.l.b16 %v4424
      %v4553 = vunpack.c.l.b16 %v4425
      %v4554 = vunpack.c.l.b16 %v4426
      %v4555 = vunpack.c.l.b16 %v4427
      %v4556 = vunpack.c.l.b16 %v4428
      %v4557 = vunpack.c.l.b16 %v4429
      %v4558 = vunpack.c.l.b16 %v4430
      %v4559 = vunpack.c.l.b16 %v4431
      %v4560 = vpack.c.b16 %v4497, %v4496
      %v4561 = vpack.c.b16 %v4499, %v4498
      %v4562 = vpack.c.b16 %v4501, %v4500
      %v4563 = vpack.c.b16 %v4503, %v4502
      %v4564 = vpack.c.b16 %v4505, %v4504
      %v4565 = vpack.c.b16 %v4507, %v4506
      %v4566 = vpack.c.b16 %v4509, %v4508
      %v4567 = vpack.c.b16 %v4511, %v4510
      %v4568 = vpack.c.b16 %v4513, %v4512
      %v4569 = vpack.c.b16 %v4515, %v4514
      %v4570 = vpack.c.b16 %v4517, %v4516
      %v4571 = vpack.c.b16 %v4519, %v4518
      %v4572 = vpack.c.b16 %v4521, %v4520
      %v4573 = vpack.c.b16 %v4523, %v4522
      %v4574 = vpack.c.b16 %v4525, %v4524
      %v4575 = vpack.c.b16 %v4527, %v4526
      %v4576 = vpack.c.b16 %v4529, %v4528
      %v4577 = vpack.c.b16 %v4531, %v4530
      %v4578 = vpack.c.b16 %v4533, %v4532
      %v4579 = vpack.c.b16 %v4535, %v4534
      %v4580 = vpack.c.b16 %v4537, %v4536
      %v4581 = vpack.c.b16 %v4539, %v4538
      %v4582 = vpack.c.b16 %v4541, %v4540
      %v4583 = vpack.c.b16 %v4543, %v4542
      %v4584 = vpack.c.b16 %v4545, %v4544
      %v4585 = vpack.c.b16 %v4547, %v4546
      %v4586 = vpack.c.b16 %v4549, %v4548
      %v4587 = vpack.c.b16 %v4551, %v4550
      %v4588 = vpack.c.b16 %v4553, %v4552
      %v4589 = vpack.c.b16 %v4555, %v4554
      %v4590 = vpack.c.b16 %v4557, %v4556
      %v4591 = vpack.c.b16 %v4559, %v4558
      %4624 = vmatpush.bf16.msra.mxu0 %v4567
      %4625 = vmatpush.bf16.msra.mxu0 %v4566
      %4626 = vmatpush.bf16.msra.mxu0 %v4565
      %4627 = vmatpush.bf16.msra.mxu0 %v4564
      %4628 = vmatpush.bf16.msra.mxu0 %v4563
      %4629 = vmatpush.bf16.msra.mxu0 %v4562
      %4630 = vmatpush.bf16.msra.mxu0 %v4561
      %4631 = vmatpush.bf16.msra.mxu0 %v4560
      %4632 = vmatmul.bf16.gmra.mxu0 %v4352
      %v4633 = vpop.f32.mrf.mxu0
      %v4634 = vadd.f32 0.0, %v4633
      %v4635 = vpop.f32.mrf.mxu0
      %v4636 = vadd.f32 0.0, %v4635
      %4637 = vmatmul.bf16.gmra.mxu0 %v4356
      %v4638 = vpop.f32.mrf.mxu0
      %v4639 = vadd.f32 0.0, %v4638
      %v4640 = vpop.f32.mrf.mxu0
      %v4641 = vadd.f32 0.0, %v4640
      %4642 = vmatmul.bf16.gmra.mxu0 %v4360
      %v4643 = vpop.f32.mrf.mxu0
      %v4644 = vadd.f32 0.0, %v4643
      %v4645 = vpop.f32.mrf.mxu0
      %v4646 = vadd.f32 0.0, %v4645
      %4647 = vmatmul.bf16.gmra.mxu0 %v4364
      %v4648 = vpop.f32.mrf.mxu0
      %v4649 = vadd.f32 0.0, %v4648
      %v4650 = vpop.f32.mrf.mxu0
      %v4651 = vadd.f32 0.0, %v4650
      %4652 = vdwg.mxu0
      %4653 = vmatpush.bf16.msra.mxu0 %v4575
      %4654 = vmatpush.bf16.msra.mxu0 %v4574
      %4655 = vmatpush.bf16.msra.mxu0 %v4573
      %4656 = vmatpush.bf16.msra.mxu0 %v4572
      %4657 = vmatpush.bf16.msra.mxu0 %v4571
      %4658 = vmatpush.bf16.msra.mxu0 %v4570
      %4659 = vmatpush.bf16.msra.mxu0 %v4569
      %4660 = vmatpush.bf16.msra.mxu0 %v4568
      %4661 = vmatmul.bf16.gmra.mxu0 %v4353
      %v4662 = vpop.f32.mrf.mxu0
      %v4663 = vadd.f32 %v4634, %v4662
      %v4664 = vpop.f32.mrf.mxu0
      %v4665 = vadd.f32 %v4636, %v4664
      %4666 = vmatmul.bf16.gmra.mxu0 %v4357
      %v4667 = vpop.f32.mrf.mxu0
      %v4668 = vadd.f32 %v4639, %v4667
      %v4669 = vpop.f32.mrf.mxu0
      %v4670 = vadd.f32 %v4641, %v4669
      %4671 = vmatmul.bf16.gmra.mxu0 %v4361
      %v4672 = vpop.f32.mrf.mxu0
      %v4673 = vadd.f32 %v4644, %v4672
      %v4674 = vpop.f32.mrf.mxu0
      %v4675 = vadd.f32 %v4646, %v4674
      %4676 = vmatmul.bf16.gmra.mxu0 %v4365
      %v4677 = vpop.f32.mrf.mxu0
      %v4678 = vadd.f32 %v4649, %v4677
      %v4679 = vpop.f32.mrf.mxu0
      %v4680 = vadd.f32 %v4651, %v4679
      %4681 = vdwg.mxu0
      %4682 = vmatpush.bf16.msra.mxu0 %v4583
      %4683 = vmatpush.bf16.msra.mxu0 %v4582
      %4684 = vmatpush.bf16.msra.mxu0 %v4581
      %4685 = vmatpush.bf16.msra.mxu0 %v4580
      %4686 = vmatpush.bf16.msra.mxu0 %v4579
      %4687 = vmatpush.bf16.msra.mxu0 %v4578
      %4688 = vmatpush.bf16.msra.mxu0 %v4577
      %4689 = vmatpush.bf16.msra.mxu0 %v4576
      %4690 = vmatmul.bf16.gmra.mxu0 %v4354
      %v4691 = vpop.f32.mrf.mxu0
      %v4692 = vadd.f32 %v4663, %v4691
      %v4693 = vpop.f32.mrf.mxu0
      %v4694 = vadd.f32 %v4665, %v4693
      %4695 = vmatmul.bf16.gmra.mxu0 %v4358
      %v4696 = vpop.f32.mrf.mxu0
      %v4697 = vadd.f32 %v4668, %v4696
      %v4698 = vpop.f32.mrf.mxu0
      %v4699 = vadd.f32 %v4670, %v4698
      %4700 = vmatmul.bf16.gmra.mxu0 %v4362
      %v4701 = vpop.f32.mrf.mxu0
      %v4702 = vadd.f32 %v4673, %v4701
      %v4703 = vpop.f32.mrf.mxu0
      %v4704 = vadd.f32 %v4675, %v4703
      %4705 = vmatmul.bf16.gmra.mxu0 %v4366
      %v4706 = vpop.f32.mrf.mxu0
      %v4707 = vadd.f32 %v4678, %v4706
      %v4708 = vpop.f32.mrf.mxu0
      %v4709 = vadd.f32 %v4680, %v4708
      %4710 = vdwg.mxu0
      %4711 = vmatpush.bf16.msra.mxu0 %v4591
      %4712 = vmatpush.bf16.msra.mxu0 %v4590
      %4713 = vmatpush.bf16.msra.mxu0 %v4589
      %4714 = vmatpush.bf16.msra.mxu0 %v4588
      %4715 = vmatpush.bf16.msra.mxu0 %v4587
      %4716 = vmatpush.bf16.msra.mxu0 %v4586
      %4717 = vmatpush.bf16.msra.mxu0 %v4585
      %4718 = vmatpush.bf16.msra.mxu0 %v4584
      %4719 = vmatmul.bf16.gmra.mxu0 %v4355
      %v4720 = vpop.f32.mrf.mxu0
      %v4721 = vadd.f32 %v4692, %v4720
      %v4722 = vpop.f32.mrf.mxu0
      %v4723 = vadd.f32 %v4694, %v4722
      %4724 = vmatmul.bf16.gmra.mxu0 %v4359
      %v4725 = vpop.f32.mrf.mxu0
      %v4726 = vadd.f32 %v4697, %v4725
      %v4727 = vpop.f32.mrf.mxu0
      %v4728 = vadd.f32 %v4699, %v4727
      %4729 = vmatmul.bf16.gmra.mxu0 %v4363
      %v4730 = vpop.f32.mrf.mxu0
      %v4731 = vadd.f32 %v4702, %v4730
      %v4732 = vpop.f32.mrf.mxu0
      %v4733 = vadd.f32 %v4704, %v4732
      %4734 = vmatmul.bf16.gmra.mxu0 %v4367
      %v4735 = vpop.f32.mrf.mxu0
      %v4736 = vadd.f32 %v4707, %v4735
      %v4737 = vpop.f32.mrf.mxu0
      %v4738 = vadd.f32 %v4709, %v4737
      %4739 = vdwg.mxu0
      %v4740 = vld [vmem:[%s14] sm:$0x1]
      %v4742 = vperm.slane %v4740, 0
      %v4744 = vmul.f32 %v4721, %v4742
      %v4745 = vmul.f32 %v4723, %v4742
      %v4746 = vmul.f32 %v4726, %v4742
      %v4747 = vmul.f32 %v4728, %v4742
      %v4748 = vmul.f32 %v4731, %v4742
      %v4749 = vmul.f32 %v4733, %v4742
      %v4750 = vmul.f32 %v4736, %v4742
      %v4751 = vmul.f32 %v4738, %v4742
      %v4752 = vld [vmem:[%s15] sm:$0x1]
      %v4754 = vperm.slane %v4752, 0
      %v4756 = vadd.f32 %v4744, %v4754
      %v4757 = vadd.f32 %v4745, %v4754
      %v4758 = vadd.f32 %v4746, %v4754
      %v4759 = vadd.f32 %v4747, %v4754
      %v4760 = vadd.f32 %v4748, %v4754
      %v4761 = vadd.f32 %v4749, %v4754
      %v4762 = vadd.f32 %v4750, %v4754
      %v4763 = vadd.f32 %v4751, %v4754
      %v4764 = vmul.f32 %v4756, 0.01
      %v4765 = vmul.f32 %v4757, 0.01
      %v4766 = vmul.f32 %v4758, 0.01
      %v4767 = vmul.f32 %v4759, 0.01
      %v4768 = vmul.f32 %v4760, 0.01
      %v4769 = vmul.f32 %v4761, 0.01
      %v4770 = vmul.f32 %v4762, 0.01
      %v4771 = vmul.f32 %v4763, 0.01
      %v4772 = vmax.f32 %v4756, %v4764
      %v4773 = vmax.f32 %v4757, %v4765
      %v4774 = vmax.f32 %v4758, %v4766
      %v4775 = vmax.f32 %v4759, %v4767
      %v4776 = vmax.f32 %v4760, %v4768
      %v4777 = vmax.f32 %v4761, %v4769
      %v4778 = vmax.f32 %v4762, %v4770
      %v4779 = vmax.f32 %v4763, %v4771
      %4780 = vst [vmem:[%s582] sm:$0xff] %v4772
      %4781 = vst [vmem:[%s582 + $0x8] sm:$0xff] %v4773
      %4782 = vst [vmem:[%s582 + $0x10] sm:$0xff] %v4774
      %4783 = vst [vmem:[%s582 + $0x18] sm:$0xff] %v4775
      %4784 = vst [vmem:[%s582 + $0x20] sm:$0xff] %v4776
      %4785 = vst [vmem:[%s582 + $0x28] sm:$0xff] %v4777
      %4786 = vst [vmem:[%s582 + $0x30] sm:$0xff] %v4778
      %4787 = vst [vmem:[%s582 + $0x38] sm:$0xff] %v4779
      %s4788 = smul.u32 8, %s32
      %p4789 = scmp.lt.s32.totalorder %s31, 1
      %s4790 = scalar_select %p4789, %s31, 1
      %p4791 = scmp.lt.s32.totalorder %s4788, 7
      %s4792 = scalar_select %p4791, %s4788, 7
      %s4793 = smul.addr %s4790, 8
      %s4794 = sadd.s32 %s4792, %s4793
      %s4795 = smul.addr %s4794, 8
      %s4796 = scalar_lea.vmem %s16, %s4795
      // Predicated region
      $region85: #{foldingnet_forward.13} parent=83 // pred_check
        %p4797 = pneg %p410
      $region86: #{foldingnet_forward.13} parent=83 // pred_check_branch
        %4799 = sbr.rel (%p4797) target = $region88
      $region87: #{foldingnet_forward.13} parent=83 // pred_region
        %s4800 = smul.u32 8, %s32
      $region88: #{foldingnet_forward.13} parent=83 // pred_fallthru
        _
    $region84: #{foldingnet_forward.13} parent=5 // pred_fallthru
      _
    %p4801 = scmp.le.s32.totalorder 2, %s22
    // Predicated region
    $region89: #{foldingnet_forward.13} parent=5 // pred_check
      %p4802 = pneg %p4801
    $region90: #{foldingnet_forward.13} parent=5 // pred_check_branch
      %4804 = sbr.rel (%p4802) target = $region92
    $region91: #{foldingnet_forward.13} parent=5 // pred_region
      %s4805 = ssub.s32 %s22, 2
      // Predicated region
      $region93: #{foldingnet_forward.13} parent=91 // pred_check
        %p4806 = pneg %p416
      $region94: #{foldingnet_forward.13} parent=91 // pred_check_branch
        %4808 = sbr.rel (%p4806) target = $region96
      $region95: #{foldingnet_forward.13} parent=91 // pred_region
        %s4809 = smul.u32 8, %s34
        %p4810 = scmp.lt.s32.totalorder %s33, 1
        %s4811 = scalar_select %p4810, %s33, 1
        %p4812 = scmp.lt.s32.totalorder %s4809, 7
        %s4813 = scalar_select %p4812, %s4809, 7
        %s4814 = smul.addr %s4811, 8
        %s4815 = sadd.s32 %s4813, %s4814
        %s4816 = smul.addr %s4815, 8
        %s4817 = scalar_lea.vmem %s16, %s4816
      $region96: #{foldingnet_forward.13} parent=91 // pred_fallthru
        _
    $region92: #{foldingnet_forward.13} parent=5 // pred_fallthru
      _
  $region6: #{foldingnet_forward.13} parent=0 // loop_footer
    %s26 = sadd.s32 1, %s22
  $region7: #{foldingnet_forward.13} parent=0 // loop_footer_branch
    %21 = sbr.rel target = $region3
  $region8: #{foldingnet_forward.13} parent=0 // loop_exit
    _

</llo_original>
